<compile_context>
chip_gen: v7x
topology: tpu7x:2x2x1
jax: 0.10.0
libtpu: 0.0.40
codegen_flags: <defaults>
</compile_context>

<pallas_src>
import functools
import math

import jax
import jax.numpy as jnp
from jax.experimental import pallas as pl
from jax.experimental.pallas import tpu as pltpu


def _gelu(h, approximate):
    if approximate:
        # tanh-approx GELU: tanh goes to the EUP (own VLIW slot), unloading
        # the VALU.  Off by default to match F.gelu(approximate='none').
        c = math.sqrt(2.0 / math.pi)
        return 0.5 * h * (1.0 + jnp.tanh(c * (h + 0.044715 * (h * h * h))))
    # Exact erf GELU, matching PyTorch F.gelu default.
    return 0.5 * h * (1.0 + jax.lax.erf(h * (1.0 / math.sqrt(2.0))))


def ffn_kernel_resident(x_ref, w1_ref, b1_ref, w2_ref, b2_ref, o_ref, *,
                        approximate_gelu):
    """Whole W1/W2 resident in VMEM: single fused pass, no accumulator scratch."""
    h = jnp.dot(x_ref[...], w1_ref[...], preferred_element_type=jnp.float32)
    h = h + b1_ref[...].astype(jnp.float32)
    h = _gelu(h, approximate_gelu)
    # Dropout: identity (eval mode).
    # TODO(synk): training-mode dropout (p=0.1) would use pltpu.prng_seed /
    # pltpu.stateful_bernoulli.
    y = jnp.dot(h.astype(w2_ref.dtype), w2_ref[...],
                preferred_element_type=jnp.float32)
    o_ref[...] = (y + b2_ref[...].astype(jnp.float32)).astype(o_ref.dtype)


def ffn_kernel_tiled(x_ref, w1_ref, b1_ref, w2_ref, b2_ref, o_ref, acc_ref, *,
                     approximate_gelu):
    """d_ff-tiled fallback (weights too large for VMEM residency)."""
    k = pl.program_id(1)

    @pl.when(k == 0)
    def _():
        acc_ref[...] = jnp.zeros_like(acc_ref)

    h = jnp.dot(x_ref[...], w1_ref[...], preferred_element_type=jnp.float32)
    h = h + b1_ref[...].astype(jnp.float32)
    h = _gelu(h, approximate_gelu)
    # Dropout: identity (eval mode).
    acc_ref[...] += jnp.dot(h.astype(w2_ref.dtype), w2_ref[...],
                            preferred_element_type=jnp.float32)

    @pl.when(k == pl.num_programs(1) - 1)
    def _():
        o_ref[...] = (acc_ref[...]
                      + b2_ref[...].astype(jnp.float32)).astype(o_ref.dtype)


def _vmem_limit_bytes():
    """Generation-aware VMEM cap: ~100 MiB on 128-MiB chips (v5e/v6e),
    48 MiB on 64-MiB chips (v7x)."""
    cap = 64 * 1024 * 1024
    try:
        info = pltpu.get_tpu_info()
        cap = int(getattr(info, "vmem_capacity_bytes", cap)) or cap
    except Exception:
        pass
    if cap >= 96 * 1024 * 1024:
        return 100 * 1024 * 1024
    return 48 * 1024 * 1024


def feed_forward(x, w1, b1, w2, b2, *, tm=None, tn=None,
                 compute_dtype=jnp.bfloat16, approximate_gelu=False):
    """x: (B, S, d_model). w1: (d_model, d_ff), b1: (d_ff,),
    w2: (d_ff, d_model), b2: (d_model,). Returns (B, S, d_model) in x.dtype."""
    B, S, d_model = x.shape
    d_ff = w1.shape[1]
    assert w1.shape == (d_model, d_ff) and w2.shape == (d_ff, d_model)
    assert d_model % 128 == 0, "d_model must be lane-aligned (multiple of 128)"
    assert d_ff % 128 == 0, "d_ff must be lane-aligned (multiple of 128)"

    M = B * S
    c_itemsize = jnp.dtype(compute_dtype).itemsize
    o_itemsize = jnp.dtype(x.dtype).itemsize
    vmem_limit = _vmem_limit_bytes()
    reserve = 2 * 1024 * 1024  # headroom for Mosaic internal scratch

    # --- tile-size heuristics (generation-aware) ------------------------------
    weight_bytes = 2 * d_model * d_ff * c_itemsize  # W1 + W2 in compute dtype

    def io_bytes(tm_):
        # double-buffered x tile + double-buffered out tile + biases (f32)
        return (2 * tm_ * d_model * c_itemsize
                + 2 * tm_ * d_model * o_itemsize
                + 2 * (d_ff + d_model) * 4)

    tm_auto = tm is None
    if tm_auto:
        # >=2 row tiles when M >= 256 so v7x's two TensorCores both get work.
        tm = 256 if M >= 512 else 128

    # Weight residency: count weights at 2x (conservative, in case the pipeline
    # still double-buffers constant-index blocks).
    resident = (2 * weight_bytes + io_bytes(tm) + reserve) <= vmem_limit
    if tn is not None:
        resident = (tn == d_ff)

    if not resident and tm_auto:
        # Weight HBM traffic scales as ceil(M/tm); use a bigger row tile when
        # the chip has VMEM to spare (128-MiB generations).
        if vmem_limit >= 96 * 1024 * 1024 and M >= 1024:
            tm = 512

    if tn is None:
        if resident:
            tn = d_ff
        else:
            # Derive tn from the VMEM budget: up to 3 pipeline buffers for each
            # of the two weight chunks, plus x/out tiles and the f32 accumulator.
            acc_bytes = tm * d_model * 4
            avail = vmem_limit - io_bytes(tm) - acc_bytes - reserve
            per_tn = 3 * 2 * d_model * c_itemsize
            tn_max = max(128, (avail // per_tn) // 128 * 128)
            tn = 128
            for cand in range(min(d_ff, tn_max), 127, -128):
                if d_ff % cand == 0:
                    tn = cand
                    break

    assert d_ff % tn == 0 and (tn % 128 == 0 or tn == d_ff), \
        "tn must divide d_ff and be lane-aligned"
    nk = d_ff // tn

    # --- pad rows so the grid is exact and stores stay lane-dense -------------
    num_row_tiles = pl.cdiv(M, tm)
    M_pad = num_row_tiles * tm

    x2 = x.reshape(M, d_model).astype(compute_dtype)
    if M_pad != M:
        x2 = jnp.pad(x2, ((0, M_pad - M), (0, 0)))

    w1c = w1.astype(compute_dtype)
    w2c = w2.astype(compute_dtype)
    b1_2d = b1.reshape(1, d_ff).astype(jnp.float32)
    b2_2d = b2.reshape(1, d_model).astype(jnp.float32)

    # --- cost estimate reflecting actual HBM traffic per path -----------------
    weight_stream = 1 if nk == 1 else num_row_tiles
    cost = pl.CostEstimate(
        flops=4 * M_pad * d_model * d_ff,          # two matmuls
        transcendentals=M_pad * d_ff,              # gelu per hidden element
        bytes_accessed=(x2.size * c_itemsize
                        + weight_stream * (w1c.size + w2c.size) * c_itemsize
                        + weight_stream * b1_2d.size * 4 + b2_2d.size * 4
                        + M_pad * d_model * o_itemsize),
    )

    if nk == 1:
        # Weights fully resident: rows-only grid, no accumulator scratch.
        kernel = functools.partial(ffn_kernel_resident,
                                   approximate_gelu=approximate_gelu)
        out = pl.pallas_call(
            kernel,
            out_shape=jax.ShapeDtypeStruct((M_pad, d_model), x.dtype),
            grid_spec=pltpu.PrefetchScalarGridSpec(
                num_scalar_prefetch=0,
                grid=(num_row_tiles,),
                in_specs=[
                    pl.BlockSpec((tm, d_model), lambda i: (i, 0)),    # x rows
                    pl.BlockSpec((d_model, d_ff), lambda i: (0, 0)),  # W1 resident
                    pl.BlockSpec((1, d_ff), lambda i: (0, 0)),        # b1 resident
                    pl.BlockSpec((d_ff, d_model), lambda i: (0, 0)),  # W2 resident
                    pl.BlockSpec((1, d_model), lambda i: (0, 0)),     # b2 resident
                ],
                out_specs=pl.BlockSpec((tm, d_model), lambda i: (i, 0)),
            ),
            compiler_params=pltpu.CompilerParams(
                dimension_semantics=("parallel",),
                vmem_limit_bytes=vmem_limit,
            ),
            cost_estimate=cost,
        )(x2, w1c, b1_2d, w2c, b2_2d)
    else:
        # d_ff-tiled fallback: rows parallel, d_ff reduction last.
        kernel = functools.partial(ffn_kernel_tiled,
                                   approximate_gelu=approximate_gelu)
        if nk >= 3:
            w1_spec = pl.BlockSpec((d_model, tn), lambda i, k: (0, k),
                                   pipeline_mode=pl.Buffered(3))
            w2_spec = pl.BlockSpec((tn, d_model), lambda i, k: (k, 0),
                                   pipeline_mode=pl.Buffered(3))
        else:
            w1_spec = pl.BlockSpec((d_model, tn), lambda i, k: (0, k))
            w2_spec = pl.BlockSpec((tn, d_model), lambda i, k: (k, 0))
        out = pl.pallas_call(
            kernel,
            out_shape=jax.ShapeDtypeStruct((M_pad, d_model), x.dtype),
            grid_spec=pltpu.PrefetchScalarGridSpec(
                num_scalar_prefetch=0,
                grid=(num_row_tiles, nk),
                in_specs=[
                    pl.BlockSpec((tm, d_model), lambda i, k: (i, 0)),  # x rows
                    w1_spec,                                           # W1 chunk
                    pl.BlockSpec((1, tn), lambda i, k: (0, k)),        # b1 chunk
                    w2_spec,                                           # W2 chunk
                    pl.BlockSpec((1, d_model), lambda i, k: (0, 0)),   # b2
                ],
                out_specs=pl.BlockSpec((tm, d_model), lambda i, k: (i, 0)),
                scratch_shapes=[pltpu.VMEM((tm, d_model), jnp.float32)],
            ),
            compiler_params=pltpu.CompilerParams(
                dimension_semantics=("parallel", "arbitrary"),
                vmem_limit_bytes=vmem_limit,
            ),
            cost_estimate=cost,
        )(x2, w1c, b1_2d, w2c, b2_2d)

    return out[:M].reshape(B, S, d_model)


if __name__ == "__main__":
    # Small batch/seq, module-default widths (d_model=512, d_ff=2048).
    B, S = 2, 8
    d_model, d_ff = 512, 2048

    key = jax.random.PRNGKey(0)
    kx, kw1, kb1, kw2, kb2 = jax.random.split(key, 5)

    x = jax.random.normal(kx, (B, S, d_model), dtype=jnp.float32)

    # Deterministic "nn.Linear"-style init (uniform in +-1/sqrt(fan_in)).
    lim1 = 1.0 / math.sqrt(d_model)
    lim2 = 1.0 / math.sqrt(d_ff)
    w1 = jax.random.uniform(kw1, (d_model, d_ff), jnp.float32, -lim1, lim1)
    b1 = jax.random.uniform(kb1, (d_ff,), jnp.float32, -lim1, lim1)
    w2 = jax.random.uniform(kw2, (d_ff, d_model), jnp.float32, -lim2, lim2)
    b2 = jax.random.uniform(kb2, (d_model,), jnp.float32, -lim2, lim2)

    # Reference in plain JAX, mirroring the kernel's bf16 MXU operands with
    # f32 accumulation (h rounded to bf16 before the second matmul).
    xb = x.astype(jnp.bfloat16).astype(jnp.float32)
    w1b = w1.astype(jnp.bfloat16).astype(jnp.float32)
    w2b = w2.astype(jnp.bfloat16).astype(jnp.float32)
    h_ref = xb.reshape(-1, d_model) @ w1b + b1
    h_ref = 0.5 * h_ref * (1.0 + jax.lax.erf(h_ref / math.sqrt(2.0)))
    h_ref = h_ref.astype(jnp.bfloat16).astype(jnp.float32)
    y_ref = (h_ref @ w2b + b2).reshape(B, S, d_model)

    # Default path: 4 MiB of bf16 weights -> VMEM-resident single fused pass.
    y = feed_forward(x, w1, b1, w2, b2)
    jax.block_until_ready(y)
    assert jnp.allclose(y, y_ref, atol=2e-2, rtol=2e-2), "resident path mismatch"

    # Forced d_ff-tiled fallback (tn=512 -> 4 reduction steps), exercising the
    # accumulator init/finalize and the deeper weight buffering.
    y_t = feed_forward(x, w1, b1, w2, b2, tn=512)
    jax.block_until_ready(y_t)
    assert jnp.allclose(y_t, y_ref, atol=2e-2, rtol=2e-2), "tiled path mismatch"

    print("KERNEL_OK")
</pallas_src>

<mosaic_0001>
module attributes {stable_mosaic.version = 11 : i64} {
  func.func @ffn_kernel_resident(%arg0: i32, %arg1: memref<128x512xbf16, #tpu.memory_space<vmem>>, %arg2: memref<512x2048xbf16, #tpu.memory_space<vmem>>, %arg3: memref<1x2048xf32, #tpu.memory_space<vmem>>, %arg4: memref<2048x512xbf16, #tpu.memory_space<vmem>>, %arg5: memref<1x512xf32, #tpu.memory_space<vmem>>, %arg6: memref<128x512xf32, #tpu.memory_space<vmem>>) attributes {dimension_semantics = [#tpu.dimension_semantics<parallel>], iteration_bounds = array<i64: 1>, scalar_prefetch = 0 : i64, scratch_operands = 0 : i64, tpu.core_type = #tpu.core_type<tc>, window_params = [{transform_indices = @transform_0, window_bounds = array<i64: 128, 512>}, {pipeline_mode = #tpu.pipeline_mode<synchronous>, transform_indices = @transform_1, window_bounds = array<i64: 512, 2048>}, {pipeline_mode = #tpu.pipeline_mode<synchronous>, transform_indices = @transform_2, window_bounds = array<i64: 1, 2048>}, {pipeline_mode = #tpu.pipeline_mode<synchronous>, transform_indices = @transform_3, window_bounds = array<i64: 2048, 512>}, {pipeline_mode = #tpu.pipeline_mode<synchronous>, transform_indices = @transform_4, window_bounds = array<i64: 1, 512>}, {transform_indices = @transform_5, window_bounds = array<i64: 128, 512>}]} {
    %c0 = arith.constant 0 : index
    %c0_0 = arith.constant 0 : index
    %0 = vector.load %arg1[%c0, %c0_0] : memref<128x512xbf16, #tpu.memory_space<vmem>>, vector<128x512xbf16>
    %c0_1 = arith.constant 0 : index
    %c0_2 = arith.constant 0 : index
    %1 = vector.load %arg2[%c0_1, %c0_2] : memref<512x2048xbf16, #tpu.memory_space<vmem>>, vector<512x2048xbf16>
    %cst = arith.constant dense<0.000000e+00> : vector<128x2048xf32>
    %2 = tpu.matmul %0, %1, %cst {dimension_numbers = #tpu.dot_dimension_numbers<[1], [0], [0], [1], [0, 0, 1, 1], [], []>} : vector<128x512xbf16>, vector<512x2048xbf16>, vector<128x2048xf32> -> vector<128x2048xf32>
    %c0_3 = arith.constant 0 : index
    %c0_4 = arith.constant 0 : index
    %3 = vector.load %arg3[%c0_3, %c0_4] : memref<1x2048xf32, #tpu.memory_space<vmem>>, vector<1x2048xf32>
    %4 = vector.broadcast %3 : vector<1x2048xf32> to vector<128x2048xf32>
    %5 = arith.addf %2, %4 : vector<128x2048xf32>
    %cst_5 = arith.constant 5.000000e-01 : f32
    %6 = vector.broadcast %cst_5 : f32 to vector<128x2048xf32>
    %7 = arith.mulf %6, %5 : vector<128x2048xf32>
    %cst_6 = arith.constant 0.707106769 : f32
    %8 = vector.broadcast %cst_6 : f32 to vector<128x2048xf32>
    %9 = arith.mulf %5, %8 : vector<128x2048xf32>
    %10 = math.erf %9 : vector<128x2048xf32>
    %cst_7 = arith.constant 1.000000e+00 : f32
    %11 = vector.broadcast %cst_7 : f32 to vector<128x2048xf32>
    %12 = arith.addf %11, %10 : vector<128x2048xf32>
    %13 = arith.mulf %7, %12 : vector<128x2048xf32>
    %14 = arith.truncf %13 : vector<128x2048xf32> to vector<128x2048xbf16>
    %c0_8 = arith.constant 0 : index
    %c0_9 = arith.constant 0 : index
    %15 = vector.load %arg4[%c0_8, %c0_9] : memref<2048x512xbf16, #tpu.memory_space<vmem>>, vector<2048x512xbf16>
    %cst_10 = arith.constant dense<0.000000e+00> : vector<128x512xf32>
    %16 = tpu.matmul %14, %15, %cst_10 {dimension_numbers = #tpu.dot_dimension_numbers<[1], [0], [0], [1], [0, 0, 1, 1], [], []>} : vector<128x2048xbf16>, vector<2048x512xbf16>, vector<128x512xf32> -> vector<128x512xf32>
    %c0_11 = arith.constant 0 : index
    %c0_12 = arith.constant 0 : index
    %17 = vector.load %arg5[%c0_11, %c0_12] : memref<1x512xf32, #tpu.memory_space<vmem>>, vector<1x512xf32>
    %18 = vector.broadcast %17 : vector<1x512xf32> to vector<128x512xf32>
    %19 = arith.addf %16, %18 : vector<128x512xf32>
    %c0_13 = arith.constant 0 : index
    %c0_14 = arith.constant 0 : index
    %20 = vector.load %arg6[%c0_13, %c0_14] : memref<128x512xf32, #tpu.memory_space<vmem>>, vector<128x512xf32>
    tpu.vector_store %arg6[%c0_13, %c0_14], %19 {strides = array<i32>} : memref<128x512xf32, #tpu.memory_space<vmem>>, vector<128x512xf32>,
    return
  }
  func.func @transform_0(%arg0: i32) -> (i32, i32) {
    %c0_i32 = arith.constant 0 : i32
    %c0_i32_0 = arith.constant 0 : i32
    return %arg0, %c0_i32 : i32, i32
  }
  func.func @transform_1(%arg0: i32) -> (i32, i32) {
    %c0_i32 = arith.constant 0 : i32
    %c0_i32_0 = arith.constant 0 : i32
    %c0_i32_1 = arith.constant 0 : i32
    return %c0_i32, %c0_i32_0 : i32, i32
  }
  func.func @transform_2(%arg0: i32) -> (i32, i32) {
    %c0_i32 = arith.constant 0 : i32
    %c0_i32_0 = arith.constant 0 : i32
    %c0_i32_1 = arith.constant 0 : i32
    return %c0_i32, %c0_i32_0 : i32, i32
  }
  func.func @transform_3(%arg0: i32) -> (i32, i32) {
    %c0_i32 = arith.constant 0 : i32
    %c0_i32_0 = arith.constant 0 : i32
    %c0_i32_1 = arith.constant 0 : i32
    return %c0_i32, %c0_i32_0 : i32, i32
  }
  func.func @transform_4(%arg0: i32) -> (i32, i32) {
    %c0_i32 = arith.constant 0 : i32
    %c0_i32_0 = arith.constant 0 : i32
    %c0_i32_1 = arith.constant 0 : i32
    return %c0_i32, %c0_i32_0 : i32, i32
  }
  func.func @transform_5(%arg0: i32) -> (i32, i32) {
    %c0_i32 = arith.constant 0 : i32
    %c0_i32_0 = arith.constant 0 : i32
    return %arg0, %c0_i32 : i32, i32
  }
}

</mosaic_0001>

<llo_original>
// kernel: tpu_custom_call.1
$region0: #{tpu_custom_call.1}
  #allocation0 [shape = 'u32[]', space=smem, size = 0x4, offset = 0x4, fixed_abs, tag = 'smem constant byte address 0x4 - core index']
  #allocation1 [shape = 'u32[144,128]{1,0:T(1,128)}', space=vmem, size = 0x12000, scoped, tag = 'internal scratch']
  %s0 = inlined_call_operand.hbm [shape: bf16[128,512], index: 0, kind: input, shape index: {}]
  %s1 = inlined_call_operand.hbm [shape: bf16[512,2048], index: 1, kind: input, shape index: {}]
  %s2 = inlined_call_operand.hbm [shape: f32[1,2048], index: 2, kind: input, shape index: {}]
  %s3 = inlined_call_operand.hbm [shape: bf16[2048,512], index: 3, kind: input, shape index: {}]
  %s4 = inlined_call_operand.hbm [shape: f32[1,512], index: 4, kind: input, shape index: {}]
  %s5 = inlined_call_operand.hbm [shape: f32[128,512], index: 5, kind: output, shape index: {}]
  %s6 = sld [smem:[#allocation0]]
  $region50: #{tpu_custom_call.1} parent=0
    _
  %s8 = ssub.s32 1, %s6
  %s9 = scalar_select 0, %s8, %s6
  $region1: #{tpu_custom_call.1} parent=0
    #allocation2 [shape = 'u8[131072]{0}', space=vmem, size = 0x20000, scoped, tag = 'input window, operand 0, single buffered']
    #allocation3 [shape = 's32[1]{0}', space=sflag, size = 0x4, scoped, tag = 'scoped memory for tpu_custom_call.1']
    #allocation4 [shape = 's32[1]{0}', space=sflag, size = 0x4, scoped, tag = 'scoped memory for tpu_custom_call.1']
    #allocation5 [shape = 'u8[2097152]{0}', space=vmem, size = 0x200000, scoped, tag = 'input window, operand 1, single buffered']
    #allocation6 [shape = 's32[1]{0}', space=sflag, size = 0x4, scoped, tag = 'scoped memory for tpu_custom_call.1']
    #allocation7 [shape = 'u8[8192]{0}', space=vmem, size = 0x2000, scoped, tag = 'input window, operand 2, single buffered']
    #allocation8 [shape = 'u8[2097152]{0}', space=vmem, size = 0x200000, scoped, tag = 'input window, operand 3, single buffered']
    #allocation9 [shape = 's32[1]{0}', space=sflag, size = 0x4, scoped, tag = 'scoped memory for tpu_custom_call.1']
    #allocation10 [shape = 'u8[2048]{0}', space=vmem, size = 0x800, scoped, tag = 'input window, operand 4, single buffered']
    #allocation11 [shape = 'u8[262144]{0}', space=vmem, size = 0x40000, scoped, tag = 'output window, operand 0, single buffered']
    %10 = vsyncpa [#allocation3], 0
    %11 = vsyncpa [#allocation6], 0
    %12 = vsyncpa [#allocation9], 0
    %13 = vsyncpa [#allocation4], 0
    // Predicated region
    $region2: #{tpu_custom_call.1} parent=1 // pred_check
      _
    $region3: #{tpu_custom_call.1} parent=1 // pred_check_branch
      %15 = sbr.rel (0) target = $region5
    $region4: #{tpu_custom_call.1} parent=1 // pred_region
      %s17 = ssub.s32 4096, 4096
      %18 = vsyncadd [#allocation3], %s17
      %s19 = sshll.u32 [#allocation2], 4
      %s20 = int_to_ptr.vmem [resolvable:$true] %s19
      %25 = dma.hbm_to_vmem [thread:$0]  %s0, 4096, %s20, [#allocation3], 256, 256, 16
    $region5: #{tpu_custom_call.1} parent=1 // pred_fallthru
      _
    // Predicated region
    $region6: #{tpu_custom_call.1} parent=1 // pred_check
      _
    $region7: #{tpu_custom_call.1} parent=1 // pred_check_branch
      %27 = sbr.rel (0) target = $region9
    $region8: #{tpu_custom_call.1} parent=1 // pred_region
      %s29 = ssub.s32 65536, 65536
      %30 = vsyncadd [#allocation6], %s29
      %s31 = sshll.u32 [#allocation5], 4
      %s32 = int_to_ptr.vmem [resolvable:$true] %s31
      %37 = dma.hbm_to_vmem [thread:$0]  %s1, 65536, %s32, [#allocation6], 1024, 1024, 64
    $region9: #{tpu_custom_call.1} parent=1 // pred_fallthru
      _
    // Predicated region
    $region10: #{tpu_custom_call.1} parent=1 // pred_check
      _
    $region11: #{tpu_custom_call.1} parent=1 // pred_check_branch
      %39 = sbr.rel (0) target = $region13
    $region12: #{tpu_custom_call.1} parent=1 // pred_region
      %s41 = ssub.s32 256, 256
      %42 = vsyncadd [#allocation6], %s41
      %s44 = sshll.u32 [#allocation7], 4
      %s45 = int_to_ptr.vmem [resolvable:$true] %s44
      %47 = dma.hbm_to_vmem [thread:$0]  %s2, 256, %s45, [#allocation6]
    $region13: #{tpu_custom_call.1} parent=1 // pred_fallthru
      _
    // Predicated region
    $region14: #{tpu_custom_call.1} parent=1 // pred_check
      _
    $region15: #{tpu_custom_call.1} parent=1 // pred_check_branch
      %49 = sbr.rel (0) target = $region17
    $region16: #{tpu_custom_call.1} parent=1 // pred_region
      %s51 = ssub.s32 65536, 65536
      %52 = vsyncadd [#allocation9], %s51
      %s53 = sshll.u32 [#allocation8], 4
      %s54 = int_to_ptr.vmem [resolvable:$true] %s53
      %59 = dma.hbm_to_vmem [thread:$0]  %s3, 65536, %s54, [#allocation9], 256, 256, 16
    $region17: #{tpu_custom_call.1} parent=1 // pred_fallthru
      _
    // Predicated region
    $region18: #{tpu_custom_call.1} parent=1 // pred_check
      _
    $region19: #{tpu_custom_call.1} parent=1 // pred_check_branch
      %61 = sbr.rel (0) target = $region21
    $region20: #{tpu_custom_call.1} parent=1 // pred_region
      %s63 = ssub.s32 64, 64
      %64 = vsyncadd [#allocation9], %s63
      %s66 = sshll.u32 [#allocation10], 4
      %s67 = int_to_ptr.vmem [resolvable:$true] %s66
      %69 = dma.hbm_to_vmem [thread:$0]  %s4, 64, %s67, [#allocation9]
    $region21: #{tpu_custom_call.1} parent=1 // pred_fallthru
      _
    // Predicated region
    $region22: #{tpu_custom_call.1} parent=1 // pred_check
      _
    $region23: #{tpu_custom_call.1} parent=1 // pred_check_branch
      %71 = sbr.rel (0) target = $region25
    $region24: #{tpu_custom_call.1} parent=1 // pred_region
      %72 = dma.done [#allocation3], 4096
    $region25: #{tpu_custom_call.1} parent=1 // pred_fallthru
      _
    // Predicated region
    $region26: #{tpu_custom_call.1} parent=1 // pred_check
      _
    $region27: #{tpu_custom_call.1} parent=1 // pred_check_branch
      %74 = sbr.rel (0) target = $region29
    $region28: #{tpu_custom_call.1} parent=1 // pred_region
      %75 = dma.done [#allocation6], 65536
    $region29: #{tpu_custom_call.1} parent=1 // pred_fallthru
      _
    // Predicated region
    $region30: #{tpu_custom_call.1} parent=1 // pred_check
      _
    $region31: #{tpu_custom_call.1} parent=1 // pred_check_branch
      %77 = sbr.rel (0) target = $region33
    $region32: #{tpu_custom_call.1} parent=1 // pred_region
      %78 = dma.done [#allocation6], 256
    $region33: #{tpu_custom_call.1} parent=1 // pred_fallthru
      _
    // Predicated region
    $region34: #{tpu_custom_call.1} parent=1 // pred_check
      _
    $region35: #{tpu_custom_call.1} parent=1 // pred_check_branch
      %80 = sbr.rel (0) target = $region37
    $region36: #{tpu_custom_call.1} parent=1 // pred_region
      %81 = dma.done [#allocation9], 65536
    $region37: #{tpu_custom_call.1} parent=1 // pred_fallthru
      _
    // Predicated region
    $region38: #{tpu_custom_call.1} parent=1 // pred_check
      _
    $region39: #{tpu_custom_call.1} parent=1 // pred_check_branch
      %83 = sbr.rel (0) target = $region41
    $region40: #{tpu_custom_call.1} parent=1 // pred_region
      %84 = dma.done [#allocation9], 64
    $region41: #{tpu_custom_call.1} parent=1 // pred_fallthru
      _
    %v85 = vld [vmem:[#allocation2] sm:$0xff]
    %v86 = vld [vmem:[#allocation2 + $0x8] sm:$0xff]
    %v87 = vld [vmem:[#allocation2 + $0x10] sm:$0xff]
    %v88 = vld [vmem:[#allocation2 + $0x18] sm:$0xff]
    %v89 = vld [vmem:[#allocation2 + $0x20] sm:$0xff]
    %v90 = vld [vmem:[#allocation2 + $0x28] sm:$0xff]
    %v91 = vld [vmem:[#allocation2 + $0x30] sm:$0xff]
    %v92 = vld [vmem:[#allocation2 + $0x38] sm:$0xff]
    %v93 = vld [vmem:[#allocation2 + $0x40] sm:$0xff]
    %v94 = vld [vmem:[#allocation2 + $0x48] sm:$0xff]
    %v95 = vld [vmem:[#allocation2 + $0x50] sm:$0xff]
    %v96 = vld [vmem:[#allocation2 + $0x58] sm:$0xff]
    %v97 = vld [vmem:[#allocation2 + $0x60] sm:$0xff]
    %v98 = vld [vmem:[#allocation2 + $0x68] sm:$0xff]
    %v99 = vld [vmem:[#allocation2 + $0x70] sm:$0xff]
    %v100 = vld [vmem:[#allocation2 + $0x78] sm:$0xff]
    %v101 = vld [vmem:[#allocation2 + $0x80] sm:$0xff]
    %v102 = vld [vmem:[#allocation2 + $0x88] sm:$0xff]
    %v103 = vld [vmem:[#allocation2 + $0x90] sm:$0xff]
    %v104 = vld [vmem:[#allocation2 + $0x98] sm:$0xff]
    %v105 = vld [vmem:[#allocation2 + $0xa0] sm:$0xff]
    %v106 = vld [vmem:[#allocation2 + $0xa8] sm:$0xff]
    %v107 = vld [vmem:[#allocation2 + $0xb0] sm:$0xff]
    %v108 = vld [vmem:[#allocation2 + $0xb8] sm:$0xff]
    %v109 = vld [vmem:[#allocation2 + $0xc0] sm:$0xff]
    %v110 = vld [vmem:[#allocation2 + $0xc8] sm:$0xff]
    %v111 = vld [vmem:[#allocation2 + $0xd0] sm:$0xff]
    %v112 = vld [vmem:[#allocation2 + $0xd8] sm:$0xff]
    %v113 = vld [vmem:[#allocation2 + $0xe0] sm:$0xff]
    %v114 = vld [vmem:[#allocation2 + $0xe8] sm:$0xff]
    %v115 = vld [vmem:[#allocation2 + $0xf0] sm:$0xff]
    %v116 = vld [vmem:[#allocation2 + $0xf8] sm:$0xff]
    %v117 = vld [vmem:[#allocation5] sm:$0xff]
    %v118 = vld [vmem:[#allocation5 + $0x8] sm:$0xff]
    %v119 = vld [vmem:[#allocation5 + $0x10] sm:$0xff]
    %v120 = vld [vmem:[#allocation5 + $0x18] sm:$0xff]
    %v121 = vld [vmem:[#allocation5 + $0x20] sm:$0xff]
    %v122 = vld [vmem:[#allocation5 + $0x28] sm:$0xff]
    %v123 = vld [vmem:[#allocation5 + $0x30] sm:$0xff]
    %v124 = vld [vmem:[#allocation5 + $0x38] sm:$0xff]
    %v125 = vld [vmem:[#allocation5 + $0x40] sm:$0xff]
    %v126 = vld [vmem:[#allocation5 + $0x48] sm:$0xff]
    %v127 = vld [vmem:[#allocation5 + $0x50] sm:$0xff]
    %v128 = vld [vmem:[#allocation5 + $0x58] sm:$0xff]
    %v129 = vld [vmem:[#allocation5 + $0x60] sm:$0xff]
    %v130 = vld [vmem:[#allocation5 + $0x68] sm:$0xff]
    %v131 = vld [vmem:[#allocation5 + $0x70] sm:$0xff]
    %v132 = vld [vmem:[#allocation5 + $0x78] sm:$0xff]
    %v133 = vld [vmem:[#allocation5 + $0x80] sm:$0xff]
    %v134 = vld [vmem:[#allocation5 + $0x88] sm:$0xff]
    %v135 = vld [vmem:[#allocation5 + $0x90] sm:$0xff]
    %v136 = vld [vmem:[#allocation5 + $0x98] sm:$0xff]
    %v137 = vld [vmem:[#allocation5 + $0xa0] sm:$0xff]
    %v138 = vld [vmem:[#allocation5 + $0xa8] sm:$0xff]
    %v139 = vld [vmem:[#allocation5 + $0xb0] sm:$0xff]
    %v140 = vld [vmem:[#allocation5 + $0xb8] sm:$0xff]
    %v141 = vld [vmem:[#allocation5 + $0xc0] sm:$0xff]
    %v142 = vld [vmem:[#allocation5 + $0xc8] sm:$0xff]
    %v143 = vld [vmem:[#allocation5 + $0xd0] sm:$0xff]
    %v144 = vld [vmem:[#allocation5 + $0xd8] sm:$0xff]
    %v145 = vld [vmem:[#allocation5 + $0xe0] sm:$0xff]
    %v146 = vld [vmem:[#allocation5 + $0xe8] sm:$0xff]
    %v147 = vld [vmem:[#allocation5 + $0xf0] sm:$0xff]
    %v148 = vld [vmem:[#allocation5 + $0xf8] sm:$0xff]
    %v149 = vld [vmem:[#allocation5 + $0x100] sm:$0xff]
    %v150 = vld [vmem:[#allocation5 + $0x108] sm:$0xff]
    %v151 = vld [vmem:[#allocation5 + $0x110] sm:$0xff]
    %v152 = vld [vmem:[#allocation5 + $0x118] sm:$0xff]
    %v153 = vld [vmem:[#allocation5 + $0x120] sm:$0xff]
    %v154 = vld [vmem:[#allocation5 + $0x128] sm:$0xff]
    %v155 = vld [vmem:[#allocation5 + $0x130] sm:$0xff]
    %v156 = vld [vmem:[#allocation5 + $0x138] sm:$0xff]
    %v157 = vld [vmem:[#allocation5 + $0x140] sm:$0xff]
    %v158 = vld [vmem:[#allocation5 + $0x148] sm:$0xff]
    %v159 = vld [vmem:[#allocation5 + $0x150] sm:$0xff]
    %v160 = vld [vmem:[#allocation5 + $0x158] sm:$0xff]
    %v161 = vld [vmem:[#allocation5 + $0x160] sm:$0xff]
    %v162 = vld [vmem:[#allocation5 + $0x168] sm:$0xff]
    %v163 = vld [vmem:[#allocation5 + $0x170] sm:$0xff]
    %v164 = vld [vmem:[#allocation5 + $0x178] sm:$0xff]
    %v165 = vld [vmem:[#allocation5 + $0x180] sm:$0xff]
    %v166 = vld [vmem:[#allocation5 + $0x188] sm:$0xff]
    %v167 = vld [vmem:[#allocation5 + $0x190] sm:$0xff]
    %v168 = vld [vmem:[#allocation5 + $0x198] sm:$0xff]
    %v169 = vld [vmem:[#allocation5 + $0x1a0] sm:$0xff]
    %v170 = vld [vmem:[#allocation5 + $0x1a8] sm:$0xff]
    %v171 = vld [vmem:[#allocation5 + $0x1b0] sm:$0xff]
    %v172 = vld [vmem:[#allocation5 + $0x1b8] sm:$0xff]
    %v173 = vld [vmem:[#allocation5 + $0x1c0] sm:$0xff]
    %v174 = vld [vmem:[#allocation5 + $0x1c8] sm:$0xff]
    %v175 = vld [vmem:[#allocation5 + $0x1d0] sm:$0xff]
    %v176 = vld [vmem:[#allocation5 + $0x1d8] sm:$0xff]
    %v177 = vld [vmem:[#allocation5 + $0x1e0] sm:$0xff]
    %v178 = vld [vmem:[#allocation5 + $0x1e8] sm:$0xff]
    %v179 = vld [vmem:[#allocation5 + $0x1f0] sm:$0xff]
    %v180 = vld [vmem:[#allocation5 + $0x1f8] sm:$0xff]
    %v181 = vld [vmem:[#allocation5 + $0x200] sm:$0xff]
    %v182 = vld [vmem:[#allocation5 + $0x208] sm:$0xff]
    %v183 = vld [vmem:[#allocation5 + $0x210] sm:$0xff]
    %v184 = vld [vmem:[#allocation5 + $0x218] sm:$0xff]
    %v185 = vld [vmem:[#allocation5 + $0x220] sm:$0xff]
    %v186 = vld [vmem:[#allocation5 + $0x228] sm:$0xff]
    %v187 = vld [vmem:[#allocation5 + $0x230] sm:$0xff]
    %v188 = vld [vmem:[#allocation5 + $0x238] sm:$0xff]
    %v189 = vld [vmem:[#allocation5 + $0x240] sm:$0xff]
    %v190 = vld [vmem:[#allocation5 + $0x248] sm:$0xff]
    %v191 = vld [vmem:[#allocation5 + $0x250] sm:$0xff]
    %v192 = vld [vmem:[#allocation5 + $0x258] sm:$0xff]
    %v193 = vld [vmem:[#allocation5 + $0x260] sm:$0xff]
    %v194 = vld [vmem:[#allocation5 + $0x268] sm:$0xff]
    %v195 = vld [vmem:[#allocation5 + $0x270] sm:$0xff]
    %v196 = vld [vmem:[#allocation5 + $0x278] sm:$0xff]
    %v197 = vld [vmem:[#allocation5 + $0x280] sm:$0xff]
    %v198 = vld [vmem:[#allocation5 + $0x288] sm:$0xff]
    %v199 = vld [vmem:[#allocation5 + $0x290] sm:$0xff]
    %v200 = vld [vmem:[#allocation5 + $0x298] sm:$0xff]
    %v201 = vld [vmem:[#allocation5 + $0x2a0] sm:$0xff]
    %v202 = vld [vmem:[#allocation5 + $0x2a8] sm:$0xff]
    %v203 = vld [vmem:[#allocation5 + $0x2b0] sm:$0xff]
    %v204 = vld [vmem:[#allocation5 + $0x2b8] sm:$0xff]
    %v205 = vld [vmem:[#allocation5 + $0x2c0] sm:$0xff]
    %v206 = vld [vmem:[#allocation5 + $0x2c8] sm:$0xff]
    %v207 = vld [vmem:[#allocation5 + $0x2d0] sm:$0xff]
    %v208 = vld [vmem:[#allocation5 + $0x2d8] sm:$0xff]
    %v209 = vld [vmem:[#allocation5 + $0x2e0] sm:$0xff]
    %v210 = vld [vmem:[#allocation5 + $0x2e8] sm:$0xff]
    %v211 = vld [vmem:[#allocation5 + $0x2f0] sm:$0xff]
    %v212 = vld [vmem:[#allocation5 + $0x2f8] sm:$0xff]
    %v213 = vld [vmem:[#allocation5 + $0x300] sm:$0xff]
    %v214 = vld [vmem:[#allocation5 + $0x308] sm:$0xff]
    %v215 = vld [vmem:[#allocation5 + $0x310] sm:$0xff]
    %v216 = vld [vmem:[#allocation5 + $0x318] sm:$0xff]
    %v217 = vld [vmem:[#allocation5 + $0x320] sm:$0xff]
    %v218 = vld [vmem:[#allocation5 + $0x328] sm:$0xff]
    %v219 = vld [vmem:[#allocation5 + $0x330] sm:$0xff]
    %v220 = vld [vmem:[#allocation5 + $0x338] sm:$0xff]
    %v221 = vld [vmem:[#allocation5 + $0x340] sm:$0xff]
    %v222 = vld [vmem:[#allocation5 + $0x348] sm:$0xff]
    %v223 = vld [vmem:[#allocation5 + $0x350] sm:$0xff]
    %v224 = vld [vmem:[#allocation5 + $0x358] sm:$0xff]
    %v225 = vld [vmem:[#allocation5 + $0x360] sm:$0xff]
    %v226 = vld [vmem:[#allocation5 + $0x368] sm:$0xff]
    %v227 = vld [vmem:[#allocation5 + $0x370] sm:$0xff]
    %v228 = vld [vmem:[#allocation5 + $0x378] sm:$0xff]
    %v229 = vld [vmem:[#allocation5 + $0x380] sm:$0xff]
    %v230 = vld [vmem:[#allocation5 + $0x388] sm:$0xff]
    %v231 = vld [vmem:[#allocation5 + $0x390] sm:$0xff]
    %v232 = vld [vmem:[#allocation5 + $0x398] sm:$0xff]
    %v233 = vld [vmem:[#allocation5 + $0x3a0] sm:$0xff]
    %v234 = vld [vmem:[#allocation5 + $0x3a8] sm:$0xff]
    %v235 = vld [vmem:[#allocation5 + $0x3b0] sm:$0xff]
    %v236 = vld [vmem:[#allocation5 + $0x3b8] sm:$0xff]
    %v237 = vld [vmem:[#allocation5 + $0x3c0] sm:$0xff]
    %v238 = vld [vmem:[#allocation5 + $0x3c8] sm:$0xff]
    %v239 = vld [vmem:[#allocation5 + $0x3d0] sm:$0xff]
    %v240 = vld [vmem:[#allocation5 + $0x3d8] sm:$0xff]
    %v241 = vld [vmem:[#allocation5 + $0x3e0] sm:$0xff]
    %v242 = vld [vmem:[#allocation5 + $0x3e8] sm:$0xff]
    %v243 = vld [vmem:[#allocation5 + $0x3f0] sm:$0xff]
    %v244 = vld [vmem:[#allocation5 + $0x3f8] sm:$0xff]
    %v245 = vld [vmem:[#allocation5 + $0x400] sm:$0xff]
    %v246 = vld [vmem:[#allocation5 + $0x408] sm:$0xff]
    %v247 = vld [vmem:[#allocation5 + $0x410] sm:$0xff]
    %v248 = vld [vmem:[#allocation5 + $0x418] sm:$0xff]
    %v249 = vld [vmem:[#allocation5 + $0x420] sm:$0xff]
    %v250 = vld [vmem:[#allocation5 + $0x428] sm:$0xff]
    %v251 = vld [vmem:[#allocation5 + $0x430] sm:$0xff]
    %v252 = vld [vmem:[#allocation5 + $0x438] sm:$0xff]
    %v253 = vld [vmem:[#allocation5 + $0x440] sm:$0xff]
    %v254 = vld [vmem:[#allocation5 + $0x448] sm:$0xff]
    %v255 = vld [vmem:[#allocation5 + $0x450] sm:$0xff]
    %v256 = vld [vmem:[#allocation5 + $0x458] sm:$0xff]
    %v257 = vld [vmem:[#allocation5 + $0x460] sm:$0xff]
    %v258 = vld [vmem:[#allocation5 + $0x468] sm:$0xff]
    %v259 = vld [vmem:[#allocation5 + $0x470] sm:$0xff]
    %v260 = vld [vmem:[#allocation5 + $0x478] sm:$0xff]
    %v261 = vld [vmem:[#allocation5 + $0x480] sm:$0xff]
    %v262 = vld [vmem:[#allocation5 + $0x488] sm:$0xff]
    %v263 = vld [vmem:[#allocation5 + $0x490] sm:$0xff]
    %v264 = vld [vmem:[#allocation5 + $0x498] sm:$0xff]
    %v265 = vld [vmem:[#allocation5 + $0x4a0] sm:$0xff]
    %v266 = vld [vmem:[#allocation5 + $0x4a8] sm:$0xff]
    %v267 = vld [vmem:[#allocation5 + $0x4b0] sm:$0xff]
    %v268 = vld [vmem:[#allocation5 + $0x4b8] sm:$0xff]
    %v269 = vld [vmem:[#allocation5 + $0x4c0] sm:$0xff]
    %v270 = vld [vmem:[#allocation5 + $0x4c8] sm:$0xff]
    %v271 = vld [vmem:[#allocation5 + $0x4d0] sm:$0xff]
    %v272 = vld [vmem:[#allocation5 + $0x4d8] sm:$0xff]
    %v273 = vld [vmem:[#allocation5 + $0x4e0] sm:$0xff]
    %v274 = vld [vmem:[#allocation5 + $0x4e8] sm:$0xff]
    %v275 = vld [vmem:[#allocation5 + $0x4f0] sm:$0xff]
    %v276 = vld [vmem:[#allocation5 + $0x4f8] sm:$0xff]
    %v277 = vld [vmem:[#allocation5 + $0x500] sm:$0xff]
    %v278 = vld [vmem:[#allocation5 + $0x508] sm:$0xff]
    %v279 = vld [vmem:[#allocation5 + $0x510] sm:$0xff]
    %v280 = vld [vmem:[#allocation5 + $0x518] sm:$0xff]
    %v281 = vld [vmem:[#allocation5 + $0x520] sm:$0xff]
    %v282 = vld [vmem:[#allocation5 + $0x528] sm:$0xff]
    %v283 = vld [vmem:[#allocation5 + $0x530] sm:$0xff]
    %v284 = vld [vmem:[#allocation5 + $0x538] sm:$0xff]
    %v285 = vld [vmem:[#allocation5 + $0x540] sm:$0xff]
    %v286 = vld [vmem:[#allocation5 + $0x548] sm:$0xff]
    %v287 = vld [vmem:[#allocation5 + $0x550] sm:$0xff]
    %v288 = vld [vmem:[#allocation5 + $0x558] sm:$0xff]
    %v289 = vld [vmem:[#allocation5 + $0x560] sm:$0xff]
    %v290 = vld [vmem:[#allocation5 + $0x568] sm:$0xff]
    %v291 = vld [vmem:[#allocation5 + $0x570] sm:$0xff]
    %v292 = vld [vmem:[#allocation5 + $0x578] sm:$0xff]
    %v293 = vld [vmem:[#allocation5 + $0x580] sm:$0xff]
    %v294 = vld [vmem:[#allocation5 + $0x588] sm:$0xff]
    %v295 = vld [vmem:[#allocation5 + $0x590] sm:$0xff]
    %v296 = vld [vmem:[#allocation5 + $0x598] sm:$0xff]
    %v297 = vld [vmem:[#allocation5 + $0x5a0] sm:$0xff]
    %v298 = vld [vmem:[#allocation5 + $0x5a8] sm:$0xff]
    %v299 = vld [vmem:[#allocation5 + $0x5b0] sm:$0xff]
    %v300 = vld [vmem:[#allocation5 + $0x5b8] sm:$0xff]
    %v301 = vld [vmem:[#allocation5 + $0x5c0] sm:$0xff]
    %v302 = vld [vmem:[#allocation5 + $0x5c8] sm:$0xff]
    %v303 = vld [vmem:[#allocation5 + $0x5d0] sm:$0xff]
    %v304 = vld [vmem:[#allocation5 + $0x5d8] sm:$0xff]
    %v305 = vld [vmem:[#allocation5 + $0x5e0] sm:$0xff]
    %v306 = vld [vmem:[#allocation5 + $0x5e8] sm:$0xff]
    %v307 = vld [vmem:[#allocation5 + $0x5f0] sm:$0xff]
    %v308 = vld [vmem:[#allocation5 + $0x5f8] sm:$0xff]
    %v309 = vld [vmem:[#allocation5 + $0x600] sm:$0xff]
    %v310 = vld [vmem:[#allocation5 + $0x608] sm:$0xff]
    %v311 = vld [vmem:[#allocation5 + $0x610] sm:$0xff]
    %v312 = vld [vmem:[#allocation5 + $0x618] sm:$0xff]
    %v313 = vld [vmem:[#allocation5 + $0x620] sm:$0xff]
    %v314 = vld [vmem:[#allocation5 + $0x628] sm:$0xff]
    %v315 = vld [vmem:[#allocation5 + $0x630] sm:$0xff]
    %v316 = vld [vmem:[#allocation5 + $0x638] sm:$0xff]
    %v317 = vld [vmem:[#allocation5 + $0x640] sm:$0xff]
    %v318 = vld [vmem:[#allocation5 + $0x648] sm:$0xff]
    %v319 = vld [vmem:[#allocation5 + $0x650] sm:$0xff]
    %v320 = vld [vmem:[#allocation5 + $0x658] sm:$0xff]
    %v321 = vld [vmem:[#allocation5 + $0x660] sm:$0xff]
    %v322 = vld [vmem:[#allocation5 + $0x668] sm:$0xff]
    %v323 = vld [vmem:[#allocation5 + $0x670] sm:$0xff]
    %v324 = vld [vmem:[#allocation5 + $0x678] sm:$0xff]
    %v325 = vld [vmem:[#allocation5 + $0x680] sm:$0xff]
    %v326 = vld [vmem:[#allocation5 + $0x688] sm:$0xff]
    %v327 = vld [vmem:[#allocation5 + $0x690] sm:$0xff]
    %v328 = vld [vmem:[#allocation5 + $0x698] sm:$0xff]
    %v329 = vld [vmem:[#allocation5 + $0x6a0] sm:$0xff]
    %v330 = vld [vmem:[#allocation5 + $0x6a8] sm:$0xff]
    %v331 = vld [vmem:[#allocation5 + $0x6b0] sm:$0xff]
    %v332 = vld [vmem:[#allocation5 + $0x6b8] sm:$0xff]
    %v333 = vld [vmem:[#allocation5 + $0x6c0] sm:$0xff]
    %v334 = vld [vmem:[#allocation5 + $0x6c8] sm:$0xff]
    %v335 = vld [vmem:[#allocation5 + $0x6d0] sm:$0xff]
    %v336 = vld [vmem:[#allocation5 + $0x6d8] sm:$0xff]
    %v337 = vld [vmem:[#allocation5 + $0x6e0] sm:$0xff]
    %v338 = vld [vmem:[#allocation5 + $0x6e8] sm:$0xff]
    %v339 = vld [vmem:[#allocation5 + $0x6f0] sm:$0xff]
    %v340 = vld [vmem:[#allocation5 + $0x6f8] sm:$0xff]
    %v341 = vld [vmem:[#allocation5 + $0x700] sm:$0xff]
    %v342 = vld [vmem:[#allocation5 + $0x708] sm:$0xff]
    %v343 = vld [vmem:[#allocation5 + $0x710] sm:$0xff]
    %v344 = vld [vmem:[#allocation5 + $0x718] sm:$0xff]
    %v345 = vld [vmem:[#allocation5 + $0x720] sm:$0xff]
    %v346 = vld [vmem:[#allocation5 + $0x728] sm:$0xff]
    %v347 = vld [vmem:[#allocation5 + $0x730] sm:$0xff]
    %v348 = vld [vmem:[#allocation5 + $0x738] sm:$0xff]
    %v349 = vld [vmem:[#allocation5 + $0x740] sm:$0xff]
    %v350 = vld [vmem:[#allocation5 + $0x748] sm:$0xff]
    %v351 = vld [vmem:[#allocation5 + $0x750] sm:$0xff]
    %v352 = vld [vmem:[#allocation5 + $0x758] sm:$0xff]
    %v353 = vld [vmem:[#allocation5 + $0x760] sm:$0xff]
    %v354 = vld [vmem:[#allocation5 + $0x768] sm:$0xff]
    %v355 = vld [vmem:[#allocation5 + $0x770] sm:$0xff]
    %v356 = vld [vmem:[#allocation5 + $0x778] sm:$0xff]
    %v357 = vld [vmem:[#allocation5 + $0x780] sm:$0xff]
    %v358 = vld [vmem:[#allocation5 + $0x788] sm:$0xff]
    %v359 = vld [vmem:[#allocation5 + $0x790] sm:$0xff]
    %v360 = vld [vmem:[#allocation5 + $0x798] sm:$0xff]
    %v361 = vld [vmem:[#allocation5 + $0x7a0] sm:$0xff]
    %v362 = vld [vmem:[#allocation5 + $0x7a8] sm:$0xff]
    %v363 = vld [vmem:[#allocation5 + $0x7b0] sm:$0xff]
    %v364 = vld [vmem:[#allocation5 + $0x7b8] sm:$0xff]
    %v365 = vld [vmem:[#allocation5 + $0x7c0] sm:$0xff]
    %v366 = vld [vmem:[#allocation5 + $0x7c8] sm:$0xff]
    %v367 = vld [vmem:[#allocation5 + $0x7d0] sm:$0xff]
    %v368 = vld [vmem:[#allocation5 + $0x7d8] sm:$0xff]
    %v369 = vld [vmem:[#allocation5 + $0x7e0] sm:$0xff]
    %v370 = vld [vmem:[#allocation5 + $0x7e8] sm:$0xff]
    %v371 = vld [vmem:[#allocation5 + $0x7f0] sm:$0xff]
    %v372 = vld [vmem:[#allocation5 + $0x7f8] sm:$0xff]
    %v373 = vld [vmem:[#allocation5 + $0x800] sm:$0xff]
    %v374 = vld [vmem:[#allocation5 + $0x808] sm:$0xff]
    %v375 = vld [vmem:[#allocation5 + $0x810] sm:$0xff]
    %v376 = vld [vmem:[#allocation5 + $0x818] sm:$0xff]
    %v377 = vld [vmem:[#allocation5 + $0x820] sm:$0xff]
    %v378 = vld [vmem:[#allocation5 + $0x828] sm:$0xff]
    %v379 = vld [vmem:[#allocation5 + $0x830] sm:$0xff]
    %v380 = vld [vmem:[#allocation5 + $0x838] sm:$0xff]
    %v381 = vld [vmem:[#allocation5 + $0x840] sm:$0xff]
    %v382 = vld [vmem:[#allocation5 + $0x848] sm:$0xff]
    %v383 = vld [vmem:[#allocation5 + $0x850] sm:$0xff]
    %v384 = vld [vmem:[#allocation5 + $0x858] sm:$0xff]
    %v385 = vld [vmem:[#allocation5 + $0x860] sm:$0xff]
    %v386 = vld [vmem:[#allocation5 + $0x868] sm:$0xff]
    %v387 = vld [vmem:[#allocation5 + $0x870] sm:$0xff]
    %v388 = vld [vmem:[#allocation5 + $0x878] sm:$0xff]
    %v389 = vld [vmem:[#allocation5 + $0x880] sm:$0xff]
    %v390 = vld [vmem:[#allocation5 + $0x888] sm:$0xff]
    %v391 = vld [vmem:[#allocation5 + $0x890] sm:$0xff]
    %v392 = vld [vmem:[#allocation5 + $0x898] sm:$0xff]
    %v393 = vld [vmem:[#allocation5 + $0x8a0] sm:$0xff]
    %v394 = vld [vmem:[#allocation5 + $0x8a8] sm:$0xff]
    %v395 = vld [vmem:[#allocation5 + $0x8b0] sm:$0xff]
    %v396 = vld [vmem:[#allocation5 + $0x8b8] sm:$0xff]
    %v397 = vld [vmem:[#allocation5 + $0x8c0] sm:$0xff]
    %v398 = vld [vmem:[#allocation5 + $0x8c8] sm:$0xff]
    %v399 = vld [vmem:[#allocation5 + $0x8d0] sm:$0xff]
    %v400 = vld [vmem:[#allocation5 + $0x8d8] sm:$0xff]
    %v401 = vld [vmem:[#allocation5 + $0x8e0] sm:$0xff]
    %v402 = vld [vmem:[#allocation5 + $0x8e8] sm:$0xff]
    %v403 = vld [vmem:[#allocation5 + $0x8f0] sm:$0xff]
    %v404 = vld [vmem:[#allocation5 + $0x8f8] sm:$0xff]
    %v405 = vld [vmem:[#allocation5 + $0x900] sm:$0xff]
    %v406 = vld [vmem:[#allocation5 + $0x908] sm:$0xff]
    %v407 = vld [vmem:[#allocation5 + $0x910] sm:$0xff]
    %v408 = vld [vmem:[#allocation5 + $0x918] sm:$0xff]
    %v409 = vld [vmem:[#allocation5 + $0x920] sm:$0xff]
    %v410 = vld [vmem:[#allocation5 + $0x928] sm:$0xff]
    %v411 = vld [vmem:[#allocation5 + $0x930] sm:$0xff]
    %v412 = vld [vmem:[#allocation5 + $0x938] sm:$0xff]
    %v413 = vld [vmem:[#allocation5 + $0x940] sm:$0xff]
    %v414 = vld [vmem:[#allocation5 + $0x948] sm:$0xff]
    %v415 = vld [vmem:[#allocation5 + $0x950] sm:$0xff]
    %v416 = vld [vmem:[#allocation5 + $0x958] sm:$0xff]
    %v417 = vld [vmem:[#allocation5 + $0x960] sm:$0xff]
    %v418 = vld [vmem:[#allocation5 + $0x968] sm:$0xff]
    %v419 = vld [vmem:[#allocation5 + $0x970] sm:$0xff]
    %v420 = vld [vmem:[#allocation5 + $0x978] sm:$0xff]
    %v421 = vld [vmem:[#allocation5 + $0x980] sm:$0xff]
    %v422 = vld [vmem:[#allocation5 + $0x988] sm:$0xff]
    %v423 = vld [vmem:[#allocation5 + $0x990] sm:$0xff]
    %v424 = vld [vmem:[#allocation5 + $0x998] sm:$0xff]
    %v425 = vld [vmem:[#allocation5 + $0x9a0] sm:$0xff]
    %v426 = vld [vmem:[#allocation5 + $0x9a8] sm:$0xff]
    %v427 = vld [vmem:[#allocation5 + $0x9b0] sm:$0xff]
    %v428 = vld [vmem:[#allocation5 + $0x9b8] sm:$0xff]
    %v429 = vld [vmem:[#allocation5 + $0x9c0] sm:$0xff]
    %v430 = vld [vmem:[#allocation5 + $0x9c8] sm:$0xff]
    %v431 = vld [vmem:[#allocation5 + $0x9d0] sm:$0xff]
    %v432 = vld [vmem:[#allocation5 + $0x9d8] sm:$0xff]
    %v433 = vld [vmem:[#allocation5 + $0x9e0] sm:$0xff]
    %v434 = vld [vmem:[#allocation5 + $0x9e8] sm:$0xff]
    %v435 = vld [vmem:[#allocation5 + $0x9f0] sm:$0xff]
    %v436 = vld [vmem:[#allocation5 + $0x9f8] sm:$0xff]
    %v437 = vld [vmem:[#allocation5 + $0xa00] sm:$0xff]
    %v438 = vld [vmem:[#allocation5 + $0xa08] sm:$0xff]
    %v439 = vld [vmem:[#allocation5 + $0xa10] sm:$0xff]
    %v440 = vld [vmem:[#allocation5 + $0xa18] sm:$0xff]
    %v441 = vld [vmem:[#allocation5 + $0xa20] sm:$0xff]
    %v442 = vld [vmem:[#allocation5 + $0xa28] sm:$0xff]
    %v443 = vld [vmem:[#allocation5 + $0xa30] sm:$0xff]
    %v444 = vld [vmem:[#allocation5 + $0xa38] sm:$0xff]
    %v445 = vld [vmem:[#allocation5 + $0xa40] sm:$0xff]
    %v446 = vld [vmem:[#allocation5 + $0xa48] sm:$0xff]
    %v447 = vld [vmem:[#allocation5 + $0xa50] sm:$0xff]
    %v448 = vld [vmem:[#allocation5 + $0xa58] sm:$0xff]
    %v449 = vld [vmem:[#allocation5 + $0xa60] sm:$0xff]
    %v450 = vld [vmem:[#allocation5 + $0xa68] sm:$0xff]
    %v451 = vld [vmem:[#allocation5 + $0xa70] sm:$0xff]
    %v452 = vld [vmem:[#allocation5 + $0xa78] sm:$0xff]
    %v453 = vld [vmem:[#allocation5 + $0xa80] sm:$0xff]
    %v454 = vld [vmem:[#allocation5 + $0xa88] sm:$0xff]
    %v455 = vld [vmem:[#allocation5 + $0xa90] sm:$0xff]
    %v456 = vld [vmem:[#allocation5 + $0xa98] sm:$0xff]
    %v457 = vld [vmem:[#allocation5 + $0xaa0] sm:$0xff]
    %v458 = vld [vmem:[#allocation5 + $0xaa8] sm:$0xff]
    %v459 = vld [vmem:[#allocation5 + $0xab0] sm:$0xff]
    %v460 = vld [vmem:[#allocation5 + $0xab8] sm:$0xff]
    %v461 = vld [vmem:[#allocation5 + $0xac0] sm:$0xff]
    %v462 = vld [vmem:[#allocation5 + $0xac8] sm:$0xff]
    %v463 = vld [vmem:[#allocation5 + $0xad0] sm:$0xff]
    %v464 = vld [vmem:[#allocation5 + $0xad8] sm:$0xff]
    %v465 = vld [vmem:[#allocation5 + $0xae0] sm:$0xff]
    %v466 = vld [vmem:[#allocation5 + $0xae8] sm:$0xff]
    %v467 = vld [vmem:[#allocation5 + $0xaf0] sm:$0xff]
    %v468 = vld [vmem:[#allocation5 + $0xaf8] sm:$0xff]
    %v469 = vld [vmem:[#allocation5 + $0xb00] sm:$0xff]
    %v470 = vld [vmem:[#allocation5 + $0xb08] sm:$0xff]
    %v471 = vld [vmem:[#allocation5 + $0xb10] sm:$0xff]
    %v472 = vld [vmem:[#allocation5 + $0xb18] sm:$0xff]
    %v473 = vld [vmem:[#allocation5 + $0xb20] sm:$0xff]
    %v474 = vld [vmem:[#allocation5 + $0xb28] sm:$0xff]
    %v475 = vld [vmem:[#allocation5 + $0xb30] sm:$0xff]
    %v476 = vld [vmem:[#allocation5 + $0xb38] sm:$0xff]
    %v477 = vld [vmem:[#allocation5 + $0xb40] sm:$0xff]
    %v478 = vld [vmem:[#allocation5 + $0xb48] sm:$0xff]
    %v479 = vld [vmem:[#allocation5 + $0xb50] sm:$0xff]
    %v480 = vld [vmem:[#allocation5 + $0xb58] sm:$0xff]
    %v481 = vld [vmem:[#allocation5 + $0xb60] sm:$0xff]
    %v482 = vld [vmem:[#allocation5 + $0xb68] sm:$0xff]
    %v483 = vld [vmem:[#allocation5 + $0xb70] sm:$0xff]
    %v484 = vld [vmem:[#allocation5 + $0xb78] sm:$0xff]
    %v485 = vld [vmem:[#allocation5 + $0xb80] sm:$0xff]
    %v486 = vld [vmem:[#allocation5 + $0xb88] sm:$0xff]
    %v487 = vld [vmem:[#allocation5 + $0xb90] sm:$0xff]
    %v488 = vld [vmem:[#allocation5 + $0xb98] sm:$0xff]
    %v489 = vld [vmem:[#allocation5 + $0xba0] sm:$0xff]
    %v490 = vld [vmem:[#allocation5 + $0xba8] sm:$0xff]
    %v491 = vld [vmem:[#allocation5 + $0xbb0] sm:$0xff]
    %v492 = vld [vmem:[#allocation5 + $0xbb8] sm:$0xff]
    %v493 = vld [vmem:[#allocation5 + $0xbc0] sm:$0xff]
    %v494 = vld [vmem:[#allocation5 + $0xbc8] sm:$0xff]
    %v495 = vld [vmem:[#allocation5 + $0xbd0] sm:$0xff]
    %v496 = vld [vmem:[#allocation5 + $0xbd8] sm:$0xff]
    %v497 = vld [vmem:[#allocation5 + $0xbe0] sm:$0xff]
    %v498 = vld [vmem:[#allocation5 + $0xbe8] sm:$0xff]
    %v499 = vld [vmem:[#allocation5 + $0xbf0] sm:$0xff]
    %v500 = vld [vmem:[#allocation5 + $0xbf8] sm:$0xff]
    %v501 = vld [vmem:[#allocation5 + $0xc00] sm:$0xff]
    %v502 = vld [vmem:[#allocation5 + $0xc08] sm:$0xff]
    %v503 = vld [vmem:[#allocation5 + $0xc10] sm:$0xff]
    %v504 = vld [vmem:[#allocation5 + $0xc18] sm:$0xff]
    %v505 = vld [vmem:[#allocation5 + $0xc20] sm:$0xff]
    %v506 = vld [vmem:[#allocation5 + $0xc28] sm:$0xff]
    %v507 = vld [vmem:[#allocation5 + $0xc30] sm:$0xff]
    %v508 = vld [vmem:[#allocation5 + $0xc38] sm:$0xff]
    %v509 = vld [vmem:[#allocation5 + $0xc40] sm:$0xff]
    %v510 = vld [vmem:[#allocation5 + $0xc48] sm:$0xff]
    %v511 = vld [vmem:[#allocation5 + $0xc50] sm:$0xff]
    %v512 = vld [vmem:[#allocation5 + $0xc58] sm:$0xff]
    %v513 = vld [vmem:[#allocation5 + $0xc60] sm:$0xff]
    %v514 = vld [vmem:[#allocation5 + $0xc68] sm:$0xff]
    %v515 = vld [vmem:[#allocation5 + $0xc70] sm:$0xff]
    %v516 = vld [vmem:[#allocation5 + $0xc78] sm:$0xff]
    %v517 = vld [vmem:[#allocation5 + $0xc80] sm:$0xff]
    %v518 = vld [vmem:[#allocation5 + $0xc88] sm:$0xff]
    %v519 = vld [vmem:[#allocation5 + $0xc90] sm:$0xff]
    %v520 = vld [vmem:[#allocation5 + $0xc98] sm:$0xff]
    %v521 = vld [vmem:[#allocation5 + $0xca0] sm:$0xff]
    %v522 = vld [vmem:[#allocation5 + $0xca8] sm:$0xff]
    %v523 = vld [vmem:[#allocation5 + $0xcb0] sm:$0xff]
    %v524 = vld [vmem:[#allocation5 + $0xcb8] sm:$0xff]
    %v525 = vld [vmem:[#allocation5 + $0xcc0] sm:$0xff]
    %v526 = vld [vmem:[#allocation5 + $0xcc8] sm:$0xff]
    %v527 = vld [vmem:[#allocation5 + $0xcd0] sm:$0xff]
    %v528 = vld [vmem:[#allocation5 + $0xcd8] sm:$0xff]
    %v529 = vld [vmem:[#allocation5 + $0xce0] sm:$0xff]
    %v530 = vld [vmem:[#allocation5 + $0xce8] sm:$0xff]
    %v531 = vld [vmem:[#allocation5 + $0xcf0] sm:$0xff]
    %v532 = vld [vmem:[#allocation5 + $0xcf8] sm:$0xff]
    %v533 = vld [vmem:[#allocation5 + $0xd00] sm:$0xff]
    %v534 = vld [vmem:[#allocation5 + $0xd08] sm:$0xff]
    %v535 = vld [vmem:[#allocation5 + $0xd10] sm:$0xff]
    %v536 = vld [vmem:[#allocation5 + $0xd18] sm:$0xff]
    %v537 = vld [vmem:[#allocation5 + $0xd20] sm:$0xff]
    %v538 = vld [vmem:[#allocation5 + $0xd28] sm:$0xff]
    %v539 = vld [vmem:[#allocation5 + $0xd30] sm:$0xff]
    %v540 = vld [vmem:[#allocation5 + $0xd38] sm:$0xff]
    %v541 = vld [vmem:[#allocation5 + $0xd40] sm:$0xff]
    %v542 = vld [vmem:[#allocation5 + $0xd48] sm:$0xff]
    %v543 = vld [vmem:[#allocation5 + $0xd50] sm:$0xff]
    %v544 = vld [vmem:[#allocation5 + $0xd58] sm:$0xff]
    %v545 = vld [vmem:[#allocation5 + $0xd60] sm:$0xff]
    %v546 = vld [vmem:[#allocation5 + $0xd68] sm:$0xff]
    %v547 = vld [vmem:[#allocation5 + $0xd70] sm:$0xff]
    %v548 = vld [vmem:[#allocation5 + $0xd78] sm:$0xff]
    %v549 = vld [vmem:[#allocation5 + $0xd80] sm:$0xff]
    %v550 = vld [vmem:[#allocation5 + $0xd88] sm:$0xff]
    %v551 = vld [vmem:[#allocation5 + $0xd90] sm:$0xff]
    %v552 = vld [vmem:[#allocation5 + $0xd98] sm:$0xff]
    %v553 = vld [vmem:[#allocation5 + $0xda0] sm:$0xff]
    %v554 = vld [vmem:[#allocation5 + $0xda8] sm:$0xff]
    %v555 = vld [vmem:[#allocation5 + $0xdb0] sm:$0xff]
    %v556 = vld [vmem:[#allocation5 + $0xdb8] sm:$0xff]
    %v557 = vld [vmem:[#allocation5 + $0xdc0] sm:$0xff]
    %v558 = vld [vmem:[#allocation5 + $0xdc8] sm:$0xff]
    %v559 = vld [vmem:[#allocation5 + $0xdd0] sm:$0xff]
    %v560 = vld [vmem:[#allocation5 + $0xdd8] sm:$0xff]
    %v561 = vld [vmem:[#allocation5 + $0xde0] sm:$0xff]
    %v562 = vld [vmem:[#allocation5 + $0xde8] sm:$0xff]
    %v563 = vld [vmem:[#allocation5 + $0xdf0] sm:$0xff]
    %v564 = vld [vmem:[#allocation5 + $0xdf8] sm:$0xff]
    %v565 = vld [vmem:[#allocation5 + $0xe00] sm:$0xff]
    %v566 = vld [vmem:[#allocation5 + $0xe08] sm:$0xff]
    %v567 = vld [vmem:[#allocation5 + $0xe10] sm:$0xff]
    %v568 = vld [vmem:[#allocation5 + $0xe18] sm:$0xff]
    %v569 = vld [vmem:[#allocation5 + $0xe20] sm:$0xff]
    %v570 = vld [vmem:[#allocation5 + $0xe28] sm:$0xff]
    %v571 = vld [vmem:[#allocation5 + $0xe30] sm:$0xff]
    %v572 = vld [vmem:[#allocation5 + $0xe38] sm:$0xff]
    %v573 = vld [vmem:[#allocation5 + $0xe40] sm:$0xff]
    %v574 = vld [vmem:[#allocation5 + $0xe48] sm:$0xff]
    %v575 = vld [vmem:[#allocation5 + $0xe50] sm:$0xff]
    %v576 = vld [vmem:[#allocation5 + $0xe58] sm:$0xff]
    %v577 = vld [vmem:[#allocation5 + $0xe60] sm:$0xff]
    %v578 = vld [vmem:[#allocation5 + $0xe68] sm:$0xff]
    %v579 = vld [vmem:[#allocation5 + $0xe70] sm:$0xff]
    %v580 = vld [vmem:[#allocation5 + $0xe78] sm:$0xff]
    %v581 = vld [vmem:[#allocation5 + $0xe80] sm:$0xff]
    %v582 = vld [vmem:[#allocation5 + $0xe88] sm:$0xff]
    %v583 = vld [vmem:[#allocation5 + $0xe90] sm:$0xff]
    %v584 = vld [vmem:[#allocation5 + $0xe98] sm:$0xff]
    %v585 = vld [vmem:[#allocation5 + $0xea0] sm:$0xff]
    %v586 = vld [vmem:[#allocation5 + $0xea8] sm:$0xff]
    %v587 = vld [vmem:[#allocation5 + $0xeb0] sm:$0xff]
    %v588 = vld [vmem:[#allocation5 + $0xeb8] sm:$0xff]
    %v589 = vld [vmem:[#allocation5 + $0xec0] sm:$0xff]
    %v590 = vld [vmem:[#allocation5 + $0xec8] sm:$0xff]
    %v591 = vld [vmem:[#allocation5 + $0xed0] sm:$0xff]
    %v592 = vld [vmem:[#allocation5 + $0xed8] sm:$0xff]
    %v593 = vld [vmem:[#allocation5 + $0xee0] sm:$0xff]
    %v594 = vld [vmem:[#allocation5 + $0xee8] sm:$0xff]
    %v595 = vld [vmem:[#allocation5 + $0xef0] sm:$0xff]
    %v596 = vld [vmem:[#allocation5 + $0xef8] sm:$0xff]
    %v597 = vld [vmem:[#allocation5 + $0xf00] sm:$0xff]
    %v598 = vld [vmem:[#allocation5 + $0xf08] sm:$0xff]
    %v599 = vld [vmem:[#allocation5 + $0xf10] sm:$0xff]
    %v600 = vld [vmem:[#allocation5 + $0xf18] sm:$0xff]
    %v601 = vld [vmem:[#allocation5 + $0xf20] sm:$0xff]
    %v602 = vld [vmem:[#allocation5 + $0xf28] sm:$0xff]
    %v603 = vld [vmem:[#allocation5 + $0xf30] sm:$0xff]
    %v604 = vld [vmem:[#allocation5 + $0xf38] sm:$0xff]
    %v605 = vld [vmem:[#allocation5 + $0xf40] sm:$0xff]
    %v606 = vld [vmem:[#allocation5 + $0xf48] sm:$0xff]
    %v607 = vld [vmem:[#allocation5 + $0xf50] sm:$0xff]
    %v608 = vld [vmem:[#allocation5 + $0xf58] sm:$0xff]
    %v609 = vld [vmem:[#allocation5 + $0xf60] sm:$0xff]
    %v610 = vld [vmem:[#allocation5 + $0xf68] sm:$0xff]
    %v611 = vld [vmem:[#allocation5 + $0xf70] sm:$0xff]
    %v612 = vld [vmem:[#allocation5 + $0xf78] sm:$0xff]
    %v613 = vld [vmem:[#allocation5 + $0xf80] sm:$0xff]
    %v614 = vld [vmem:[#allocation5 + $0xf88] sm:$0xff]
    %v615 = vld [vmem:[#allocation5 + $0xf90] sm:$0xff]
    %v616 = vld [vmem:[#allocation5 + $0xf98] sm:$0xff]
    %v617 = vld [vmem:[#allocation5 + $0xfa0] sm:$0xff]
    %v618 = vld [vmem:[#allocation5 + $0xfa8] sm:$0xff]
    %v619 = vld [vmem:[#allocation5 + $0xfb0] sm:$0xff]
    %v620 = vld [vmem:[#allocation5 + $0xfb8] sm:$0xff]
    %v621 = vld [vmem:[#allocation5 + $0xfc0] sm:$0xff]
    %v622 = vld [vmem:[#allocation5 + $0xfc8] sm:$0xff]
    %v623 = vld [vmem:[#allocation5 + $0xfd0] sm:$0xff]
    %v624 = vld [vmem:[#allocation5 + $0xfd8] sm:$0xff]
    %v625 = vld [vmem:[#allocation5 + $0xfe0] sm:$0xff]
    %v626 = vld [vmem:[#allocation5 + $0xfe8] sm:$0xff]
    %v627 = vld [vmem:[#allocation5 + $0xff0] sm:$0xff]
    %v628 = vld [vmem:[#allocation5 + $0xff8] sm:$0xff]
    %v629 = vld [vmem:[#allocation7] sm:$0xff]
    %v630 = vld [vmem:[#allocation7 + $0x8] sm:$0xff]
    %v633 = vlaneseq
    %v634 = vshrl.u32 %v633, 7
    %v635 = vsub.s32 0, %v634
    %v636 = vrot.slane %v629, %v635
    %v637 = vlaneseq
    %v638 = vshrl.u32 %v637, 7
    %v639 = vsub.s32 1, %v638
    %v640 = vrot.slane %v629, %v639
    %v641 = vlaneseq
    %v642 = vshrl.u32 %v641, 7
    %v643 = vsub.s32 2, %v642
    %v644 = vrot.slane %v629, %v643
    %v645 = vlaneseq
    %v646 = vshrl.u32 %v645, 7
    %v647 = vsub.s32 3, %v646
    %v648 = vrot.slane %v629, %v647
    %v649 = vlaneseq
    %v650 = vshrl.u32 %v649, 7
    %v651 = vsub.s32 4, %v650
    %v652 = vrot.slane %v629, %v651
    %v653 = vlaneseq
    %v654 = vshrl.u32 %v653, 7
    %v655 = vsub.s32 5, %v654
    %v656 = vrot.slane %v629, %v655
    %v657 = vlaneseq
    %v658 = vshrl.u32 %v657, 7
    %v659 = vsub.s32 6, %v658
    %v660 = vrot.slane %v629, %v659
    %v661 = vlaneseq
    %v662 = vshrl.u32 %v661, 7
    %v663 = vsub.s32 7, %v662
    %v664 = vrot.slane %v629, %v663
    %v665 = vlaneseq
    %v666 = vshrl.u32 %v665, 7
    %v667 = vsub.s32 0, %v666
    %v668 = vrot.slane %v630, %v667
    %v669 = vlaneseq
    %v670 = vshrl.u32 %v669, 7
    %v671 = vsub.s32 1, %v670
    %v672 = vrot.slane %v630, %v671
    %v673 = vlaneseq
    %v674 = vshrl.u32 %v673, 7
    %v675 = vsub.s32 2, %v674
    %v676 = vrot.slane %v630, %v675
    %v677 = vlaneseq
    %v678 = vshrl.u32 %v677, 7
    %v679 = vsub.s32 3, %v678
    %v680 = vrot.slane %v630, %v679
    %v681 = vlaneseq
    %v682 = vshrl.u32 %v681, 7
    %v683 = vsub.s32 4, %v682
    %v684 = vrot.slane %v630, %v683
    %v685 = vlaneseq
    %v686 = vshrl.u32 %v685, 7
    %v687 = vsub.s32 5, %v686
    %v688 = vrot.slane %v630, %v687
    %v689 = vlaneseq
    %v690 = vshrl.u32 %v689, 7
    %v691 = vsub.s32 6, %v690
    %v692 = vrot.slane %v630, %v691
    %v693 = vlaneseq
    %v694 = vshrl.u32 %v693, 7
    %v695 = vsub.s32 7, %v694
    %v696 = vrot.slane %v630, %v695
    %v745 = vunpack.c.l.b16 %v85
    %v746 = vunpack.c.h.b16 %v85
    %v747 = vunpack.c.l.b16 %v86
    %v748 = vunpack.c.h.b16 %v86
    %v749 = vunpack.c.l.b16 %v87
    %v750 = vunpack.c.h.b16 %v87
    %v751 = vunpack.c.l.b16 %v88
    %v752 = vunpack.c.h.b16 %v88
    %v753 = vunpack.c.l.b16 %v89
    %v754 = vunpack.c.h.b16 %v89
    %v755 = vunpack.c.l.b16 %v90
    %v756 = vunpack.c.h.b16 %v90
    %v757 = vunpack.c.l.b16 %v91
    %v758 = vunpack.c.h.b16 %v91
    %v759 = vunpack.c.l.b16 %v92
    %v760 = vunpack.c.h.b16 %v92
    %v761 = vunpack.c.l.b16 %v93
    %v762 = vunpack.c.h.b16 %v93
    %v763 = vunpack.c.l.b16 %v94
    %v764 = vunpack.c.h.b16 %v94
    %v765 = vunpack.c.l.b16 %v95
    %v766 = vunpack.c.h.b16 %v95
    %v767 = vunpack.c.l.b16 %v96
    %v768 = vunpack.c.h.b16 %v96
    %v769 = vunpack.c.l.b16 %v97
    %v770 = vunpack.c.h.b16 %v97
    %v771 = vunpack.c.l.b16 %v98
    %v772 = vunpack.c.h.b16 %v98
    %v773 = vunpack.c.l.b16 %v99
    %v774 = vunpack.c.h.b16 %v99
    %v775 = vunpack.c.l.b16 %v100
    %v776 = vunpack.c.h.b16 %v100
    %v777 = vunpack.c.l.b16 %v101
    %v778 = vunpack.c.h.b16 %v101
    %v779 = vunpack.c.l.b16 %v102
    %v780 = vunpack.c.h.b16 %v102
    %v781 = vunpack.c.l.b16 %v103
    %v782 = vunpack.c.h.b16 %v103
    %v783 = vunpack.c.l.b16 %v104
    %v784 = vunpack.c.h.b16 %v104
    %v785 = vunpack.c.l.b16 %v105
    %v786 = vunpack.c.h.b16 %v105
    %v787 = vunpack.c.l.b16 %v106
    %v788 = vunpack.c.h.b16 %v106
    %v789 = vunpack.c.l.b16 %v107
    %v790 = vunpack.c.h.b16 %v107
    %v791 = vunpack.c.l.b16 %v108
    %v792 = vunpack.c.h.b16 %v108
    %v793 = vunpack.c.l.b16 %v109
    %v794 = vunpack.c.h.b16 %v109
    %v795 = vunpack.c.l.b16 %v110
    %v796 = vunpack.c.h.b16 %v110
    %v797 = vunpack.c.l.b16 %v111
    %v798 = vunpack.c.h.b16 %v111
    %v799 = vunpack.c.l.b16 %v112
    %v800 = vunpack.c.h.b16 %v112
    %v801 = vunpack.c.l.b16 %v113
    %v802 = vunpack.c.h.b16 %v113
    %v803 = vunpack.c.l.b16 %v114
    %v804 = vunpack.c.h.b16 %v114
    %v805 = vunpack.c.l.b16 %v115
    %v806 = vunpack.c.h.b16 %v115
    %v807 = vunpack.c.l.b16 %v116
    %v808 = vunpack.c.h.b16 %v116
    %v809 = vpack.c.b16 %v749, %v745
    %v810 = vpack.c.b16 %v750, %v746
    %v811 = vpack.c.b16 %v751, %v747
    %v812 = vpack.c.b16 %v752, %v748
    %v813 = vpack.c.b16 %v757, %v753
    %v814 = vpack.c.b16 %v758, %v754
    %v815 = vpack.c.b16 %v759, %v755
    %v816 = vpack.c.b16 %v760, %v756
    %v817 = vpack.c.b16 %v765, %v761
    %v818 = vpack.c.b16 %v766, %v762
    %v819 = vpack.c.b16 %v767, %v763
    %v820 = vpack.c.b16 %v768, %v764
    %v821 = vpack.c.b16 %v773, %v769
    %v822 = vpack.c.b16 %v774, %v770
    %v823 = vpack.c.b16 %v775, %v771
    %v824 = vpack.c.b16 %v776, %v772
    %v825 = vpack.c.b16 %v781, %v777
    %v826 = vpack.c.b16 %v782, %v778
    %v827 = vpack.c.b16 %v783, %v779
    %v828 = vpack.c.b16 %v784, %v780
    %v829 = vpack.c.b16 %v789, %v785
    %v830 = vpack.c.b16 %v790, %v786
    %v831 = vpack.c.b16 %v791, %v787
    %v832 = vpack.c.b16 %v792, %v788
    %v833 = vpack.c.b16 %v797, %v793
    %v834 = vpack.c.b16 %v798, %v794
    %v835 = vpack.c.b16 %v799, %v795
    %v836 = vpack.c.b16 %v800, %v796
    %v837 = vpack.c.b16 %v805, %v801
    %v838 = vpack.c.b16 %v806, %v802
    %v839 = vpack.c.b16 %v807, %v803
    %v840 = vpack.c.b16 %v808, %v804
    %v1385 = vunpack.c.l.b16 %v117
    %v1386 = vunpack.c.h.b16 %v117
    %v1387 = vunpack.c.l.b16 %v118
    %v1388 = vunpack.c.h.b16 %v118
    %v1389 = vunpack.c.l.b16 %v119
    %v1390 = vunpack.c.h.b16 %v119
    %v1391 = vunpack.c.l.b16 %v120
    %v1392 = vunpack.c.h.b16 %v120
    %v1393 = vunpack.c.l.b16 %v121
    %v1394 = vunpack.c.h.b16 %v121
    %v1395 = vunpack.c.l.b16 %v122
    %v1396 = vunpack.c.h.b16 %v122
    %v1397 = vunpack.c.l.b16 %v123
    %v1398 = vunpack.c.h.b16 %v123
    %v1399 = vunpack.c.l.b16 %v124
    %v1400 = vunpack.c.h.b16 %v124
    %v1401 = vunpack.c.l.b16 %v125
    %v1402 = vunpack.c.h.b16 %v125
    %v1403 = vunpack.c.l.b16 %v126
    %v1404 = vunpack.c.h.b16 %v126
    %v1405 = vunpack.c.l.b16 %v127
    %v1406 = vunpack.c.h.b16 %v127
    %v1407 = vunpack.c.l.b16 %v128
    %v1408 = vunpack.c.h.b16 %v128
    %v1409 = vunpack.c.l.b16 %v129
    %v1410 = vunpack.c.h.b16 %v129
    %v1411 = vunpack.c.l.b16 %v130
    %v1412 = vunpack.c.h.b16 %v130
    %v1413 = vunpack.c.l.b16 %v131
    %v1414 = vunpack.c.h.b16 %v131
    %v1415 = vunpack.c.l.b16 %v132
    %v1416 = vunpack.c.h.b16 %v132
    %v1417 = vunpack.c.l.b16 %v133
    %v1418 = vunpack.c.h.b16 %v133
    %v1419 = vunpack.c.l.b16 %v134
    %v1420 = vunpack.c.h.b16 %v134
    %v1421 = vunpack.c.l.b16 %v135
    %v1422 = vunpack.c.h.b16 %v135
    %v1423 = vunpack.c.l.b16 %v136
    %v1424 = vunpack.c.h.b16 %v136
    %v1425 = vunpack.c.l.b16 %v137
    %v1426 = vunpack.c.h.b16 %v137
    %v1427 = vunpack.c.l.b16 %v138
    %v1428 = vunpack.c.h.b16 %v138
    %v1429 = vunpack.c.l.b16 %v139
    %v1430 = vunpack.c.h.b16 %v139
    %v1431 = vunpack.c.l.b16 %v140
    %v1432 = vunpack.c.h.b16 %v140
    %v1433 = vunpack.c.l.b16 %v141
    %v1434 = vunpack.c.h.b16 %v141
    %v1435 = vunpack.c.l.b16 %v142
    %v1436 = vunpack.c.h.b16 %v142
    %v1437 = vunpack.c.l.b16 %v143
    %v1438 = vunpack.c.h.b16 %v143
    %v1439 = vunpack.c.l.b16 %v144
    %v1440 = vunpack.c.h.b16 %v144
    %v1441 = vunpack.c.l.b16 %v145
    %v1442 = vunpack.c.h.b16 %v145
    %v1443 = vunpack.c.l.b16 %v146
    %v1444 = vunpack.c.h.b16 %v146
    %v1445 = vunpack.c.l.b16 %v147
    %v1446 = vunpack.c.h.b16 %v147
    %v1447 = vunpack.c.l.b16 %v148
    %v1448 = vunpack.c.h.b16 %v148
    %v1449 = vunpack.c.l.b16 %v149
    %v1450 = vunpack.c.h.b16 %v149
    %v1451 = vunpack.c.l.b16 %v150
    %v1452 = vunpack.c.h.b16 %v150
    %v1453 = vunpack.c.l.b16 %v151
    %v1454 = vunpack.c.h.b16 %v151
    %v1455 = vunpack.c.l.b16 %v152
    %v1456 = vunpack.c.h.b16 %v152
    %v1457 = vunpack.c.l.b16 %v153
    %v1458 = vunpack.c.h.b16 %v153
    %v1459 = vunpack.c.l.b16 %v154
    %v1460 = vunpack.c.h.b16 %v154
    %v1461 = vunpack.c.l.b16 %v155
    %v1462 = vunpack.c.h.b16 %v155
    %v1463 = vunpack.c.l.b16 %v156
    %v1464 = vunpack.c.h.b16 %v156
    %v1465 = vunpack.c.l.b16 %v157
    %v1466 = vunpack.c.h.b16 %v157
    %v1467 = vunpack.c.l.b16 %v158
    %v1468 = vunpack.c.h.b16 %v158
    %v1469 = vunpack.c.l.b16 %v159
    %v1470 = vunpack.c.h.b16 %v159
    %v1471 = vunpack.c.l.b16 %v160
    %v1472 = vunpack.c.h.b16 %v160
    %v1473 = vunpack.c.l.b16 %v161
    %v1474 = vunpack.c.h.b16 %v161
    %v1475 = vunpack.c.l.b16 %v162
    %v1476 = vunpack.c.h.b16 %v162
    %v1477 = vunpack.c.l.b16 %v163
    %v1478 = vunpack.c.h.b16 %v163
    %v1479 = vunpack.c.l.b16 %v164
    %v1480 = vunpack.c.h.b16 %v164
    %v1481 = vunpack.c.l.b16 %v165
    %v1482 = vunpack.c.h.b16 %v165
    %v1483 = vunpack.c.l.b16 %v166
    %v1484 = vunpack.c.h.b16 %v166
    %v1485 = vunpack.c.l.b16 %v167
    %v1486 = vunpack.c.h.b16 %v167
    %v1487 = vunpack.c.l.b16 %v168
    %v1488 = vunpack.c.h.b16 %v168
    %v1489 = vunpack.c.l.b16 %v169
    %v1490 = vunpack.c.h.b16 %v169
    %v1491 = vunpack.c.l.b16 %v170
    %v1492 = vunpack.c.h.b16 %v170
    %v1493 = vunpack.c.l.b16 %v171
    %v1494 = vunpack.c.h.b16 %v171
    %v1495 = vunpack.c.l.b16 %v172
    %v1496 = vunpack.c.h.b16 %v172
    %v1497 = vunpack.c.l.b16 %v173
    %v1498 = vunpack.c.h.b16 %v173
    %v1499 = vunpack.c.l.b16 %v174
    %v1500 = vunpack.c.h.b16 %v174
    %v1501 = vunpack.c.l.b16 %v175
    %v1502 = vunpack.c.h.b16 %v175
    %v1503 = vunpack.c.l.b16 %v176
    %v1504 = vunpack.c.h.b16 %v176
    %v1505 = vunpack.c.l.b16 %v177
    %v1506 = vunpack.c.h.b16 %v177
    %v1507 = vunpack.c.l.b16 %v178
    %v1508 = vunpack.c.h.b16 %v178
    %v1509 = vunpack.c.l.b16 %v179
    %v1510 = vunpack.c.h.b16 %v179
    %v1511 = vunpack.c.l.b16 %v180
    %v1512 = vunpack.c.h.b16 %v180
    %v1513 = vunpack.c.l.b16 %v181
    %v1514 = vunpack.c.h.b16 %v181
    %v1515 = vunpack.c.l.b16 %v182
    %v1516 = vunpack.c.h.b16 %v182
    %v1517 = vunpack.c.l.b16 %v183
    %v1518 = vunpack.c.h.b16 %v183
    %v1519 = vunpack.c.l.b16 %v184
    %v1520 = vunpack.c.h.b16 %v184
    %v1521 = vunpack.c.l.b16 %v185
    %v1522 = vunpack.c.h.b16 %v185
    %v1523 = vunpack.c.l.b16 %v186
    %v1524 = vunpack.c.h.b16 %v186
    %v1525 = vunpack.c.l.b16 %v187
    %v1526 = vunpack.c.h.b16 %v187
    %v1527 = vunpack.c.l.b16 %v188
    %v1528 = vunpack.c.h.b16 %v188
    %v1529 = vunpack.c.l.b16 %v189
    %v1530 = vunpack.c.h.b16 %v189
    %v1531 = vunpack.c.l.b16 %v190
    %v1532 = vunpack.c.h.b16 %v190
    %v1533 = vunpack.c.l.b16 %v191
    %v1534 = vunpack.c.h.b16 %v191
    %v1535 = vunpack.c.l.b16 %v192
    %v1536 = vunpack.c.h.b16 %v192
    %v1537 = vunpack.c.l.b16 %v193
    %v1538 = vunpack.c.h.b16 %v193
    %v1539 = vunpack.c.l.b16 %v194
    %v1540 = vunpack.c.h.b16 %v194
    %v1541 = vunpack.c.l.b16 %v195
    %v1542 = vunpack.c.h.b16 %v195
    %v1543 = vunpack.c.l.b16 %v196
    %v1544 = vunpack.c.h.b16 %v196
    %v1545 = vunpack.c.l.b16 %v197
    %v1546 = vunpack.c.h.b16 %v197
    %v1547 = vunpack.c.l.b16 %v198
    %v1548 = vunpack.c.h.b16 %v198
    %v1549 = vunpack.c.l.b16 %v199
    %v1550 = vunpack.c.h.b16 %v199
    %v1551 = vunpack.c.l.b16 %v200
    %v1552 = vunpack.c.h.b16 %v200
    %v1553 = vunpack.c.l.b16 %v201
    %v1554 = vunpack.c.h.b16 %v201
    %v1555 = vunpack.c.l.b16 %v202
    %v1556 = vunpack.c.h.b16 %v202
    %v1557 = vunpack.c.l.b16 %v203
    %v1558 = vunpack.c.h.b16 %v203
    %v1559 = vunpack.c.l.b16 %v204
    %v1560 = vunpack.c.h.b16 %v204
    %v1561 = vunpack.c.l.b16 %v205
    %v1562 = vunpack.c.h.b16 %v205
    %v1563 = vunpack.c.l.b16 %v206
    %v1564 = vunpack.c.h.b16 %v206
    %v1565 = vunpack.c.l.b16 %v207
    %v1566 = vunpack.c.h.b16 %v207
    %v1567 = vunpack.c.l.b16 %v208
    %v1568 = vunpack.c.h.b16 %v208
    %v1569 = vunpack.c.l.b16 %v209
    %v1570 = vunpack.c.h.b16 %v209
    %v1571 = vunpack.c.l.b16 %v210
    %v1572 = vunpack.c.h.b16 %v210
    %v1573 = vunpack.c.l.b16 %v211
    %v1574 = vunpack.c.h.b16 %v211
    %v1575 = vunpack.c.l.b16 %v212
    %v1576 = vunpack.c.h.b16 %v212
    %v1577 = vunpack.c.l.b16 %v213
    %v1578 = vunpack.c.h.b16 %v213
    %v1579 = vunpack.c.l.b16 %v214
    %v1580 = vunpack.c.h.b16 %v214
    %v1581 = vunpack.c.l.b16 %v215
    %v1582 = vunpack.c.h.b16 %v215
    %v1583 = vunpack.c.l.b16 %v216
    %v1584 = vunpack.c.h.b16 %v216
    %v1585 = vunpack.c.l.b16 %v217
    %v1586 = vunpack.c.h.b16 %v217
    %v1587 = vunpack.c.l.b16 %v218
    %v1588 = vunpack.c.h.b16 %v218
    %v1589 = vunpack.c.l.b16 %v219
    %v1590 = vunpack.c.h.b16 %v219
    %v1591 = vunpack.c.l.b16 %v220
    %v1592 = vunpack.c.h.b16 %v220
    %v1593 = vunpack.c.l.b16 %v221
    %v1594 = vunpack.c.h.b16 %v221
    %v1595 = vunpack.c.l.b16 %v222
    %v1596 = vunpack.c.h.b16 %v222
    %v1597 = vunpack.c.l.b16 %v223
    %v1598 = vunpack.c.h.b16 %v223
    %v1599 = vunpack.c.l.b16 %v224
    %v1600 = vunpack.c.h.b16 %v224
    %v1601 = vunpack.c.l.b16 %v225
    %v1602 = vunpack.c.h.b16 %v225
    %v1603 = vunpack.c.l.b16 %v226
    %v1604 = vunpack.c.h.b16 %v226
    %v1605 = vunpack.c.l.b16 %v227
    %v1606 = vunpack.c.h.b16 %v227
    %v1607 = vunpack.c.l.b16 %v228
    %v1608 = vunpack.c.h.b16 %v228
    %v1609 = vunpack.c.l.b16 %v229
    %v1610 = vunpack.c.h.b16 %v229
    %v1611 = vunpack.c.l.b16 %v230
    %v1612 = vunpack.c.h.b16 %v230
    %v1613 = vunpack.c.l.b16 %v231
    %v1614 = vunpack.c.h.b16 %v231
    %v1615 = vunpack.c.l.b16 %v232
    %v1616 = vunpack.c.h.b16 %v232
    %v1617 = vunpack.c.l.b16 %v233
    %v1618 = vunpack.c.h.b16 %v233
    %v1619 = vunpack.c.l.b16 %v234
    %v1620 = vunpack.c.h.b16 %v234
    %v1621 = vunpack.c.l.b16 %v235
    %v1622 = vunpack.c.h.b16 %v235
    %v1623 = vunpack.c.l.b16 %v236
    %v1624 = vunpack.c.h.b16 %v236
    %v1625 = vunpack.c.l.b16 %v237
    %v1626 = vunpack.c.h.b16 %v237
    %v1627 = vunpack.c.l.b16 %v238
    %v1628 = vunpack.c.h.b16 %v238
    %v1629 = vunpack.c.l.b16 %v239
    %v1630 = vunpack.c.h.b16 %v239
    %v1631 = vunpack.c.l.b16 %v240
    %v1632 = vunpack.c.h.b16 %v240
    %v1633 = vunpack.c.l.b16 %v241
    %v1634 = vunpack.c.h.b16 %v241
    %v1635 = vunpack.c.l.b16 %v242
    %v1636 = vunpack.c.h.b16 %v242
    %v1637 = vunpack.c.l.b16 %v243
    %v1638 = vunpack.c.h.b16 %v243
    %v1639 = vunpack.c.l.b16 %v244
    %v1640 = vunpack.c.h.b16 %v244
    %v1641 = vunpack.c.l.b16 %v245
    %v1642 = vunpack.c.h.b16 %v245
    %v1643 = vunpack.c.l.b16 %v246
    %v1644 = vunpack.c.h.b16 %v246
    %v1645 = vunpack.c.l.b16 %v247
    %v1646 = vunpack.c.h.b16 %v247
    %v1647 = vunpack.c.l.b16 %v248
    %v1648 = vunpack.c.h.b16 %v248
    %v1649 = vunpack.c.l.b16 %v249
    %v1650 = vunpack.c.h.b16 %v249
    %v1651 = vunpack.c.l.b16 %v250
    %v1652 = vunpack.c.h.b16 %v250
    %v1653 = vunpack.c.l.b16 %v251
    %v1654 = vunpack.c.h.b16 %v251
    %v1655 = vunpack.c.l.b16 %v252
    %v1656 = vunpack.c.h.b16 %v252
    %v1657 = vunpack.c.l.b16 %v253
    %v1658 = vunpack.c.h.b16 %v253
    %v1659 = vunpack.c.l.b16 %v254
    %v1660 = vunpack.c.h.b16 %v254
    %v1661 = vunpack.c.l.b16 %v255
    %v1662 = vunpack.c.h.b16 %v255
    %v1663 = vunpack.c.l.b16 %v256
    %v1664 = vunpack.c.h.b16 %v256
    %v1665 = vunpack.c.l.b16 %v257
    %v1666 = vunpack.c.h.b16 %v257
    %v1667 = vunpack.c.l.b16 %v258
    %v1668 = vunpack.c.h.b16 %v258
    %v1669 = vunpack.c.l.b16 %v259
    %v1670 = vunpack.c.h.b16 %v259
    %v1671 = vunpack.c.l.b16 %v260
    %v1672 = vunpack.c.h.b16 %v260
    %v1673 = vunpack.c.l.b16 %v261
    %v1674 = vunpack.c.h.b16 %v261
    %v1675 = vunpack.c.l.b16 %v262
    %v1676 = vunpack.c.h.b16 %v262
    %v1677 = vunpack.c.l.b16 %v263
    %v1678 = vunpack.c.h.b16 %v263
    %v1679 = vunpack.c.l.b16 %v264
    %v1680 = vunpack.c.h.b16 %v264
    %v1681 = vunpack.c.l.b16 %v265
    %v1682 = vunpack.c.h.b16 %v265
    %v1683 = vunpack.c.l.b16 %v266
    %v1684 = vunpack.c.h.b16 %v266
    %v1685 = vunpack.c.l.b16 %v267
    %v1686 = vunpack.c.h.b16 %v267
    %v1687 = vunpack.c.l.b16 %v268
    %v1688 = vunpack.c.h.b16 %v268
    %v1689 = vunpack.c.l.b16 %v269
    %v1690 = vunpack.c.h.b16 %v269
    %v1691 = vunpack.c.l.b16 %v270
    %v1692 = vunpack.c.h.b16 %v270
    %v1693 = vunpack.c.l.b16 %v271
    %v1694 = vunpack.c.h.b16 %v271
    %v1695 = vunpack.c.l.b16 %v272
    %v1696 = vunpack.c.h.b16 %v272
    %v1697 = vunpack.c.l.b16 %v273
    %v1698 = vunpack.c.h.b16 %v273
    %v1699 = vunpack.c.l.b16 %v274
    %v1700 = vunpack.c.h.b16 %v274
    %v1701 = vunpack.c.l.b16 %v275
    %v1702 = vunpack.c.h.b16 %v275
    %v1703 = vunpack.c.l.b16 %v276
    %v1704 = vunpack.c.h.b16 %v276
    %v1705 = vunpack.c.l.b16 %v277
    %v1706 = vunpack.c.h.b16 %v277
    %v1707 = vunpack.c.l.b16 %v278
    %v1708 = vunpack.c.h.b16 %v278
    %v1709 = vunpack.c.l.b16 %v279
    %v1710 = vunpack.c.h.b16 %v279
    %v1711 = vunpack.c.l.b16 %v280
    %v1712 = vunpack.c.h.b16 %v280
    %v1713 = vunpack.c.l.b16 %v281
    %v1714 = vunpack.c.h.b16 %v281
    %v1715 = vunpack.c.l.b16 %v282
    %v1716 = vunpack.c.h.b16 %v282
    %v1717 = vunpack.c.l.b16 %v283
    %v1718 = vunpack.c.h.b16 %v283
    %v1719 = vunpack.c.l.b16 %v284
    %v1720 = vunpack.c.h.b16 %v284
    %v1721 = vunpack.c.l.b16 %v285
    %v1722 = vunpack.c.h.b16 %v285
    %v1723 = vunpack.c.l.b16 %v286
    %v1724 = vunpack.c.h.b16 %v286
    %v1725 = vunpack.c.l.b16 %v287
    %v1726 = vunpack.c.h.b16 %v287
    %v1727 = vunpack.c.l.b16 %v288
    %v1728 = vunpack.c.h.b16 %v288
    %v1729 = vunpack.c.l.b16 %v289
    %v1730 = vunpack.c.h.b16 %v289
    %v1731 = vunpack.c.l.b16 %v290
    %v1732 = vunpack.c.h.b16 %v290
    %v1733 = vunpack.c.l.b16 %v291
    %v1734 = vunpack.c.h.b16 %v291
    %v1735 = vunpack.c.l.b16 %v292
    %v1736 = vunpack.c.h.b16 %v292
    %v1737 = vunpack.c.l.b16 %v293
    %v1738 = vunpack.c.h.b16 %v293
    %v1739 = vunpack.c.l.b16 %v294
    %v1740 = vunpack.c.h.b16 %v294
    %v1741 = vunpack.c.l.b16 %v295
    %v1742 = vunpack.c.h.b16 %v295
    %v1743 = vunpack.c.l.b16 %v296
    %v1744 = vunpack.c.h.b16 %v296
    %v1745 = vunpack.c.l.b16 %v297
    %v1746 = vunpack.c.h.b16 %v297
    %v1747 = vunpack.c.l.b16 %v298
    %v1748 = vunpack.c.h.b16 %v298
    %v1749 = vunpack.c.l.b16 %v299
    %v1750 = vunpack.c.h.b16 %v299
    %v1751 = vunpack.c.l.b16 %v300
    %v1752 = vunpack.c.h.b16 %v300
    %v1753 = vunpack.c.l.b16 %v301
    %v1754 = vunpack.c.h.b16 %v301
    %v1755 = vunpack.c.l.b16 %v302
    %v1756 = vunpack.c.h.b16 %v302
    %v1757 = vunpack.c.l.b16 %v303
    %v1758 = vunpack.c.h.b16 %v303
    %v1759 = vunpack.c.l.b16 %v304
    %v1760 = vunpack.c.h.b16 %v304
    %v1761 = vunpack.c.l.b16 %v305
    %v1762 = vunpack.c.h.b16 %v305
    %v1763 = vunpack.c.l.b16 %v306
    %v1764 = vunpack.c.h.b16 %v306
    %v1765 = vunpack.c.l.b16 %v307
    %v1766 = vunpack.c.h.b16 %v307
    %v1767 = vunpack.c.l.b16 %v308
    %v1768 = vunpack.c.h.b16 %v308
    %v1769 = vunpack.c.l.b16 %v309
    %v1770 = vunpack.c.h.b16 %v309
    %v1771 = vunpack.c.l.b16 %v310
    %v1772 = vunpack.c.h.b16 %v310
    %v1773 = vunpack.c.l.b16 %v311
    %v1774 = vunpack.c.h.b16 %v311
    %v1775 = vunpack.c.l.b16 %v312
    %v1776 = vunpack.c.h.b16 %v312
    %v1777 = vunpack.c.l.b16 %v313
    %v1778 = vunpack.c.h.b16 %v313
    %v1779 = vunpack.c.l.b16 %v314
    %v1780 = vunpack.c.h.b16 %v314
    %v1781 = vunpack.c.l.b16 %v315
    %v1782 = vunpack.c.h.b16 %v315
    %v1783 = vunpack.c.l.b16 %v316
    %v1784 = vunpack.c.h.b16 %v316
    %v1785 = vunpack.c.l.b16 %v317
    %v1786 = vunpack.c.h.b16 %v317
    %v1787 = vunpack.c.l.b16 %v318
    %v1788 = vunpack.c.h.b16 %v318
    %v1789 = vunpack.c.l.b16 %v319
    %v1790 = vunpack.c.h.b16 %v319
    %v1791 = vunpack.c.l.b16 %v320
    %v1792 = vunpack.c.h.b16 %v320
    %v1793 = vunpack.c.l.b16 %v321
    %v1794 = vunpack.c.h.b16 %v321
    %v1795 = vunpack.c.l.b16 %v322
    %v1796 = vunpack.c.h.b16 %v322
    %v1797 = vunpack.c.l.b16 %v323
    %v1798 = vunpack.c.h.b16 %v323
    %v1799 = vunpack.c.l.b16 %v324
    %v1800 = vunpack.c.h.b16 %v324
    %v1801 = vunpack.c.l.b16 %v325
    %v1802 = vunpack.c.h.b16 %v325
    %v1803 = vunpack.c.l.b16 %v326
    %v1804 = vunpack.c.h.b16 %v326
    %v1805 = vunpack.c.l.b16 %v327
    %v1806 = vunpack.c.h.b16 %v327
    %v1807 = vunpack.c.l.b16 %v328
    %v1808 = vunpack.c.h.b16 %v328
    %v1809 = vunpack.c.l.b16 %v329
    %v1810 = vunpack.c.h.b16 %v329
    %v1811 = vunpack.c.l.b16 %v330
    %v1812 = vunpack.c.h.b16 %v330
    %v1813 = vunpack.c.l.b16 %v331
    %v1814 = vunpack.c.h.b16 %v331
    %v1815 = vunpack.c.l.b16 %v332
    %v1816 = vunpack.c.h.b16 %v332
    %v1817 = vunpack.c.l.b16 %v333
    %v1818 = vunpack.c.h.b16 %v333
    %v1819 = vunpack.c.l.b16 %v334
    %v1820 = vunpack.c.h.b16 %v334
    %v1821 = vunpack.c.l.b16 %v335
    %v1822 = vunpack.c.h.b16 %v335
    %v1823 = vunpack.c.l.b16 %v336
    %v1824 = vunpack.c.h.b16 %v336
    %v1825 = vunpack.c.l.b16 %v337
    %v1826 = vunpack.c.h.b16 %v337
    %v1827 = vunpack.c.l.b16 %v338
    %v1828 = vunpack.c.h.b16 %v338
    %v1829 = vunpack.c.l.b16 %v339
    %v1830 = vunpack.c.h.b16 %v339
    %v1831 = vunpack.c.l.b16 %v340
    %v1832 = vunpack.c.h.b16 %v340
    %v1833 = vunpack.c.l.b16 %v341
    %v1834 = vunpack.c.h.b16 %v341
    %v1835 = vunpack.c.l.b16 %v342
    %v1836 = vunpack.c.h.b16 %v342
    %v1837 = vunpack.c.l.b16 %v343
    %v1838 = vunpack.c.h.b16 %v343
    %v1839 = vunpack.c.l.b16 %v344
    %v1840 = vunpack.c.h.b16 %v344
    %v1841 = vunpack.c.l.b16 %v345
    %v1842 = vunpack.c.h.b16 %v345
    %v1843 = vunpack.c.l.b16 %v346
    %v1844 = vunpack.c.h.b16 %v346
    %v1845 = vunpack.c.l.b16 %v347
    %v1846 = vunpack.c.h.b16 %v347
    %v1847 = vunpack.c.l.b16 %v348
    %v1848 = vunpack.c.h.b16 %v348
    %v1849 = vunpack.c.l.b16 %v349
    %v1850 = vunpack.c.h.b16 %v349
    %v1851 = vunpack.c.l.b16 %v350
    %v1852 = vunpack.c.h.b16 %v350
    %v1853 = vunpack.c.l.b16 %v351
    %v1854 = vunpack.c.h.b16 %v351
    %v1855 = vunpack.c.l.b16 %v352
    %v1856 = vunpack.c.h.b16 %v352
    %v1857 = vunpack.c.l.b16 %v353
    %v1858 = vunpack.c.h.b16 %v353
    %v1859 = vunpack.c.l.b16 %v354
    %v1860 = vunpack.c.h.b16 %v354
    %v1861 = vunpack.c.l.b16 %v355
    %v1862 = vunpack.c.h.b16 %v355
    %v1863 = vunpack.c.l.b16 %v356
    %v1864 = vunpack.c.h.b16 %v356
    %v1865 = vunpack.c.l.b16 %v357
    %v1866 = vunpack.c.h.b16 %v357
    %v1867 = vunpack.c.l.b16 %v358
    %v1868 = vunpack.c.h.b16 %v358
    %v1869 = vunpack.c.l.b16 %v359
    %v1870 = vunpack.c.h.b16 %v359
    %v1871 = vunpack.c.l.b16 %v360
    %v1872 = vunpack.c.h.b16 %v360
    %v1873 = vunpack.c.l.b16 %v361
    %v1874 = vunpack.c.h.b16 %v361
    %v1875 = vunpack.c.l.b16 %v362
    %v1876 = vunpack.c.h.b16 %v362
    %v1877 = vunpack.c.l.b16 %v363
    %v1878 = vunpack.c.h.b16 %v363
    %v1879 = vunpack.c.l.b16 %v364
    %v1880 = vunpack.c.h.b16 %v364
    %v1881 = vunpack.c.l.b16 %v365
    %v1882 = vunpack.c.h.b16 %v365
    %v1883 = vunpack.c.l.b16 %v366
    %v1884 = vunpack.c.h.b16 %v366
    %v1885 = vunpack.c.l.b16 %v367
    %v1886 = vunpack.c.h.b16 %v367
    %v1887 = vunpack.c.l.b16 %v368
    %v1888 = vunpack.c.h.b16 %v368
    %v1889 = vunpack.c.l.b16 %v369
    %v1890 = vunpack.c.h.b16 %v369
    %v1891 = vunpack.c.l.b16 %v370
    %v1892 = vunpack.c.h.b16 %v370
    %v1893 = vunpack.c.l.b16 %v371
    %v1894 = vunpack.c.h.b16 %v371
    %v1895 = vunpack.c.l.b16 %v372
    %v1896 = vunpack.c.h.b16 %v372
    %v1897 = vunpack.c.l.b16 %v373
    %v1898 = vunpack.c.h.b16 %v373
    %v1899 = vunpack.c.l.b16 %v374
    %v1900 = vunpack.c.h.b16 %v374
    %v1901 = vunpack.c.l.b16 %v375
    %v1902 = vunpack.c.h.b16 %v375
    %v1903 = vunpack.c.l.b16 %v376
    %v1904 = vunpack.c.h.b16 %v376
    %v1905 = vunpack.c.l.b16 %v377
    %v1906 = vunpack.c.h.b16 %v377
    %v1907 = vunpack.c.l.b16 %v378
    %v1908 = vunpack.c.h.b16 %v378
    %v1909 = vunpack.c.l.b16 %v379
    %v1910 = vunpack.c.h.b16 %v379
    %v1911 = vunpack.c.l.b16 %v380
    %v1912 = vunpack.c.h.b16 %v380
    %v1913 = vunpack.c.l.b16 %v381
    %v1914 = vunpack.c.h.b16 %v381
    %v1915 = vunpack.c.l.b16 %v382
    %v1916 = vunpack.c.h.b16 %v382
    %v1917 = vunpack.c.l.b16 %v383
    %v1918 = vunpack.c.h.b16 %v383
    %v1919 = vunpack.c.l.b16 %v384
    %v1920 = vunpack.c.h.b16 %v384
    %v1921 = vunpack.c.l.b16 %v385
    %v1922 = vunpack.c.h.b16 %v385
    %v1923 = vunpack.c.l.b16 %v386
    %v1924 = vunpack.c.h.b16 %v386
    %v1925 = vunpack.c.l.b16 %v387
    %v1926 = vunpack.c.h.b16 %v387
    %v1927 = vunpack.c.l.b16 %v388
    %v1928 = vunpack.c.h.b16 %v388
    %v1929 = vunpack.c.l.b16 %v389
    %v1930 = vunpack.c.h.b16 %v389
    %v1931 = vunpack.c.l.b16 %v390
    %v1932 = vunpack.c.h.b16 %v390
    %v1933 = vunpack.c.l.b16 %v391
    %v1934 = vunpack.c.h.b16 %v391
    %v1935 = vunpack.c.l.b16 %v392
    %v1936 = vunpack.c.h.b16 %v392
    %v1937 = vunpack.c.l.b16 %v393
    %v1938 = vunpack.c.h.b16 %v393
    %v1939 = vunpack.c.l.b16 %v394
    %v1940 = vunpack.c.h.b16 %v394
    %v1941 = vunpack.c.l.b16 %v395
    %v1942 = vunpack.c.h.b16 %v395
    %v1943 = vunpack.c.l.b16 %v396
    %v1944 = vunpack.c.h.b16 %v396
    %v1945 = vunpack.c.l.b16 %v397
    %v1946 = vunpack.c.h.b16 %v397
    %v1947 = vunpack.c.l.b16 %v398
    %v1948 = vunpack.c.h.b16 %v398
    %v1949 = vunpack.c.l.b16 %v399
    %v1950 = vunpack.c.h.b16 %v399
    %v1951 = vunpack.c.l.b16 %v400
    %v1952 = vunpack.c.h.b16 %v400
    %v1953 = vunpack.c.l.b16 %v401
    %v1954 = vunpack.c.h.b16 %v401
    %v1955 = vunpack.c.l.b16 %v402
    %v1956 = vunpack.c.h.b16 %v402
    %v1957 = vunpack.c.l.b16 %v403
    %v1958 = vunpack.c.h.b16 %v403
    %v1959 = vunpack.c.l.b16 %v404
    %v1960 = vunpack.c.h.b16 %v404
    %v1961 = vunpack.c.l.b16 %v405
    %v1962 = vunpack.c.h.b16 %v405
    %v1963 = vunpack.c.l.b16 %v406
    %v1964 = vunpack.c.h.b16 %v406
    %v1965 = vunpack.c.l.b16 %v407
    %v1966 = vunpack.c.h.b16 %v407
    %v1967 = vunpack.c.l.b16 %v408
    %v1968 = vunpack.c.h.b16 %v408
    %v1969 = vunpack.c.l.b16 %v409
    %v1970 = vunpack.c.h.b16 %v409
    %v1971 = vunpack.c.l.b16 %v410
    %v1972 = vunpack.c.h.b16 %v410
    %v1973 = vunpack.c.l.b16 %v411
    %v1974 = vunpack.c.h.b16 %v411
    %v1975 = vunpack.c.l.b16 %v412
    %v1976 = vunpack.c.h.b16 %v412
    %v1977 = vunpack.c.l.b16 %v413
    %v1978 = vunpack.c.h.b16 %v413
    %v1979 = vunpack.c.l.b16 %v414
    %v1980 = vunpack.c.h.b16 %v414
    %v1981 = vunpack.c.l.b16 %v415
    %v1982 = vunpack.c.h.b16 %v415
    %v1983 = vunpack.c.l.b16 %v416
    %v1984 = vunpack.c.h.b16 %v416
    %v1985 = vunpack.c.l.b16 %v417
    %v1986 = vunpack.c.h.b16 %v417
    %v1987 = vunpack.c.l.b16 %v418
    %v1988 = vunpack.c.h.b16 %v418
    %v1989 = vunpack.c.l.b16 %v419
    %v1990 = vunpack.c.h.b16 %v419
    %v1991 = vunpack.c.l.b16 %v420
    %v1992 = vunpack.c.h.b16 %v420
    %v1993 = vunpack.c.l.b16 %v421
    %v1994 = vunpack.c.h.b16 %v421
    %v1995 = vunpack.c.l.b16 %v422
    %v1996 = vunpack.c.h.b16 %v422
    %v1997 = vunpack.c.l.b16 %v423
    %v1998 = vunpack.c.h.b16 %v423
    %v1999 = vunpack.c.l.b16 %v424
    %v2000 = vunpack.c.h.b16 %v424
    %v2001 = vunpack.c.l.b16 %v425
    %v2002 = vunpack.c.h.b16 %v425
    %v2003 = vunpack.c.l.b16 %v426
    %v2004 = vunpack.c.h.b16 %v426
    %v2005 = vunpack.c.l.b16 %v427
    %v2006 = vunpack.c.h.b16 %v427
    %v2007 = vunpack.c.l.b16 %v428
    %v2008 = vunpack.c.h.b16 %v428
    %v2009 = vunpack.c.l.b16 %v429
    %v2010 = vunpack.c.h.b16 %v429
    %v2011 = vunpack.c.l.b16 %v430
    %v2012 = vunpack.c.h.b16 %v430
    %v2013 = vunpack.c.l.b16 %v431
    %v2014 = vunpack.c.h.b16 %v431
    %v2015 = vunpack.c.l.b16 %v432
    %v2016 = vunpack.c.h.b16 %v432
    %v2017 = vunpack.c.l.b16 %v433
    %v2018 = vunpack.c.h.b16 %v433
    %v2019 = vunpack.c.l.b16 %v434
    %v2020 = vunpack.c.h.b16 %v434
    %v2021 = vunpack.c.l.b16 %v435
    %v2022 = vunpack.c.h.b16 %v435
    %v2023 = vunpack.c.l.b16 %v436
    %v2024 = vunpack.c.h.b16 %v436
    %v2025 = vunpack.c.l.b16 %v437
    %v2026 = vunpack.c.h.b16 %v437
    %v2027 = vunpack.c.l.b16 %v438
    %v2028 = vunpack.c.h.b16 %v438
    %v2029 = vunpack.c.l.b16 %v439
    %v2030 = vunpack.c.h.b16 %v439
    %v2031 = vunpack.c.l.b16 %v440
    %v2032 = vunpack.c.h.b16 %v440
    %v2033 = vunpack.c.l.b16 %v441
    %v2034 = vunpack.c.h.b16 %v441
    %v2035 = vunpack.c.l.b16 %v442
    %v2036 = vunpack.c.h.b16 %v442
    %v2037 = vunpack.c.l.b16 %v443
    %v2038 = vunpack.c.h.b16 %v443
    %v2039 = vunpack.c.l.b16 %v444
    %v2040 = vunpack.c.h.b16 %v444
    %v2041 = vunpack.c.l.b16 %v445
    %v2042 = vunpack.c.h.b16 %v445
    %v2043 = vunpack.c.l.b16 %v446
    %v2044 = vunpack.c.h.b16 %v446
    %v2045 = vunpack.c.l.b16 %v447
    %v2046 = vunpack.c.h.b16 %v447
    %v2047 = vunpack.c.l.b16 %v448
    %v2048 = vunpack.c.h.b16 %v448
    %v2049 = vunpack.c.l.b16 %v449
    %v2050 = vunpack.c.h.b16 %v449
    %v2051 = vunpack.c.l.b16 %v450
    %v2052 = vunpack.c.h.b16 %v450
    %v2053 = vunpack.c.l.b16 %v451
    %v2054 = vunpack.c.h.b16 %v451
    %v2055 = vunpack.c.l.b16 %v452
    %v2056 = vunpack.c.h.b16 %v452
    %v2057 = vunpack.c.l.b16 %v453
    %v2058 = vunpack.c.h.b16 %v453
    %v2059 = vunpack.c.l.b16 %v454
    %v2060 = vunpack.c.h.b16 %v454
    %v2061 = vunpack.c.l.b16 %v455
    %v2062 = vunpack.c.h.b16 %v455
    %v2063 = vunpack.c.l.b16 %v456
    %v2064 = vunpack.c.h.b16 %v456
    %v2065 = vunpack.c.l.b16 %v457
    %v2066 = vunpack.c.h.b16 %v457
    %v2067 = vunpack.c.l.b16 %v458
    %v2068 = vunpack.c.h.b16 %v458
    %v2069 = vunpack.c.l.b16 %v459
    %v2070 = vunpack.c.h.b16 %v459
    %v2071 = vunpack.c.l.b16 %v460
    %v2072 = vunpack.c.h.b16 %v460
    %v2073 = vunpack.c.l.b16 %v461
    %v2074 = vunpack.c.h.b16 %v461
    %v2075 = vunpack.c.l.b16 %v462
    %v2076 = vunpack.c.h.b16 %v462
    %v2077 = vunpack.c.l.b16 %v463
    %v2078 = vunpack.c.h.b16 %v463
    %v2079 = vunpack.c.l.b16 %v464
    %v2080 = vunpack.c.h.b16 %v464
    %v2081 = vunpack.c.l.b16 %v465
    %v2082 = vunpack.c.h.b16 %v465
    %v2083 = vunpack.c.l.b16 %v466
    %v2084 = vunpack.c.h.b16 %v466
    %v2085 = vunpack.c.l.b16 %v467
    %v2086 = vunpack.c.h.b16 %v467
    %v2087 = vunpack.c.l.b16 %v468
    %v2088 = vunpack.c.h.b16 %v468
    %v2089 = vunpack.c.l.b16 %v469
    %v2090 = vunpack.c.h.b16 %v469
    %v2091 = vunpack.c.l.b16 %v470
    %v2092 = vunpack.c.h.b16 %v470
    %v2093 = vunpack.c.l.b16 %v471
    %v2094 = vunpack.c.h.b16 %v471
    %v2095 = vunpack.c.l.b16 %v472
    %v2096 = vunpack.c.h.b16 %v472
    %v2097 = vunpack.c.l.b16 %v473
    %v2098 = vunpack.c.h.b16 %v473
    %v2099 = vunpack.c.l.b16 %v474
    %v2100 = vunpack.c.h.b16 %v474
    %v2101 = vunpack.c.l.b16 %v475
    %v2102 = vunpack.c.h.b16 %v475
    %v2103 = vunpack.c.l.b16 %v476
    %v2104 = vunpack.c.h.b16 %v476
    %v2105 = vunpack.c.l.b16 %v477
    %v2106 = vunpack.c.h.b16 %v477
    %v2107 = vunpack.c.l.b16 %v478
    %v2108 = vunpack.c.h.b16 %v478
    %v2109 = vunpack.c.l.b16 %v479
    %v2110 = vunpack.c.h.b16 %v479
    %v2111 = vunpack.c.l.b16 %v480
    %v2112 = vunpack.c.h.b16 %v480
    %v2113 = vunpack.c.l.b16 %v481
    %v2114 = vunpack.c.h.b16 %v481
    %v2115 = vunpack.c.l.b16 %v482
    %v2116 = vunpack.c.h.b16 %v482
    %v2117 = vunpack.c.l.b16 %v483
    %v2118 = vunpack.c.h.b16 %v483
    %v2119 = vunpack.c.l.b16 %v484
    %v2120 = vunpack.c.h.b16 %v484
    %v2121 = vunpack.c.l.b16 %v485
    %v2122 = vunpack.c.h.b16 %v485
    %v2123 = vunpack.c.l.b16 %v486
    %v2124 = vunpack.c.h.b16 %v486
    %v2125 = vunpack.c.l.b16 %v487
    %v2126 = vunpack.c.h.b16 %v487
    %v2127 = vunpack.c.l.b16 %v488
    %v2128 = vunpack.c.h.b16 %v488
    %v2129 = vunpack.c.l.b16 %v489
    %v2130 = vunpack.c.h.b16 %v489
    %v2131 = vunpack.c.l.b16 %v490
    %v2132 = vunpack.c.h.b16 %v490
    %v2133 = vunpack.c.l.b16 %v491
    %v2134 = vunpack.c.h.b16 %v491
    %v2135 = vunpack.c.l.b16 %v492
    %v2136 = vunpack.c.h.b16 %v492
    %v2137 = vunpack.c.l.b16 %v493
    %v2138 = vunpack.c.h.b16 %v493
    %v2139 = vunpack.c.l.b16 %v494
    %v2140 = vunpack.c.h.b16 %v494
    %v2141 = vunpack.c.l.b16 %v495
    %v2142 = vunpack.c.h.b16 %v495
    %v2143 = vunpack.c.l.b16 %v496
    %v2144 = vunpack.c.h.b16 %v496
    %v2145 = vunpack.c.l.b16 %v497
    %v2146 = vunpack.c.h.b16 %v497
    %v2147 = vunpack.c.l.b16 %v498
    %v2148 = vunpack.c.h.b16 %v498
    %v2149 = vunpack.c.l.b16 %v499
    %v2150 = vunpack.c.h.b16 %v499
    %v2151 = vunpack.c.l.b16 %v500
    %v2152 = vunpack.c.h.b16 %v500
    %v2153 = vunpack.c.l.b16 %v501
    %v2154 = vunpack.c.h.b16 %v501
    %v2155 = vunpack.c.l.b16 %v502
    %v2156 = vunpack.c.h.b16 %v502
    %v2157 = vunpack.c.l.b16 %v503
    %v2158 = vunpack.c.h.b16 %v503
    %v2159 = vunpack.c.l.b16 %v504
    %v2160 = vunpack.c.h.b16 %v504
    %v2161 = vunpack.c.l.b16 %v505
    %v2162 = vunpack.c.h.b16 %v505
    %v2163 = vunpack.c.l.b16 %v506
    %v2164 = vunpack.c.h.b16 %v506
    %v2165 = vunpack.c.l.b16 %v507
    %v2166 = vunpack.c.h.b16 %v507
    %v2167 = vunpack.c.l.b16 %v508
    %v2168 = vunpack.c.h.b16 %v508
    %v2169 = vunpack.c.l.b16 %v509
    %v2170 = vunpack.c.h.b16 %v509
    %v2171 = vunpack.c.l.b16 %v510
    %v2172 = vunpack.c.h.b16 %v510
    %v2173 = vunpack.c.l.b16 %v511
    %v2174 = vunpack.c.h.b16 %v511
    %v2175 = vunpack.c.l.b16 %v512
    %v2176 = vunpack.c.h.b16 %v512
    %v2177 = vunpack.c.l.b16 %v513
    %v2178 = vunpack.c.h.b16 %v513
    %v2179 = vunpack.c.l.b16 %v514
    %v2180 = vunpack.c.h.b16 %v514
    %v2181 = vunpack.c.l.b16 %v515
    %v2182 = vunpack.c.h.b16 %v515
    %v2183 = vunpack.c.l.b16 %v516
    %v2184 = vunpack.c.h.b16 %v516
    %v2185 = vunpack.c.l.b16 %v517
    %v2186 = vunpack.c.h.b16 %v517
    %v2187 = vunpack.c.l.b16 %v518
    %v2188 = vunpack.c.h.b16 %v518
    %v2189 = vunpack.c.l.b16 %v519
    %v2190 = vunpack.c.h.b16 %v519
    %v2191 = vunpack.c.l.b16 %v520
    %v2192 = vunpack.c.h.b16 %v520
    %v2193 = vunpack.c.l.b16 %v521
    %v2194 = vunpack.c.h.b16 %v521
    %v2195 = vunpack.c.l.b16 %v522
    %v2196 = vunpack.c.h.b16 %v522
    %v2197 = vunpack.c.l.b16 %v523
    %v2198 = vunpack.c.h.b16 %v523
    %v2199 = vunpack.c.l.b16 %v524
    %v2200 = vunpack.c.h.b16 %v524
    %v2201 = vunpack.c.l.b16 %v525
    %v2202 = vunpack.c.h.b16 %v525
    %v2203 = vunpack.c.l.b16 %v526
    %v2204 = vunpack.c.h.b16 %v526
    %v2205 = vunpack.c.l.b16 %v527
    %v2206 = vunpack.c.h.b16 %v527
    %v2207 = vunpack.c.l.b16 %v528
    %v2208 = vunpack.c.h.b16 %v528
    %v2209 = vunpack.c.l.b16 %v529
    %v2210 = vunpack.c.h.b16 %v529
    %v2211 = vunpack.c.l.b16 %v530
    %v2212 = vunpack.c.h.b16 %v530
    %v2213 = vunpack.c.l.b16 %v531
    %v2214 = vunpack.c.h.b16 %v531
    %v2215 = vunpack.c.l.b16 %v532
    %v2216 = vunpack.c.h.b16 %v532
    %v2217 = vunpack.c.l.b16 %v533
    %v2218 = vunpack.c.h.b16 %v533
    %v2219 = vunpack.c.l.b16 %v534
    %v2220 = vunpack.c.h.b16 %v534
    %v2221 = vunpack.c.l.b16 %v535
    %v2222 = vunpack.c.h.b16 %v535
    %v2223 = vunpack.c.l.b16 %v536
    %v2224 = vunpack.c.h.b16 %v536
    %v2225 = vunpack.c.l.b16 %v537
    %v2226 = vunpack.c.h.b16 %v537
    %v2227 = vunpack.c.l.b16 %v538
    %v2228 = vunpack.c.h.b16 %v538
    %v2229 = vunpack.c.l.b16 %v539
    %v2230 = vunpack.c.h.b16 %v539
    %v2231 = vunpack.c.l.b16 %v540
    %v2232 = vunpack.c.h.b16 %v540
    %v2233 = vunpack.c.l.b16 %v541
    %v2234 = vunpack.c.h.b16 %v541
    %v2235 = vunpack.c.l.b16 %v542
    %v2236 = vunpack.c.h.b16 %v542
    %v2237 = vunpack.c.l.b16 %v543
    %v2238 = vunpack.c.h.b16 %v543
    %v2239 = vunpack.c.l.b16 %v544
    %v2240 = vunpack.c.h.b16 %v544
    %v2241 = vunpack.c.l.b16 %v545
    %v2242 = vunpack.c.h.b16 %v545
    %v2243 = vunpack.c.l.b16 %v546
    %v2244 = vunpack.c.h.b16 %v546
    %v2245 = vunpack.c.l.b16 %v547
    %v2246 = vunpack.c.h.b16 %v547
    %v2247 = vunpack.c.l.b16 %v548
    %v2248 = vunpack.c.h.b16 %v548
    %v2249 = vunpack.c.l.b16 %v549
    %v2250 = vunpack.c.h.b16 %v549
    %v2251 = vunpack.c.l.b16 %v550
    %v2252 = vunpack.c.h.b16 %v550
    %v2253 = vunpack.c.l.b16 %v551
    %v2254 = vunpack.c.h.b16 %v551
    %v2255 = vunpack.c.l.b16 %v552
    %v2256 = vunpack.c.h.b16 %v552
    %v2257 = vunpack.c.l.b16 %v553
    %v2258 = vunpack.c.h.b16 %v553
    %v2259 = vunpack.c.l.b16 %v554
    %v2260 = vunpack.c.h.b16 %v554
    %v2261 = vunpack.c.l.b16 %v555
    %v2262 = vunpack.c.h.b16 %v555
    %v2263 = vunpack.c.l.b16 %v556
    %v2264 = vunpack.c.h.b16 %v556
    %v2265 = vunpack.c.l.b16 %v557
    %v2266 = vunpack.c.h.b16 %v557
    %v2267 = vunpack.c.l.b16 %v558
    %v2268 = vunpack.c.h.b16 %v558
    %v2269 = vunpack.c.l.b16 %v559
    %v2270 = vunpack.c.h.b16 %v559
    %v2271 = vunpack.c.l.b16 %v560
    %v2272 = vunpack.c.h.b16 %v560
    %v2273 = vunpack.c.l.b16 %v561
    %v2274 = vunpack.c.h.b16 %v561
    %v2275 = vunpack.c.l.b16 %v562
    %v2276 = vunpack.c.h.b16 %v562
    %v2277 = vunpack.c.l.b16 %v563
    %v2278 = vunpack.c.h.b16 %v563
    %v2279 = vunpack.c.l.b16 %v564
    %v2280 = vunpack.c.h.b16 %v564
    %v2281 = vunpack.c.l.b16 %v565
    %v2282 = vunpack.c.h.b16 %v565
    %v2283 = vunpack.c.l.b16 %v566
    %v2284 = vunpack.c.h.b16 %v566
    %v2285 = vunpack.c.l.b16 %v567
    %v2286 = vunpack.c.h.b16 %v567
    %v2287 = vunpack.c.l.b16 %v568
    %v2288 = vunpack.c.h.b16 %v568
    %v2289 = vunpack.c.l.b16 %v569
    %v2290 = vunpack.c.h.b16 %v569
    %v2291 = vunpack.c.l.b16 %v570
    %v2292 = vunpack.c.h.b16 %v570
    %v2293 = vunpack.c.l.b16 %v571
    %v2294 = vunpack.c.h.b16 %v571
    %v2295 = vunpack.c.l.b16 %v572
    %v2296 = vunpack.c.h.b16 %v572
    %v2297 = vunpack.c.l.b16 %v573
    %v2298 = vunpack.c.h.b16 %v573
    %v2299 = vunpack.c.l.b16 %v574
    %v2300 = vunpack.c.h.b16 %v574
    %v2301 = vunpack.c.l.b16 %v575
    %v2302 = vunpack.c.h.b16 %v575
    %v2303 = vunpack.c.l.b16 %v576
    %v2304 = vunpack.c.h.b16 %v576
    %v2305 = vunpack.c.l.b16 %v577
    %v2306 = vunpack.c.h.b16 %v577
    %v2307 = vunpack.c.l.b16 %v578
    %v2308 = vunpack.c.h.b16 %v578
    %v2309 = vunpack.c.l.b16 %v579
    %v2310 = vunpack.c.h.b16 %v579
    %v2311 = vunpack.c.l.b16 %v580
    %v2312 = vunpack.c.h.b16 %v580
    %v2313 = vunpack.c.l.b16 %v581
    %v2314 = vunpack.c.h.b16 %v581
    %v2315 = vunpack.c.l.b16 %v582
    %v2316 = vunpack.c.h.b16 %v582
    %v2317 = vunpack.c.l.b16 %v583
    %v2318 = vunpack.c.h.b16 %v583
    %v2319 = vunpack.c.l.b16 %v584
    %v2320 = vunpack.c.h.b16 %v584
    %v2321 = vunpack.c.l.b16 %v585
    %v2322 = vunpack.c.h.b16 %v585
    %v2323 = vunpack.c.l.b16 %v586
    %v2324 = vunpack.c.h.b16 %v586
    %v2325 = vunpack.c.l.b16 %v587
    %v2326 = vunpack.c.h.b16 %v587
    %v2327 = vunpack.c.l.b16 %v588
    %v2328 = vunpack.c.h.b16 %v588
    %v2329 = vunpack.c.l.b16 %v589
    %v2330 = vunpack.c.h.b16 %v589
    %v2331 = vunpack.c.l.b16 %v590
    %v2332 = vunpack.c.h.b16 %v590
    %v2333 = vunpack.c.l.b16 %v591
    %v2334 = vunpack.c.h.b16 %v591
    %v2335 = vunpack.c.l.b16 %v592
    %v2336 = vunpack.c.h.b16 %v592
    %v2337 = vunpack.c.l.b16 %v593
    %v2338 = vunpack.c.h.b16 %v593
    %v2339 = vunpack.c.l.b16 %v594
    %v2340 = vunpack.c.h.b16 %v594
    %v2341 = vunpack.c.l.b16 %v595
    %v2342 = vunpack.c.h.b16 %v595
    %v2343 = vunpack.c.l.b16 %v596
    %v2344 = vunpack.c.h.b16 %v596
    %v2345 = vunpack.c.l.b16 %v597
    %v2346 = vunpack.c.h.b16 %v597
    %v2347 = vunpack.c.l.b16 %v598
    %v2348 = vunpack.c.h.b16 %v598
    %v2349 = vunpack.c.l.b16 %v599
    %v2350 = vunpack.c.h.b16 %v599
    %v2351 = vunpack.c.l.b16 %v600
    %v2352 = vunpack.c.h.b16 %v600
    %v2353 = vunpack.c.l.b16 %v601
    %v2354 = vunpack.c.h.b16 %v601
    %v2355 = vunpack.c.l.b16 %v602
    %v2356 = vunpack.c.h.b16 %v602
    %v2357 = vunpack.c.l.b16 %v603
    %v2358 = vunpack.c.h.b16 %v603
    %v2359 = vunpack.c.l.b16 %v604
    %v2360 = vunpack.c.h.b16 %v604
    %v2361 = vunpack.c.l.b16 %v605
    %v2362 = vunpack.c.h.b16 %v605
    %v2363 = vunpack.c.l.b16 %v606
    %v2364 = vunpack.c.h.b16 %v606
    %v2365 = vunpack.c.l.b16 %v607
    %v2366 = vunpack.c.h.b16 %v607
    %v2367 = vunpack.c.l.b16 %v608
    %v2368 = vunpack.c.h.b16 %v608
    %v2369 = vunpack.c.l.b16 %v609
    %v2370 = vunpack.c.h.b16 %v609
    %v2371 = vunpack.c.l.b16 %v610
    %v2372 = vunpack.c.h.b16 %v610
    %v2373 = vunpack.c.l.b16 %v611
    %v2374 = vunpack.c.h.b16 %v611
    %v2375 = vunpack.c.l.b16 %v612
    %v2376 = vunpack.c.h.b16 %v612
    %v2377 = vunpack.c.l.b16 %v613
    %v2378 = vunpack.c.h.b16 %v613
    %v2379 = vunpack.c.l.b16 %v614
    %v2380 = vunpack.c.h.b16 %v614
    %v2381 = vunpack.c.l.b16 %v615
    %v2382 = vunpack.c.h.b16 %v615
    %v2383 = vunpack.c.l.b16 %v616
    %v2384 = vunpack.c.h.b16 %v616
    %v2385 = vunpack.c.l.b16 %v617
    %v2386 = vunpack.c.h.b16 %v617
    %v2387 = vunpack.c.l.b16 %v618
    %v2388 = vunpack.c.h.b16 %v618
    %v2389 = vunpack.c.l.b16 %v619
    %v2390 = vunpack.c.h.b16 %v619
    %v2391 = vunpack.c.l.b16 %v620
    %v2392 = vunpack.c.h.b16 %v620
    %v2393 = vunpack.c.l.b16 %v621
    %v2394 = vunpack.c.h.b16 %v621
    %v2395 = vunpack.c.l.b16 %v622
    %v2396 = vunpack.c.h.b16 %v622
    %v2397 = vunpack.c.l.b16 %v623
    %v2398 = vunpack.c.h.b16 %v623
    %v2399 = vunpack.c.l.b16 %v624
    %v2400 = vunpack.c.h.b16 %v624
    %v2401 = vunpack.c.l.b16 %v625
    %v2402 = vunpack.c.h.b16 %v625
    %v2403 = vunpack.c.l.b16 %v626
    %v2404 = vunpack.c.h.b16 %v626
    %v2405 = vunpack.c.l.b16 %v627
    %v2406 = vunpack.c.h.b16 %v627
    %v2407 = vunpack.c.l.b16 %v628
    %v2408 = vunpack.c.h.b16 %v628
    %v2409 = vpack.c.b16 %v1401, %v1385
    %v2410 = vpack.c.b16 %v1402, %v1386
    %v2411 = vpack.c.b16 %v1403, %v1387
    %v2412 = vpack.c.b16 %v1404, %v1388
    %v2413 = vpack.c.b16 %v1405, %v1389
    %v2414 = vpack.c.b16 %v1406, %v1390
    %v2415 = vpack.c.b16 %v1407, %v1391
    %v2416 = vpack.c.b16 %v1408, %v1392
    %v2417 = vpack.c.b16 %v1409, %v1393
    %v2418 = vpack.c.b16 %v1410, %v1394
    %v2419 = vpack.c.b16 %v1411, %v1395
    %v2420 = vpack.c.b16 %v1412, %v1396
    %v2421 = vpack.c.b16 %v1413, %v1397
    %v2422 = vpack.c.b16 %v1414, %v1398
    %v2423 = vpack.c.b16 %v1415, %v1399
    %v2424 = vpack.c.b16 %v1416, %v1400
    %v2425 = vpack.c.b16 %v1433, %v1417
    %v2426 = vpack.c.b16 %v1434, %v1418
    %v2427 = vpack.c.b16 %v1435, %v1419
    %v2428 = vpack.c.b16 %v1436, %v1420
    %v2429 = vpack.c.b16 %v1437, %v1421
    %v2430 = vpack.c.b16 %v1438, %v1422
    %v2431 = vpack.c.b16 %v1439, %v1423
    %v2432 = vpack.c.b16 %v1440, %v1424
    %v2433 = vpack.c.b16 %v1441, %v1425
    %v2434 = vpack.c.b16 %v1442, %v1426
    %v2435 = vpack.c.b16 %v1443, %v1427
    %v2436 = vpack.c.b16 %v1444, %v1428
    %v2437 = vpack.c.b16 %v1445, %v1429
    %v2438 = vpack.c.b16 %v1446, %v1430
    %v2439 = vpack.c.b16 %v1447, %v1431
    %v2440 = vpack.c.b16 %v1448, %v1432
    %v2441 = vpack.c.b16 %v1465, %v1449
    %v2442 = vpack.c.b16 %v1466, %v1450
    %v2443 = vpack.c.b16 %v1467, %v1451
    %v2444 = vpack.c.b16 %v1468, %v1452
    %v2445 = vpack.c.b16 %v1469, %v1453
    %v2446 = vpack.c.b16 %v1470, %v1454
    %v2447 = vpack.c.b16 %v1471, %v1455
    %v2448 = vpack.c.b16 %v1472, %v1456
    %v2449 = vpack.c.b16 %v1473, %v1457
    %v2450 = vpack.c.b16 %v1474, %v1458
    %v2451 = vpack.c.b16 %v1475, %v1459
    %v2452 = vpack.c.b16 %v1476, %v1460
    %v2453 = vpack.c.b16 %v1477, %v1461
    %v2454 = vpack.c.b16 %v1478, %v1462
    %v2455 = vpack.c.b16 %v1479, %v1463
    %v2456 = vpack.c.b16 %v1480, %v1464
    %v2457 = vpack.c.b16 %v1497, %v1481
    %v2458 = vpack.c.b16 %v1498, %v1482
    %v2459 = vpack.c.b16 %v1499, %v1483
    %v2460 = vpack.c.b16 %v1500, %v1484
    %v2461 = vpack.c.b16 %v1501, %v1485
    %v2462 = vpack.c.b16 %v1502, %v1486
    %v2463 = vpack.c.b16 %v1503, %v1487
    %v2464 = vpack.c.b16 %v1504, %v1488
    %v2465 = vpack.c.b16 %v1505, %v1489
    %v2466 = vpack.c.b16 %v1506, %v1490
    %v2467 = vpack.c.b16 %v1507, %v1491
    %v2468 = vpack.c.b16 %v1508, %v1492
    %v2469 = vpack.c.b16 %v1509, %v1493
    %v2470 = vpack.c.b16 %v1510, %v1494
    %v2471 = vpack.c.b16 %v1511, %v1495
    %v2472 = vpack.c.b16 %v1512, %v1496
    %v2473 = vpack.c.b16 %v1529, %v1513
    %v2474 = vpack.c.b16 %v1530, %v1514
    %v2475 = vpack.c.b16 %v1531, %v1515
    %v2476 = vpack.c.b16 %v1532, %v1516
    %v2477 = vpack.c.b16 %v1533, %v1517
    %v2478 = vpack.c.b16 %v1534, %v1518
    %v2479 = vpack.c.b16 %v1535, %v1519
    %v2480 = vpack.c.b16 %v1536, %v1520
    %v2481 = vpack.c.b16 %v1537, %v1521
    %v2482 = vpack.c.b16 %v1538, %v1522
    %v2483 = vpack.c.b16 %v1539, %v1523
    %v2484 = vpack.c.b16 %v1540, %v1524
    %v2485 = vpack.c.b16 %v1541, %v1525
    %v2486 = vpack.c.b16 %v1542, %v1526
    %v2487 = vpack.c.b16 %v1543, %v1527
    %v2488 = vpack.c.b16 %v1544, %v1528
    %v2489 = vpack.c.b16 %v1561, %v1545
    %v2490 = vpack.c.b16 %v1562, %v1546
    %v2491 = vpack.c.b16 %v1563, %v1547
    %v2492 = vpack.c.b16 %v1564, %v1548
    %v2493 = vpack.c.b16 %v1565, %v1549
    %v2494 = vpack.c.b16 %v1566, %v1550
    %v2495 = vpack.c.b16 %v1567, %v1551
    %v2496 = vpack.c.b16 %v1568, %v1552
    %v2497 = vpack.c.b16 %v1569, %v1553
    %v2498 = vpack.c.b16 %v1570, %v1554
    %v2499 = vpack.c.b16 %v1571, %v1555
    %v2500 = vpack.c.b16 %v1572, %v1556
    %v2501 = vpack.c.b16 %v1573, %v1557
    %v2502 = vpack.c.b16 %v1574, %v1558
    %v2503 = vpack.c.b16 %v1575, %v1559
    %v2504 = vpack.c.b16 %v1576, %v1560
    %v2505 = vpack.c.b16 %v1593, %v1577
    %v2506 = vpack.c.b16 %v1594, %v1578
    %v2507 = vpack.c.b16 %v1595, %v1579
    %v2508 = vpack.c.b16 %v1596, %v1580
    %v2509 = vpack.c.b16 %v1597, %v1581
    %v2510 = vpack.c.b16 %v1598, %v1582
    %v2511 = vpack.c.b16 %v1599, %v1583
    %v2512 = vpack.c.b16 %v1600, %v1584
    %v2513 = vpack.c.b16 %v1601, %v1585
    %v2514 = vpack.c.b16 %v1602, %v1586
    %v2515 = vpack.c.b16 %v1603, %v1587
    %v2516 = vpack.c.b16 %v1604, %v1588
    %v2517 = vpack.c.b16 %v1605, %v1589
    %v2518 = vpack.c.b16 %v1606, %v1590
    %v2519 = vpack.c.b16 %v1607, %v1591
    %v2520 = vpack.c.b16 %v1608, %v1592
    %v2521 = vpack.c.b16 %v1625, %v1609
    %v2522 = vpack.c.b16 %v1626, %v1610
    %v2523 = vpack.c.b16 %v1627, %v1611
    %v2524 = vpack.c.b16 %v1628, %v1612
    %v2525 = vpack.c.b16 %v1629, %v1613
    %v2526 = vpack.c.b16 %v1630, %v1614
    %v2527 = vpack.c.b16 %v1631, %v1615
    %v2528 = vpack.c.b16 %v1632, %v1616
    %v2529 = vpack.c.b16 %v1633, %v1617
    %v2530 = vpack.c.b16 %v1634, %v1618
    %v2531 = vpack.c.b16 %v1635, %v1619
    %v2532 = vpack.c.b16 %v1636, %v1620
    %v2533 = vpack.c.b16 %v1637, %v1621
    %v2534 = vpack.c.b16 %v1638, %v1622
    %v2535 = vpack.c.b16 %v1639, %v1623
    %v2536 = vpack.c.b16 %v1640, %v1624
    %v2537 = vpack.c.b16 %v1657, %v1641
    %v2538 = vpack.c.b16 %v1658, %v1642
    %v2539 = vpack.c.b16 %v1659, %v1643
    %v2540 = vpack.c.b16 %v1660, %v1644
    %v2541 = vpack.c.b16 %v1661, %v1645
    %v2542 = vpack.c.b16 %v1662, %v1646
    %v2543 = vpack.c.b16 %v1663, %v1647
    %v2544 = vpack.c.b16 %v1664, %v1648
    %v2545 = vpack.c.b16 %v1665, %v1649
    %v2546 = vpack.c.b16 %v1666, %v1650
    %v2547 = vpack.c.b16 %v1667, %v1651
    %v2548 = vpack.c.b16 %v1668, %v1652
    %v2549 = vpack.c.b16 %v1669, %v1653
    %v2550 = vpack.c.b16 %v1670, %v1654
    %v2551 = vpack.c.b16 %v1671, %v1655
    %v2552 = vpack.c.b16 %v1672, %v1656
    %v2553 = vpack.c.b16 %v1689, %v1673
    %v2554 = vpack.c.b16 %v1690, %v1674
    %v2555 = vpack.c.b16 %v1691, %v1675
    %v2556 = vpack.c.b16 %v1692, %v1676
    %v2557 = vpack.c.b16 %v1693, %v1677
    %v2558 = vpack.c.b16 %v1694, %v1678
    %v2559 = vpack.c.b16 %v1695, %v1679
    %v2560 = vpack.c.b16 %v1696, %v1680
    %v2561 = vpack.c.b16 %v1697, %v1681
    %v2562 = vpack.c.b16 %v1698, %v1682
    %v2563 = vpack.c.b16 %v1699, %v1683
    %v2564 = vpack.c.b16 %v1700, %v1684
    %v2565 = vpack.c.b16 %v1701, %v1685
    %v2566 = vpack.c.b16 %v1702, %v1686
    %v2567 = vpack.c.b16 %v1703, %v1687
    %v2568 = vpack.c.b16 %v1704, %v1688
    %v2569 = vpack.c.b16 %v1721, %v1705
    %v2570 = vpack.c.b16 %v1722, %v1706
    %v2571 = vpack.c.b16 %v1723, %v1707
    %v2572 = vpack.c.b16 %v1724, %v1708
    %v2573 = vpack.c.b16 %v1725, %v1709
    %v2574 = vpack.c.b16 %v1726, %v1710
    %v2575 = vpack.c.b16 %v1727, %v1711
    %v2576 = vpack.c.b16 %v1728, %v1712
    %v2577 = vpack.c.b16 %v1729, %v1713
    %v2578 = vpack.c.b16 %v1730, %v1714
    %v2579 = vpack.c.b16 %v1731, %v1715
    %v2580 = vpack.c.b16 %v1732, %v1716
    %v2581 = vpack.c.b16 %v1733, %v1717
    %v2582 = vpack.c.b16 %v1734, %v1718
    %v2583 = vpack.c.b16 %v1735, %v1719
    %v2584 = vpack.c.b16 %v1736, %v1720
    %v2585 = vpack.c.b16 %v1753, %v1737
    %v2586 = vpack.c.b16 %v1754, %v1738
    %v2587 = vpack.c.b16 %v1755, %v1739
    %v2588 = vpack.c.b16 %v1756, %v1740
    %v2589 = vpack.c.b16 %v1757, %v1741
    %v2590 = vpack.c.b16 %v1758, %v1742
    %v2591 = vpack.c.b16 %v1759, %v1743
    %v2592 = vpack.c.b16 %v1760, %v1744
    %v2593 = vpack.c.b16 %v1761, %v1745
    %v2594 = vpack.c.b16 %v1762, %v1746
    %v2595 = vpack.c.b16 %v1763, %v1747
    %v2596 = vpack.c.b16 %v1764, %v1748
    %v2597 = vpack.c.b16 %v1765, %v1749
    %v2598 = vpack.c.b16 %v1766, %v1750
    %v2599 = vpack.c.b16 %v1767, %v1751
    %v2600 = vpack.c.b16 %v1768, %v1752
    %v2601 = vpack.c.b16 %v1785, %v1769
    %v2602 = vpack.c.b16 %v1786, %v1770
    %v2603 = vpack.c.b16 %v1787, %v1771
    %v2604 = vpack.c.b16 %v1788, %v1772
    %v2605 = vpack.c.b16 %v1789, %v1773
    %v2606 = vpack.c.b16 %v1790, %v1774
    %v2607 = vpack.c.b16 %v1791, %v1775
    %v2608 = vpack.c.b16 %v1792, %v1776
    %v2609 = vpack.c.b16 %v1793, %v1777
    %v2610 = vpack.c.b16 %v1794, %v1778
    %v2611 = vpack.c.b16 %v1795, %v1779
    %v2612 = vpack.c.b16 %v1796, %v1780
    %v2613 = vpack.c.b16 %v1797, %v1781
    %v2614 = vpack.c.b16 %v1798, %v1782
    %v2615 = vpack.c.b16 %v1799, %v1783
    %v2616 = vpack.c.b16 %v1800, %v1784
    %v2617 = vpack.c.b16 %v1817, %v1801
    %v2618 = vpack.c.b16 %v1818, %v1802
    %v2619 = vpack.c.b16 %v1819, %v1803
    %v2620 = vpack.c.b16 %v1820, %v1804
    %v2621 = vpack.c.b16 %v1821, %v1805
    %v2622 = vpack.c.b16 %v1822, %v1806
    %v2623 = vpack.c.b16 %v1823, %v1807
    %v2624 = vpack.c.b16 %v1824, %v1808
    %v2625 = vpack.c.b16 %v1825, %v1809
    %v2626 = vpack.c.b16 %v1826, %v1810
    %v2627 = vpack.c.b16 %v1827, %v1811
    %v2628 = vpack.c.b16 %v1828, %v1812
    %v2629 = vpack.c.b16 %v1829, %v1813
    %v2630 = vpack.c.b16 %v1830, %v1814
    %v2631 = vpack.c.b16 %v1831, %v1815
    %v2632 = vpack.c.b16 %v1832, %v1816
    %v2633 = vpack.c.b16 %v1849, %v1833
    %v2634 = vpack.c.b16 %v1850, %v1834
    %v2635 = vpack.c.b16 %v1851, %v1835
    %v2636 = vpack.c.b16 %v1852, %v1836
    %v2637 = vpack.c.b16 %v1853, %v1837
    %v2638 = vpack.c.b16 %v1854, %v1838
    %v2639 = vpack.c.b16 %v1855, %v1839
    %v2640 = vpack.c.b16 %v1856, %v1840
    %v2641 = vpack.c.b16 %v1857, %v1841
    %v2642 = vpack.c.b16 %v1858, %v1842
    %v2643 = vpack.c.b16 %v1859, %v1843
    %v2644 = vpack.c.b16 %v1860, %v1844
    %v2645 = vpack.c.b16 %v1861, %v1845
    %v2646 = vpack.c.b16 %v1862, %v1846
    %v2647 = vpack.c.b16 %v1863, %v1847
    %v2648 = vpack.c.b16 %v1864, %v1848
    %v2649 = vpack.c.b16 %v1881, %v1865
    %v2650 = vpack.c.b16 %v1882, %v1866
    %v2651 = vpack.c.b16 %v1883, %v1867
    %v2652 = vpack.c.b16 %v1884, %v1868
    %v2653 = vpack.c.b16 %v1885, %v1869
    %v2654 = vpack.c.b16 %v1886, %v1870
    %v2655 = vpack.c.b16 %v1887, %v1871
    %v2656 = vpack.c.b16 %v1888, %v1872
    %v2657 = vpack.c.b16 %v1889, %v1873
    %v2658 = vpack.c.b16 %v1890, %v1874
    %v2659 = vpack.c.b16 %v1891, %v1875
    %v2660 = vpack.c.b16 %v1892, %v1876
    %v2661 = vpack.c.b16 %v1893, %v1877
    %v2662 = vpack.c.b16 %v1894, %v1878
    %v2663 = vpack.c.b16 %v1895, %v1879
    %v2664 = vpack.c.b16 %v1896, %v1880
    %v2665 = vpack.c.b16 %v1913, %v1897
    %v2666 = vpack.c.b16 %v1914, %v1898
    %v2667 = vpack.c.b16 %v1915, %v1899
    %v2668 = vpack.c.b16 %v1916, %v1900
    %v2669 = vpack.c.b16 %v1917, %v1901
    %v2670 = vpack.c.b16 %v1918, %v1902
    %v2671 = vpack.c.b16 %v1919, %v1903
    %v2672 = vpack.c.b16 %v1920, %v1904
    %v2673 = vpack.c.b16 %v1921, %v1905
    %v2674 = vpack.c.b16 %v1922, %v1906
    %v2675 = vpack.c.b16 %v1923, %v1907
    %v2676 = vpack.c.b16 %v1924, %v1908
    %v2677 = vpack.c.b16 %v1925, %v1909
    %v2678 = vpack.c.b16 %v1926, %v1910
    %v2679 = vpack.c.b16 %v1927, %v1911
    %v2680 = vpack.c.b16 %v1928, %v1912
    %v2681 = vpack.c.b16 %v1945, %v1929
    %v2682 = vpack.c.b16 %v1946, %v1930
    %v2683 = vpack.c.b16 %v1947, %v1931
    %v2684 = vpack.c.b16 %v1948, %v1932
    %v2685 = vpack.c.b16 %v1949, %v1933
    %v2686 = vpack.c.b16 %v1950, %v1934
    %v2687 = vpack.c.b16 %v1951, %v1935
    %v2688 = vpack.c.b16 %v1952, %v1936
    %v2689 = vpack.c.b16 %v1953, %v1937
    %v2690 = vpack.c.b16 %v1954, %v1938
    %v2691 = vpack.c.b16 %v1955, %v1939
    %v2692 = vpack.c.b16 %v1956, %v1940
    %v2693 = vpack.c.b16 %v1957, %v1941
    %v2694 = vpack.c.b16 %v1958, %v1942
    %v2695 = vpack.c.b16 %v1959, %v1943
    %v2696 = vpack.c.b16 %v1960, %v1944
    %v2697 = vpack.c.b16 %v1977, %v1961
    %v2698 = vpack.c.b16 %v1978, %v1962
    %v2699 = vpack.c.b16 %v1979, %v1963
    %v2700 = vpack.c.b16 %v1980, %v1964
    %v2701 = vpack.c.b16 %v1981, %v1965
    %v2702 = vpack.c.b16 %v1982, %v1966
    %v2703 = vpack.c.b16 %v1983, %v1967
    %v2704 = vpack.c.b16 %v1984, %v1968
    %v2705 = vpack.c.b16 %v1985, %v1969
    %v2706 = vpack.c.b16 %v1986, %v1970
    %v2707 = vpack.c.b16 %v1987, %v1971
    %v2708 = vpack.c.b16 %v1988, %v1972
    %v2709 = vpack.c.b16 %v1989, %v1973
    %v2710 = vpack.c.b16 %v1990, %v1974
    %v2711 = vpack.c.b16 %v1991, %v1975
    %v2712 = vpack.c.b16 %v1992, %v1976
    %v2713 = vpack.c.b16 %v2009, %v1993
    %v2714 = vpack.c.b16 %v2010, %v1994
    %v2715 = vpack.c.b16 %v2011, %v1995
    %v2716 = vpack.c.b16 %v2012, %v1996
    %v2717 = vpack.c.b16 %v2013, %v1997
    %v2718 = vpack.c.b16 %v2014, %v1998
    %v2719 = vpack.c.b16 %v2015, %v1999
    %v2720 = vpack.c.b16 %v2016, %v2000
    %v2721 = vpack.c.b16 %v2017, %v2001
    %v2722 = vpack.c.b16 %v2018, %v2002
    %v2723 = vpack.c.b16 %v2019, %v2003
    %v2724 = vpack.c.b16 %v2020, %v2004
    %v2725 = vpack.c.b16 %v2021, %v2005
    %v2726 = vpack.c.b16 %v2022, %v2006
    %v2727 = vpack.c.b16 %v2023, %v2007
    %v2728 = vpack.c.b16 %v2024, %v2008
    %v2729 = vpack.c.b16 %v2041, %v2025
    %v2730 = vpack.c.b16 %v2042, %v2026
    %v2731 = vpack.c.b16 %v2043, %v2027
    %v2732 = vpack.c.b16 %v2044, %v2028
    %v2733 = vpack.c.b16 %v2045, %v2029
    %v2734 = vpack.c.b16 %v2046, %v2030
    %v2735 = vpack.c.b16 %v2047, %v2031
    %v2736 = vpack.c.b16 %v2048, %v2032
    %v2737 = vpack.c.b16 %v2049, %v2033
    %v2738 = vpack.c.b16 %v2050, %v2034
    %v2739 = vpack.c.b16 %v2051, %v2035
    %v2740 = vpack.c.b16 %v2052, %v2036
    %v2741 = vpack.c.b16 %v2053, %v2037
    %v2742 = vpack.c.b16 %v2054, %v2038
    %v2743 = vpack.c.b16 %v2055, %v2039
    %v2744 = vpack.c.b16 %v2056, %v2040
    %v2745 = vpack.c.b16 %v2073, %v2057
    %v2746 = vpack.c.b16 %v2074, %v2058
    %v2747 = vpack.c.b16 %v2075, %v2059
    %v2748 = vpack.c.b16 %v2076, %v2060
    %v2749 = vpack.c.b16 %v2077, %v2061
    %v2750 = vpack.c.b16 %v2078, %v2062
    %v2751 = vpack.c.b16 %v2079, %v2063
    %v2752 = vpack.c.b16 %v2080, %v2064
    %v2753 = vpack.c.b16 %v2081, %v2065
    %v2754 = vpack.c.b16 %v2082, %v2066
    %v2755 = vpack.c.b16 %v2083, %v2067
    %v2756 = vpack.c.b16 %v2084, %v2068
    %v2757 = vpack.c.b16 %v2085, %v2069
    %v2758 = vpack.c.b16 %v2086, %v2070
    %v2759 = vpack.c.b16 %v2087, %v2071
    %v2760 = vpack.c.b16 %v2088, %v2072
    %v2761 = vpack.c.b16 %v2105, %v2089
    %v2762 = vpack.c.b16 %v2106, %v2090
    %v2763 = vpack.c.b16 %v2107, %v2091
    %v2764 = vpack.c.b16 %v2108, %v2092
    %v2765 = vpack.c.b16 %v2109, %v2093
    %v2766 = vpack.c.b16 %v2110, %v2094
    %v2767 = vpack.c.b16 %v2111, %v2095
    %v2768 = vpack.c.b16 %v2112, %v2096
    %v2769 = vpack.c.b16 %v2113, %v2097
    %v2770 = vpack.c.b16 %v2114, %v2098
    %v2771 = vpack.c.b16 %v2115, %v2099
    %v2772 = vpack.c.b16 %v2116, %v2100
    %v2773 = vpack.c.b16 %v2117, %v2101
    %v2774 = vpack.c.b16 %v2118, %v2102
    %v2775 = vpack.c.b16 %v2119, %v2103
    %v2776 = vpack.c.b16 %v2120, %v2104
    %v2777 = vpack.c.b16 %v2137, %v2121
    %v2778 = vpack.c.b16 %v2138, %v2122
    %v2779 = vpack.c.b16 %v2139, %v2123
    %v2780 = vpack.c.b16 %v2140, %v2124
    %v2781 = vpack.c.b16 %v2141, %v2125
    %v2782 = vpack.c.b16 %v2142, %v2126
    %v2783 = vpack.c.b16 %v2143, %v2127
    %v2784 = vpack.c.b16 %v2144, %v2128
    %v2785 = vpack.c.b16 %v2145, %v2129
    %v2786 = vpack.c.b16 %v2146, %v2130
    %v2787 = vpack.c.b16 %v2147, %v2131
    %v2788 = vpack.c.b16 %v2148, %v2132
    %v2789 = vpack.c.b16 %v2149, %v2133
    %v2790 = vpack.c.b16 %v2150, %v2134
    %v2791 = vpack.c.b16 %v2151, %v2135
    %v2792 = vpack.c.b16 %v2152, %v2136
    %v2793 = vpack.c.b16 %v2169, %v2153
    %v2794 = vpack.c.b16 %v2170, %v2154
    %v2795 = vpack.c.b16 %v2171, %v2155
    %v2796 = vpack.c.b16 %v2172, %v2156
    %v2797 = vpack.c.b16 %v2173, %v2157
    %v2798 = vpack.c.b16 %v2174, %v2158
    %v2799 = vpack.c.b16 %v2175, %v2159
    %v2800 = vpack.c.b16 %v2176, %v2160
    %v2801 = vpack.c.b16 %v2177, %v2161
    %v2802 = vpack.c.b16 %v2178, %v2162
    %v2803 = vpack.c.b16 %v2179, %v2163
    %v2804 = vpack.c.b16 %v2180, %v2164
    %v2805 = vpack.c.b16 %v2181, %v2165
    %v2806 = vpack.c.b16 %v2182, %v2166
    %v2807 = vpack.c.b16 %v2183, %v2167
    %v2808 = vpack.c.b16 %v2184, %v2168
    %v2809 = vpack.c.b16 %v2201, %v2185
    %v2810 = vpack.c.b16 %v2202, %v2186
    %v2811 = vpack.c.b16 %v2203, %v2187
    %v2812 = vpack.c.b16 %v2204, %v2188
    %v2813 = vpack.c.b16 %v2205, %v2189
    %v2814 = vpack.c.b16 %v2206, %v2190
    %v2815 = vpack.c.b16 %v2207, %v2191
    %v2816 = vpack.c.b16 %v2208, %v2192
    %v2817 = vpack.c.b16 %v2209, %v2193
    %v2818 = vpack.c.b16 %v2210, %v2194
    %v2819 = vpack.c.b16 %v2211, %v2195
    %v2820 = vpack.c.b16 %v2212, %v2196
    %v2821 = vpack.c.b16 %v2213, %v2197
    %v2822 = vpack.c.b16 %v2214, %v2198
    %v2823 = vpack.c.b16 %v2215, %v2199
    %v2824 = vpack.c.b16 %v2216, %v2200
    %v2825 = vpack.c.b16 %v2233, %v2217
    %v2826 = vpack.c.b16 %v2234, %v2218
    %v2827 = vpack.c.b16 %v2235, %v2219
    %v2828 = vpack.c.b16 %v2236, %v2220
    %v2829 = vpack.c.b16 %v2237, %v2221
    %v2830 = vpack.c.b16 %v2238, %v2222
    %v2831 = vpack.c.b16 %v2239, %v2223
    %v2832 = vpack.c.b16 %v2240, %v2224
    %v2833 = vpack.c.b16 %v2241, %v2225
    %v2834 = vpack.c.b16 %v2242, %v2226
    %v2835 = vpack.c.b16 %v2243, %v2227
    %v2836 = vpack.c.b16 %v2244, %v2228
    %v2837 = vpack.c.b16 %v2245, %v2229
    %v2838 = vpack.c.b16 %v2246, %v2230
    %v2839 = vpack.c.b16 %v2247, %v2231
    %v2840 = vpack.c.b16 %v2248, %v2232
    %v2841 = vpack.c.b16 %v2265, %v2249
    %v2842 = vpack.c.b16 %v2266, %v2250
    %v2843 = vpack.c.b16 %v2267, %v2251
    %v2844 = vpack.c.b16 %v2268, %v2252
    %v2845 = vpack.c.b16 %v2269, %v2253
    %v2846 = vpack.c.b16 %v2270, %v2254
    %v2847 = vpack.c.b16 %v2271, %v2255
    %v2848 = vpack.c.b16 %v2272, %v2256
    %v2849 = vpack.c.b16 %v2273, %v2257
    %v2850 = vpack.c.b16 %v2274, %v2258
    %v2851 = vpack.c.b16 %v2275, %v2259
    %v2852 = vpack.c.b16 %v2276, %v2260
    %v2853 = vpack.c.b16 %v2277, %v2261
    %v2854 = vpack.c.b16 %v2278, %v2262
    %v2855 = vpack.c.b16 %v2279, %v2263
    %v2856 = vpack.c.b16 %v2280, %v2264
    %v2857 = vpack.c.b16 %v2297, %v2281
    %v2858 = vpack.c.b16 %v2298, %v2282
    %v2859 = vpack.c.b16 %v2299, %v2283
    %v2860 = vpack.c.b16 %v2300, %v2284
    %v2861 = vpack.c.b16 %v2301, %v2285
    %v2862 = vpack.c.b16 %v2302, %v2286
    %v2863 = vpack.c.b16 %v2303, %v2287
    %v2864 = vpack.c.b16 %v2304, %v2288
    %v2865 = vpack.c.b16 %v2305, %v2289
    %v2866 = vpack.c.b16 %v2306, %v2290
    %v2867 = vpack.c.b16 %v2307, %v2291
    %v2868 = vpack.c.b16 %v2308, %v2292
    %v2869 = vpack.c.b16 %v2309, %v2293
    %v2870 = vpack.c.b16 %v2310, %v2294
    %v2871 = vpack.c.b16 %v2311, %v2295
    %v2872 = vpack.c.b16 %v2312, %v2296
    %v2873 = vpack.c.b16 %v2329, %v2313
    %v2874 = vpack.c.b16 %v2330, %v2314
    %v2875 = vpack.c.b16 %v2331, %v2315
    %v2876 = vpack.c.b16 %v2332, %v2316
    %v2877 = vpack.c.b16 %v2333, %v2317
    %v2878 = vpack.c.b16 %v2334, %v2318
    %v2879 = vpack.c.b16 %v2335, %v2319
    %v2880 = vpack.c.b16 %v2336, %v2320
    %v2881 = vpack.c.b16 %v2337, %v2321
    %v2882 = vpack.c.b16 %v2338, %v2322
    %v2883 = vpack.c.b16 %v2339, %v2323
    %v2884 = vpack.c.b16 %v2340, %v2324
    %v2885 = vpack.c.b16 %v2341, %v2325
    %v2886 = vpack.c.b16 %v2342, %v2326
    %v2887 = vpack.c.b16 %v2343, %v2327
    %v2888 = vpack.c.b16 %v2344, %v2328
    %v2889 = vpack.c.b16 %v2361, %v2345
    %v2890 = vpack.c.b16 %v2362, %v2346
    %v2891 = vpack.c.b16 %v2363, %v2347
    %v2892 = vpack.c.b16 %v2364, %v2348
    %v2893 = vpack.c.b16 %v2365, %v2349
    %v2894 = vpack.c.b16 %v2366, %v2350
    %v2895 = vpack.c.b16 %v2367, %v2351
    %v2896 = vpack.c.b16 %v2368, %v2352
    %v2897 = vpack.c.b16 %v2369, %v2353
    %v2898 = vpack.c.b16 %v2370, %v2354
    %v2899 = vpack.c.b16 %v2371, %v2355
    %v2900 = vpack.c.b16 %v2372, %v2356
    %v2901 = vpack.c.b16 %v2373, %v2357
    %v2902 = vpack.c.b16 %v2374, %v2358
    %v2903 = vpack.c.b16 %v2375, %v2359
    %v2904 = vpack.c.b16 %v2376, %v2360
    %v2905 = vpack.c.b16 %v2393, %v2377
    %v2906 = vpack.c.b16 %v2394, %v2378
    %v2907 = vpack.c.b16 %v2395, %v2379
    %v2908 = vpack.c.b16 %v2396, %v2380
    %v2909 = vpack.c.b16 %v2397, %v2381
    %v2910 = vpack.c.b16 %v2398, %v2382
    %v2911 = vpack.c.b16 %v2399, %v2383
    %v2912 = vpack.c.b16 %v2400, %v2384
    %v2913 = vpack.c.b16 %v2401, %v2385
    %v2914 = vpack.c.b16 %v2402, %v2386
    %v2915 = vpack.c.b16 %v2403, %v2387
    %v2916 = vpack.c.b16 %v2404, %v2388
    %v2917 = vpack.c.b16 %v2405, %v2389
    %v2918 = vpack.c.b16 %v2406, %v2390
    %v2919 = vpack.c.b16 %v2407, %v2391
    %v2920 = vpack.c.b16 %v2408, %v2392
    %3433 = vmatprep.subr.bf16.mxu0 %v2410
    %3434 = vmatpush1.bf16.msra.mxu0 %v2409
    %3435 = vmatprep.subr.bf16.mxu0 %v2426
    %3436 = vmatpush1.bf16.msra.mxu0 %v2425
    %3437 = vmatprep.subr.bf16.mxu0 %v2442
    %3438 = vmatpush1.bf16.msra.mxu0 %v2441
    %3439 = vmatprep.subr.bf16.mxu0 %v2458
    %3440 = vmatpush1.bf16.msra.mxu0 %v2457
    %3441 = vmatprep.subr.bf16.mxu0 %v2474
    %3442 = vmatpush1.bf16.msra.mxu0 %v2473
    %3443 = vmatprep.subr.bf16.mxu0 %v2490
    %3444 = vmatpush1.bf16.msra.mxu0 %v2489
    %3445 = vmatprep.subr.bf16.mxu0 %v2506
    %3446 = vmatpush1.bf16.msra.mxu0 %v2505
    %3447 = vmatprep.subr.bf16.mxu0 %v2522
    %3448 = vmatpush1.bf16.msra.mxu0 %v2521
    %3449 = vmatprep.subr.bf16.mxu0 %v2538
    %3450 = vmatpush1.bf16.msra.mxu0 %v2537
    %3451 = vmatprep.subr.bf16.mxu0 %v2554
    %3452 = vmatpush1.bf16.msra.mxu0 %v2553
    %3453 = vmatprep.subr.bf16.mxu0 %v2570
    %3454 = vmatpush1.bf16.msra.mxu0 %v2569
    %3455 = vmatprep.subr.bf16.mxu0 %v2586
    %3456 = vmatpush1.bf16.msra.mxu0 %v2585
    %3457 = vmatprep.subr.bf16.mxu0 %v2602
    %3458 = vmatpush1.bf16.msra.mxu0 %v2601
    %3459 = vmatprep.subr.bf16.mxu0 %v2618
    %3460 = vmatpush1.bf16.msra.mxu0 %v2617
    %3461 = vmatprep.subr.bf16.mxu0 %v2634
    %3462 = vmatpush1.bf16.msra.mxu0 %v2633
    %3463 = vmatprep.subr.bf16.mxu0 %v2650
    %3464 = vmatpush1.bf16.msra.mxu0 %v2649
    %3465 = vmatprep.mubr.bf16.mxu0 %v810
    %3466 = vmatmul.mubr.bf16.gmra.mrb[0].mxu0 %v809
    %v3467 = vpop.f32.mrb[0].mxu0
    %v3468 = vadd.f32 %v636, %v3467
    %v3469 = vpop.f32.mrb[0].mxu0
    %v3470 = vadd.f32 %v640, %v3469
    %v3471 = vpop.f32.mrb[0].mxu0
    %v3472 = vadd.f32 %v636, %v3471
    %v3473 = vpop.f32.mrb[0].mxu0
    %v3474 = vadd.f32 %v640, %v3473
    %3475 = vmatprep.mubr.bf16.mxu0 %v814
    %3476 = vmatmul.mubr.bf16.gmra.mrb[0].mxu0 %v813
    %v3477 = vpop.f32.mrb[0].mxu0
    %v3478 = vadd.f32 %v636, %v3477
    %v3479 = vpop.f32.mrb[0].mxu0
    %v3480 = vadd.f32 %v640, %v3479
    %v3481 = vpop.f32.mrb[0].mxu0
    %v3482 = vadd.f32 %v636, %v3481
    %v3483 = vpop.f32.mrb[0].mxu0
    %v3484 = vadd.f32 %v640, %v3483
    %3485 = vmatprep.mubr.bf16.mxu0 %v818
    %3486 = vmatmul.mubr.bf16.gmra.mrb[0].mxu0 %v817
    %v3487 = vpop.f32.mrb[0].mxu0
    %v3488 = vadd.f32 %v636, %v3487
    %v3489 = vpop.f32.mrb[0].mxu0
    %v3490 = vadd.f32 %v640, %v3489
    %v3491 = vpop.f32.mrb[0].mxu0
    %v3492 = vadd.f32 %v636, %v3491
    %v3493 = vpop.f32.mrb[0].mxu0
    %v3494 = vadd.f32 %v640, %v3493
    %3495 = vmatprep.mubr.bf16.mxu0 %v822
    %3496 = vmatmul.mubr.bf16.gmra.mrb[0].mxu0 %v821
    %v3497 = vpop.f32.mrb[0].mxu0
    %v3498 = vadd.f32 %v636, %v3497
    %v3499 = vpop.f32.mrb[0].mxu0
    %v3500 = vadd.f32 %v640, %v3499
    %v3501 = vpop.f32.mrb[0].mxu0
    %v3502 = vadd.f32 %v636, %v3501
    %v3503 = vpop.f32.mrb[0].mxu0
    %v3504 = vadd.f32 %v640, %v3503
    %3505 = vmatprep.mubr.bf16.mxu0 %v826
    %3506 = vmatmul.mubr.bf16.gmra.mrb[0].mxu0 %v825
    %v3507 = vpop.f32.mrb[0].mxu0
    %v3508 = vadd.f32 %v636, %v3507
    %v3509 = vpop.f32.mrb[0].mxu0
    %v3510 = vadd.f32 %v640, %v3509
    %v3511 = vpop.f32.mrb[0].mxu0
    %v3512 = vadd.f32 %v636, %v3511
    %v3513 = vpop.f32.mrb[0].mxu0
    %v3514 = vadd.f32 %v640, %v3513
    %3515 = vmatprep.mubr.bf16.mxu0 %v830
    %3516 = vmatmul.mubr.bf16.gmra.mrb[0].mxu0 %v829
    %v3517 = vpop.f32.mrb[0].mxu0
    %v3518 = vadd.f32 %v636, %v3517
    %v3519 = vpop.f32.mrb[0].mxu0
    %v3520 = vadd.f32 %v640, %v3519
    %v3521 = vpop.f32.mrb[0].mxu0
    %v3522 = vadd.f32 %v636, %v3521
    %v3523 = vpop.f32.mrb[0].mxu0
    %v3524 = vadd.f32 %v640, %v3523
    %3525 = vmatprep.mubr.bf16.mxu0 %v834
    %3526 = vmatmul.mubr.bf16.gmra.mrb[0].mxu0 %v833
    %v3527 = vpop.f32.mrb[0].mxu0
    %v3528 = vadd.f32 %v636, %v3527
    %v3529 = vpop.f32.mrb[0].mxu0
    %v3530 = vadd.f32 %v640, %v3529
    %v3531 = vpop.f32.mrb[0].mxu0
    %v3532 = vadd.f32 %v636, %v3531
    %v3533 = vpop.f32.mrb[0].mxu0
    %v3534 = vadd.f32 %v640, %v3533
    %3535 = vmatprep.mubr.bf16.mxu0 %v838
    %3536 = vmatmul.mubr.bf16.gmra.mrb[0].mxu0 %v837
    %v3537 = vpop.f32.mrb[0].mxu0
    %v3538 = vadd.f32 %v636, %v3537
    %v3539 = vpop.f32.mrb[0].mxu0
    %v3540 = vadd.f32 %v640, %v3539
    %v3541 = vpop.f32.mrb[0].mxu0
    %v3542 = vadd.f32 %v636, %v3541
    %v3543 = vpop.f32.mrb[0].mxu0
    %v3544 = vadd.f32 %v640, %v3543
    %3545 = vdwg.mxu0
    %3546 = vmatprep.subr.bf16.mxu0 %v2666
    %3547 = vmatpush1.bf16.msra.mxu0 %v2665
    %3548 = vmatprep.subr.bf16.mxu0 %v2682
    %3549 = vmatpush1.bf16.msra.mxu0 %v2681
    %3550 = vmatprep.subr.bf16.mxu0 %v2698
    %3551 = vmatpush1.bf16.msra.mxu0 %v2697
    %3552 = vmatprep.subr.bf16.mxu0 %v2714
    %3553 = vmatpush1.bf16.msra.mxu0 %v2713
    %3554 = vmatprep.subr.bf16.mxu0 %v2730
    %3555 = vmatpush1.bf16.msra.mxu0 %v2729
    %3556 = vmatprep.subr.bf16.mxu0 %v2746
    %3557 = vmatpush1.bf16.msra.mxu0 %v2745
    %3558 = vmatprep.subr.bf16.mxu0 %v2762
    %3559 = vmatpush1.bf16.msra.mxu0 %v2761
    %3560 = vmatprep.subr.bf16.mxu0 %v2778
    %3561 = vmatpush1.bf16.msra.mxu0 %v2777
    %3562 = vmatprep.subr.bf16.mxu0 %v2794
    %3563 = vmatpush1.bf16.msra.mxu0 %v2793
    %3564 = vmatprep.subr.bf16.mxu0 %v2810
    %3565 = vmatpush1.bf16.msra.mxu0 %v2809
    %3566 = vmatprep.subr.bf16.mxu0 %v2826
    %3567 = vmatpush1.bf16.msra.mxu0 %v2825
    %3568 = vmatprep.subr.bf16.mxu0 %v2842
    %3569 = vmatpush1.bf16.msra.mxu0 %v2841
    %3570 = vmatprep.subr.bf16.mxu0 %v2858
    %3571 = vmatpush1.bf16.msra.mxu0 %v2857
    %3572 = vmatprep.subr.bf16.mxu0 %v2874
    %3573 = vmatpush1.bf16.msra.mxu0 %v2873
    %3574 = vmatprep.subr.bf16.mxu0 %v2890
    %3575 = vmatpush1.bf16.msra.mxu0 %v2889
    %3576 = vmatprep.subr.bf16.mxu0 %v2906
    %3577 = vmatpush1.bf16.msra.mxu0 %v2905
    %3578 = vmatprep.mubr.bf16.mxu0 %v812
    %3579 = vmatmul.mubr.bf16.gmra.mrb[0].mxu0 %v811
    %v3580 = vpop.f32.mrb[0].mxu0
    %v3581 = vadd.f32 %v3468, %v3580
    %v3582 = vpop.f32.mrb[0].mxu0
    %v3583 = vadd.f32 %v3470, %v3582
    %v3584 = vpop.f32.mrb[0].mxu0
    %v3585 = vadd.f32 %v3472, %v3584
    %v3586 = vpop.f32.mrb[0].mxu0
    %v3587 = vadd.f32 %v3474, %v3586
    %3588 = vmatprep.mubr.bf16.mxu0 %v816
    %3589 = vmatmul.mubr.bf16.gmra.mrb[0].mxu0 %v815
    %v3590 = vpop.f32.mrb[0].mxu0
    %v3591 = vadd.f32 %v3478, %v3590
    %v3592 = vpop.f32.mrb[0].mxu0
    %v3593 = vadd.f32 %v3480, %v3592
    %v3594 = vpop.f32.mrb[0].mxu0
    %v3595 = vadd.f32 %v3482, %v3594
    %v3596 = vpop.f32.mrb[0].mxu0
    %v3597 = vadd.f32 %v3484, %v3596
    %3598 = vmatprep.mubr.bf16.mxu0 %v820
    %3599 = vmatmul.mubr.bf16.gmra.mrb[0].mxu0 %v819
    %v3600 = vpop.f32.mrb[0].mxu0
    %v3601 = vadd.f32 %v3488, %v3600
    %v3602 = vpop.f32.mrb[0].mxu0
    %v3603 = vadd.f32 %v3490, %v3602
    %v3604 = vpop.f32.mrb[0].mxu0
    %v3605 = vadd.f32 %v3492, %v3604
    %v3606 = vpop.f32.mrb[0].mxu0
    %v3607 = vadd.f32 %v3494, %v3606
    %3608 = vmatprep.mubr.bf16.mxu0 %v824
    %3609 = vmatmul.mubr.bf16.gmra.mrb[0].mxu0 %v823
    %v3610 = vpop.f32.mrb[0].mxu0
    %v3611 = vadd.f32 %v3498, %v3610
    %v3612 = vpop.f32.mrb[0].mxu0
    %v3613 = vadd.f32 %v3500, %v3612
    %v3614 = vpop.f32.mrb[0].mxu0
    %v3615 = vadd.f32 %v3502, %v3614
    %v3616 = vpop.f32.mrb[0].mxu0
    %v3617 = vadd.f32 %v3504, %v3616
    %3618 = vmatprep.mubr.bf16.mxu0 %v828
    %3619 = vmatmul.mubr.bf16.gmra.mrb[0].mxu0 %v827
    %v3620 = vpop.f32.mrb[0].mxu0
    %v3621 = vadd.f32 %v3508, %v3620
    %v3622 = vpop.f32.mrb[0].mxu0
    %v3623 = vadd.f32 %v3510, %v3622
    %v3624 = vpop.f32.mrb[0].mxu0
    %v3625 = vadd.f32 %v3512, %v3624
    %v3626 = vpop.f32.mrb[0].mxu0
    %v3627 = vadd.f32 %v3514, %v3626
    %3628 = vmatprep.mubr.bf16.mxu0 %v832
    %3629 = vmatmul.mubr.bf16.gmra.mrb[0].mxu0 %v831
    %v3630 = vpop.f32.mrb[0].mxu0
    %v3631 = vadd.f32 %v3518, %v3630
    %v3632 = vpop.f32.mrb[0].mxu0
    %v3633 = vadd.f32 %v3520, %v3632
    %v3634 = vpop.f32.mrb[0].mxu0
    %v3635 = vadd.f32 %v3522, %v3634
    %v3636 = vpop.f32.mrb[0].mxu0
    %v3637 = vadd.f32 %v3524, %v3636
    %3638 = vmatprep.mubr.bf16.mxu0 %v836
    %3639 = vmatmul.mubr.bf16.gmra.mrb[0].mxu0 %v835
    %v3640 = vpop.f32.mrb[0].mxu0
    %v3641 = vadd.f32 %v3528, %v3640
    %v3642 = vpop.f32.mrb[0].mxu0
    %v3643 = vadd.f32 %v3530, %v3642
    %v3644 = vpop.f32.mrb[0].mxu0
    %v3645 = vadd.f32 %v3532, %v3644
    %v3646 = vpop.f32.mrb[0].mxu0
    %v3647 = vadd.f32 %v3534, %v3646
    %3648 = vmatprep.mubr.bf16.mxu0 %v840
    %3649 = vmatmul.mubr.bf16.gmra.mrb[0].mxu0 %v839
    %v3650 = vpop.f32.mrb[0].mxu0
    %v3651 = vadd.f32 %v3538, %v3650
    %v3652 = vpop.f32.mrb[0].mxu0
    %v3653 = vadd.f32 %v3540, %v3652
    %v3654 = vpop.f32.mrb[0].mxu0
    %v3655 = vadd.f32 %v3542, %v3654
    %v3656 = vpop.f32.mrb[0].mxu0
    %v3657 = vadd.f32 %v3544, %v3656
    %3658 = vdwg.mxu0
    %3659 = vmatprep.subr.bf16.mxu0 %v2412
    %3660 = vmatpush1.bf16.msra.mxu0 %v2411
    %3661 = vmatprep.subr.bf16.mxu0 %v2428
    %3662 = vmatpush1.bf16.msra.mxu0 %v2427
    %3663 = vmatprep.subr.bf16.mxu0 %v2444
    %3664 = vmatpush1.bf16.msra.mxu0 %v2443
    %3665 = vmatprep.subr.bf16.mxu0 %v2460
    %3666 = vmatpush1.bf16.msra.mxu0 %v2459
    %3667 = vmatprep.subr.bf16.mxu0 %v2476
    %3668 = vmatpush1.bf16.msra.mxu0 %v2475
    %3669 = vmatprep.subr.bf16.mxu0 %v2492
    %3670 = vmatpush1.bf16.msra.mxu0 %v2491
    %3671 = vmatprep.subr.bf16.mxu0 %v2508
    %3672 = vmatpush1.bf16.msra.mxu0 %v2507
    %3673 = vmatprep.subr.bf16.mxu0 %v2524
    %3674 = vmatpush1.bf16.msra.mxu0 %v2523
    %3675 = vmatprep.subr.bf16.mxu0 %v2540
    %3676 = vmatpush1.bf16.msra.mxu0 %v2539
    %3677 = vmatprep.subr.bf16.mxu0 %v2556
    %3678 = vmatpush1.bf16.msra.mxu0 %v2555
    %3679 = vmatprep.subr.bf16.mxu0 %v2572
    %3680 = vmatpush1.bf16.msra.mxu0 %v2571
    %3681 = vmatprep.subr.bf16.mxu0 %v2588
    %3682 = vmatpush1.bf16.msra.mxu0 %v2587
    %3683 = vmatprep.subr.bf16.mxu0 %v2604
    %3684 = vmatpush1.bf16.msra.mxu0 %v2603
    %3685 = vmatprep.subr.bf16.mxu0 %v2620
    %3686 = vmatpush1.bf16.msra.mxu0 %v2619
    %3687 = vmatprep.subr.bf16.mxu0 %v2636
    %3688 = vmatpush1.bf16.msra.mxu0 %v2635
    %3689 = vmatprep.subr.bf16.mxu0 %v2652
    %3690 = vmatpush1.bf16.msra.mxu0 %v2651
    %3691 = vmatprep.mubr.bf16.mxu0 %v810
    %3692 = vmatmul.mubr.bf16.gmra.mrb[0].mxu0 %v809
    %v3693 = vpop.f32.mrb[0].mxu0
    %v3694 = vadd.f32 %v644, %v3693
    %v3695 = vpop.f32.mrb[0].mxu0
    %v3696 = vadd.f32 %v648, %v3695
    %v3697 = vpop.f32.mrb[0].mxu0
    %v3698 = vadd.f32 %v644, %v3697
    %v3699 = vpop.f32.mrb[0].mxu0
    %v3700 = vadd.f32 %v648, %v3699
    %3701 = vmatprep.mubr.bf16.mxu0 %v814
    %3702 = vmatmul.mubr.bf16.gmra.mrb[0].mxu0 %v813
    %v3703 = vpop.f32.mrb[0].mxu0
    %v3704 = vadd.f32 %v644, %v3703
    %v3705 = vpop.f32.mrb[0].mxu0
    %v3706 = vadd.f32 %v648, %v3705
    %v3707 = vpop.f32.mrb[0].mxu0
    %v3708 = vadd.f32 %v644, %v3707
    %v3709 = vpop.f32.mrb[0].mxu0
    %v3710 = vadd.f32 %v648, %v3709
    %3711 = vmatprep.mubr.bf16.mxu0 %v818
    %3712 = vmatmul.mubr.bf16.gmra.mrb[0].mxu0 %v817
    %v3713 = vpop.f32.mrb[0].mxu0
    %v3714 = vadd.f32 %v644, %v3713
    %v3715 = vpop.f32.mrb[0].mxu0
    %v3716 = vadd.f32 %v648, %v3715
    %v3717 = vpop.f32.mrb[0].mxu0
    %v3718 = vadd.f32 %v644, %v3717
    %v3719 = vpop.f32.mrb[0].mxu0
    %v3720 = vadd.f32 %v648, %v3719
    %3721 = vmatprep.mubr.bf16.mxu0 %v822
    %3722 = vmatmul.mubr.bf16.gmra.mrb[0].mxu0 %v821
    %v3723 = vpop.f32.mrb[0].mxu0
    %v3724 = vadd.f32 %v644, %v3723
    %v3725 = vpop.f32.mrb[0].mxu0
    %v3726 = vadd.f32 %v648, %v3725
    %v3727 = vpop.f32.mrb[0].mxu0
    %v3728 = vadd.f32 %v644, %v3727
    %v3729 = vpop.f32.mrb[0].mxu0
    %v3730 = vadd.f32 %v648, %v3729
    %3731 = vmatprep.mubr.bf16.mxu0 %v826
    %3732 = vmatmul.mubr.bf16.gmra.mrb[0].mxu0 %v825
    %v3733 = vpop.f32.mrb[0].mxu0
    %v3734 = vadd.f32 %v644, %v3733
    %v3735 = vpop.f32.mrb[0].mxu0
    %v3736 = vadd.f32 %v648, %v3735
    %v3737 = vpop.f32.mrb[0].mxu0
    %v3738 = vadd.f32 %v644, %v3737
    %v3739 = vpop.f32.mrb[0].mxu0
    %v3740 = vadd.f32 %v648, %v3739
    %3741 = vmatprep.mubr.bf16.mxu0 %v830
    %3742 = vmatmul.mubr.bf16.gmra.mrb[0].mxu0 %v829
    %v3743 = vpop.f32.mrb[0].mxu0
    %v3744 = vadd.f32 %v644, %v3743
    %v3745 = vpop.f32.mrb[0].mxu0
    %v3746 = vadd.f32 %v648, %v3745
    %v3747 = vpop.f32.mrb[0].mxu0
    %v3748 = vadd.f32 %v644, %v3747
    %v3749 = vpop.f32.mrb[0].mxu0
    %v3750 = vadd.f32 %v648, %v3749
    %3751 = vmatprep.mubr.bf16.mxu0 %v834
    %3752 = vmatmul.mubr.bf16.gmra.mrb[0].mxu0 %v833
    %v3753 = vpop.f32.mrb[0].mxu0
    %v3754 = vadd.f32 %v644, %v3753
    %v3755 = vpop.f32.mrb[0].mxu0
    %v3756 = vadd.f32 %v648, %v3755
    %v3757 = vpop.f32.mrb[0].mxu0
    %v3758 = vadd.f32 %v644, %v3757
    %v3759 = vpop.f32.mrb[0].mxu0
    %v3760 = vadd.f32 %v648, %v3759
    %3761 = vmatprep.mubr.bf16.mxu0 %v838
    %3762 = vmatmul.mubr.bf16.gmra.mrb[0].mxu0 %v837
    %v3763 = vpop.f32.mrb[0].mxu0
    %v3764 = vadd.f32 %v644, %v3763
    %v3765 = vpop.f32.mrb[0].mxu0
    %v3766 = vadd.f32 %v648, %v3765
    %v3767 = vpop.f32.mrb[0].mxu0
    %v3768 = vadd.f32 %v644, %v3767
    %v3769 = vpop.f32.mrb[0].mxu0
    %v3770 = vadd.f32 %v648, %v3769
    %3771 = vdwg.mxu0
    %3772 = vmatprep.subr.bf16.mxu0 %v2668
    %3773 = vmatpush1.bf16.msra.mxu0 %v2667
    %3774 = vmatprep.subr.bf16.mxu0 %v2684
    %3775 = vmatpush1.bf16.msra.mxu0 %v2683
    %3776 = vmatprep.subr.bf16.mxu0 %v2700
    %3777 = vmatpush1.bf16.msra.mxu0 %v2699
    %3778 = vmatprep.subr.bf16.mxu0 %v2716
    %3779 = vmatpush1.bf16.msra.mxu0 %v2715
    %3780 = vmatprep.subr.bf16.mxu0 %v2732
    %3781 = vmatpush1.bf16.msra.mxu0 %v2731
    %3782 = vmatprep.subr.bf16.mxu0 %v2748
    %3783 = vmatpush1.bf16.msra.mxu0 %v2747
    %3784 = vmatprep.subr.bf16.mxu0 %v2764
    %3785 = vmatpush1.bf16.msra.mxu0 %v2763
    %3786 = vmatprep.subr.bf16.mxu0 %v2780
    %3787 = vmatpush1.bf16.msra.mxu0 %v2779
    %3788 = vmatprep.subr.bf16.mxu0 %v2796
    %3789 = vmatpush1.bf16.msra.mxu0 %v2795
    %3790 = vmatprep.subr.bf16.mxu0 %v2812
    %3791 = vmatpush1.bf16.msra.mxu0 %v2811
    %3792 = vmatprep.subr.bf16.mxu0 %v2828
    %3793 = vmatpush1.bf16.msra.mxu0 %v2827
    %3794 = vmatprep.subr.bf16.mxu0 %v2844
    %3795 = vmatpush1.bf16.msra.mxu0 %v2843
    %3796 = vmatprep.subr.bf16.mxu0 %v2860
    %3797 = vmatpush1.bf16.msra.mxu0 %v2859
    %3798 = vmatprep.subr.bf16.mxu0 %v2876
    %3799 = vmatpush1.bf16.msra.mxu0 %v2875
    %3800 = vmatprep.subr.bf16.mxu0 %v2892
    %3801 = vmatpush1.bf16.msra.mxu0 %v2891
    %3802 = vmatprep.subr.bf16.mxu0 %v2908
    %3803 = vmatpush1.bf16.msra.mxu0 %v2907
    %3804 = vmatprep.mubr.bf16.mxu0 %v812
    %3805 = vmatmul.mubr.bf16.gmra.mrb[0].mxu0 %v811
    %v3806 = vpop.f32.mrb[0].mxu0
    %v3807 = vadd.f32 %v3694, %v3806
    %v3808 = vpop.f32.mrb[0].mxu0
    %v3809 = vadd.f32 %v3696, %v3808
    %v3810 = vpop.f32.mrb[0].mxu0
    %v3811 = vadd.f32 %v3698, %v3810
    %v3812 = vpop.f32.mrb[0].mxu0
    %v3813 = vadd.f32 %v3700, %v3812
    %3814 = vmatprep.mubr.bf16.mxu0 %v816
    %3815 = vmatmul.mubr.bf16.gmra.mrb[0].mxu0 %v815
    %v3816 = vpop.f32.mrb[0].mxu0
    %v3817 = vadd.f32 %v3704, %v3816
    %v3818 = vpop.f32.mrb[0].mxu0
    %v3819 = vadd.f32 %v3706, %v3818
    %v3820 = vpop.f32.mrb[0].mxu0
    %v3821 = vadd.f32 %v3708, %v3820
    %v3822 = vpop.f32.mrb[0].mxu0
    %v3823 = vadd.f32 %v3710, %v3822
    %3824 = vmatprep.mubr.bf16.mxu0 %v820
    %3825 = vmatmul.mubr.bf16.gmra.mrb[0].mxu0 %v819
    %v3826 = vpop.f32.mrb[0].mxu0
    %v3827 = vadd.f32 %v3714, %v3826
    %v3828 = vpop.f32.mrb[0].mxu0
    %v3829 = vadd.f32 %v3716, %v3828
    %v3830 = vpop.f32.mrb[0].mxu0
    %v3831 = vadd.f32 %v3718, %v3830
    %v3832 = vpop.f32.mrb[0].mxu0
    %v3833 = vadd.f32 %v3720, %v3832
    %3834 = vmatprep.mubr.bf16.mxu0 %v824
    %3835 = vmatmul.mubr.bf16.gmra.mrb[0].mxu0 %v823
    %v3836 = vpop.f32.mrb[0].mxu0
    %v3837 = vadd.f32 %v3724, %v3836
    %v3838 = vpop.f32.mrb[0].mxu0
    %v3839 = vadd.f32 %v3726, %v3838
    %v3840 = vpop.f32.mrb[0].mxu0
    %v3841 = vadd.f32 %v3728, %v3840
    %v3842 = vpop.f32.mrb[0].mxu0
    %v3843 = vadd.f32 %v3730, %v3842
    %3844 = vmatprep.mubr.bf16.mxu0 %v828
    %3845 = vmatmul.mubr.bf16.gmra.mrb[0].mxu0 %v827
    %v3846 = vpop.f32.mrb[0].mxu0
    %v3847 = vadd.f32 %v3734, %v3846
    %v3848 = vpop.f32.mrb[0].mxu0
    %v3849 = vadd.f32 %v3736, %v3848
    %v3850 = vpop.f32.mrb[0].mxu0
    %v3851 = vadd.f32 %v3738, %v3850
    %v3852 = vpop.f32.mrb[0].mxu0
    %v3853 = vadd.f32 %v3740, %v3852
    %3854 = vmatprep.mubr.bf16.mxu0 %v832
    %3855 = vmatmul.mubr.bf16.gmra.mrb[0].mxu0 %v831
    %v3856 = vpop.f32.mrb[0].mxu0
    %v3857 = vadd.f32 %v3744, %v3856
    %v3858 = vpop.f32.mrb[0].mxu0
    %v3859 = vadd.f32 %v3746, %v3858
    %v3860 = vpop.f32.mrb[0].mxu0
    %v3861 = vadd.f32 %v3748, %v3860
    %v3862 = vpop.f32.mrb[0].mxu0
    %v3863 = vadd.f32 %v3750, %v3862
    %3864 = vmatprep.mubr.bf16.mxu0 %v836
    %3865 = vmatmul.mubr.bf16.gmra.mrb[0].mxu0 %v835
    %v3866 = vpop.f32.mrb[0].mxu0
    %v3867 = vadd.f32 %v3754, %v3866
    %v3868 = vpop.f32.mrb[0].mxu0
    %v3869 = vadd.f32 %v3756, %v3868
    %v3870 = vpop.f32.mrb[0].mxu0
    %v3871 = vadd.f32 %v3758, %v3870
    %v3872 = vpop.f32.mrb[0].mxu0
    %v3873 = vadd.f32 %v3760, %v3872
    %3874 = vmatprep.mubr.bf16.mxu0 %v840
    %3875 = vmatmul.mubr.bf16.gmra.mrb[0].mxu0 %v839
    %v3876 = vpop.f32.mrb[0].mxu0
    %v3877 = vadd.f32 %v3764, %v3876
    %v3878 = vpop.f32.mrb[0].mxu0
    %v3879 = vadd.f32 %v3766, %v3878
    %v3880 = vpop.f32.mrb[0].mxu0
    %v3881 = vadd.f32 %v3768, %v3880
    %v3882 = vpop.f32.mrb[0].mxu0
    %v3883 = vadd.f32 %v3770, %v3882
    %3884 = vdwg.mxu0
    %3885 = vmatprep.subr.bf16.mxu0 %v2414
    %3886 = vmatpush1.bf16.msra.mxu0 %v2413
    %3887 = vmatprep.subr.bf16.mxu0 %v2430
    %3888 = vmatpush1.bf16.msra.mxu0 %v2429
    %3889 = vmatprep.subr.bf16.mxu0 %v2446
    %3890 = vmatpush1.bf16.msra.mxu0 %v2445
    %3891 = vmatprep.subr.bf16.mxu0 %v2462
    %3892 = vmatpush1.bf16.msra.mxu0 %v2461
    %3893 = vmatprep.subr.bf16.mxu0 %v2478
    %3894 = vmatpush1.bf16.msra.mxu0 %v2477
    %3895 = vmatprep.subr.bf16.mxu0 %v2494
    %3896 = vmatpush1.bf16.msra.mxu0 %v2493
    %3897 = vmatprep.subr.bf16.mxu0 %v2510
    %3898 = vmatpush1.bf16.msra.mxu0 %v2509
    %3899 = vmatprep.subr.bf16.mxu0 %v2526
    %3900 = vmatpush1.bf16.msra.mxu0 %v2525
    %3901 = vmatprep.subr.bf16.mxu0 %v2542
    %3902 = vmatpush1.bf16.msra.mxu0 %v2541
    %3903 = vmatprep.subr.bf16.mxu0 %v2558
    %3904 = vmatpush1.bf16.msra.mxu0 %v2557
    %3905 = vmatprep.subr.bf16.mxu0 %v2574
    %3906 = vmatpush1.bf16.msra.mxu0 %v2573
    %3907 = vmatprep.subr.bf16.mxu0 %v2590
    %3908 = vmatpush1.bf16.msra.mxu0 %v2589
    %3909 = vmatprep.subr.bf16.mxu0 %v2606
    %3910 = vmatpush1.bf16.msra.mxu0 %v2605
    %3911 = vmatprep.subr.bf16.mxu0 %v2622
    %3912 = vmatpush1.bf16.msra.mxu0 %v2621
    %3913 = vmatprep.subr.bf16.mxu0 %v2638
    %3914 = vmatpush1.bf16.msra.mxu0 %v2637
    %3915 = vmatprep.subr.bf16.mxu0 %v2654
    %3916 = vmatpush1.bf16.msra.mxu0 %v2653
    %3917 = vmatprep.mubr.bf16.mxu0 %v810
    %3918 = vmatmul.mubr.bf16.gmra.mrb[0].mxu0 %v809
    %v3919 = vpop.f32.mrb[0].mxu0
    %v3920 = vadd.f32 %v652, %v3919
    %v3921 = vpop.f32.mrb[0].mxu0
    %v3922 = vadd.f32 %v656, %v3921
    %v3923 = vpop.f32.mrb[0].mxu0
    %v3924 = vadd.f32 %v652, %v3923
    %v3925 = vpop.f32.mrb[0].mxu0
    %v3926 = vadd.f32 %v656, %v3925
    %3927 = vmatprep.mubr.bf16.mxu0 %v814
    %3928 = vmatmul.mubr.bf16.gmra.mrb[0].mxu0 %v813
    %v3929 = vpop.f32.mrb[0].mxu0
    %v3930 = vadd.f32 %v652, %v3929
    %v3931 = vpop.f32.mrb[0].mxu0
    %v3932 = vadd.f32 %v656, %v3931
    %v3933 = vpop.f32.mrb[0].mxu0
    %v3934 = vadd.f32 %v652, %v3933
    %v3935 = vpop.f32.mrb[0].mxu0
    %v3936 = vadd.f32 %v656, %v3935
    %3937 = vmatprep.mubr.bf16.mxu0 %v818
    %3938 = vmatmul.mubr.bf16.gmra.mrb[0].mxu0 %v817
    %v3939 = vpop.f32.mrb[0].mxu0
    %v3940 = vadd.f32 %v652, %v3939
    %v3941 = vpop.f32.mrb[0].mxu0
    %v3942 = vadd.f32 %v656, %v3941
    %v3943 = vpop.f32.mrb[0].mxu0
    %v3944 = vadd.f32 %v652, %v3943
    %v3945 = vpop.f32.mrb[0].mxu0
    %v3946 = vadd.f32 %v656, %v3945
    %3947 = vmatprep.mubr.bf16.mxu0 %v822
    %3948 = vmatmul.mubr.bf16.gmra.mrb[0].mxu0 %v821
    %v3949 = vpop.f32.mrb[0].mxu0
    %v3950 = vadd.f32 %v652, %v3949
    %v3951 = vpop.f32.mrb[0].mxu0
    %v3952 = vadd.f32 %v656, %v3951
    %v3953 = vpop.f32.mrb[0].mxu0
    %v3954 = vadd.f32 %v652, %v3953
    %v3955 = vpop.f32.mrb[0].mxu0
    %v3956 = vadd.f32 %v656, %v3955
    %3957 = vmatprep.mubr.bf16.mxu0 %v826
    %3958 = vmatmul.mubr.bf16.gmra.mrb[0].mxu0 %v825
    %v3959 = vpop.f32.mrb[0].mxu0
    %v3960 = vadd.f32 %v652, %v3959
    %v3961 = vpop.f32.mrb[0].mxu0
    %v3962 = vadd.f32 %v656, %v3961
    %v3963 = vpop.f32.mrb[0].mxu0
    %v3964 = vadd.f32 %v652, %v3963
    %v3965 = vpop.f32.mrb[0].mxu0
    %v3966 = vadd.f32 %v656, %v3965
    %3967 = vmatprep.mubr.bf16.mxu0 %v830
    %3968 = vmatmul.mubr.bf16.gmra.mrb[0].mxu0 %v829
    %v3969 = vpop.f32.mrb[0].mxu0
    %v3970 = vadd.f32 %v652, %v3969
    %v3971 = vpop.f32.mrb[0].mxu0
    %v3972 = vadd.f32 %v656, %v3971
    %v3973 = vpop.f32.mrb[0].mxu0
    %v3974 = vadd.f32 %v652, %v3973
    %v3975 = vpop.f32.mrb[0].mxu0
    %v3976 = vadd.f32 %v656, %v3975
    %3977 = vmatprep.mubr.bf16.mxu0 %v834
    %3978 = vmatmul.mubr.bf16.gmra.mrb[0].mxu0 %v833
    %v3979 = vpop.f32.mrb[0].mxu0
    %v3980 = vadd.f32 %v652, %v3979
    %v3981 = vpop.f32.mrb[0].mxu0
    %v3982 = vadd.f32 %v656, %v3981
    %v3983 = vpop.f32.mrb[0].mxu0
    %v3984 = vadd.f32 %v652, %v3983
    %v3985 = vpop.f32.mrb[0].mxu0
    %v3986 = vadd.f32 %v656, %v3985
    %3987 = vmatprep.mubr.bf16.mxu0 %v838
    %3988 = vmatmul.mubr.bf16.gmra.mrb[0].mxu0 %v837
    %v3989 = vpop.f32.mrb[0].mxu0
    %v3990 = vadd.f32 %v652, %v3989
    %v3991 = vpop.f32.mrb[0].mxu0
    %v3992 = vadd.f32 %v656, %v3991
    %v3993 = vpop.f32.mrb[0].mxu0
    %v3994 = vadd.f32 %v652, %v3993
    %v3995 = vpop.f32.mrb[0].mxu0
    %v3996 = vadd.f32 %v656, %v3995
    %3997 = vdwg.mxu0
    %3998 = vmatprep.subr.bf16.mxu0 %v2670
    %3999 = vmatpush1.bf16.msra.mxu0 %v2669
    %4000 = vmatprep.subr.bf16.mxu0 %v2686
    %4001 = vmatpush1.bf16.msra.mxu0 %v2685
    %4002 = vmatprep.subr.bf16.mxu0 %v2702
    %4003 = vmatpush1.bf16.msra.mxu0 %v2701
    %4004 = vmatprep.subr.bf16.mxu0 %v2718
    %4005 = vmatpush1.bf16.msra.mxu0 %v2717
    %4006 = vmatprep.subr.bf16.mxu0 %v2734
    %4007 = vmatpush1.bf16.msra.mxu0 %v2733
    %4008 = vmatprep.subr.bf16.mxu0 %v2750
    %4009 = vmatpush1.bf16.msra.mxu0 %v2749
    %4010 = vmatprep.subr.bf16.mxu0 %v2766
    %4011 = vmatpush1.bf16.msra.mxu0 %v2765
    %4012 = vmatprep.subr.bf16.mxu0 %v2782
    %4013 = vmatpush1.bf16.msra.mxu0 %v2781
    %4014 = vmatprep.subr.bf16.mxu0 %v2798
    %4015 = vmatpush1.bf16.msra.mxu0 %v2797
    %4016 = vmatprep.subr.bf16.mxu0 %v2814
    %4017 = vmatpush1.bf16.msra.mxu0 %v2813
    %4018 = vmatprep.subr.bf16.mxu0 %v2830
    %4019 = vmatpush1.bf16.msra.mxu0 %v2829
    %4020 = vmatprep.subr.bf16.mxu0 %v2846
    %4021 = vmatpush1.bf16.msra.mxu0 %v2845
    %4022 = vmatprep.subr.bf16.mxu0 %v2862
    %4023 = vmatpush1.bf16.msra.mxu0 %v2861
    %4024 = vmatprep.subr.bf16.mxu0 %v2878
    %4025 = vmatpush1.bf16.msra.mxu0 %v2877
    %4026 = vmatprep.subr.bf16.mxu0 %v2894
    %4027 = vmatpush1.bf16.msra.mxu0 %v2893
    %4028 = vmatprep.subr.bf16.mxu0 %v2910
    %4029 = vmatpush1.bf16.msra.mxu0 %v2909
    %4030 = vmatprep.mubr.bf16.mxu0 %v812
    %4031 = vmatmul.mubr.bf16.gmra.mrb[0].mxu0 %v811
    %v4032 = vpop.f32.mrb[0].mxu0
    %v4033 = vadd.f32 %v3920, %v4032
    %v4034 = vpop.f32.mrb[0].mxu0
    %v4035 = vadd.f32 %v3922, %v4034
    %v4036 = vpop.f32.mrb[0].mxu0
    %v4037 = vadd.f32 %v3924, %v4036
    %v4038 = vpop.f32.mrb[0].mxu0
    %v4039 = vadd.f32 %v3926, %v4038
    %4040 = vmatprep.mubr.bf16.mxu0 %v816
    %4041 = vmatmul.mubr.bf16.gmra.mrb[0].mxu0 %v815
    %v4042 = vpop.f32.mrb[0].mxu0
    %v4043 = vadd.f32 %v3930, %v4042
    %v4044 = vpop.f32.mrb[0].mxu0
    %v4045 = vadd.f32 %v3932, %v4044
    %v4046 = vpop.f32.mrb[0].mxu0
    %v4047 = vadd.f32 %v3934, %v4046
    %v4048 = vpop.f32.mrb[0].mxu0
    %v4049 = vadd.f32 %v3936, %v4048
    %4050 = vmatprep.mubr.bf16.mxu0 %v820
    %4051 = vmatmul.mubr.bf16.gmra.mrb[0].mxu0 %v819
    %v4052 = vpop.f32.mrb[0].mxu0
    %v4053 = vadd.f32 %v3940, %v4052
    %v4054 = vpop.f32.mrb[0].mxu0
    %v4055 = vadd.f32 %v3942, %v4054
    %v4056 = vpop.f32.mrb[0].mxu0
    %v4057 = vadd.f32 %v3944, %v4056
    %v4058 = vpop.f32.mrb[0].mxu0
    %v4059 = vadd.f32 %v3946, %v4058
    %4060 = vmatprep.mubr.bf16.mxu0 %v824
    %4061 = vmatmul.mubr.bf16.gmra.mrb[0].mxu0 %v823
    %v4062 = vpop.f32.mrb[0].mxu0
    %v4063 = vadd.f32 %v3950, %v4062
    %v4064 = vpop.f32.mrb[0].mxu0
    %v4065 = vadd.f32 %v3952, %v4064
    %v4066 = vpop.f32.mrb[0].mxu0
    %v4067 = vadd.f32 %v3954, %v4066
    %v4068 = vpop.f32.mrb[0].mxu0
    %v4069 = vadd.f32 %v3956, %v4068
    %4070 = vmatprep.mubr.bf16.mxu0 %v828
    %4071 = vmatmul.mubr.bf16.gmra.mrb[0].mxu0 %v827
    %v4072 = vpop.f32.mrb[0].mxu0
    %v4073 = vadd.f32 %v3960, %v4072
    %v4074 = vpop.f32.mrb[0].mxu0
    %v4075 = vadd.f32 %v3962, %v4074
    %v4076 = vpop.f32.mrb[0].mxu0
    %v4077 = vadd.f32 %v3964, %v4076
    %v4078 = vpop.f32.mrb[0].mxu0
    %v4079 = vadd.f32 %v3966, %v4078
    %4080 = vmatprep.mubr.bf16.mxu0 %v832
    %4081 = vmatmul.mubr.bf16.gmra.mrb[0].mxu0 %v831
    %v4082 = vpop.f32.mrb[0].mxu0
    %v4083 = vadd.f32 %v3970, %v4082
    %v4084 = vpop.f32.mrb[0].mxu0
    %v4085 = vadd.f32 %v3972, %v4084
    %v4086 = vpop.f32.mrb[0].mxu0
    %v4087 = vadd.f32 %v3974, %v4086
    %v4088 = vpop.f32.mrb[0].mxu0
    %v4089 = vadd.f32 %v3976, %v4088
    %4090 = vmatprep.mubr.bf16.mxu0 %v836
    %4091 = vmatmul.mubr.bf16.gmra.mrb[0].mxu0 %v835
    %v4092 = vpop.f32.mrb[0].mxu0
    %v4093 = vadd.f32 %v3980, %v4092
    %v4094 = vpop.f32.mrb[0].mxu0
    %v4095 = vadd.f32 %v3982, %v4094
    %v4096 = vpop.f32.mrb[0].mxu0
    %v4097 = vadd.f32 %v3984, %v4096
    %v4098 = vpop.f32.mrb[0].mxu0
    %v4099 = vadd.f32 %v3986, %v4098
    %4100 = vmatprep.mubr.bf16.mxu0 %v840
    %4101 = vmatmul.mubr.bf16.gmra.mrb[0].mxu0 %v839
    %v4102 = vpop.f32.mrb[0].mxu0
    %v4103 = vadd.f32 %v3990, %v4102
    %v4104 = vpop.f32.mrb[0].mxu0
    %v4105 = vadd.f32 %v3992, %v4104
    %v4106 = vpop.f32.mrb[0].mxu0
    %v4107 = vadd.f32 %v3994, %v4106
    %v4108 = vpop.f32.mrb[0].mxu0
    %v4109 = vadd.f32 %v3996, %v4108
    %4110 = vdwg.mxu0
    %4111 = vmatprep.subr.bf16.mxu0 %v2416
    %4112 = vmatpush1.bf16.msra.mxu0 %v2415
    %4113 = vmatprep.subr.bf16.mxu0 %v2432
    %4114 = vmatpush1.bf16.msra.mxu0 %v2431
    %4115 = vmatprep.subr.bf16.mxu0 %v2448
    %4116 = vmatpush1.bf16.msra.mxu0 %v2447
    %4117 = vmatprep.subr.bf16.mxu0 %v2464
    %4118 = vmatpush1.bf16.msra.mxu0 %v2463
    %4119 = vmatprep.subr.bf16.mxu0 %v2480
    %4120 = vmatpush1.bf16.msra.mxu0 %v2479
    %4121 = vmatprep.subr.bf16.mxu0 %v2496
    %4122 = vmatpush1.bf16.msra.mxu0 %v2495
    %4123 = vmatprep.subr.bf16.mxu0 %v2512
    %4124 = vmatpush1.bf16.msra.mxu0 %v2511
    %4125 = vmatprep.subr.bf16.mxu0 %v2528
    %4126 = vmatpush1.bf16.msra.mxu0 %v2527
    %4127 = vmatprep.subr.bf16.mxu0 %v2544
    %4128 = vmatpush1.bf16.msra.mxu0 %v2543
    %4129 = vmatprep.subr.bf16.mxu0 %v2560
    %4130 = vmatpush1.bf16.msra.mxu0 %v2559
    %4131 = vmatprep.subr.bf16.mxu0 %v2576
    %4132 = vmatpush1.bf16.msra.mxu0 %v2575
    %4133 = vmatprep.subr.bf16.mxu0 %v2592
    %4134 = vmatpush1.bf16.msra.mxu0 %v2591
    %4135 = vmatprep.subr.bf16.mxu0 %v2608
    %4136 = vmatpush1.bf16.msra.mxu0 %v2607
    %4137 = vmatprep.subr.bf16.mxu0 %v2624
    %4138 = vmatpush1.bf16.msra.mxu0 %v2623
    %4139 = vmatprep.subr.bf16.mxu0 %v2640
    %4140 = vmatpush1.bf16.msra.mxu0 %v2639
    %4141 = vmatprep.subr.bf16.mxu0 %v2656
    %4142 = vmatpush1.bf16.msra.mxu0 %v2655
    %4143 = vmatprep.mubr.bf16.mxu0 %v810
    %4144 = vmatmul.mubr.bf16.gmra.mrb[0].mxu0 %v809
    %v4145 = vpop.f32.mrb[0].mxu0
    %v4146 = vadd.f32 %v660, %v4145
    %v4147 = vpop.f32.mrb[0].mxu0
    %v4148 = vadd.f32 %v664, %v4147
    %v4149 = vpop.f32.mrb[0].mxu0
    %v4150 = vadd.f32 %v660, %v4149
    %v4151 = vpop.f32.mrb[0].mxu0
    %v4152 = vadd.f32 %v664, %v4151
    %4153 = vmatprep.mubr.bf16.mxu0 %v814
    %4154 = vmatmul.mubr.bf16.gmra.mrb[0].mxu0 %v813
    %v4155 = vpop.f32.mrb[0].mxu0
    %v4156 = vadd.f32 %v660, %v4155
    %v4157 = vpop.f32.mrb[0].mxu0
    %v4158 = vadd.f32 %v664, %v4157
    %v4159 = vpop.f32.mrb[0].mxu0
    %v4160 = vadd.f32 %v660, %v4159
    %v4161 = vpop.f32.mrb[0].mxu0
    %v4162 = vadd.f32 %v664, %v4161
    %4163 = vmatprep.mubr.bf16.mxu0 %v818
    %4164 = vmatmul.mubr.bf16.gmra.mrb[0].mxu0 %v817
    %v4165 = vpop.f32.mrb[0].mxu0
    %v4166 = vadd.f32 %v660, %v4165
    %v4167 = vpop.f32.mrb[0].mxu0
    %v4168 = vadd.f32 %v664, %v4167
    %v4169 = vpop.f32.mrb[0].mxu0
    %v4170 = vadd.f32 %v660, %v4169
    %v4171 = vpop.f32.mrb[0].mxu0
    %v4172 = vadd.f32 %v664, %v4171
    %4173 = vmatprep.mubr.bf16.mxu0 %v822
    %4174 = vmatmul.mubr.bf16.gmra.mrb[0].mxu0 %v821
    %v4175 = vpop.f32.mrb[0].mxu0
    %v4176 = vadd.f32 %v660, %v4175
    %v4177 = vpop.f32.mrb[0].mxu0
    %v4178 = vadd.f32 %v664, %v4177
    %v4179 = vpop.f32.mrb[0].mxu0
    %v4180 = vadd.f32 %v660, %v4179
    %v4181 = vpop.f32.mrb[0].mxu0
    %v4182 = vadd.f32 %v664, %v4181
    %4183 = vmatprep.mubr.bf16.mxu0 %v826
    %4184 = vmatmul.mubr.bf16.gmra.mrb[0].mxu0 %v825
    %v4185 = vpop.f32.mrb[0].mxu0
    %v4186 = vadd.f32 %v660, %v4185
    %v4187 = vpop.f32.mrb[0].mxu0
    %v4188 = vadd.f32 %v664, %v4187
    %v4189 = vpop.f32.mrb[0].mxu0
    %v4190 = vadd.f32 %v660, %v4189
    %v4191 = vpop.f32.mrb[0].mxu0
    %v4192 = vadd.f32 %v664, %v4191
    %4193 = vmatprep.mubr.bf16.mxu0 %v830
    %4194 = vmatmul.mubr.bf16.gmra.mrb[0].mxu0 %v829
    %v4195 = vpop.f32.mrb[0].mxu0
    %v4196 = vadd.f32 %v660, %v4195
    %v4197 = vpop.f32.mrb[0].mxu0
    %v4198 = vadd.f32 %v664, %v4197
    %v4199 = vpop.f32.mrb[0].mxu0
    %v4200 = vadd.f32 %v660, %v4199
    %v4201 = vpop.f32.mrb[0].mxu0
    %v4202 = vadd.f32 %v664, %v4201
    %4203 = vmatprep.mubr.bf16.mxu0 %v834
    %4204 = vmatmul.mubr.bf16.gmra.mrb[0].mxu0 %v833
    %v4205 = vpop.f32.mrb[0].mxu0
    %v4206 = vadd.f32 %v660, %v4205
    %v4207 = vpop.f32.mrb[0].mxu0
    %v4208 = vadd.f32 %v664, %v4207
    %v4209 = vpop.f32.mrb[0].mxu0
    %v4210 = vadd.f32 %v660, %v4209
    %v4211 = vpop.f32.mrb[0].mxu0
    %v4212 = vadd.f32 %v664, %v4211
    %4213 = vmatprep.mubr.bf16.mxu0 %v838
    %4214 = vmatmul.mubr.bf16.gmra.mrb[0].mxu0 %v837
    %v4215 = vpop.f32.mrb[0].mxu0
    %v4216 = vadd.f32 %v660, %v4215
    %v4217 = vpop.f32.mrb[0].mxu0
    %v4218 = vadd.f32 %v664, %v4217
    %v4219 = vpop.f32.mrb[0].mxu0
    %v4220 = vadd.f32 %v660, %v4219
    %v4221 = vpop.f32.mrb[0].mxu0
    %v4222 = vadd.f32 %v664, %v4221
    %4223 = vdwg.mxu0
    %4224 = vmatprep.subr.bf16.mxu0 %v2672
    %4225 = vmatpush1.bf16.msra.mxu0 %v2671
    %4226 = vmatprep.subr.bf16.mxu0 %v2688
    %4227 = vmatpush1.bf16.msra.mxu0 %v2687
    %4228 = vmatprep.subr.bf16.mxu0 %v2704
    %4229 = vmatpush1.bf16.msra.mxu0 %v2703
    %4230 = vmatprep.subr.bf16.mxu0 %v2720
    %4231 = vmatpush1.bf16.msra.mxu0 %v2719
    %4232 = vmatprep.subr.bf16.mxu0 %v2736
    %4233 = vmatpush1.bf16.msra.mxu0 %v2735
    %4234 = vmatprep.subr.bf16.mxu0 %v2752
    %4235 = vmatpush1.bf16.msra.mxu0 %v2751
    %4236 = vmatprep.subr.bf16.mxu0 %v2768
    %4237 = vmatpush1.bf16.msra.mxu0 %v2767
    %4238 = vmatprep.subr.bf16.mxu0 %v2784
    %4239 = vmatpush1.bf16.msra.mxu0 %v2783
    %4240 = vmatprep.subr.bf16.mxu0 %v2800
    %4241 = vmatpush1.bf16.msra.mxu0 %v2799
    %4242 = vmatprep.subr.bf16.mxu0 %v2816
    %4243 = vmatpush1.bf16.msra.mxu0 %v2815
    %4244 = vmatprep.subr.bf16.mxu0 %v2832
    %4245 = vmatpush1.bf16.msra.mxu0 %v2831
    %4246 = vmatprep.subr.bf16.mxu0 %v2848
    %4247 = vmatpush1.bf16.msra.mxu0 %v2847
    %4248 = vmatprep.subr.bf16.mxu0 %v2864
    %4249 = vmatpush1.bf16.msra.mxu0 %v2863
    %4250 = vmatprep.subr.bf16.mxu0 %v2880
    %4251 = vmatpush1.bf16.msra.mxu0 %v2879
    %4252 = vmatprep.subr.bf16.mxu0 %v2896
    %4253 = vmatpush1.bf16.msra.mxu0 %v2895
    %4254 = vmatprep.subr.bf16.mxu0 %v2912
    %4255 = vmatpush1.bf16.msra.mxu0 %v2911
    %4256 = vmatprep.mubr.bf16.mxu0 %v812
    %4257 = vmatmul.mubr.bf16.gmra.mrb[0].mxu0 %v811
    %v4258 = vpop.f32.mrb[0].mxu0
    %v4259 = vadd.f32 %v4146, %v4258
    %v4260 = vpop.f32.mrb[0].mxu0
    %v4261 = vadd.f32 %v4148, %v4260
    %v4262 = vpop.f32.mrb[0].mxu0
    %v4263 = vadd.f32 %v4150, %v4262
    %v4264 = vpop.f32.mrb[0].mxu0
    %v4265 = vadd.f32 %v4152, %v4264
    %4266 = vmatprep.mubr.bf16.mxu0 %v816
    %4267 = vmatmul.mubr.bf16.gmra.mrb[0].mxu0 %v815
    %v4268 = vpop.f32.mrb[0].mxu0
    %v4269 = vadd.f32 %v4156, %v4268
    %v4270 = vpop.f32.mrb[0].mxu0
    %v4271 = vadd.f32 %v4158, %v4270
    %v4272 = vpop.f32.mrb[0].mxu0
    %v4273 = vadd.f32 %v4160, %v4272
    %v4274 = vpop.f32.mrb[0].mxu0
    %v4275 = vadd.f32 %v4162, %v4274
    %4276 = vmatprep.mubr.bf16.mxu0 %v820
    %4277 = vmatmul.mubr.bf16.gmra.mrb[0].mxu0 %v819
    %v4278 = vpop.f32.mrb[0].mxu0
    %v4279 = vadd.f32 %v4166, %v4278
    %v4280 = vpop.f32.mrb[0].mxu0
    %v4281 = vadd.f32 %v4168, %v4280
    %v4282 = vpop.f32.mrb[0].mxu0
    %v4283 = vadd.f32 %v4170, %v4282
    %v4284 = vpop.f32.mrb[0].mxu0
    %v4285 = vadd.f32 %v4172, %v4284
    %4286 = vmatprep.mubr.bf16.mxu0 %v824
    %4287 = vmatmul.mubr.bf16.gmra.mrb[0].mxu0 %v823
    %v4288 = vpop.f32.mrb[0].mxu0
    %v4289 = vadd.f32 %v4176, %v4288
    %v4290 = vpop.f32.mrb[0].mxu0
    %v4291 = vadd.f32 %v4178, %v4290
    %v4292 = vpop.f32.mrb[0].mxu0
    %v4293 = vadd.f32 %v4180, %v4292
    %v4294 = vpop.f32.mrb[0].mxu0
    %v4295 = vadd.f32 %v4182, %v4294
    %4296 = vmatprep.mubr.bf16.mxu0 %v828
    %4297 = vmatmul.mubr.bf16.gmra.mrb[0].mxu0 %v827
    %v4298 = vpop.f32.mrb[0].mxu0
    %v4299 = vadd.f32 %v4186, %v4298
    %v4300 = vpop.f32.mrb[0].mxu0
    %v4301 = vadd.f32 %v4188, %v4300
    %v4302 = vpop.f32.mrb[0].mxu0
    %v4303 = vadd.f32 %v4190, %v4302
    %v4304 = vpop.f32.mrb[0].mxu0
    %v4305 = vadd.f32 %v4192, %v4304
    %4306 = vmatprep.mubr.bf16.mxu0 %v832
    %4307 = vmatmul.mubr.bf16.gmra.mrb[0].mxu0 %v831
    %v4308 = vpop.f32.mrb[0].mxu0
    %v4309 = vadd.f32 %v4196, %v4308
    %v4310 = vpop.f32.mrb[0].mxu0
    %v4311 = vadd.f32 %v4198, %v4310
    %v4312 = vpop.f32.mrb[0].mxu0
    %v4313 = vadd.f32 %v4200, %v4312
    %v4314 = vpop.f32.mrb[0].mxu0
    %v4315 = vadd.f32 %v4202, %v4314
    %4316 = vmatprep.mubr.bf16.mxu0 %v836
    %4317 = vmatmul.mubr.bf16.gmra.mrb[0].mxu0 %v835
    %v4318 = vpop.f32.mrb[0].mxu0
    %v4319 = vadd.f32 %v4206, %v4318
    %v4320 = vpop.f32.mrb[0].mxu0
    %v4321 = vadd.f32 %v4208, %v4320
    %v4322 = vpop.f32.mrb[0].mxu0
    %v4323 = vadd.f32 %v4210, %v4322
    %v4324 = vpop.f32.mrb[0].mxu0
    %v4325 = vadd.f32 %v4212, %v4324
    %4326 = vmatprep.mubr.bf16.mxu0 %v840
    %4327 = vmatmul.mubr.bf16.gmra.mrb[0].mxu0 %v839
    %v4328 = vpop.f32.mrb[0].mxu0
    %v4329 = vadd.f32 %v4216, %v4328
    %v4330 = vpop.f32.mrb[0].mxu0
    %v4331 = vadd.f32 %v4218, %v4330
    %v4332 = vpop.f32.mrb[0].mxu0
    %v4333 = vadd.f32 %v4220, %v4332
    %v4334 = vpop.f32.mrb[0].mxu0
    %v4335 = vadd.f32 %v4222, %v4334
    %4336 = vdwg.mxu0
    %4337 = vmatprep.subr.bf16.mxu0 %v2418
    %4338 = vmatpush1.bf16.msra.mxu0 %v2417
    %4339 = vmatprep.subr.bf16.mxu0 %v2434
    %4340 = vmatpush1.bf16.msra.mxu0 %v2433
    %4341 = vmatprep.subr.bf16.mxu0 %v2450
    %4342 = vmatpush1.bf16.msra.mxu0 %v2449
    %4343 = vmatprep.subr.bf16.mxu0 %v2466
    %4344 = vmatpush1.bf16.msra.mxu0 %v2465
    %4345 = vmatprep.subr.bf16.mxu0 %v2482
    %4346 = vmatpush1.bf16.msra.mxu0 %v2481
    %4347 = vmatprep.subr.bf16.mxu0 %v2498
    %4348 = vmatpush1.bf16.msra.mxu0 %v2497
    %4349 = vmatprep.subr.bf16.mxu0 %v2514
    %4350 = vmatpush1.bf16.msra.mxu0 %v2513
    %4351 = vmatprep.subr.bf16.mxu0 %v2530
    %4352 = vmatpush1.bf16.msra.mxu0 %v2529
    %4353 = vmatprep.subr.bf16.mxu0 %v2546
    %4354 = vmatpush1.bf16.msra.mxu0 %v2545
    %4355 = vmatprep.subr.bf16.mxu0 %v2562
    %4356 = vmatpush1.bf16.msra.mxu0 %v2561
    %4357 = vmatprep.subr.bf16.mxu0 %v2578
    %4358 = vmatpush1.bf16.msra.mxu0 %v2577
    %4359 = vmatprep.subr.bf16.mxu0 %v2594
    %4360 = vmatpush1.bf16.msra.mxu0 %v2593
    %4361 = vmatprep.subr.bf16.mxu0 %v2610
    %4362 = vmatpush1.bf16.msra.mxu0 %v2609
    %4363 = vmatprep.subr.bf16.mxu0 %v2626
    %4364 = vmatpush1.bf16.msra.mxu0 %v2625
    %4365 = vmatprep.subr.bf16.mxu0 %v2642
    %4366 = vmatpush1.bf16.msra.mxu0 %v2641
    %4367 = vmatprep.subr.bf16.mxu0 %v2658
    %4368 = vmatpush1.bf16.msra.mxu0 %v2657
    %4369 = vmatprep.mubr.bf16.mxu0 %v810
    %4370 = vmatmul.mubr.bf16.gmra.mrb[0].mxu0 %v809
    %v4371 = vpop.f32.mrb[0].mxu0
    %v4372 = vadd.f32 %v668, %v4371
    %v4373 = vpop.f32.mrb[0].mxu0
    %v4374 = vadd.f32 %v672, %v4373
    %v4375 = vpop.f32.mrb[0].mxu0
    %v4376 = vadd.f32 %v668, %v4375
    %v4377 = vpop.f32.mrb[0].mxu0
    %v4378 = vadd.f32 %v672, %v4377
    %4379 = vmatprep.mubr.bf16.mxu0 %v814
    %4380 = vmatmul.mubr.bf16.gmra.mrb[0].mxu0 %v813
    %v4381 = vpop.f32.mrb[0].mxu0
    %v4382 = vadd.f32 %v668, %v4381
    %v4383 = vpop.f32.mrb[0].mxu0
    %v4384 = vadd.f32 %v672, %v4383
    %v4385 = vpop.f32.mrb[0].mxu0
    %v4386 = vadd.f32 %v668, %v4385
    %v4387 = vpop.f32.mrb[0].mxu0
    %v4388 = vadd.f32 %v672, %v4387
    %4389 = vmatprep.mubr.bf16.mxu0 %v818
    %4390 = vmatmul.mubr.bf16.gmra.mrb[0].mxu0 %v817
    %v4391 = vpop.f32.mrb[0].mxu0
    %v4392 = vadd.f32 %v668, %v4391
    %v4393 = vpop.f32.mrb[0].mxu0
    %v4394 = vadd.f32 %v672, %v4393
    %v4395 = vpop.f32.mrb[0].mxu0
    %v4396 = vadd.f32 %v668, %v4395
    %v4397 = vpop.f32.mrb[0].mxu0
    %v4398 = vadd.f32 %v672, %v4397
    %4399 = vmatprep.mubr.bf16.mxu0 %v822
    %4400 = vmatmul.mubr.bf16.gmra.mrb[0].mxu0 %v821
    %v4401 = vpop.f32.mrb[0].mxu0
    %v4402 = vadd.f32 %v668, %v4401
    %v4403 = vpop.f32.mrb[0].mxu0
    %v4404 = vadd.f32 %v672, %v4403
    %v4405 = vpop.f32.mrb[0].mxu0
    %v4406 = vadd.f32 %v668, %v4405
    %v4407 = vpop.f32.mrb[0].mxu0
    %v4408 = vadd.f32 %v672, %v4407
    %4409 = vmatprep.mubr.bf16.mxu0 %v826
    %4410 = vmatmul.mubr.bf16.gmra.mrb[0].mxu0 %v825
    %v4411 = vpop.f32.mrb[0].mxu0
    %v4412 = vadd.f32 %v668, %v4411
    %v4413 = vpop.f32.mrb[0].mxu0
    %v4414 = vadd.f32 %v672, %v4413
    %v4415 = vpop.f32.mrb[0].mxu0
    %v4416 = vadd.f32 %v668, %v4415
    %v4417 = vpop.f32.mrb[0].mxu0
    %v4418 = vadd.f32 %v672, %v4417
    %4419 = vmatprep.mubr.bf16.mxu0 %v830
    %4420 = vmatmul.mubr.bf16.gmra.mrb[0].mxu0 %v829
    %v4421 = vpop.f32.mrb[0].mxu0
    %v4422 = vadd.f32 %v668, %v4421
    %v4423 = vpop.f32.mrb[0].mxu0
    %v4424 = vadd.f32 %v672, %v4423
    %v4425 = vpop.f32.mrb[0].mxu0
    %v4426 = vadd.f32 %v668, %v4425
    %v4427 = vpop.f32.mrb[0].mxu0
    %v4428 = vadd.f32 %v672, %v4427
    %4429 = vmatprep.mubr.bf16.mxu0 %v834
    %4430 = vmatmul.mubr.bf16.gmra.mrb[0].mxu0 %v833
    %v4431 = vpop.f32.mrb[0].mxu0
    %v4432 = vadd.f32 %v668, %v4431
    %v4433 = vpop.f32.mrb[0].mxu0
    %v4434 = vadd.f32 %v672, %v4433
    %v4435 = vpop.f32.mrb[0].mxu0
    %v4436 = vadd.f32 %v668, %v4435
    %v4437 = vpop.f32.mrb[0].mxu0
    %v4438 = vadd.f32 %v672, %v4437
    %4439 = vmatprep.mubr.bf16.mxu0 %v838
    %4440 = vmatmul.mubr.bf16.gmra.mrb[0].mxu0 %v837
    %v4441 = vpop.f32.mrb[0].mxu0
    %v4442 = vadd.f32 %v668, %v4441
    %v4443 = vpop.f32.mrb[0].mxu0
    %v4444 = vadd.f32 %v672, %v4443
    %v4445 = vpop.f32.mrb[0].mxu0
    %v4446 = vadd.f32 %v668, %v4445
    %v4447 = vpop.f32.mrb[0].mxu0
    %v4448 = vadd.f32 %v672, %v4447
    %4449 = vdwg.mxu0
    %4450 = vmatprep.subr.bf16.mxu0 %v2674
    %4451 = vmatpush1.bf16.msra.mxu0 %v2673
    %4452 = vmatprep.subr.bf16.mxu0 %v2690
    %4453 = vmatpush1.bf16.msra.mxu0 %v2689
    %4454 = vmatprep.subr.bf16.mxu0 %v2706
    %4455 = vmatpush1.bf16.msra.mxu0 %v2705
    %4456 = vmatprep.subr.bf16.mxu0 %v2722
    %4457 = vmatpush1.bf16.msra.mxu0 %v2721
    %4458 = vmatprep.subr.bf16.mxu0 %v2738
    %4459 = vmatpush1.bf16.msra.mxu0 %v2737
    %4460 = vmatprep.subr.bf16.mxu0 %v2754
    %4461 = vmatpush1.bf16.msra.mxu0 %v2753
    %4462 = vmatprep.subr.bf16.mxu0 %v2770
    %4463 = vmatpush1.bf16.msra.mxu0 %v2769
    %4464 = vmatprep.subr.bf16.mxu0 %v2786
    %4465 = vmatpush1.bf16.msra.mxu0 %v2785
    %4466 = vmatprep.subr.bf16.mxu0 %v2802
    %4467 = vmatpush1.bf16.msra.mxu0 %v2801
    %4468 = vmatprep.subr.bf16.mxu0 %v2818
    %4469 = vmatpush1.bf16.msra.mxu0 %v2817
    %4470 = vmatprep.subr.bf16.mxu0 %v2834
    %4471 = vmatpush1.bf16.msra.mxu0 %v2833
    %4472 = vmatprep.subr.bf16.mxu0 %v2850
    %4473 = vmatpush1.bf16.msra.mxu0 %v2849
    %4474 = vmatprep.subr.bf16.mxu0 %v2866
    %4475 = vmatpush1.bf16.msra.mxu0 %v2865
    %4476 = vmatprep.subr.bf16.mxu0 %v2882
    %4477 = vmatpush1.bf16.msra.mxu0 %v2881
    %4478 = vmatprep.subr.bf16.mxu0 %v2898
    %4479 = vmatpush1.bf16.msra.mxu0 %v2897
    %4480 = vmatprep.subr.bf16.mxu0 %v2914
    %4481 = vmatpush1.bf16.msra.mxu0 %v2913
    %4482 = vmatprep.mubr.bf16.mxu0 %v812
    %4483 = vmatmul.mubr.bf16.gmra.mrb[0].mxu0 %v811
    %v4484 = vpop.f32.mrb[0].mxu0
    %v4485 = vadd.f32 %v4372, %v4484
    %v4486 = vpop.f32.mrb[0].mxu0
    %v4487 = vadd.f32 %v4374, %v4486
    %v4488 = vpop.f32.mrb[0].mxu0
    %v4489 = vadd.f32 %v4376, %v4488
    %v4490 = vpop.f32.mrb[0].mxu0
    %v4491 = vadd.f32 %v4378, %v4490
    %4492 = vmatprep.mubr.bf16.mxu0 %v816
    %4493 = vmatmul.mubr.bf16.gmra.mrb[0].mxu0 %v815
    %v4494 = vpop.f32.mrb[0].mxu0
    %v4495 = vadd.f32 %v4382, %v4494
    %v4496 = vpop.f32.mrb[0].mxu0
    %v4497 = vadd.f32 %v4384, %v4496
    %v4498 = vpop.f32.mrb[0].mxu0
    %v4499 = vadd.f32 %v4386, %v4498
    %v4500 = vpop.f32.mrb[0].mxu0
    %v4501 = vadd.f32 %v4388, %v4500
    %4502 = vmatprep.mubr.bf16.mxu0 %v820
    %4503 = vmatmul.mubr.bf16.gmra.mrb[0].mxu0 %v819
    %v4504 = vpop.f32.mrb[0].mxu0
    %v4505 = vadd.f32 %v4392, %v4504
    %v4506 = vpop.f32.mrb[0].mxu0
    %v4507 = vadd.f32 %v4394, %v4506
    %v4508 = vpop.f32.mrb[0].mxu0
    %v4509 = vadd.f32 %v4396, %v4508
    %v4510 = vpop.f32.mrb[0].mxu0
    %v4511 = vadd.f32 %v4398, %v4510
    %4512 = vmatprep.mubr.bf16.mxu0 %v824
    %4513 = vmatmul.mubr.bf16.gmra.mrb[0].mxu0 %v823
    %v4514 = vpop.f32.mrb[0].mxu0
    %v4515 = vadd.f32 %v4402, %v4514
    %v4516 = vpop.f32.mrb[0].mxu0
    %v4517 = vadd.f32 %v4404, %v4516
    %v4518 = vpop.f32.mrb[0].mxu0
    %v4519 = vadd.f32 %v4406, %v4518
    %v4520 = vpop.f32.mrb[0].mxu0
    %v4521 = vadd.f32 %v4408, %v4520
    %4522 = vmatprep.mubr.bf16.mxu0 %v828
    %4523 = vmatmul.mubr.bf16.gmra.mrb[0].mxu0 %v827
    %v4524 = vpop.f32.mrb[0].mxu0
    %v4525 = vadd.f32 %v4412, %v4524
    %v4526 = vpop.f32.mrb[0].mxu0
    %v4527 = vadd.f32 %v4414, %v4526
    %v4528 = vpop.f32.mrb[0].mxu0
    %v4529 = vadd.f32 %v4416, %v4528
    %v4530 = vpop.f32.mrb[0].mxu0
    %v4531 = vadd.f32 %v4418, %v4530
    %4532 = vmatprep.mubr.bf16.mxu0 %v832
    %4533 = vmatmul.mubr.bf16.gmra.mrb[0].mxu0 %v831
    %v4534 = vpop.f32.mrb[0].mxu0
    %v4535 = vadd.f32 %v4422, %v4534
    %v4536 = vpop.f32.mrb[0].mxu0
    %v4537 = vadd.f32 %v4424, %v4536
    %v4538 = vpop.f32.mrb[0].mxu0
    %v4539 = vadd.f32 %v4426, %v4538
    %v4540 = vpop.f32.mrb[0].mxu0
    %v4541 = vadd.f32 %v4428, %v4540
    %4542 = vmatprep.mubr.bf16.mxu0 %v836
    %4543 = vmatmul.mubr.bf16.gmra.mrb[0].mxu0 %v835
    %v4544 = vpop.f32.mrb[0].mxu0
    %v4545 = vadd.f32 %v4432, %v4544
    %v4546 = vpop.f32.mrb[0].mxu0
    %v4547 = vadd.f32 %v4434, %v4546
    %v4548 = vpop.f32.mrb[0].mxu0
    %v4549 = vadd.f32 %v4436, %v4548
    %v4550 = vpop.f32.mrb[0].mxu0
    %v4551 = vadd.f32 %v4438, %v4550
    %4552 = vmatprep.mubr.bf16.mxu0 %v840
    %4553 = vmatmul.mubr.bf16.gmra.mrb[0].mxu0 %v839
    %v4554 = vpop.f32.mrb[0].mxu0
    %v4555 = vadd.f32 %v4442, %v4554
    %v4556 = vpop.f32.mrb[0].mxu0
    %v4557 = vadd.f32 %v4444, %v4556
    %v4558 = vpop.f32.mrb[0].mxu0
    %v4559 = vadd.f32 %v4446, %v4558
    %v4560 = vpop.f32.mrb[0].mxu0
    %v4561 = vadd.f32 %v4448, %v4560
    %4562 = vdwg.mxu0
    %4563 = vmatprep.subr.bf16.mxu0 %v2420
    %4564 = vmatpush1.bf16.msra.mxu0 %v2419
    %4565 = vmatprep.subr.bf16.mxu0 %v2436
    %4566 = vmatpush1.bf16.msra.mxu0 %v2435
    %4567 = vmatprep.subr.bf16.mxu0 %v2452
    %4568 = vmatpush1.bf16.msra.mxu0 %v2451
    %4569 = vmatprep.subr.bf16.mxu0 %v2468
    %4570 = vmatpush1.bf16.msra.mxu0 %v2467
    %4571 = vmatprep.subr.bf16.mxu0 %v2484
    %4572 = vmatpush1.bf16.msra.mxu0 %v2483
    %4573 = vmatprep.subr.bf16.mxu0 %v2500
    %4574 = vmatpush1.bf16.msra.mxu0 %v2499
    %4575 = vmatprep.subr.bf16.mxu0 %v2516
    %4576 = vmatpush1.bf16.msra.mxu0 %v2515
    %4577 = vmatprep.subr.bf16.mxu0 %v2532
    %4578 = vmatpush1.bf16.msra.mxu0 %v2531
    %4579 = vmatprep.subr.bf16.mxu0 %v2548
    %4580 = vmatpush1.bf16.msra.mxu0 %v2547
    %4581 = vmatprep.subr.bf16.mxu0 %v2564
    %4582 = vmatpush1.bf16.msra.mxu0 %v2563
    %4583 = vmatprep.subr.bf16.mxu0 %v2580
    %4584 = vmatpush1.bf16.msra.mxu0 %v2579
    %4585 = vmatprep.subr.bf16.mxu0 %v2596
    %4586 = vmatpush1.bf16.msra.mxu0 %v2595
    %4587 = vmatprep.subr.bf16.mxu0 %v2612
    %4588 = vmatpush1.bf16.msra.mxu0 %v2611
    %4589 = vmatprep.subr.bf16.mxu0 %v2628
    %4590 = vmatpush1.bf16.msra.mxu0 %v2627
    %4591 = vmatprep.subr.bf16.mxu0 %v2644
    %4592 = vmatpush1.bf16.msra.mxu0 %v2643
    %4593 = vmatprep.subr.bf16.mxu0 %v2660
    %4594 = vmatpush1.bf16.msra.mxu0 %v2659
    %4595 = vmatprep.mubr.bf16.mxu0 %v810
    %4596 = vmatmul.mubr.bf16.gmra.mrb[0].mxu0 %v809
    %v4597 = vpop.f32.mrb[0].mxu0
    %v4598 = vadd.f32 %v676, %v4597
    %v4599 = vpop.f32.mrb[0].mxu0
    %v4600 = vadd.f32 %v680, %v4599
    %v4601 = vpop.f32.mrb[0].mxu0
    %v4602 = vadd.f32 %v676, %v4601
    %v4603 = vpop.f32.mrb[0].mxu0
    %v4604 = vadd.f32 %v680, %v4603
    %4605 = vmatprep.mubr.bf16.mxu0 %v814
    %4606 = vmatmul.mubr.bf16.gmra.mrb[0].mxu0 %v813
    %v4607 = vpop.f32.mrb[0].mxu0
    %v4608 = vadd.f32 %v676, %v4607
    %v4609 = vpop.f32.mrb[0].mxu0
    %v4610 = vadd.f32 %v680, %v4609
    %v4611 = vpop.f32.mrb[0].mxu0
    %v4612 = vadd.f32 %v676, %v4611
    %v4613 = vpop.f32.mrb[0].mxu0
    %v4614 = vadd.f32 %v680, %v4613
    %4615 = vmatprep.mubr.bf16.mxu0 %v818
    %4616 = vmatmul.mubr.bf16.gmra.mrb[0].mxu0 %v817
    %v4617 = vpop.f32.mrb[0].mxu0
    %v4618 = vadd.f32 %v676, %v4617
    %v4619 = vpop.f32.mrb[0].mxu0
    %v4620 = vadd.f32 %v680, %v4619
    %v4621 = vpop.f32.mrb[0].mxu0
    %v4622 = vadd.f32 %v676, %v4621
    %v4623 = vpop.f32.mrb[0].mxu0
    %v4624 = vadd.f32 %v680, %v4623
    %4625 = vmatprep.mubr.bf16.mxu0 %v822
    %4626 = vmatmul.mubr.bf16.gmra.mrb[0].mxu0 %v821
    %v4627 = vpop.f32.mrb[0].mxu0
    %v4628 = vadd.f32 %v676, %v4627
    %v4629 = vpop.f32.mrb[0].mxu0
    %v4630 = vadd.f32 %v680, %v4629
    %v4631 = vpop.f32.mrb[0].mxu0
    %v4632 = vadd.f32 %v676, %v4631
    %v4633 = vpop.f32.mrb[0].mxu0
    %v4634 = vadd.f32 %v680, %v4633
    %4635 = vmatprep.mubr.bf16.mxu0 %v826
    %4636 = vmatmul.mubr.bf16.gmra.mrb[0].mxu0 %v825
    %v4637 = vpop.f32.mrb[0].mxu0
    %v4638 = vadd.f32 %v676, %v4637
    %v4639 = vpop.f32.mrb[0].mxu0
    %v4640 = vadd.f32 %v680, %v4639
    %v4641 = vpop.f32.mrb[0].mxu0
    %v4642 = vadd.f32 %v676, %v4641
    %v4643 = vpop.f32.mrb[0].mxu0
    %v4644 = vadd.f32 %v680, %v4643
    %4645 = vmatprep.mubr.bf16.mxu0 %v830
    %4646 = vmatmul.mubr.bf16.gmra.mrb[0].mxu0 %v829
    %v4647 = vpop.f32.mrb[0].mxu0
    %v4648 = vadd.f32 %v676, %v4647
    %v4649 = vpop.f32.mrb[0].mxu0
    %v4650 = vadd.f32 %v680, %v4649
    %v4651 = vpop.f32.mrb[0].mxu0
    %v4652 = vadd.f32 %v676, %v4651
    %v4653 = vpop.f32.mrb[0].mxu0
    %v4654 = vadd.f32 %v680, %v4653
    %4655 = vmatprep.mubr.bf16.mxu0 %v834
    %4656 = vmatmul.mubr.bf16.gmra.mrb[0].mxu0 %v833
    %v4657 = vpop.f32.mrb[0].mxu0
    %v4658 = vadd.f32 %v676, %v4657
    %v4659 = vpop.f32.mrb[0].mxu0
    %v4660 = vadd.f32 %v680, %v4659
    %v4661 = vpop.f32.mrb[0].mxu0
    %v4662 = vadd.f32 %v676, %v4661
    %v4663 = vpop.f32.mrb[0].mxu0
    %v4664 = vadd.f32 %v680, %v4663
    %4665 = vmatprep.mubr.bf16.mxu0 %v838
    %4666 = vmatmul.mubr.bf16.gmra.mrb[0].mxu0 %v837
    %v4667 = vpop.f32.mrb[0].mxu0
    %v4668 = vadd.f32 %v676, %v4667
    %v4669 = vpop.f32.mrb[0].mxu0
    %v4670 = vadd.f32 %v680, %v4669
    %v4671 = vpop.f32.mrb[0].mxu0
    %v4672 = vadd.f32 %v676, %v4671
    %v4673 = vpop.f32.mrb[0].mxu0
    %v4674 = vadd.f32 %v680, %v4673
    %4675 = vdwg.mxu0
    %4676 = vmatprep.subr.bf16.mxu0 %v2676
    %4677 = vmatpush1.bf16.msra.mxu0 %v2675
    %4678 = vmatprep.subr.bf16.mxu0 %v2692
    %4679 = vmatpush1.bf16.msra.mxu0 %v2691
    %4680 = vmatprep.subr.bf16.mxu0 %v2708
    %4681 = vmatpush1.bf16.msra.mxu0 %v2707
    %4682 = vmatprep.subr.bf16.mxu0 %v2724
    %4683 = vmatpush1.bf16.msra.mxu0 %v2723
    %4684 = vmatprep.subr.bf16.mxu0 %v2740
    %4685 = vmatpush1.bf16.msra.mxu0 %v2739
    %4686 = vmatprep.subr.bf16.mxu0 %v2756
    %4687 = vmatpush1.bf16.msra.mxu0 %v2755
    %4688 = vmatprep.subr.bf16.mxu0 %v2772
    %4689 = vmatpush1.bf16.msra.mxu0 %v2771
    %4690 = vmatprep.subr.bf16.mxu0 %v2788
    %4691 = vmatpush1.bf16.msra.mxu0 %v2787
    %4692 = vmatprep.subr.bf16.mxu0 %v2804
    %4693 = vmatpush1.bf16.msra.mxu0 %v2803
    %4694 = vmatprep.subr.bf16.mxu0 %v2820
    %4695 = vmatpush1.bf16.msra.mxu0 %v2819
    %4696 = vmatprep.subr.bf16.mxu0 %v2836
    %4697 = vmatpush1.bf16.msra.mxu0 %v2835
    %4698 = vmatprep.subr.bf16.mxu0 %v2852
    %4699 = vmatpush1.bf16.msra.mxu0 %v2851
    %4700 = vmatprep.subr.bf16.mxu0 %v2868
    %4701 = vmatpush1.bf16.msra.mxu0 %v2867
    %4702 = vmatprep.subr.bf16.mxu0 %v2884
    %4703 = vmatpush1.bf16.msra.mxu0 %v2883
    %4704 = vmatprep.subr.bf16.mxu0 %v2900
    %4705 = vmatpush1.bf16.msra.mxu0 %v2899
    %4706 = vmatprep.subr.bf16.mxu0 %v2916
    %4707 = vmatpush1.bf16.msra.mxu0 %v2915
    %4708 = vmatprep.mubr.bf16.mxu0 %v812
    %4709 = vmatmul.mubr.bf16.gmra.mrb[0].mxu0 %v811
    %v4710 = vpop.f32.mrb[0].mxu0
    %v4711 = vadd.f32 %v4598, %v4710
    %v4712 = vpop.f32.mrb[0].mxu0
    %v4713 = vadd.f32 %v4600, %v4712
    %v4714 = vpop.f32.mrb[0].mxu0
    %v4715 = vadd.f32 %v4602, %v4714
    %v4716 = vpop.f32.mrb[0].mxu0
    %v4717 = vadd.f32 %v4604, %v4716
    %4718 = vmatprep.mubr.bf16.mxu0 %v816
    %4719 = vmatmul.mubr.bf16.gmra.mrb[0].mxu0 %v815
    %v4720 = vpop.f32.mrb[0].mxu0
    %v4721 = vadd.f32 %v4608, %v4720
    %v4722 = vpop.f32.mrb[0].mxu0
    %v4723 = vadd.f32 %v4610, %v4722
    %v4724 = vpop.f32.mrb[0].mxu0
    %v4725 = vadd.f32 %v4612, %v4724
    %v4726 = vpop.f32.mrb[0].mxu0
    %v4727 = vadd.f32 %v4614, %v4726
    %4728 = vmatprep.mubr.bf16.mxu0 %v820
    %4729 = vmatmul.mubr.bf16.gmra.mrb[0].mxu0 %v819
    %v4730 = vpop.f32.mrb[0].mxu0
    %v4731 = vadd.f32 %v4618, %v4730
    %v4732 = vpop.f32.mrb[0].mxu0
    %v4733 = vadd.f32 %v4620, %v4732
    %v4734 = vpop.f32.mrb[0].mxu0
    %v4735 = vadd.f32 %v4622, %v4734
    %v4736 = vpop.f32.mrb[0].mxu0
    %v4737 = vadd.f32 %v4624, %v4736
    %4738 = vmatprep.mubr.bf16.mxu0 %v824
    %4739 = vmatmul.mubr.bf16.gmra.mrb[0].mxu0 %v823
    %v4740 = vpop.f32.mrb[0].mxu0
    %v4741 = vadd.f32 %v4628, %v4740
    %v4742 = vpop.f32.mrb[0].mxu0
    %v4743 = vadd.f32 %v4630, %v4742
    %v4744 = vpop.f32.mrb[0].mxu0
    %v4745 = vadd.f32 %v4632, %v4744
    %v4746 = vpop.f32.mrb[0].mxu0
    %v4747 = vadd.f32 %v4634, %v4746
    %4748 = vmatprep.mubr.bf16.mxu0 %v828
    %4749 = vmatmul.mubr.bf16.gmra.mrb[0].mxu0 %v827
    %v4750 = vpop.f32.mrb[0].mxu0
    %v4751 = vadd.f32 %v4638, %v4750
    %v4752 = vpop.f32.mrb[0].mxu0
    %v4753 = vadd.f32 %v4640, %v4752
    %v4754 = vpop.f32.mrb[0].mxu0
    %v4755 = vadd.f32 %v4642, %v4754
    %v4756 = vpop.f32.mrb[0].mxu0
    %v4757 = vadd.f32 %v4644, %v4756
    %4758 = vmatprep.mubr.bf16.mxu0 %v832
    %4759 = vmatmul.mubr.bf16.gmra.mrb[0].mxu0 %v831
    %v4760 = vpop.f32.mrb[0].mxu0
    %v4761 = vadd.f32 %v4648, %v4760
    %v4762 = vpop.f32.mrb[0].mxu0
    %v4763 = vadd.f32 %v4650, %v4762
    %v4764 = vpop.f32.mrb[0].mxu0
    %v4765 = vadd.f32 %v4652, %v4764
    %v4766 = vpop.f32.mrb[0].mxu0
    %v4767 = vadd.f32 %v4654, %v4766
    %4768 = vmatprep.mubr.bf16.mxu0 %v836
    %4769 = vmatmul.mubr.bf16.gmra.mrb[0].mxu0 %v835
    %v4770 = vpop.f32.mrb[0].mxu0
    %v4771 = vadd.f32 %v4658, %v4770
    %v4772 = vpop.f32.mrb[0].mxu0
    %v4773 = vadd.f32 %v4660, %v4772
    %v4774 = vpop.f32.mrb[0].mxu0
    %v4775 = vadd.f32 %v4662, %v4774
    %v4776 = vpop.f32.mrb[0].mxu0
    %v4777 = vadd.f32 %v4664, %v4776
    %4778 = vmatprep.mubr.bf16.mxu0 %v840
    %4779 = vmatmul.mubr.bf16.gmra.mrb[0].mxu0 %v839
    %v4780 = vpop.f32.mrb[0].mxu0
    %v4781 = vadd.f32 %v4668, %v4780
    %v4782 = vpop.f32.mrb[0].mxu0
    %v4783 = vadd.f32 %v4670, %v4782
    %v4784 = vpop.f32.mrb[0].mxu0
    %v4785 = vadd.f32 %v4672, %v4784
    %v4786 = vpop.f32.mrb[0].mxu0
    %v4787 = vadd.f32 %v4674, %v4786
    %4788 = vdwg.mxu0
    %4789 = vmatprep.subr.bf16.mxu0 %v2422
    %4790 = vmatpush1.bf16.msra.mxu0 %v2421
    %4791 = vmatprep.subr.bf16.mxu0 %v2438
    %4792 = vmatpush1.bf16.msra.mxu0 %v2437
    %4793 = vmatprep.subr.bf16.mxu0 %v2454
    %4794 = vmatpush1.bf16.msra.mxu0 %v2453
    %4795 = vmatprep.subr.bf16.mxu0 %v2470
    %4796 = vmatpush1.bf16.msra.mxu0 %v2469
    %4797 = vmatprep.subr.bf16.mxu0 %v2486
    %4798 = vmatpush1.bf16.msra.mxu0 %v2485
    %4799 = vmatprep.subr.bf16.mxu0 %v2502
    %4800 = vmatpush1.bf16.msra.mxu0 %v2501
    %4801 = vmatprep.subr.bf16.mxu0 %v2518
    %4802 = vmatpush1.bf16.msra.mxu0 %v2517
    %4803 = vmatprep.subr.bf16.mxu0 %v2534
    %4804 = vmatpush1.bf16.msra.mxu0 %v2533
    %4805 = vmatprep.subr.bf16.mxu0 %v2550
    %4806 = vmatpush1.bf16.msra.mxu0 %v2549
    %4807 = vmatprep.subr.bf16.mxu0 %v2566
    %4808 = vmatpush1.bf16.msra.mxu0 %v2565
    %4809 = vmatprep.subr.bf16.mxu0 %v2582
    %4810 = vmatpush1.bf16.msra.mxu0 %v2581
    %4811 = vmatprep.subr.bf16.mxu0 %v2598
    %4812 = vmatpush1.bf16.msra.mxu0 %v2597
    %4813 = vmatprep.subr.bf16.mxu0 %v2614
    %4814 = vmatpush1.bf16.msra.mxu0 %v2613
    %4815 = vmatprep.subr.bf16.mxu0 %v2630
    %4816 = vmatpush1.bf16.msra.mxu0 %v2629
    %4817 = vmatprep.subr.bf16.mxu0 %v2646
    %4818 = vmatpush1.bf16.msra.mxu0 %v2645
    %4819 = vmatprep.subr.bf16.mxu0 %v2662
    %4820 = vmatpush1.bf16.msra.mxu0 %v2661
    %4821 = vmatprep.mubr.bf16.mxu0 %v810
    %4822 = vmatmul.mubr.bf16.gmra.mrb[0].mxu0 %v809
    %v4823 = vpop.f32.mrb[0].mxu0
    %v4824 = vadd.f32 %v684, %v4823
    %v4825 = vpop.f32.mrb[0].mxu0
    %v4826 = vadd.f32 %v688, %v4825
    %v4827 = vpop.f32.mrb[0].mxu0
    %v4828 = vadd.f32 %v684, %v4827
    %v4829 = vpop.f32.mrb[0].mxu0
    %v4830 = vadd.f32 %v688, %v4829
    %4831 = vmatprep.mubr.bf16.mxu0 %v814
    %4832 = vmatmul.mubr.bf16.gmra.mrb[0].mxu0 %v813
    %v4833 = vpop.f32.mrb[0].mxu0
    %v4834 = vadd.f32 %v684, %v4833
    %v4835 = vpop.f32.mrb[0].mxu0
    %v4836 = vadd.f32 %v688, %v4835
    %v4837 = vpop.f32.mrb[0].mxu0
    %v4838 = vadd.f32 %v684, %v4837
    %v4839 = vpop.f32.mrb[0].mxu0
    %v4840 = vadd.f32 %v688, %v4839
    %4841 = vmatprep.mubr.bf16.mxu0 %v818
    %4842 = vmatmul.mubr.bf16.gmra.mrb[0].mxu0 %v817
    %v4843 = vpop.f32.mrb[0].mxu0
    %v4844 = vadd.f32 %v684, %v4843
    %v4845 = vpop.f32.mrb[0].mxu0
    %v4846 = vadd.f32 %v688, %v4845
    %v4847 = vpop.f32.mrb[0].mxu0
    %v4848 = vadd.f32 %v684, %v4847
    %v4849 = vpop.f32.mrb[0].mxu0
    %v4850 = vadd.f32 %v688, %v4849
    %4851 = vmatprep.mubr.bf16.mxu0 %v822
    %4852 = vmatmul.mubr.bf16.gmra.mrb[0].mxu0 %v821
    %v4853 = vpop.f32.mrb[0].mxu0
    %v4854 = vadd.f32 %v684, %v4853
    %v4855 = vpop.f32.mrb[0].mxu0
    %v4856 = vadd.f32 %v688, %v4855
    %v4857 = vpop.f32.mrb[0].mxu0
    %v4858 = vadd.f32 %v684, %v4857
    %v4859 = vpop.f32.mrb[0].mxu0
    %v4860 = vadd.f32 %v688, %v4859
    %4861 = vmatprep.mubr.bf16.mxu0 %v826
    %4862 = vmatmul.mubr.bf16.gmra.mrb[0].mxu0 %v825
    %v4863 = vpop.f32.mrb[0].mxu0
    %v4864 = vadd.f32 %v684, %v4863
    %v4865 = vpop.f32.mrb[0].mxu0
    %v4866 = vadd.f32 %v688, %v4865
    %v4867 = vpop.f32.mrb[0].mxu0
    %v4868 = vadd.f32 %v684, %v4867
    %v4869 = vpop.f32.mrb[0].mxu0
    %v4870 = vadd.f32 %v688, %v4869
    %4871 = vmatprep.mubr.bf16.mxu0 %v830
    %4872 = vmatmul.mubr.bf16.gmra.mrb[0].mxu0 %v829
    %v4873 = vpop.f32.mrb[0].mxu0
    %v4874 = vadd.f32 %v684, %v4873
    %v4875 = vpop.f32.mrb[0].mxu0
    %v4876 = vadd.f32 %v688, %v4875
    %v4877 = vpop.f32.mrb[0].mxu0
    %v4878 = vadd.f32 %v684, %v4877
    %v4879 = vpop.f32.mrb[0].mxu0
    %v4880 = vadd.f32 %v688, %v4879
    %4881 = vmatprep.mubr.bf16.mxu0 %v834
    %4882 = vmatmul.mubr.bf16.gmra.mrb[0].mxu0 %v833
    %v4883 = vpop.f32.mrb[0].mxu0
    %v4884 = vadd.f32 %v684, %v4883
    %v4885 = vpop.f32.mrb[0].mxu0
    %v4886 = vadd.f32 %v688, %v4885
    %v4887 = vpop.f32.mrb[0].mxu0
    %v4888 = vadd.f32 %v684, %v4887
    %v4889 = vpop.f32.mrb[0].mxu0
    %v4890 = vadd.f32 %v688, %v4889
    %4891 = vmatprep.mubr.bf16.mxu0 %v838
    %4892 = vmatmul.mubr.bf16.gmra.mrb[0].mxu0 %v837
    %v4893 = vpop.f32.mrb[0].mxu0
    %v4894 = vadd.f32 %v684, %v4893
    %v4895 = vpop.f32.mrb[0].mxu0
    %v4896 = vadd.f32 %v688, %v4895
    %v4897 = vpop.f32.mrb[0].mxu0
    %v4898 = vadd.f32 %v684, %v4897
    %v4899 = vpop.f32.mrb[0].mxu0
    %v4900 = vadd.f32 %v688, %v4899
    %4901 = vdwg.mxu0
    %4902 = vmatprep.subr.bf16.mxu0 %v2678
    %4903 = vmatpush1.bf16.msra.mxu0 %v2677
    %4904 = vmatprep.subr.bf16.mxu0 %v2694
    %4905 = vmatpush1.bf16.msra.mxu0 %v2693
    %4906 = vmatprep.subr.bf16.mxu0 %v2710
    %4907 = vmatpush1.bf16.msra.mxu0 %v2709
    %4908 = vmatprep.subr.bf16.mxu0 %v2726
    %4909 = vmatpush1.bf16.msra.mxu0 %v2725
    %4910 = vmatprep.subr.bf16.mxu0 %v2742
    %4911 = vmatpush1.bf16.msra.mxu0 %v2741
    %4912 = vmatprep.subr.bf16.mxu0 %v2758
    %4913 = vmatpush1.bf16.msra.mxu0 %v2757
    %4914 = vmatprep.subr.bf16.mxu0 %v2774
    %4915 = vmatpush1.bf16.msra.mxu0 %v2773
    %4916 = vmatprep.subr.bf16.mxu0 %v2790
    %4917 = vmatpush1.bf16.msra.mxu0 %v2789
    %4918 = vmatprep.subr.bf16.mxu0 %v2806
    %4919 = vmatpush1.bf16.msra.mxu0 %v2805
    %4920 = vmatprep.subr.bf16.mxu0 %v2822
    %4921 = vmatpush1.bf16.msra.mxu0 %v2821
    %4922 = vmatprep.subr.bf16.mxu0 %v2838
    %4923 = vmatpush1.bf16.msra.mxu0 %v2837
    %4924 = vmatprep.subr.bf16.mxu0 %v2854
    %4925 = vmatpush1.bf16.msra.mxu0 %v2853
    %4926 = vmatprep.subr.bf16.mxu0 %v2870
    %4927 = vmatpush1.bf16.msra.mxu0 %v2869
    %4928 = vmatprep.subr.bf16.mxu0 %v2886
    %4929 = vmatpush1.bf16.msra.mxu0 %v2885
    %4930 = vmatprep.subr.bf16.mxu0 %v2902
    %4931 = vmatpush1.bf16.msra.mxu0 %v2901
    %4932 = vmatprep.subr.bf16.mxu0 %v2918
    %4933 = vmatpush1.bf16.msra.mxu0 %v2917
    %4934 = vmatprep.mubr.bf16.mxu0 %v812
    %4935 = vmatmul.mubr.bf16.gmra.mrb[0].mxu0 %v811
    %v4936 = vpop.f32.mrb[0].mxu0
    %v4937 = vadd.f32 %v4824, %v4936
    %v4938 = vpop.f32.mrb[0].mxu0
    %v4939 = vadd.f32 %v4826, %v4938
    %v4940 = vpop.f32.mrb[0].mxu0
    %v4941 = vadd.f32 %v4828, %v4940
    %v4942 = vpop.f32.mrb[0].mxu0
    %v4943 = vadd.f32 %v4830, %v4942
    %4944 = vmatprep.mubr.bf16.mxu0 %v816
    %4945 = vmatmul.mubr.bf16.gmra.mrb[0].mxu0 %v815
    %v4946 = vpop.f32.mrb[0].mxu0
    %v4947 = vadd.f32 %v4834, %v4946
    %v4948 = vpop.f32.mrb[0].mxu0
    %v4949 = vadd.f32 %v4836, %v4948
    %v4950 = vpop.f32.mrb[0].mxu0
    %v4951 = vadd.f32 %v4838, %v4950
    %v4952 = vpop.f32.mrb[0].mxu0
    %v4953 = vadd.f32 %v4840, %v4952
    %4954 = vmatprep.mubr.bf16.mxu0 %v820
    %4955 = vmatmul.mubr.bf16.gmra.mrb[0].mxu0 %v819
    %v4956 = vpop.f32.mrb[0].mxu0
    %v4957 = vadd.f32 %v4844, %v4956
    %v4958 = vpop.f32.mrb[0].mxu0
    %v4959 = vadd.f32 %v4846, %v4958
    %v4960 = vpop.f32.mrb[0].mxu0
    %v4961 = vadd.f32 %v4848, %v4960
    %v4962 = vpop.f32.mrb[0].mxu0
    %v4963 = vadd.f32 %v4850, %v4962
    %4964 = vmatprep.mubr.bf16.mxu0 %v824
    %4965 = vmatmul.mubr.bf16.gmra.mrb[0].mxu0 %v823
    %v4966 = vpop.f32.mrb[0].mxu0
    %v4967 = vadd.f32 %v4854, %v4966
    %v4968 = vpop.f32.mrb[0].mxu0
    %v4969 = vadd.f32 %v4856, %v4968
    %v4970 = vpop.f32.mrb[0].mxu0
    %v4971 = vadd.f32 %v4858, %v4970
    %v4972 = vpop.f32.mrb[0].mxu0
    %v4973 = vadd.f32 %v4860, %v4972
    %4974 = vmatprep.mubr.bf16.mxu0 %v828
    %4975 = vmatmul.mubr.bf16.gmra.mrb[0].mxu0 %v827
    %v4976 = vpop.f32.mrb[0].mxu0
    %v4977 = vadd.f32 %v4864, %v4976
    %v4978 = vpop.f32.mrb[0].mxu0
    %v4979 = vadd.f32 %v4866, %v4978
    %v4980 = vpop.f32.mrb[0].mxu0
    %v4981 = vadd.f32 %v4868, %v4980
    %v4982 = vpop.f32.mrb[0].mxu0
    %v4983 = vadd.f32 %v4870, %v4982
    %4984 = vmatprep.mubr.bf16.mxu0 %v832
    %4985 = vmatmul.mubr.bf16.gmra.mrb[0].mxu0 %v831
    %v4986 = vpop.f32.mrb[0].mxu0
    %v4987 = vadd.f32 %v4874, %v4986
    %v4988 = vpop.f32.mrb[0].mxu0
    %v4989 = vadd.f32 %v4876, %v4988
    %v4990 = vpop.f32.mrb[0].mxu0
    %v4991 = vadd.f32 %v4878, %v4990
    %v4992 = vpop.f32.mrb[0].mxu0
    %v4993 = vadd.f32 %v4880, %v4992
    %4994 = vmatprep.mubr.bf16.mxu0 %v836
    %4995 = vmatmul.mubr.bf16.gmra.mrb[0].mxu0 %v835
    %v4996 = vpop.f32.mrb[0].mxu0
    %v4997 = vadd.f32 %v4884, %v4996
    %v4998 = vpop.f32.mrb[0].mxu0
    %v4999 = vadd.f32 %v4886, %v4998
    %v5000 = vpop.f32.mrb[0].mxu0
    %v5001 = vadd.f32 %v4888, %v5000
    %v5002 = vpop.f32.mrb[0].mxu0
    %v5003 = vadd.f32 %v4890, %v5002
    %5004 = vmatprep.mubr.bf16.mxu0 %v840
    %5005 = vmatmul.mubr.bf16.gmra.mrb[0].mxu0 %v839
    %v5006 = vpop.f32.mrb[0].mxu0
    %v5007 = vadd.f32 %v4894, %v5006
    %v5008 = vpop.f32.mrb[0].mxu0
    %v5009 = vadd.f32 %v4896, %v5008
    %v5010 = vpop.f32.mrb[0].mxu0
    %v5011 = vadd.f32 %v4898, %v5010
    %v5012 = vpop.f32.mrb[0].mxu0
    %v5013 = vadd.f32 %v4900, %v5012
    %5014 = vdwg.mxu0
    %5015 = vmatprep.subr.bf16.mxu0 %v2424
    %5016 = vmatpush1.bf16.msra.mxu0 %v2423
    %5017 = vmatprep.subr.bf16.mxu0 %v2440
    %5018 = vmatpush1.bf16.msra.mxu0 %v2439
    %5019 = vmatprep.subr.bf16.mxu0 %v2456
    %5020 = vmatpush1.bf16.msra.mxu0 %v2455
    %5021 = vmatprep.subr.bf16.mxu0 %v2472
    %5022 = vmatpush1.bf16.msra.mxu0 %v2471
    %5023 = vmatprep.subr.bf16.mxu0 %v2488
    %5024 = vmatpush1.bf16.msra.mxu0 %v2487
    %5025 = vmatprep.subr.bf16.mxu0 %v2504
    %5026 = vmatpush1.bf16.msra.mxu0 %v2503
    %5027 = vmatprep.subr.bf16.mxu0 %v2520
    %5028 = vmatpush1.bf16.msra.mxu0 %v2519
    %5029 = vmatprep.subr.bf16.mxu0 %v2536
    %5030 = vmatpush1.bf16.msra.mxu0 %v2535
    %5031 = vmatprep.subr.bf16.mxu0 %v2552
    %5032 = vmatpush1.bf16.msra.mxu0 %v2551
    %5033 = vmatprep.subr.bf16.mxu0 %v2568
    %5034 = vmatpush1.bf16.msra.mxu0 %v2567
    %5035 = vmatprep.subr.bf16.mxu0 %v2584
    %5036 = vmatpush1.bf16.msra.mxu0 %v2583
    %5037 = vmatprep.subr.bf16.mxu0 %v2600
    %5038 = vmatpush1.bf16.msra.mxu0 %v2599
    %5039 = vmatprep.subr.bf16.mxu0 %v2616
    %5040 = vmatpush1.bf16.msra.mxu0 %v2615
    %5041 = vmatprep.subr.bf16.mxu0 %v2632
    %5042 = vmatpush1.bf16.msra.mxu0 %v2631
    %5043 = vmatprep.subr.bf16.mxu0 %v2648
    %5044 = vmatpush1.bf16.msra.mxu0 %v2647
    %5045 = vmatprep.subr.bf16.mxu0 %v2664
    %5046 = vmatpush1.bf16.msra.mxu0 %v2663
    %5047 = vmatprep.mubr.bf16.mxu0 %v810
    %5048 = vmatmul.mubr.bf16.gmra.mrb[0].mxu0 %v809
    %v5049 = vpop.f32.mrb[0].mxu0
    %v5050 = vadd.f32 %v692, %v5049
    %v5051 = vpop.f32.mrb[0].mxu0
    %v5052 = vadd.f32 %v696, %v5051
    %v5053 = vpop.f32.mrb[0].mxu0
    %v5054 = vadd.f32 %v692, %v5053
    %v5055 = vpop.f32.mrb[0].mxu0
    %v5056 = vadd.f32 %v696, %v5055
    %5057 = vmatprep.mubr.bf16.mxu0 %v814
    %5058 = vmatmul.mubr.bf16.gmra.mrb[0].mxu0 %v813
    %v5059 = vpop.f32.mrb[0].mxu0
    %v5060 = vadd.f32 %v692, %v5059
    %v5061 = vpop.f32.mrb[0].mxu0
    %v5062 = vadd.f32 %v696, %v5061
    %v5063 = vpop.f32.mrb[0].mxu0
    %v5064 = vadd.f32 %v692, %v5063
    %v5065 = vpop.f32.mrb[0].mxu0
    %v5066 = vadd.f32 %v696, %v5065
    %5067 = vmatprep.mubr.bf16.mxu0 %v818
    %5068 = vmatmul.mubr.bf16.gmra.mrb[0].mxu0 %v817
    %v5069 = vpop.f32.mrb[0].mxu0
    %v5070 = vadd.f32 %v692, %v5069
    %v5071 = vpop.f32.mrb[0].mxu0
    %v5072 = vadd.f32 %v696, %v5071
    %v5073 = vpop.f32.mrb[0].mxu0
    %v5074 = vadd.f32 %v692, %v5073
    %v5075 = vpop.f32.mrb[0].mxu0
    %v5076 = vadd.f32 %v696, %v5075
    %5077 = vmatprep.mubr.bf16.mxu0 %v822
    %5078 = vmatmul.mubr.bf16.gmra.mrb[0].mxu0 %v821
    %v5079 = vpop.f32.mrb[0].mxu0
    %v5080 = vadd.f32 %v692, %v5079
    %v5081 = vpop.f32.mrb[0].mxu0
    %v5082 = vadd.f32 %v696, %v5081
    %v5083 = vpop.f32.mrb[0].mxu0
    %v5084 = vadd.f32 %v692, %v5083
    %v5085 = vpop.f32.mrb[0].mxu0
    %v5086 = vadd.f32 %v696, %v5085
    %5087 = vmatprep.mubr.bf16.mxu0 %v826
    %5088 = vmatmul.mubr.bf16.gmra.mrb[0].mxu0 %v825
    %v5089 = vpop.f32.mrb[0].mxu0
    %v5090 = vadd.f32 %v692, %v5089
    %v5091 = vpop.f32.mrb[0].mxu0
    %v5092 = vadd.f32 %v696, %v5091
    %v5093 = vpop.f32.mrb[0].mxu0
    %v5094 = vadd.f32 %v692, %v5093
    %v5095 = vpop.f32.mrb[0].mxu0
    %v5096 = vadd.f32 %v696, %v5095
    %5097 = vmatprep.mubr.bf16.mxu0 %v830
    %5098 = vmatmul.mubr.bf16.gmra.mrb[0].mxu0 %v829
    %v5099 = vpop.f32.mrb[0].mxu0
    %v5100 = vadd.f32 %v692, %v5099
    %v5101 = vpop.f32.mrb[0].mxu0
    %v5102 = vadd.f32 %v696, %v5101
    %v5103 = vpop.f32.mrb[0].mxu0
    %v5104 = vadd.f32 %v692, %v5103
    %v5105 = vpop.f32.mrb[0].mxu0
    %v5106 = vadd.f32 %v696, %v5105
    %5107 = vmatprep.mubr.bf16.mxu0 %v834
    %5108 = vmatmul.mubr.bf16.gmra.mrb[0].mxu0 %v833
    %v5109 = vpop.f32.mrb[0].mxu0
    %v5110 = vadd.f32 %v692, %v5109
    %v5111 = vpop.f32.mrb[0].mxu0
    %v5112 = vadd.f32 %v696, %v5111
    %v5113 = vpop.f32.mrb[0].mxu0
    %v5114 = vadd.f32 %v692, %v5113
    %v5115 = vpop.f32.mrb[0].mxu0
    %v5116 = vadd.f32 %v696, %v5115
    %5117 = vmatprep.mubr.bf16.mxu0 %v838
    %5118 = vmatmul.mubr.bf16.gmra.mrb[0].mxu0 %v837
    %v5119 = vpop.f32.mrb[0].mxu0
    %v5120 = vadd.f32 %v692, %v5119
    %v5121 = vpop.f32.mrb[0].mxu0
    %v5122 = vadd.f32 %v696, %v5121
    %v5123 = vpop.f32.mrb[0].mxu0
    %v5124 = vadd.f32 %v692, %v5123
    %v5125 = vpop.f32.mrb[0].mxu0
    %v5126 = vadd.f32 %v696, %v5125
    %5127 = vdwg.mxu0
    %5128 = vmatprep.subr.bf16.mxu0 %v2680
    %5129 = vmatpush1.bf16.msra.mxu0 %v2679
    %5130 = vmatprep.subr.bf16.mxu0 %v2696
    %5131 = vmatpush1.bf16.msra.mxu0 %v2695
    %5132 = vmatprep.subr.bf16.mxu0 %v2712
    %5133 = vmatpush1.bf16.msra.mxu0 %v2711
    %5134 = vmatprep.subr.bf16.mxu0 %v2728
    %5135 = vmatpush1.bf16.msra.mxu0 %v2727
    %5136 = vmatprep.subr.bf16.mxu0 %v2744
    %5137 = vmatpush1.bf16.msra.mxu0 %v2743
    %5138 = vmatprep.subr.bf16.mxu0 %v2760
    %5139 = vmatpush1.bf16.msra.mxu0 %v2759
    %5140 = vmatprep.subr.bf16.mxu0 %v2776
    %5141 = vmatpush1.bf16.msra.mxu0 %v2775
    %5142 = vmatprep.subr.bf16.mxu0 %v2792
    %5143 = vmatpush1.bf16.msra.mxu0 %v2791
    %5144 = vmatprep.subr.bf16.mxu0 %v2808
    %5145 = vmatpush1.bf16.msra.mxu0 %v2807
    %5146 = vmatprep.subr.bf16.mxu0 %v2824
    %5147 = vmatpush1.bf16.msra.mxu0 %v2823
    %5148 = vmatprep.subr.bf16.mxu0 %v2840
    %5149 = vmatpush1.bf16.msra.mxu0 %v2839
    %5150 = vmatprep.subr.bf16.mxu0 %v2856
    %5151 = vmatpush1.bf16.msra.mxu0 %v2855
    %5152 = vmatprep.subr.bf16.mxu0 %v2872
    %5153 = vmatpush1.bf16.msra.mxu0 %v2871
    %5154 = vmatprep.subr.bf16.mxu0 %v2888
    %5155 = vmatpush1.bf16.msra.mxu0 %v2887
    %5156 = vmatprep.subr.bf16.mxu0 %v2904
    %5157 = vmatpush1.bf16.msra.mxu0 %v2903
    %5158 = vmatprep.subr.bf16.mxu0 %v2920
    %5159 = vmatpush1.bf16.msra.mxu0 %v2919
    %5160 = vmatprep.mubr.bf16.mxu0 %v812
    %5161 = vmatmul.mubr.bf16.gmra.mrb[0].mxu0 %v811
    %v5162 = vpop.f32.mrb[0].mxu0
    %v5163 = vadd.f32 %v5050, %v5162
    %v5164 = vpop.f32.mrb[0].mxu0
    %v5165 = vadd.f32 %v5052, %v5164
    %v5166 = vpop.f32.mrb[0].mxu0
    %v5167 = vadd.f32 %v5054, %v5166
    %v5168 = vpop.f32.mrb[0].mxu0
    %v5169 = vadd.f32 %v5056, %v5168
    %5170 = vmatprep.mubr.bf16.mxu0 %v816
    %5171 = vmatmul.mubr.bf16.gmra.mrb[0].mxu0 %v815
    %v5172 = vpop.f32.mrb[0].mxu0
    %v5173 = vadd.f32 %v5060, %v5172
    %v5174 = vpop.f32.mrb[0].mxu0
    %v5175 = vadd.f32 %v5062, %v5174
    %v5176 = vpop.f32.mrb[0].mxu0
    %v5177 = vadd.f32 %v5064, %v5176
    %v5178 = vpop.f32.mrb[0].mxu0
    %v5179 = vadd.f32 %v5066, %v5178
    %5180 = vmatprep.mubr.bf16.mxu0 %v820
    %5181 = vmatmul.mubr.bf16.gmra.mrb[0].mxu0 %v819
    %v5182 = vpop.f32.mrb[0].mxu0
    %v5183 = vadd.f32 %v5070, %v5182
    %v5184 = vpop.f32.mrb[0].mxu0
    %v5185 = vadd.f32 %v5072, %v5184
    %v5186 = vpop.f32.mrb[0].mxu0
    %v5187 = vadd.f32 %v5074, %v5186
    %v5188 = vpop.f32.mrb[0].mxu0
    %v5189 = vadd.f32 %v5076, %v5188
    %5190 = vmatprep.mubr.bf16.mxu0 %v824
    %5191 = vmatmul.mubr.bf16.gmra.mrb[0].mxu0 %v823
    %v5192 = vpop.f32.mrb[0].mxu0
    %v5193 = vadd.f32 %v5080, %v5192
    %v5194 = vpop.f32.mrb[0].mxu0
    %v5195 = vadd.f32 %v5082, %v5194
    %v5196 = vpop.f32.mrb[0].mxu0
    %v5197 = vadd.f32 %v5084, %v5196
    %v5198 = vpop.f32.mrb[0].mxu0
    %v5199 = vadd.f32 %v5086, %v5198
    %5200 = vmatprep.mubr.bf16.mxu0 %v828
    %5201 = vmatmul.mubr.bf16.gmra.mrb[0].mxu0 %v827
    %v5202 = vpop.f32.mrb[0].mxu0
    %v5203 = vadd.f32 %v5090, %v5202
    %v5204 = vpop.f32.mrb[0].mxu0
    %v5205 = vadd.f32 %v5092, %v5204
    %v5206 = vpop.f32.mrb[0].mxu0
    %v5207 = vadd.f32 %v5094, %v5206
    %v5208 = vpop.f32.mrb[0].mxu0
    %v5209 = vadd.f32 %v5096, %v5208
    %5210 = vmatprep.mubr.bf16.mxu0 %v832
    %5211 = vmatmul.mubr.bf16.gmra.mrb[0].mxu0 %v831
    %v5212 = vpop.f32.mrb[0].mxu0
    %v5213 = vadd.f32 %v5100, %v5212
    %v5214 = vpop.f32.mrb[0].mxu0
    %v5215 = vadd.f32 %v5102, %v5214
    %v5216 = vpop.f32.mrb[0].mxu0
    %v5217 = vadd.f32 %v5104, %v5216
    %v5218 = vpop.f32.mrb[0].mxu0
    %v5219 = vadd.f32 %v5106, %v5218
    %5220 = vmatprep.mubr.bf16.mxu0 %v836
    %5221 = vmatmul.mubr.bf16.gmra.mrb[0].mxu0 %v835
    %v5222 = vpop.f32.mrb[0].mxu0
    %v5223 = vadd.f32 %v5110, %v5222
    %v5224 = vpop.f32.mrb[0].mxu0
    %v5225 = vadd.f32 %v5112, %v5224
    %v5226 = vpop.f32.mrb[0].mxu0
    %v5227 = vadd.f32 %v5114, %v5226
    %v5228 = vpop.f32.mrb[0].mxu0
    %v5229 = vadd.f32 %v5116, %v5228
    %5230 = vmatprep.mubr.bf16.mxu0 %v840
    %5231 = vmatmul.mubr.bf16.gmra.mrb[0].mxu0 %v839
    %v5232 = vpop.f32.mrb[0].mxu0
    %v5233 = vadd.f32 %v5120, %v5232
    %v5234 = vpop.f32.mrb[0].mxu0
    %v5235 = vadd.f32 %v5122, %v5234
    %v5236 = vpop.f32.mrb[0].mxu0
    %v5237 = vadd.f32 %v5124, %v5236
    %v5238 = vpop.f32.mrb[0].mxu0
    %v5239 = vadd.f32 %v5126, %v5238
    %5240 = vdwg.mxu0
    %v5241 = vmul.f32 %v3581, 0.5
    %v5242 = vmul.f32 %v3583, 0.5
    %v5243 = vmul.f32 %v3807, 0.5
    %v5244 = vmul.f32 %v3809, 0.5
    %v5245 = vmul.f32 %v4033, 0.5
    %v5246 = vmul.f32 %v4035, 0.5
    %v5247 = vmul.f32 %v4259, 0.5
    %v5248 = vmul.f32 %v4261, 0.5
    %v5249 = vmul.f32 %v4485, 0.5
    %v5250 = vmul.f32 %v4487, 0.5
    %v5251 = vmul.f32 %v4711, 0.5
    %v5252 = vmul.f32 %v4713, 0.5
    %v5253 = vmul.f32 %v4937, 0.5
    %v5254 = vmul.f32 %v4939, 0.5
    %v5255 = vmul.f32 %v5163, 0.5
    %v5256 = vmul.f32 %v5165, 0.5
    %v5257 = vmul.f32 %v3585, 0.5
    %v5258 = vmul.f32 %v3587, 0.5
    %v5259 = vmul.f32 %v3811, 0.5
    %v5260 = vmul.f32 %v3813, 0.5
    %v5261 = vmul.f32 %v4037, 0.5
    %v5262 = vmul.f32 %v4039, 0.5
    %v5263 = vmul.f32 %v4263, 0.5
    %v5264 = vmul.f32 %v4265, 0.5
    %v5265 = vmul.f32 %v4489, 0.5
    %v5266 = vmul.f32 %v4491, 0.5
    %v5267 = vmul.f32 %v4715, 0.5
    %v5268 = vmul.f32 %v4717, 0.5
    %v5269 = vmul.f32 %v4941, 0.5
    %v5270 = vmul.f32 %v4943, 0.5
    %v5271 = vmul.f32 %v5167, 0.5
    %v5272 = vmul.f32 %v5169, 0.5
    %v5273 = vmul.f32 %v3591, 0.5
    %v5274 = vmul.f32 %v3593, 0.5
    %v5275 = vmul.f32 %v3817, 0.5
    %v5276 = vmul.f32 %v3819, 0.5
    %v5277 = vmul.f32 %v4043, 0.5
    %v5278 = vmul.f32 %v4045, 0.5
    %v5279 = vmul.f32 %v4269, 0.5
    %v5280 = vmul.f32 %v4271, 0.5
    %v5281 = vmul.f32 %v4495, 0.5
    %v5282 = vmul.f32 %v4497, 0.5
    %v5283 = vmul.f32 %v4721, 0.5
    %v5284 = vmul.f32 %v4723, 0.5
    %v5285 = vmul.f32 %v4947, 0.5
    %v5286 = vmul.f32 %v4949, 0.5
    %v5287 = vmul.f32 %v5173, 0.5
    %v5288 = vmul.f32 %v5175, 0.5
    %v5289 = vmul.f32 %v3595, 0.5
    %v5290 = vmul.f32 %v3597, 0.5
    %v5291 = vmul.f32 %v3821, 0.5
    %v5292 = vmul.f32 %v3823, 0.5
    %v5293 = vmul.f32 %v4047, 0.5
    %v5294 = vmul.f32 %v4049, 0.5
    %v5295 = vmul.f32 %v4273, 0.5
    %v5296 = vmul.f32 %v4275, 0.5
    %v5297 = vmul.f32 %v4499, 0.5
    %v5298 = vmul.f32 %v4501, 0.5
    %v5299 = vmul.f32 %v4725, 0.5
    %v5300 = vmul.f32 %v4727, 0.5
    %v5301 = vmul.f32 %v4951, 0.5
    %v5302 = vmul.f32 %v4953, 0.5
    %v5303 = vmul.f32 %v5177, 0.5
    %v5304 = vmul.f32 %v5179, 0.5
    %v5305 = vmul.f32 %v3601, 0.5
    %v5306 = vmul.f32 %v3603, 0.5
    %v5307 = vmul.f32 %v3827, 0.5
    %v5308 = vmul.f32 %v3829, 0.5
    %v5309 = vmul.f32 %v4053, 0.5
    %v5310 = vmul.f32 %v4055, 0.5
    %v5311 = vmul.f32 %v4279, 0.5
    %v5312 = vmul.f32 %v4281, 0.5
    %v5313 = vmul.f32 %v4505, 0.5
    %v5314 = vmul.f32 %v4507, 0.5
    %v5315 = vmul.f32 %v4731, 0.5
    %v5316 = vmul.f32 %v4733, 0.5
    %v5317 = vmul.f32 %v4957, 0.5
    %v5318 = vmul.f32 %v4959, 0.5
    %v5319 = vmul.f32 %v5183, 0.5
    %v5320 = vmul.f32 %v5185, 0.5
    %v5321 = vmul.f32 %v3605, 0.5
    %v5322 = vmul.f32 %v3607, 0.5
    %v5323 = vmul.f32 %v3831, 0.5
    %v5324 = vmul.f32 %v3833, 0.5
    %v5325 = vmul.f32 %v4057, 0.5
    %v5326 = vmul.f32 %v4059, 0.5
    %v5327 = vmul.f32 %v4283, 0.5
    %v5328 = vmul.f32 %v4285, 0.5
    %v5329 = vmul.f32 %v4509, 0.5
    %v5330 = vmul.f32 %v4511, 0.5
    %v5331 = vmul.f32 %v4735, 0.5
    %v5332 = vmul.f32 %v4737, 0.5
    %v5333 = vmul.f32 %v4961, 0.5
    %v5334 = vmul.f32 %v4963, 0.5
    %v5335 = vmul.f32 %v5187, 0.5
    %v5336 = vmul.f32 %v5189, 0.5
    %v5337 = vmul.f32 %v3611, 0.5
    %v5338 = vmul.f32 %v3613, 0.5
    %v5339 = vmul.f32 %v3837, 0.5
    %v5340 = vmul.f32 %v3839, 0.5
    %v5341 = vmul.f32 %v4063, 0.5
    %v5342 = vmul.f32 %v4065, 0.5
    %v5343 = vmul.f32 %v4289, 0.5
    %v5344 = vmul.f32 %v4291, 0.5
    %v5345 = vmul.f32 %v4515, 0.5
    %v5346 = vmul.f32 %v4517, 0.5
    %v5347 = vmul.f32 %v4741, 0.5
    %v5348 = vmul.f32 %v4743, 0.5
    %v5349 = vmul.f32 %v4967, 0.5
    %v5350 = vmul.f32 %v4969, 0.5
    %v5351 = vmul.f32 %v5193, 0.5
    %v5352 = vmul.f32 %v5195, 0.5
    %v5353 = vmul.f32 %v3615, 0.5
    %v5354 = vmul.f32 %v3617, 0.5
    %v5355 = vmul.f32 %v3841, 0.5
    %v5356 = vmul.f32 %v3843, 0.5
    %v5357 = vmul.f32 %v4067, 0.5
    %v5358 = vmul.f32 %v4069, 0.5
    %v5359 = vmul.f32 %v4293, 0.5
    %v5360 = vmul.f32 %v4295, 0.5
    %v5361 = vmul.f32 %v4519, 0.5
    %v5362 = vmul.f32 %v4521, 0.5
    %v5363 = vmul.f32 %v4745, 0.5
    %v5364 = vmul.f32 %v4747, 0.5
    %v5365 = vmul.f32 %v4971, 0.5
    %v5366 = vmul.f32 %v4973, 0.5
    %v5367 = vmul.f32 %v5197, 0.5
    %v5368 = vmul.f32 %v5199, 0.5
    %v5369 = vmul.f32 %v3621, 0.5
    %v5370 = vmul.f32 %v3623, 0.5
    %v5371 = vmul.f32 %v3847, 0.5
    %v5372 = vmul.f32 %v3849, 0.5
    %v5373 = vmul.f32 %v4073, 0.5
    %v5374 = vmul.f32 %v4075, 0.5
    %v5375 = vmul.f32 %v4299, 0.5
    %v5376 = vmul.f32 %v4301, 0.5
    %v5377 = vmul.f32 %v4525, 0.5
    %v5378 = vmul.f32 %v4527, 0.5
    %v5379 = vmul.f32 %v4751, 0.5
    %v5380 = vmul.f32 %v4753, 0.5
    %v5381 = vmul.f32 %v4977, 0.5
    %v5382 = vmul.f32 %v4979, 0.5
    %v5383 = vmul.f32 %v5203, 0.5
    %v5384 = vmul.f32 %v5205, 0.5
    %v5385 = vmul.f32 %v3625, 0.5
    %v5386 = vmul.f32 %v3627, 0.5
    %v5387 = vmul.f32 %v3851, 0.5
    %v5388 = vmul.f32 %v3853, 0.5
    %v5389 = vmul.f32 %v4077, 0.5
    %v5390 = vmul.f32 %v4079, 0.5
    %v5391 = vmul.f32 %v4303, 0.5
    %v5392 = vmul.f32 %v4305, 0.5
    %v5393 = vmul.f32 %v4529, 0.5
    %v5394 = vmul.f32 %v4531, 0.5
    %v5395 = vmul.f32 %v4755, 0.5
    %v5396 = vmul.f32 %v4757, 0.5
    %v5397 = vmul.f32 %v4981, 0.5
    %v5398 = vmul.f32 %v4983, 0.5
    %v5399 = vmul.f32 %v5207, 0.5
    %v5400 = vmul.f32 %v5209, 0.5
    %v5401 = vmul.f32 %v3631, 0.5
    %v5402 = vmul.f32 %v3633, 0.5
    %v5403 = vmul.f32 %v3857, 0.5
    %v5404 = vmul.f32 %v3859, 0.5
    %v5405 = vmul.f32 %v4083, 0.5
    %v5406 = vmul.f32 %v4085, 0.5
    %v5407 = vmul.f32 %v4309, 0.5
    %v5408 = vmul.f32 %v4311, 0.5
    %v5409 = vmul.f32 %v4535, 0.5
    %v5410 = vmul.f32 %v4537, 0.5
    %v5411 = vmul.f32 %v4761, 0.5
    %v5412 = vmul.f32 %v4763, 0.5
    %v5413 = vmul.f32 %v4987, 0.5
    %v5414 = vmul.f32 %v4989, 0.5
    %v5415 = vmul.f32 %v5213, 0.5
    %v5416 = vmul.f32 %v5215, 0.5
    %v5417 = vmul.f32 %v3635, 0.5
    %v5418 = vmul.f32 %v3637, 0.5
    %v5419 = vmul.f32 %v3861, 0.5
    %v5420 = vmul.f32 %v3863, 0.5
    %v5421 = vmul.f32 %v4087, 0.5
    %v5422 = vmul.f32 %v4089, 0.5
    %v5423 = vmul.f32 %v4313, 0.5
    %v5424 = vmul.f32 %v4315, 0.5
    %v5425 = vmul.f32 %v4539, 0.5
    %v5426 = vmul.f32 %v4541, 0.5
    %v5427 = vmul.f32 %v4765, 0.5
    %v5428 = vmul.f32 %v4767, 0.5
    %v5429 = vmul.f32 %v4991, 0.5
    %v5430 = vmul.f32 %v4993, 0.5
    %v5431 = vmul.f32 %v5217, 0.5
    %v5432 = vmul.f32 %v5219, 0.5
    %v5433 = vmul.f32 %v3641, 0.5
    %v5434 = vmul.f32 %v3643, 0.5
    %v5435 = vmul.f32 %v3867, 0.5
    %v5436 = vmul.f32 %v3869, 0.5
    %v5437 = vmul.f32 %v4093, 0.5
    %v5438 = vmul.f32 %v4095, 0.5
    %v5439 = vmul.f32 %v4319, 0.5
    %v5440 = vmul.f32 %v4321, 0.5
    %v5441 = vmul.f32 %v4545, 0.5
    %v5442 = vmul.f32 %v4547, 0.5
    %v5443 = vmul.f32 %v4771, 0.5
    %v5444 = vmul.f32 %v4773, 0.5
    %v5445 = vmul.f32 %v4997, 0.5
    %v5446 = vmul.f32 %v4999, 0.5
    %v5447 = vmul.f32 %v5223, 0.5
    %v5448 = vmul.f32 %v5225, 0.5
    %v5449 = vmul.f32 %v3645, 0.5
    %v5450 = vmul.f32 %v3647, 0.5
    %v5451 = vmul.f32 %v3871, 0.5
    %v5452 = vmul.f32 %v3873, 0.5
    %v5453 = vmul.f32 %v4097, 0.5
    %v5454 = vmul.f32 %v4099, 0.5
    %v5455 = vmul.f32 %v4323, 0.5
    %v5456 = vmul.f32 %v4325, 0.5
    %v5457 = vmul.f32 %v4549, 0.5
    %v5458 = vmul.f32 %v4551, 0.5
    %v5459 = vmul.f32 %v4775, 0.5
    %v5460 = vmul.f32 %v4777, 0.5
    %v5461 = vmul.f32 %v5001, 0.5
    %v5462 = vmul.f32 %v5003, 0.5
    %v5463 = vmul.f32 %v5227, 0.5
    %v5464 = vmul.f32 %v5229, 0.5
    %v5465 = vmul.f32 %v3651, 0.5
    %v5466 = vmul.f32 %v3653, 0.5
    %v5467 = vmul.f32 %v3877, 0.5
    %v5468 = vmul.f32 %v3879, 0.5
    %v5469 = vmul.f32 %v4103, 0.5
    %v5470 = vmul.f32 %v4105, 0.5
    %v5471 = vmul.f32 %v4329, 0.5
    %v5472 = vmul.f32 %v4331, 0.5
    %v5473 = vmul.f32 %v4555, 0.5
    %v5474 = vmul.f32 %v4557, 0.5
    %v5475 = vmul.f32 %v4781, 0.5
    %v5476 = vmul.f32 %v4783, 0.5
    %v5477 = vmul.f32 %v5007, 0.5
    %v5478 = vmul.f32 %v5009, 0.5
    %v5479 = vmul.f32 %v5233, 0.5
    %v5480 = vmul.f32 %v5235, 0.5
    %v5481 = vmul.f32 %v3655, 0.5
    %v5482 = vmul.f32 %v3657, 0.5
    %v5483 = vmul.f32 %v3881, 0.5
    %v5484 = vmul.f32 %v3883, 0.5
    %v5485 = vmul.f32 %v4107, 0.5
    %v5486 = vmul.f32 %v4109, 0.5
    %v5487 = vmul.f32 %v4333, 0.5
    %v5488 = vmul.f32 %v4335, 0.5
    %v5489 = vmul.f32 %v4559, 0.5
    %v5490 = vmul.f32 %v4561, 0.5
    %v5491 = vmul.f32 %v4785, 0.5
    %v5492 = vmul.f32 %v4787, 0.5
    %v5493 = vmul.f32 %v5011, 0.5
    %v5494 = vmul.f32 %v5013, 0.5
    %v5495 = vmul.f32 %v5237, 0.5
    %v5496 = vmul.f32 %v5239, 0.5
    %v5497 = vmul.f32 %v3581, 0.70710677
    %v5498 = vmul.f32 %v3583, 0.70710677
    %v5499 = vmul.f32 %v3807, 0.70710677
    %v5500 = vmul.f32 %v3809, 0.70710677
    %v5501 = vmul.f32 %v4033, 0.70710677
    %v5502 = vmul.f32 %v4035, 0.70710677
    %v5503 = vmul.f32 %v4259, 0.70710677
    %v5504 = vmul.f32 %v4261, 0.70710677
    %v5505 = vmul.f32 %v4485, 0.70710677
    %v5506 = vmul.f32 %v4487, 0.70710677
    %v5507 = vmul.f32 %v4711, 0.70710677
    %v5508 = vmul.f32 %v4713, 0.70710677
    %v5509 = vmul.f32 %v4937, 0.70710677
    %v5510 = vmul.f32 %v4939, 0.70710677
    %v5511 = vmul.f32 %v5163, 0.70710677
    %v5512 = vmul.f32 %v5165, 0.70710677
    %v5513 = vmul.f32 %v3585, 0.70710677
    %v5514 = vmul.f32 %v3587, 0.70710677
    %v5515 = vmul.f32 %v3811, 0.70710677
    %v5516 = vmul.f32 %v3813, 0.70710677
    %v5517 = vmul.f32 %v4037, 0.70710677
    %v5518 = vmul.f32 %v4039, 0.70710677
    %v5519 = vmul.f32 %v4263, 0.70710677
    %v5520 = vmul.f32 %v4265, 0.70710677
    %v5521 = vmul.f32 %v4489, 0.70710677
    %v5522 = vmul.f32 %v4491, 0.70710677
    %v5523 = vmul.f32 %v4715, 0.70710677
    %v5524 = vmul.f32 %v4717, 0.70710677
    %v5525 = vmul.f32 %v4941, 0.70710677
    %v5526 = vmul.f32 %v4943, 0.70710677
    %v5527 = vmul.f32 %v5167, 0.70710677
    %v5528 = vmul.f32 %v5169, 0.70710677
    %v5529 = vmul.f32 %v3591, 0.70710677
    %v5530 = vmul.f32 %v3593, 0.70710677
    %v5531 = vmul.f32 %v3817, 0.70710677
    %v5532 = vmul.f32 %v3819, 0.70710677
    %v5533 = vmul.f32 %v4043, 0.70710677
    %v5534 = vmul.f32 %v4045, 0.70710677
    %v5535 = vmul.f32 %v4269, 0.70710677
    %v5536 = vmul.f32 %v4271, 0.70710677
    %v5537 = vmul.f32 %v4495, 0.70710677
    %v5538 = vmul.f32 %v4497, 0.70710677
    %v5539 = vmul.f32 %v4721, 0.70710677
    %v5540 = vmul.f32 %v4723, 0.70710677
    %v5541 = vmul.f32 %v4947, 0.70710677
    %v5542 = vmul.f32 %v4949, 0.70710677
    %v5543 = vmul.f32 %v5173, 0.70710677
    %v5544 = vmul.f32 %v5175, 0.70710677
    %v5545 = vmul.f32 %v3595, 0.70710677
    %v5546 = vmul.f32 %v3597, 0.70710677
    %v5547 = vmul.f32 %v3821, 0.70710677
    %v5548 = vmul.f32 %v3823, 0.70710677
    %v5549 = vmul.f32 %v4047, 0.70710677
    %v5550 = vmul.f32 %v4049, 0.70710677
    %v5551 = vmul.f32 %v4273, 0.70710677
    %v5552 = vmul.f32 %v4275, 0.70710677
    %v5553 = vmul.f32 %v4499, 0.70710677
    %v5554 = vmul.f32 %v4501, 0.70710677
    %v5555 = vmul.f32 %v4725, 0.70710677
    %v5556 = vmul.f32 %v4727, 0.70710677
    %v5557 = vmul.f32 %v4951, 0.70710677
    %v5558 = vmul.f32 %v4953, 0.70710677
    %v5559 = vmul.f32 %v5177, 0.70710677
    %v5560 = vmul.f32 %v5179, 0.70710677
    %v5561 = vmul.f32 %v3601, 0.70710677
    %v5562 = vmul.f32 %v3603, 0.70710677
    %v5563 = vmul.f32 %v3827, 0.70710677
    %v5564 = vmul.f32 %v3829, 0.70710677
    %v5565 = vmul.f32 %v4053, 0.70710677
    %v5566 = vmul.f32 %v4055, 0.70710677
    %v5567 = vmul.f32 %v4279, 0.70710677
    %v5568 = vmul.f32 %v4281, 0.70710677
    %v5569 = vmul.f32 %v4505, 0.70710677
    %v5570 = vmul.f32 %v4507, 0.70710677
    %v5571 = vmul.f32 %v4731, 0.70710677
    %v5572 = vmul.f32 %v4733, 0.70710677
    %v5573 = vmul.f32 %v4957, 0.70710677
    %v5574 = vmul.f32 %v4959, 0.70710677
    %v5575 = vmul.f32 %v5183, 0.70710677
    %v5576 = vmul.f32 %v5185, 0.70710677
    %v5577 = vmul.f32 %v3605, 0.70710677
    %v5578 = vmul.f32 %v3607, 0.70710677
    %v5579 = vmul.f32 %v3831, 0.70710677
    %v5580 = vmul.f32 %v3833, 0.70710677
    %v5581 = vmul.f32 %v4057, 0.70710677
    %v5582 = vmul.f32 %v4059, 0.70710677
    %v5583 = vmul.f32 %v4283, 0.70710677
    %v5584 = vmul.f32 %v4285, 0.70710677
    %v5585 = vmul.f32 %v4509, 0.70710677
    %v5586 = vmul.f32 %v4511, 0.70710677
    %v5587 = vmul.f32 %v4735, 0.70710677
    %v5588 = vmul.f32 %v4737, 0.70710677
    %v5589 = vmul.f32 %v4961, 0.70710677
    %v5590 = vmul.f32 %v4963, 0.70710677
    %v5591 = vmul.f32 %v5187, 0.70710677
    %v5592 = vmul.f32 %v5189, 0.70710677
    %v5593 = vmul.f32 %v3611, 0.70710677
    %v5594 = vmul.f32 %v3613, 0.70710677
    %v5595 = vmul.f32 %v3837, 0.70710677
    %v5596 = vmul.f32 %v3839, 0.70710677
    %v5597 = vmul.f32 %v4063, 0.70710677
    %v5598 = vmul.f32 %v4065, 0.70710677
    %v5599 = vmul.f32 %v4289, 0.70710677
    %v5600 = vmul.f32 %v4291, 0.70710677
    %v5601 = vmul.f32 %v4515, 0.70710677
    %v5602 = vmul.f32 %v4517, 0.70710677
    %v5603 = vmul.f32 %v4741, 0.70710677
    %v5604 = vmul.f32 %v4743, 0.70710677
    %v5605 = vmul.f32 %v4967, 0.70710677
    %v5606 = vmul.f32 %v4969, 0.70710677
    %v5607 = vmul.f32 %v5193, 0.70710677
    %v5608 = vmul.f32 %v5195, 0.70710677
    %v5609 = vmul.f32 %v3615, 0.70710677
    %v5610 = vmul.f32 %v3617, 0.70710677
    %v5611 = vmul.f32 %v3841, 0.70710677
    %v5612 = vmul.f32 %v3843, 0.70710677
    %v5613 = vmul.f32 %v4067, 0.70710677
    %v5614 = vmul.f32 %v4069, 0.70710677
    %v5615 = vmul.f32 %v4293, 0.70710677
    %v5616 = vmul.f32 %v4295, 0.70710677
    %v5617 = vmul.f32 %v4519, 0.70710677
    %v5618 = vmul.f32 %v4521, 0.70710677
    %v5619 = vmul.f32 %v4745, 0.70710677
    %v5620 = vmul.f32 %v4747, 0.70710677
    %v5621 = vmul.f32 %v4971, 0.70710677
    %v5622 = vmul.f32 %v4973, 0.70710677
    %v5623 = vmul.f32 %v5197, 0.70710677
    %v5624 = vmul.f32 %v5199, 0.70710677
    %v5625 = vmul.f32 %v3621, 0.70710677
    %v5626 = vmul.f32 %v3623, 0.70710677
    %v5627 = vmul.f32 %v3847, 0.70710677
    %v5628 = vmul.f32 %v3849, 0.70710677
    %v5629 = vmul.f32 %v4073, 0.70710677
    %v5630 = vmul.f32 %v4075, 0.70710677
    %v5631 = vmul.f32 %v4299, 0.70710677
    %v5632 = vmul.f32 %v4301, 0.70710677
    %v5633 = vmul.f32 %v4525, 0.70710677
    %v5634 = vmul.f32 %v4527, 0.70710677
    %v5635 = vmul.f32 %v4751, 0.70710677
    %v5636 = vmul.f32 %v4753, 0.70710677
    %v5637 = vmul.f32 %v4977, 0.70710677
    %v5638 = vmul.f32 %v4979, 0.70710677
    %v5639 = vmul.f32 %v5203, 0.70710677
    %v5640 = vmul.f32 %v5205, 0.70710677
    %v5641 = vmul.f32 %v3625, 0.70710677
    %v5642 = vmul.f32 %v3627, 0.70710677
    %v5643 = vmul.f32 %v3851, 0.70710677
    %v5644 = vmul.f32 %v3853, 0.70710677
    %v5645 = vmul.f32 %v4077, 0.70710677
    %v5646 = vmul.f32 %v4079, 0.70710677
    %v5647 = vmul.f32 %v4303, 0.70710677
    %v5648 = vmul.f32 %v4305, 0.70710677
    %v5649 = vmul.f32 %v4529, 0.70710677
    %v5650 = vmul.f32 %v4531, 0.70710677
    %v5651 = vmul.f32 %v4755, 0.70710677
    %v5652 = vmul.f32 %v4757, 0.70710677
    %v5653 = vmul.f32 %v4981, 0.70710677
    %v5654 = vmul.f32 %v4983, 0.70710677
    %v5655 = vmul.f32 %v5207, 0.70710677
    %v5656 = vmul.f32 %v5209, 0.70710677
    %v5657 = vmul.f32 %v3631, 0.70710677
    %v5658 = vmul.f32 %v3633, 0.70710677
    %v5659 = vmul.f32 %v3857, 0.70710677
    %v5660 = vmul.f32 %v3859, 0.70710677
    %v5661 = vmul.f32 %v4083, 0.70710677
    %v5662 = vmul.f32 %v4085, 0.70710677
    %v5663 = vmul.f32 %v4309, 0.70710677
    %v5664 = vmul.f32 %v4311, 0.70710677
    %v5665 = vmul.f32 %v4535, 0.70710677
    %v5666 = vmul.f32 %v4537, 0.70710677
    %v5667 = vmul.f32 %v4761, 0.70710677
    %v5668 = vmul.f32 %v4763, 0.70710677
    %v5669 = vmul.f32 %v4987, 0.70710677
    %v5670 = vmul.f32 %v4989, 0.70710677
    %v5671 = vmul.f32 %v5213, 0.70710677
    %v5672 = vmul.f32 %v5215, 0.70710677
    %v5673 = vmul.f32 %v3635, 0.70710677
    %v5674 = vmul.f32 %v3637, 0.70710677
    %v5675 = vmul.f32 %v3861, 0.70710677
    %v5676 = vmul.f32 %v3863, 0.70710677
    %v5677 = vmul.f32 %v4087, 0.70710677
    %v5678 = vmul.f32 %v4089, 0.70710677
    %v5679 = vmul.f32 %v4313, 0.70710677
    %v5680 = vmul.f32 %v4315, 0.70710677
    %v5681 = vmul.f32 %v4539, 0.70710677
    %v5682 = vmul.f32 %v4541, 0.70710677
    %v5683 = vmul.f32 %v4765, 0.70710677
    %v5684 = vmul.f32 %v4767, 0.70710677
    %v5685 = vmul.f32 %v4991, 0.70710677
    %v5686 = vmul.f32 %v4993, 0.70710677
    %v5687 = vmul.f32 %v5217, 0.70710677
    %v5688 = vmul.f32 %v5219, 0.70710677
    %v5689 = vmul.f32 %v3641, 0.70710677
    %v5690 = vmul.f32 %v3643, 0.70710677
    %v5691 = vmul.f32 %v3867, 0.70710677
    %v5692 = vmul.f32 %v3869, 0.70710677
    %v5693 = vmul.f32 %v4093, 0.70710677
    %v5694 = vmul.f32 %v4095, 0.70710677
    %v5695 = vmul.f32 %v4319, 0.70710677
    %v5696 = vmul.f32 %v4321, 0.70710677
    %v5697 = vmul.f32 %v4545, 0.70710677
    %v5698 = vmul.f32 %v4547, 0.70710677
    %v5699 = vmul.f32 %v4771, 0.70710677
    %v5700 = vmul.f32 %v4773, 0.70710677
    %v5701 = vmul.f32 %v4997, 0.70710677
    %v5702 = vmul.f32 %v4999, 0.70710677
    %v5703 = vmul.f32 %v5223, 0.70710677
    %v5704 = vmul.f32 %v5225, 0.70710677
    %v5705 = vmul.f32 %v3645, 0.70710677
    %v5706 = vmul.f32 %v3647, 0.70710677
    %v5707 = vmul.f32 %v3871, 0.70710677
    %v5708 = vmul.f32 %v3873, 0.70710677
    %v5709 = vmul.f32 %v4097, 0.70710677
    %v5710 = vmul.f32 %v4099, 0.70710677
    %v5711 = vmul.f32 %v4323, 0.70710677
    %v5712 = vmul.f32 %v4325, 0.70710677
    %v5713 = vmul.f32 %v4549, 0.70710677
    %v5714 = vmul.f32 %v4551, 0.70710677
    %v5715 = vmul.f32 %v4775, 0.70710677
    %v5716 = vmul.f32 %v4777, 0.70710677
    %v5717 = vmul.f32 %v5001, 0.70710677
    %v5718 = vmul.f32 %v5003, 0.70710677
    %v5719 = vmul.f32 %v5227, 0.70710677
    %v5720 = vmul.f32 %v5229, 0.70710677
    %v5721 = vmul.f32 %v3651, 0.70710677
    %v5722 = vmul.f32 %v3653, 0.70710677
    %v5723 = vmul.f32 %v3877, 0.70710677
    %v5724 = vmul.f32 %v3879, 0.70710677
    %v5725 = vmul.f32 %v4103, 0.70710677
    %v5726 = vmul.f32 %v4105, 0.70710677
    %v5727 = vmul.f32 %v4329, 0.70710677
    %v5728 = vmul.f32 %v4331, 0.70710677
    %v5729 = vmul.f32 %v4555, 0.70710677
    %v5730 = vmul.f32 %v4557, 0.70710677
    %v5731 = vmul.f32 %v4781, 0.70710677
    %v5732 = vmul.f32 %v4783, 0.70710677
    %v5733 = vmul.f32 %v5007, 0.70710677
    %v5734 = vmul.f32 %v5009, 0.70710677
    %v5735 = vmul.f32 %v5233, 0.70710677
    %v5736 = vmul.f32 %v5235, 0.70710677
    %v5737 = vmul.f32 %v3655, 0.70710677
    %v5738 = vmul.f32 %v3657, 0.70710677
    %v5739 = vmul.f32 %v3881, 0.70710677
    %v5740 = vmul.f32 %v3883, 0.70710677
    %v5741 = vmul.f32 %v4107, 0.70710677
    %v5742 = vmul.f32 %v4109, 0.70710677
    %v5743 = vmul.f32 %v4333, 0.70710677
    %v5744 = vmul.f32 %v4335, 0.70710677
    %v5745 = vmul.f32 %v4559, 0.70710677
    %v5746 = vmul.f32 %v4561, 0.70710677
    %v5747 = vmul.f32 %v4785, 0.70710677
    %v5748 = vmul.f32 %v4787, 0.70710677
    %v5749 = vmul.f32 %v5011, 0.70710677
    %v5750 = vmul.f32 %v5013, 0.70710677
    %v5751 = vmul.f32 %v5237, 0.70710677
    %v5752 = vmul.f32 %v5239, 0.70710677
    %v5753 = verf.f32.pop %v5497
    %v5754 = verf.f32.pop %v5498
    %v5755 = verf.f32.pop %v5499
    %v5756 = verf.f32.pop %v5500
    %v5757 = verf.f32.pop %v5501
    %v5758 = verf.f32.pop %v5502
    %v5759 = verf.f32.pop %v5503
    %v5760 = verf.f32.pop %v5504
    %v5761 = verf.f32.pop %v5505
    %v5762 = verf.f32.pop %v5506
    %v5763 = verf.f32.pop %v5507
    %v5764 = verf.f32.pop %v5508
    %v5765 = verf.f32.pop %v5509
    %v5766 = verf.f32.pop %v5510
    %v5767 = verf.f32.pop %v5511
    %v5768 = verf.f32.pop %v5512
    %v5769 = verf.f32.pop %v5513
    %v5770 = verf.f32.pop %v5514
    %v5771 = verf.f32.pop %v5515
    %v5772 = verf.f32.pop %v5516
    %v5773 = verf.f32.pop %v5517
    %v5774 = verf.f32.pop %v5518
    %v5775 = verf.f32.pop %v5519
    %v5776 = verf.f32.pop %v5520
    %v5777 = verf.f32.pop %v5521
    %v5778 = verf.f32.pop %v5522
    %v5779 = verf.f32.pop %v5523
    %v5780 = verf.f32.pop %v5524
    %v5781 = verf.f32.pop %v5525
    %v5782 = verf.f32.pop %v5526
    %v5783 = verf.f32.pop %v5527
    %v5784 = verf.f32.pop %v5528
    %v5785 = verf.f32.pop %v5529
    %v5786 = verf.f32.pop %v5530
    %v5787 = verf.f32.pop %v5531
    %v5788 = verf.f32.pop %v5532
    %v5789 = verf.f32.pop %v5533
    %v5790 = verf.f32.pop %v5534
    %v5791 = verf.f32.pop %v5535
    %v5792 = verf.f32.pop %v5536
    %v5793 = verf.f32.pop %v5537
    %v5794 = verf.f32.pop %v5538
    %v5795 = verf.f32.pop %v5539
    %v5796 = verf.f32.pop %v5540
    %v5797 = verf.f32.pop %v5541
    %v5798 = verf.f32.pop %v5542
    %v5799 = verf.f32.pop %v5543
    %v5800 = verf.f32.pop %v5544
    %v5801 = verf.f32.pop %v5545
    %v5802 = verf.f32.pop %v5546
    %v5803 = verf.f32.pop %v5547
    %v5804 = verf.f32.pop %v5548
    %v5805 = verf.f32.pop %v5549
    %v5806 = verf.f32.pop %v5550
    %v5807 = verf.f32.pop %v5551
    %v5808 = verf.f32.pop %v5552
    %v5809 = verf.f32.pop %v5553
    %v5810 = verf.f32.pop %v5554
    %v5811 = verf.f32.pop %v5555
    %v5812 = verf.f32.pop %v5556
    %v5813 = verf.f32.pop %v5557
    %v5814 = verf.f32.pop %v5558
    %v5815 = verf.f32.pop %v5559
    %v5816 = verf.f32.pop %v5560
    %v5817 = verf.f32.pop %v5561
    %v5818 = verf.f32.pop %v5562
    %v5819 = verf.f32.pop %v5563
    %v5820 = verf.f32.pop %v5564
    %v5821 = verf.f32.pop %v5565
    %v5822 = verf.f32.pop %v5566
    %v5823 = verf.f32.pop %v5567
    %v5824 = verf.f32.pop %v5568
    %v5825 = verf.f32.pop %v5569
    %v5826 = verf.f32.pop %v5570
    %v5827 = verf.f32.pop %v5571
    %v5828 = verf.f32.pop %v5572
    %v5829 = verf.f32.pop %v5573
    %v5830 = verf.f32.pop %v5574
    %v5831 = verf.f32.pop %v5575
    %v5832 = verf.f32.pop %v5576
    %v5833 = verf.f32.pop %v5577
    %v5834 = verf.f32.pop %v5578
    %v5835 = verf.f32.pop %v5579
    %v5836 = verf.f32.pop %v5580
    %v5837 = verf.f32.pop %v5581
    %v5838 = verf.f32.pop %v5582
    %v5839 = verf.f32.pop %v5583
    %v5840 = verf.f32.pop %v5584
    %v5841 = verf.f32.pop %v5585
    %v5842 = verf.f32.pop %v5586
    %v5843 = verf.f32.pop %v5587
    %v5844 = verf.f32.pop %v5588
    %v5845 = verf.f32.pop %v5589
    %v5846 = verf.f32.pop %v5590
    %v5847 = verf.f32.pop %v5591
    %v5848 = verf.f32.pop %v5592
    %v5849 = verf.f32.pop %v5593
    %v5850 = verf.f32.pop %v5594
    %v5851 = verf.f32.pop %v5595
    %v5852 = verf.f32.pop %v5596
    %v5853 = verf.f32.pop %v5597
    %v5854 = verf.f32.pop %v5598
    %v5855 = verf.f32.pop %v5599
    %v5856 = verf.f32.pop %v5600
    %v5857 = verf.f32.pop %v5601
    %v5858 = verf.f32.pop %v5602
    %v5859 = verf.f32.pop %v5603
    %v5860 = verf.f32.pop %v5604
    %v5861 = verf.f32.pop %v5605
    %v5862 = verf.f32.pop %v5606
    %v5863 = verf.f32.pop %v5607
    %v5864 = verf.f32.pop %v5608
    %v5865 = verf.f32.pop %v5609
    %v5866 = verf.f32.pop %v5610
    %v5867 = verf.f32.pop %v5611
    %v5868 = verf.f32.pop %v5612
    %v5869 = verf.f32.pop %v5613
    %v5870 = verf.f32.pop %v5614
    %v5871 = verf.f32.pop %v5615
    %v5872 = verf.f32.pop %v5616
    %v5873 = verf.f32.pop %v5617
    %v5874 = verf.f32.pop %v5618
    %v5875 = verf.f32.pop %v5619
    %v5876 = verf.f32.pop %v5620
    %v5877 = verf.f32.pop %v5621
    %v5878 = verf.f32.pop %v5622
    %v5879 = verf.f32.pop %v5623
    %v5880 = verf.f32.pop %v5624
    %v5881 = verf.f32.pop %v5625
    %v5882 = verf.f32.pop %v5626
    %v5883 = verf.f32.pop %v5627
    %v5884 = verf.f32.pop %v5628
    %v5885 = verf.f32.pop %v5629
    %v5886 = verf.f32.pop %v5630
    %v5887 = verf.f32.pop %v5631
    %v5888 = verf.f32.pop %v5632
    %v5889 = verf.f32.pop %v5633
    %v5890 = verf.f32.pop %v5634
    %v5891 = verf.f32.pop %v5635
    %v5892 = verf.f32.pop %v5636
    %v5893 = verf.f32.pop %v5637
    %v5894 = verf.f32.pop %v5638
    %v5895 = verf.f32.pop %v5639
    %v5896 = verf.f32.pop %v5640
    %v5897 = verf.f32.pop %v5641
    %v5898 = verf.f32.pop %v5642
    %v5899 = verf.f32.pop %v5643
    %v5900 = verf.f32.pop %v5644
    %v5901 = verf.f32.pop %v5645
    %v5902 = verf.f32.pop %v5646
    %v5903 = verf.f32.pop %v5647
    %v5904 = verf.f32.pop %v5648
    %v5905 = verf.f32.pop %v5649
    %v5906 = verf.f32.pop %v5650
    %v5907 = verf.f32.pop %v5651
    %v5908 = verf.f32.pop %v5652
    %v5909 = verf.f32.pop %v5653
    %v5910 = verf.f32.pop %v5654
    %v5911 = verf.f32.pop %v5655
    %v5912 = verf.f32.pop %v5656
    %v5913 = verf.f32.pop %v5657
    %v5914 = verf.f32.pop %v5658
    %v5915 = verf.f32.pop %v5659
    %v5916 = verf.f32.pop %v5660
    %v5917 = verf.f32.pop %v5661
    %v5918 = verf.f32.pop %v5662
    %v5919 = verf.f32.pop %v5663
    %v5920 = verf.f32.pop %v5664
    %v5921 = verf.f32.pop %v5665
    %v5922 = verf.f32.pop %v5666
    %v5923 = verf.f32.pop %v5667
    %v5924 = verf.f32.pop %v5668
    %v5925 = verf.f32.pop %v5669
    %v5926 = verf.f32.pop %v5670
    %v5927 = verf.f32.pop %v5671
    %v5928 = verf.f32.pop %v5672
    %v5929 = verf.f32.pop %v5673
    %v5930 = verf.f32.pop %v5674
    %v5931 = verf.f32.pop %v5675
    %v5932 = verf.f32.pop %v5676
    %v5933 = verf.f32.pop %v5677
    %v5934 = verf.f32.pop %v5678
    %v5935 = verf.f32.pop %v5679
    %v5936 = verf.f32.pop %v5680
    %v5937 = verf.f32.pop %v5681
    %v5938 = verf.f32.pop %v5682
    %v5939 = verf.f32.pop %v5683
    %v5940 = verf.f32.pop %v5684
    %v5941 = verf.f32.pop %v5685
    %v5942 = verf.f32.pop %v5686
    %v5943 = verf.f32.pop %v5687
    %v5944 = verf.f32.pop %v5688
    %v5945 = verf.f32.pop %v5689
    %v5946 = verf.f32.pop %v5690
    %v5947 = verf.f32.pop %v5691
    %v5948 = verf.f32.pop %v5692
    %v5949 = verf.f32.pop %v5693
    %v5950 = verf.f32.pop %v5694
    %v5951 = verf.f32.pop %v5695
    %v5952 = verf.f32.pop %v5696
    %v5953 = verf.f32.pop %v5697
    %v5954 = verf.f32.pop %v5698
    %v5955 = verf.f32.pop %v5699
    %v5956 = verf.f32.pop %v5700
    %v5957 = verf.f32.pop %v5701
    %v5958 = verf.f32.pop %v5702
    %v5959 = verf.f32.pop %v5703
    %v5960 = verf.f32.pop %v5704
    %v5961 = verf.f32.pop %v5705
    %v5962 = verf.f32.pop %v5706
    %v5963 = verf.f32.pop %v5707
    %v5964 = verf.f32.pop %v5708
    %v5965 = verf.f32.pop %v5709
    %v5966 = verf.f32.pop %v5710
    %v5967 = verf.f32.pop %v5711
    %v5968 = verf.f32.pop %v5712
    %v5969 = verf.f32.pop %v5713
    %v5970 = verf.f32.pop %v5714
    %v5971 = verf.f32.pop %v5715
    %v5972 = verf.f32.pop %v5716
    %v5973 = verf.f32.pop %v5717
    %v5974 = verf.f32.pop %v5718
    %v5975 = verf.f32.pop %v5719
    %v5976 = verf.f32.pop %v5720
    %v5977 = verf.f32.pop %v5721
    %v5978 = verf.f32.pop %v5722
    %v5979 = verf.f32.pop %v5723
    %v5980 = verf.f32.pop %v5724
    %v5981 = verf.f32.pop %v5725
    %v5982 = verf.f32.pop %v5726
    %v5983 = verf.f32.pop %v5727
    %v5984 = verf.f32.pop %v5728
    %v5985 = verf.f32.pop %v5729
    %v5986 = verf.f32.pop %v5730
    %v5987 = verf.f32.pop %v5731
    %v5988 = verf.f32.pop %v5732
    %v5989 = verf.f32.pop %v5733
    %v5990 = verf.f32.pop %v5734
    %v5991 = verf.f32.pop %v5735
    %v5992 = verf.f32.pop %v5736
    %v5993 = verf.f32.pop %v5737
    %v5994 = verf.f32.pop %v5738
    %v5995 = verf.f32.pop %v5739
    %v5996 = verf.f32.pop %v5740
    %v5997 = verf.f32.pop %v5741
    %v5998 = verf.f32.pop %v5742
    %v5999 = verf.f32.pop %v5743
    %v6000 = verf.f32.pop %v5744
    %v6001 = verf.f32.pop %v5745
    %v6002 = verf.f32.pop %v5746
    %v6003 = verf.f32.pop %v5747
    %v6004 = verf.f32.pop %v5748
    %v6005 = verf.f32.pop %v5749
    %v6006 = verf.f32.pop %v5750
    %v6007 = verf.f32.pop %v5751
    %v6008 = verf.f32.pop %v5752
    %v6009 = vadd.f32 %v5753, 1.0
    %v6010 = vadd.f32 %v5754, 1.0
    %v6011 = vadd.f32 %v5755, 1.0
    %v6012 = vadd.f32 %v5756, 1.0
    %v6013 = vadd.f32 %v5757, 1.0
    %v6014 = vadd.f32 %v5758, 1.0
    %v6015 = vadd.f32 %v5759, 1.0
    %v6016 = vadd.f32 %v5760, 1.0
    %v6017 = vadd.f32 %v5761, 1.0
    %v6018 = vadd.f32 %v5762, 1.0
    %v6019 = vadd.f32 %v5763, 1.0
    %v6020 = vadd.f32 %v5764, 1.0
    %v6021 = vadd.f32 %v5765, 1.0
    %v6022 = vadd.f32 %v5766, 1.0
    %v6023 = vadd.f32 %v5767, 1.0
    %v6024 = vadd.f32 %v5768, 1.0
    %v6025 = vadd.f32 %v5769, 1.0
    %v6026 = vadd.f32 %v5770, 1.0
    %v6027 = vadd.f32 %v5771, 1.0
    %v6028 = vadd.f32 %v5772, 1.0
    %v6029 = vadd.f32 %v5773, 1.0
    %v6030 = vadd.f32 %v5774, 1.0
    %v6031 = vadd.f32 %v5775, 1.0
    %v6032 = vadd.f32 %v5776, 1.0
    %v6033 = vadd.f32 %v5777, 1.0
    %v6034 = vadd.f32 %v5778, 1.0
    %v6035 = vadd.f32 %v5779, 1.0
    %v6036 = vadd.f32 %v5780, 1.0
    %v6037 = vadd.f32 %v5781, 1.0
    %v6038 = vadd.f32 %v5782, 1.0
    %v6039 = vadd.f32 %v5783, 1.0
    %v6040 = vadd.f32 %v5784, 1.0
    %v6041 = vadd.f32 %v5785, 1.0
    %v6042 = vadd.f32 %v5786, 1.0
    %v6043 = vadd.f32 %v5787, 1.0
    %v6044 = vadd.f32 %v5788, 1.0
    %v6045 = vadd.f32 %v5789, 1.0
    %v6046 = vadd.f32 %v5790, 1.0
    %v6047 = vadd.f32 %v5791, 1.0
    %v6048 = vadd.f32 %v5792, 1.0
    %v6049 = vadd.f32 %v5793, 1.0
    %v6050 = vadd.f32 %v5794, 1.0
    %v6051 = vadd.f32 %v5795, 1.0
    %v6052 = vadd.f32 %v5796, 1.0
    %v6053 = vadd.f32 %v5797, 1.0
    %v6054 = vadd.f32 %v5798, 1.0
    %v6055 = vadd.f32 %v5799, 1.0
    %v6056 = vadd.f32 %v5800, 1.0
    %v6057 = vadd.f32 %v5801, 1.0
    %v6058 = vadd.f32 %v5802, 1.0
    %v6059 = vadd.f32 %v5803, 1.0
    %v6060 = vadd.f32 %v5804, 1.0
    %v6061 = vadd.f32 %v5805, 1.0
    %v6062 = vadd.f32 %v5806, 1.0
    %v6063 = vadd.f32 %v5807, 1.0
    %v6064 = vadd.f32 %v5808, 1.0
    %v6065 = vadd.f32 %v5809, 1.0
    %v6066 = vadd.f32 %v5810, 1.0
    %v6067 = vadd.f32 %v5811, 1.0
    %v6068 = vadd.f32 %v5812, 1.0
    %v6069 = vadd.f32 %v5813, 1.0
    %v6070 = vadd.f32 %v5814, 1.0
    %v6071 = vadd.f32 %v5815, 1.0
    %v6072 = vadd.f32 %v5816, 1.0
    %v6073 = vadd.f32 %v5817, 1.0
    %v6074 = vadd.f32 %v5818, 1.0
    %v6075 = vadd.f32 %v5819, 1.0
    %v6076 = vadd.f32 %v5820, 1.0
    %v6077 = vadd.f32 %v5821, 1.0
    %v6078 = vadd.f32 %v5822, 1.0
    %v6079 = vadd.f32 %v5823, 1.0
    %v6080 = vadd.f32 %v5824, 1.0
    %v6081 = vadd.f32 %v5825, 1.0
    %v6082 = vadd.f32 %v5826, 1.0
    %v6083 = vadd.f32 %v5827, 1.0
    %v6084 = vadd.f32 %v5828, 1.0
    %v6085 = vadd.f32 %v5829, 1.0
    %v6086 = vadd.f32 %v5830, 1.0
    %v6087 = vadd.f32 %v5831, 1.0
    %v6088 = vadd.f32 %v5832, 1.0
    %v6089 = vadd.f32 %v5833, 1.0
    %v6090 = vadd.f32 %v5834, 1.0
    %v6091 = vadd.f32 %v5835, 1.0
    %v6092 = vadd.f32 %v5836, 1.0
    %v6093 = vadd.f32 %v5837, 1.0
    %v6094 = vadd.f32 %v5838, 1.0
    %v6095 = vadd.f32 %v5839, 1.0
    %v6096 = vadd.f32 %v5840, 1.0
    %v6097 = vadd.f32 %v5841, 1.0
    %v6098 = vadd.f32 %v5842, 1.0
    %v6099 = vadd.f32 %v5843, 1.0
    %v6100 = vadd.f32 %v5844, 1.0
    %v6101 = vadd.f32 %v5845, 1.0
    %v6102 = vadd.f32 %v5846, 1.0
    %v6103 = vadd.f32 %v5847, 1.0
    %v6104 = vadd.f32 %v5848, 1.0
    %v6105 = vadd.f32 %v5849, 1.0
    %v6106 = vadd.f32 %v5850, 1.0
    %v6107 = vadd.f32 %v5851, 1.0
    %v6108 = vadd.f32 %v5852, 1.0
    %v6109 = vadd.f32 %v5853, 1.0
    %v6110 = vadd.f32 %v5854, 1.0
    %v6111 = vadd.f32 %v5855, 1.0
    %v6112 = vadd.f32 %v5856, 1.0
    %v6113 = vadd.f32 %v5857, 1.0
    %v6114 = vadd.f32 %v5858, 1.0
    %v6115 = vadd.f32 %v5859, 1.0
    %v6116 = vadd.f32 %v5860, 1.0
    %v6117 = vadd.f32 %v5861, 1.0
    %v6118 = vadd.f32 %v5862, 1.0
    %v6119 = vadd.f32 %v5863, 1.0
    %v6120 = vadd.f32 %v5864, 1.0
    %v6121 = vadd.f32 %v5865, 1.0
    %v6122 = vadd.f32 %v5866, 1.0
    %v6123 = vadd.f32 %v5867, 1.0
    %v6124 = vadd.f32 %v5868, 1.0
    %v6125 = vadd.f32 %v5869, 1.0
    %v6126 = vadd.f32 %v5870, 1.0
    %v6127 = vadd.f32 %v5871, 1.0
    %v6128 = vadd.f32 %v5872, 1.0
    %v6129 = vadd.f32 %v5873, 1.0
    %v6130 = vadd.f32 %v5874, 1.0
    %v6131 = vadd.f32 %v5875, 1.0
    %v6132 = vadd.f32 %v5876, 1.0
    %v6133 = vadd.f32 %v5877, 1.0
    %v6134 = vadd.f32 %v5878, 1.0
    %v6135 = vadd.f32 %v5879, 1.0
    %v6136 = vadd.f32 %v5880, 1.0
    %v6137 = vadd.f32 %v5881, 1.0
    %v6138 = vadd.f32 %v5882, 1.0
    %v6139 = vadd.f32 %v5883, 1.0
    %v6140 = vadd.f32 %v5884, 1.0
    %v6141 = vadd.f32 %v5885, 1.0
    %v6142 = vadd.f32 %v5886, 1.0
    %v6143 = vadd.f32 %v5887, 1.0
    %v6144 = vadd.f32 %v5888, 1.0
    %v6145 = vadd.f32 %v5889, 1.0
    %v6146 = vadd.f32 %v5890, 1.0
    %v6147 = vadd.f32 %v5891, 1.0
    %v6148 = vadd.f32 %v5892, 1.0
    %v6149 = vadd.f32 %v5893, 1.0
    %v6150 = vadd.f32 %v5894, 1.0
    %v6151 = vadd.f32 %v5895, 1.0
    %v6152 = vadd.f32 %v5896, 1.0
    %v6153 = vadd.f32 %v5897, 1.0
    %v6154 = vadd.f32 %v5898, 1.0
    %v6155 = vadd.f32 %v5899, 1.0
    %v6156 = vadd.f32 %v5900, 1.0
    %v6157 = vadd.f32 %v5901, 1.0
    %v6158 = vadd.f32 %v5902, 1.0
    %v6159 = vadd.f32 %v5903, 1.0
    %v6160 = vadd.f32 %v5904, 1.0
    %v6161 = vadd.f32 %v5905, 1.0
    %v6162 = vadd.f32 %v5906, 1.0
    %v6163 = vadd.f32 %v5907, 1.0
    %v6164 = vadd.f32 %v5908, 1.0
    %v6165 = vadd.f32 %v5909, 1.0
    %v6166 = vadd.f32 %v5910, 1.0
    %v6167 = vadd.f32 %v5911, 1.0
    %v6168 = vadd.f32 %v5912, 1.0
    %v6169 = vadd.f32 %v5913, 1.0
    %v6170 = vadd.f32 %v5914, 1.0
    %v6171 = vadd.f32 %v5915, 1.0
    %v6172 = vadd.f32 %v5916, 1.0
    %v6173 = vadd.f32 %v5917, 1.0
    %v6174 = vadd.f32 %v5918, 1.0
    %v6175 = vadd.f32 %v5919, 1.0
    %v6176 = vadd.f32 %v5920, 1.0
    %v6177 = vadd.f32 %v5921, 1.0
    %v6178 = vadd.f32 %v5922, 1.0
    %v6179 = vadd.f32 %v5923, 1.0
    %v6180 = vadd.f32 %v5924, 1.0
    %v6181 = vadd.f32 %v5925, 1.0
    %v6182 = vadd.f32 %v5926, 1.0
    %v6183 = vadd.f32 %v5927, 1.0
    %v6184 = vadd.f32 %v5928, 1.0
    %v6185 = vadd.f32 %v5929, 1.0
    %v6186 = vadd.f32 %v5930, 1.0
    %v6187 = vadd.f32 %v5931, 1.0
    %v6188 = vadd.f32 %v5932, 1.0
    %v6189 = vadd.f32 %v5933, 1.0
    %v6190 = vadd.f32 %v5934, 1.0
    %v6191 = vadd.f32 %v5935, 1.0
    %v6192 = vadd.f32 %v5936, 1.0
    %v6193 = vadd.f32 %v5937, 1.0
    %v6194 = vadd.f32 %v5938, 1.0
    %v6195 = vadd.f32 %v5939, 1.0
    %v6196 = vadd.f32 %v5940, 1.0
    %v6197 = vadd.f32 %v5941, 1.0
    %v6198 = vadd.f32 %v5942, 1.0
    %v6199 = vadd.f32 %v5943, 1.0
    %v6200 = vadd.f32 %v5944, 1.0
    %v6201 = vadd.f32 %v5945, 1.0
    %v6202 = vadd.f32 %v5946, 1.0
    %v6203 = vadd.f32 %v5947, 1.0
    %v6204 = vadd.f32 %v5948, 1.0
    %v6205 = vadd.f32 %v5949, 1.0
    %v6206 = vadd.f32 %v5950, 1.0
    %v6207 = vadd.f32 %v5951, 1.0
    %v6208 = vadd.f32 %v5952, 1.0
    %v6209 = vadd.f32 %v5953, 1.0
    %v6210 = vadd.f32 %v5954, 1.0
    %v6211 = vadd.f32 %v5955, 1.0
    %v6212 = vadd.f32 %v5956, 1.0
    %v6213 = vadd.f32 %v5957, 1.0
    %v6214 = vadd.f32 %v5958, 1.0
    %v6215 = vadd.f32 %v5959, 1.0
    %v6216 = vadd.f32 %v5960, 1.0
    %v6217 = vadd.f32 %v5961, 1.0
    %v6218 = vadd.f32 %v5962, 1.0
    %v6219 = vadd.f32 %v5963, 1.0
    %v6220 = vadd.f32 %v5964, 1.0
    %v6221 = vadd.f32 %v5965, 1.0
    %v6222 = vadd.f32 %v5966, 1.0
    %v6223 = vadd.f32 %v5967, 1.0
    %v6224 = vadd.f32 %v5968, 1.0
    %v6225 = vadd.f32 %v5969, 1.0
    %v6226 = vadd.f32 %v5970, 1.0
    %v6227 = vadd.f32 %v5971, 1.0
    %v6228 = vadd.f32 %v5972, 1.0
    %v6229 = vadd.f32 %v5973, 1.0
    %v6230 = vadd.f32 %v5974, 1.0
    %v6231 = vadd.f32 %v5975, 1.0
    %v6232 = vadd.f32 %v5976, 1.0
    %v6233 = vadd.f32 %v5977, 1.0
    %v6234 = vadd.f32 %v5978, 1.0
    %v6235 = vadd.f32 %v5979, 1.0
    %v6236 = vadd.f32 %v5980, 1.0
    %v6237 = vadd.f32 %v5981, 1.0
    %v6238 = vadd.f32 %v5982, 1.0
    %v6239 = vadd.f32 %v5983, 1.0
    %v6240 = vadd.f32 %v5984, 1.0
    %v6241 = vadd.f32 %v5985, 1.0
    %v6242 = vadd.f32 %v5986, 1.0
    %v6243 = vadd.f32 %v5987, 1.0
    %v6244 = vadd.f32 %v5988, 1.0
    %v6245 = vadd.f32 %v5989, 1.0
    %v6246 = vadd.f32 %v5990, 1.0
    %v6247 = vadd.f32 %v5991, 1.0
    %v6248 = vadd.f32 %v5992, 1.0
    %v6249 = vadd.f32 %v5993, 1.0
    %v6250 = vadd.f32 %v5994, 1.0
    %v6251 = vadd.f32 %v5995, 1.0
    %v6252 = vadd.f32 %v5996, 1.0
    %v6253 = vadd.f32 %v5997, 1.0
    %v6254 = vadd.f32 %v5998, 1.0
    %v6255 = vadd.f32 %v5999, 1.0
    %v6256 = vadd.f32 %v6000, 1.0
    %v6257 = vadd.f32 %v6001, 1.0
    %v6258 = vadd.f32 %v6002, 1.0
    %v6259 = vadd.f32 %v6003, 1.0
    %v6260 = vadd.f32 %v6004, 1.0
    %v6261 = vadd.f32 %v6005, 1.0
    %v6262 = vadd.f32 %v6006, 1.0
    %v6263 = vadd.f32 %v6007, 1.0
    %v6264 = vadd.f32 %v6008, 1.0
    %v6265 = vmul.f32 %v5241, %v6009
    %v6266 = vmul.f32 %v5242, %v6010
    %v6267 = vmul.f32 %v5243, %v6011
    %v6268 = vmul.f32 %v5244, %v6012
    %v6269 = vmul.f32 %v5245, %v6013
    %v6270 = vmul.f32 %v5246, %v6014
    %v6271 = vmul.f32 %v5247, %v6015
    %v6272 = vmul.f32 %v5248, %v6016
    %v6273 = vmul.f32 %v5249, %v6017
    %v6274 = vmul.f32 %v5250, %v6018
    %v6275 = vmul.f32 %v5251, %v6019
    %v6276 = vmul.f32 %v5252, %v6020
    %v6277 = vmul.f32 %v5253, %v6021
    %v6278 = vmul.f32 %v5254, %v6022
    %v6279 = vmul.f32 %v5255, %v6023
    %v6280 = vmul.f32 %v5256, %v6024
    %v6281 = vmul.f32 %v5257, %v6025
    %v6282 = vmul.f32 %v5258, %v6026
    %v6283 = vmul.f32 %v5259, %v6027
    %v6284 = vmul.f32 %v5260, %v6028
    %v6285 = vmul.f32 %v5261, %v6029
    %v6286 = vmul.f32 %v5262, %v6030
    %v6287 = vmul.f32 %v5263, %v6031
    %v6288 = vmul.f32 %v5264, %v6032
    %v6289 = vmul.f32 %v5265, %v6033
    %v6290 = vmul.f32 %v5266, %v6034
    %v6291 = vmul.f32 %v5267, %v6035
    %v6292 = vmul.f32 %v5268, %v6036
    %v6293 = vmul.f32 %v5269, %v6037
    %v6294 = vmul.f32 %v5270, %v6038
    %v6295 = vmul.f32 %v5271, %v6039
    %v6296 = vmul.f32 %v5272, %v6040
    %v6297 = vmul.f32 %v5273, %v6041
    %v6298 = vmul.f32 %v5274, %v6042
    %v6299 = vmul.f32 %v5275, %v6043
    %v6300 = vmul.f32 %v5276, %v6044
    %v6301 = vmul.f32 %v5277, %v6045
    %v6302 = vmul.f32 %v5278, %v6046
    %v6303 = vmul.f32 %v5279, %v6047
    %v6304 = vmul.f32 %v5280, %v6048
    %v6305 = vmul.f32 %v5281, %v6049
    %v6306 = vmul.f32 %v5282, %v6050
    %v6307 = vmul.f32 %v5283, %v6051
    %v6308 = vmul.f32 %v5284, %v6052
    %v6309 = vmul.f32 %v5285, %v6053
    %v6310 = vmul.f32 %v5286, %v6054
    %v6311 = vmul.f32 %v5287, %v6055
    %v6312 = vmul.f32 %v5288, %v6056
    %v6313 = vmul.f32 %v5289, %v6057
    %v6314 = vmul.f32 %v5290, %v6058
    %v6315 = vmul.f32 %v5291, %v6059
    %v6316 = vmul.f32 %v5292, %v6060
    %v6317 = vmul.f32 %v5293, %v6061
    %v6318 = vmul.f32 %v5294, %v6062
    %v6319 = vmul.f32 %v5295, %v6063
    %v6320 = vmul.f32 %v5296, %v6064
    %v6321 = vmul.f32 %v5297, %v6065
    %v6322 = vmul.f32 %v5298, %v6066
    %v6323 = vmul.f32 %v5299, %v6067
    %v6324 = vmul.f32 %v5300, %v6068
    %v6325 = vmul.f32 %v5301, %v6069
    %v6326 = vmul.f32 %v5302, %v6070
    %v6327 = vmul.f32 %v5303, %v6071
    %v6328 = vmul.f32 %v5304, %v6072
    %v6329 = vmul.f32 %v5305, %v6073
    %v6330 = vmul.f32 %v5306, %v6074
    %v6331 = vmul.f32 %v5307, %v6075
    %v6332 = vmul.f32 %v5308, %v6076
    %v6333 = vmul.f32 %v5309, %v6077
    %v6334 = vmul.f32 %v5310, %v6078
    %v6335 = vmul.f32 %v5311, %v6079
    %v6336 = vmul.f32 %v5312, %v6080
    %v6337 = vmul.f32 %v5313, %v6081
    %v6338 = vmul.f32 %v5314, %v6082
    %v6339 = vmul.f32 %v5315, %v6083
    %v6340 = vmul.f32 %v5316, %v6084
    %v6341 = vmul.f32 %v5317, %v6085
    %v6342 = vmul.f32 %v5318, %v6086
    %v6343 = vmul.f32 %v5319, %v6087
    %v6344 = vmul.f32 %v5320, %v6088
    %v6345 = vmul.f32 %v5321, %v6089
    %v6346 = vmul.f32 %v5322, %v6090
    %v6347 = vmul.f32 %v5323, %v6091
    %v6348 = vmul.f32 %v5324, %v6092
    %v6349 = vmul.f32 %v5325, %v6093
    %v6350 = vmul.f32 %v5326, %v6094
    %v6351 = vmul.f32 %v5327, %v6095
    %v6352 = vmul.f32 %v5328, %v6096
    %v6353 = vmul.f32 %v5329, %v6097
    %v6354 = vmul.f32 %v5330, %v6098
    %v6355 = vmul.f32 %v5331, %v6099
    %v6356 = vmul.f32 %v5332, %v6100
    %v6357 = vmul.f32 %v5333, %v6101
    %v6358 = vmul.f32 %v5334, %v6102
    %v6359 = vmul.f32 %v5335, %v6103
    %v6360 = vmul.f32 %v5336, %v6104
    %v6361 = vmul.f32 %v5337, %v6105
    %v6362 = vmul.f32 %v5338, %v6106
    %v6363 = vmul.f32 %v5339, %v6107
    %v6364 = vmul.f32 %v5340, %v6108
    %v6365 = vmul.f32 %v5341, %v6109
    %v6366 = vmul.f32 %v5342, %v6110
    %v6367 = vmul.f32 %v5343, %v6111
    %v6368 = vmul.f32 %v5344, %v6112
    %v6369 = vmul.f32 %v5345, %v6113
    %v6370 = vmul.f32 %v5346, %v6114
    %v6371 = vmul.f32 %v5347, %v6115
    %v6372 = vmul.f32 %v5348, %v6116
    %v6373 = vmul.f32 %v5349, %v6117
    %v6374 = vmul.f32 %v5350, %v6118
    %v6375 = vmul.f32 %v5351, %v6119
    %v6376 = vmul.f32 %v5352, %v6120
    %v6377 = vmul.f32 %v5353, %v6121
    %v6378 = vmul.f32 %v5354, %v6122
    %v6379 = vmul.f32 %v5355, %v6123
    %v6380 = vmul.f32 %v5356, %v6124
    %v6381 = vmul.f32 %v5357, %v6125
    %v6382 = vmul.f32 %v5358, %v6126
    %v6383 = vmul.f32 %v5359, %v6127
    %v6384 = vmul.f32 %v5360, %v6128
    %v6385 = vmul.f32 %v5361, %v6129
    %v6386 = vmul.f32 %v5362, %v6130
    %v6387 = vmul.f32 %v5363, %v6131
    %v6388 = vmul.f32 %v5364, %v6132
    %v6389 = vmul.f32 %v5365, %v6133
    %v6390 = vmul.f32 %v5366, %v6134
    %v6391 = vmul.f32 %v5367, %v6135
    %v6392 = vmul.f32 %v5368, %v6136
    %v6393 = vmul.f32 %v5369, %v6137
    %v6394 = vmul.f32 %v5370, %v6138
    %v6395 = vmul.f32 %v5371, %v6139
    %v6396 = vmul.f32 %v5372, %v6140
    %v6397 = vmul.f32 %v5373, %v6141
    %v6398 = vmul.f32 %v5374, %v6142
    %v6399 = vmul.f32 %v5375, %v6143
    %v6400 = vmul.f32 %v5376, %v6144
    %v6401 = vmul.f32 %v5377, %v6145
    %v6402 = vmul.f32 %v5378, %v6146
    %v6403 = vmul.f32 %v5379, %v6147
    %v6404 = vmul.f32 %v5380, %v6148
    %v6405 = vmul.f32 %v5381, %v6149
    %v6406 = vmul.f32 %v5382, %v6150
    %v6407 = vmul.f32 %v5383, %v6151
    %v6408 = vmul.f32 %v5384, %v6152
    %v6409 = vmul.f32 %v5385, %v6153
    %v6410 = vmul.f32 %v5386, %v6154
    %v6411 = vmul.f32 %v5387, %v6155
    %v6412 = vmul.f32 %v5388, %v6156
    %v6413 = vmul.f32 %v5389, %v6157
    %v6414 = vmul.f32 %v5390, %v6158
    %v6415 = vmul.f32 %v5391, %v6159
    %v6416 = vmul.f32 %v5392, %v6160
    %v6417 = vmul.f32 %v5393, %v6161
    %v6418 = vmul.f32 %v5394, %v6162
    %v6419 = vmul.f32 %v5395, %v6163
    %v6420 = vmul.f32 %v5396, %v6164
    %v6421 = vmul.f32 %v5397, %v6165
    %v6422 = vmul.f32 %v5398, %v6166
    %v6423 = vmul.f32 %v5399, %v6167
    %v6424 = vmul.f32 %v5400, %v6168
    %v6425 = vmul.f32 %v5401, %v6169
    %v6426 = vmul.f32 %v5402, %v6170
    %v6427 = vmul.f32 %v5403, %v6171
    %v6428 = vmul.f32 %v5404, %v6172
    %v6429 = vmul.f32 %v5405, %v6173
    %v6430 = vmul.f32 %v5406, %v6174
    %v6431 = vmul.f32 %v5407, %v6175
    %v6432 = vmul.f32 %v5408, %v6176
    %v6433 = vmul.f32 %v5409, %v6177
    %v6434 = vmul.f32 %v5410, %v6178
    %v6435 = vmul.f32 %v5411, %v6179
    %v6436 = vmul.f32 %v5412, %v6180
    %v6437 = vmul.f32 %v5413, %v6181
    %v6438 = vmul.f32 %v5414, %v6182
    %v6439 = vmul.f32 %v5415, %v6183
    %v6440 = vmul.f32 %v5416, %v6184
    %v6441 = vmul.f32 %v5417, %v6185
    %v6442 = vmul.f32 %v5418, %v6186
    %v6443 = vmul.f32 %v5419, %v6187
    %v6444 = vmul.f32 %v5420, %v6188
    %v6445 = vmul.f32 %v5421, %v6189
    %v6446 = vmul.f32 %v5422, %v6190
    %v6447 = vmul.f32 %v5423, %v6191
    %v6448 = vmul.f32 %v5424, %v6192
    %v6449 = vmul.f32 %v5425, %v6193
    %v6450 = vmul.f32 %v5426, %v6194
    %v6451 = vmul.f32 %v5427, %v6195
    %v6452 = vmul.f32 %v5428, %v6196
    %v6453 = vmul.f32 %v5429, %v6197
    %v6454 = vmul.f32 %v5430, %v6198
    %v6455 = vmul.f32 %v5431, %v6199
    %v6456 = vmul.f32 %v5432, %v6200
    %v6457 = vmul.f32 %v5433, %v6201
    %v6458 = vmul.f32 %v5434, %v6202
    %v6459 = vmul.f32 %v5435, %v6203
    %v6460 = vmul.f32 %v5436, %v6204
    %v6461 = vmul.f32 %v5437, %v6205
    %v6462 = vmul.f32 %v5438, %v6206
    %v6463 = vmul.f32 %v5439, %v6207
    %v6464 = vmul.f32 %v5440, %v6208
    %v6465 = vmul.f32 %v5441, %v6209
    %v6466 = vmul.f32 %v5442, %v6210
    %v6467 = vmul.f32 %v5443, %v6211
    %v6468 = vmul.f32 %v5444, %v6212
    %v6469 = vmul.f32 %v5445, %v6213
    %v6470 = vmul.f32 %v5446, %v6214
    %v6471 = vmul.f32 %v5447, %v6215
    %v6472 = vmul.f32 %v5448, %v6216
    %v6473 = vmul.f32 %v5449, %v6217
    %v6474 = vmul.f32 %v5450, %v6218
    %v6475 = vmul.f32 %v5451, %v6219
    %v6476 = vmul.f32 %v5452, %v6220
    %v6477 = vmul.f32 %v5453, %v6221
    %v6478 = vmul.f32 %v5454, %v6222
    %v6479 = vmul.f32 %v5455, %v6223
    %v6480 = vmul.f32 %v5456, %v6224
    %v6481 = vmul.f32 %v5457, %v6225
    %v6482 = vmul.f32 %v5458, %v6226
    %v6483 = vmul.f32 %v5459, %v6227
    %v6484 = vmul.f32 %v5460, %v6228
    %v6485 = vmul.f32 %v5461, %v6229
    %v6486 = vmul.f32 %v5462, %v6230
    %v6487 = vmul.f32 %v5463, %v6231
    %v6488 = vmul.f32 %v5464, %v6232
    %v6489 = vmul.f32 %v5465, %v6233
    %v6490 = vmul.f32 %v5466, %v6234
    %v6491 = vmul.f32 %v5467, %v6235
    %v6492 = vmul.f32 %v5468, %v6236
    %v6493 = vmul.f32 %v5469, %v6237
    %v6494 = vmul.f32 %v5470, %v6238
    %v6495 = vmul.f32 %v5471, %v6239
    %v6496 = vmul.f32 %v5472, %v6240
    %v6497 = vmul.f32 %v5473, %v6241
    %v6498 = vmul.f32 %v5474, %v6242
    %v6499 = vmul.f32 %v5475, %v6243
    %v6500 = vmul.f32 %v5476, %v6244
    %v6501 = vmul.f32 %v5477, %v6245
    %v6502 = vmul.f32 %v5478, %v6246
    %v6503 = vmul.f32 %v5479, %v6247
    %v6504 = vmul.f32 %v5480, %v6248
    %v6505 = vmul.f32 %v5481, %v6249
    %v6506 = vmul.f32 %v5482, %v6250
    %v6507 = vmul.f32 %v5483, %v6251
    %v6508 = vmul.f32 %v5484, %v6252
    %v6509 = vmul.f32 %v5485, %v6253
    %v6510 = vmul.f32 %v5486, %v6254
    %v6511 = vmul.f32 %v5487, %v6255
    %v6512 = vmul.f32 %v5488, %v6256
    %v6513 = vmul.f32 %v5489, %v6257
    %v6514 = vmul.f32 %v5490, %v6258
    %v6515 = vmul.f32 %v5491, %v6259
    %v6516 = vmul.f32 %v5492, %v6260
    %v6517 = vmul.f32 %v5493, %v6261
    %v6518 = vmul.f32 %v5494, %v6262
    %v6519 = vmul.f32 %v5495, %v6263
    %v6520 = vmul.f32 %v5496, %v6264
    %v6521 = vpack.c.bf16 %v6281, %v6265
    %v6522 = vpack.c.bf16 %v6282, %v6266
    %v6523 = vpack.c.bf16 %v6283, %v6267
    %v6524 = vpack.c.bf16 %v6284, %v6268
    %v6525 = vpack.c.bf16 %v6285, %v6269
    %v6526 = vpack.c.bf16 %v6286, %v6270
    %v6527 = vpack.c.bf16 %v6287, %v6271
    %v6528 = vpack.c.bf16 %v6288, %v6272
    %v6529 = vpack.c.bf16 %v6289, %v6273
    %v6530 = vpack.c.bf16 %v6290, %v6274
    %v6531 = vpack.c.bf16 %v6291, %v6275
    %v6532 = vpack.c.bf16 %v6292, %v6276
    %v6533 = vpack.c.bf16 %v6293, %v6277
    %v6534 = vpack.c.bf16 %v6294, %v6278
    %v6535 = vpack.c.bf16 %v6295, %v6279
    %v6536 = vpack.c.bf16 %v6296, %v6280
    %v6537 = vpack.c.bf16 %v6313, %v6297
    %v6538 = vpack.c.bf16 %v6314, %v6298
    %v6539 = vpack.c.bf16 %v6315, %v6299
    %v6540 = vpack.c.bf16 %v6316, %v6300
    %v6541 = vpack.c.bf16 %v6317, %v6301
    %v6542 = vpack.c.bf16 %v6318, %v6302
    %v6543 = vpack.c.bf16 %v6319, %v6303
    %v6544 = vpack.c.bf16 %v6320, %v6304
    %v6545 = vpack.c.bf16 %v6321, %v6305
    %v6546 = vpack.c.bf16 %v6322, %v6306
    %v6547 = vpack.c.bf16 %v6323, %v6307
    %v6548 = vpack.c.bf16 %v6324, %v6308
    %v6549 = vpack.c.bf16 %v6325, %v6309
    %v6550 = vpack.c.bf16 %v6326, %v6310
    %v6551 = vpack.c.bf16 %v6327, %v6311
    %v6552 = vpack.c.bf16 %v6328, %v6312
    %v6553 = vpack.c.bf16 %v6345, %v6329
    %v6554 = vpack.c.bf16 %v6346, %v6330
    %v6555 = vpack.c.bf16 %v6347, %v6331
    %v6556 = vpack.c.bf16 %v6348, %v6332
    %v6557 = vpack.c.bf16 %v6349, %v6333
    %v6558 = vpack.c.bf16 %v6350, %v6334
    %v6559 = vpack.c.bf16 %v6351, %v6335
    %v6560 = vpack.c.bf16 %v6352, %v6336
    %v6561 = vpack.c.bf16 %v6353, %v6337
    %v6562 = vpack.c.bf16 %v6354, %v6338
    %v6563 = vpack.c.bf16 %v6355, %v6339
    %v6564 = vpack.c.bf16 %v6356, %v6340
    %v6565 = vpack.c.bf16 %v6357, %v6341
    %v6566 = vpack.c.bf16 %v6358, %v6342
    %v6567 = vpack.c.bf16 %v6359, %v6343
    %v6568 = vpack.c.bf16 %v6360, %v6344
    %v6569 = vpack.c.bf16 %v6377, %v6361
    %v6570 = vpack.c.bf16 %v6378, %v6362
    %v6571 = vpack.c.bf16 %v6379, %v6363
    %v6572 = vpack.c.bf16 %v6380, %v6364
    %v6573 = vpack.c.bf16 %v6381, %v6365
    %v6574 = vpack.c.bf16 %v6382, %v6366
    %v6575 = vpack.c.bf16 %v6383, %v6367
    %v6576 = vpack.c.bf16 %v6384, %v6368
    %v6577 = vpack.c.bf16 %v6385, %v6369
    %v6578 = vpack.c.bf16 %v6386, %v6370
    %v6579 = vpack.c.bf16 %v6387, %v6371
    %v6580 = vpack.c.bf16 %v6388, %v6372
    %v6581 = vpack.c.bf16 %v6389, %v6373
    %v6582 = vpack.c.bf16 %v6390, %v6374
    %v6583 = vpack.c.bf16 %v6391, %v6375
    %v6584 = vpack.c.bf16 %v6392, %v6376
    %v6585 = vpack.c.bf16 %v6409, %v6393
    %v6586 = vpack.c.bf16 %v6410, %v6394
    %v6587 = vpack.c.bf16 %v6411, %v6395
    %v6588 = vpack.c.bf16 %v6412, %v6396
    %v6589 = vpack.c.bf16 %v6413, %v6397
    %v6590 = vpack.c.bf16 %v6414, %v6398
    %v6591 = vpack.c.bf16 %v6415, %v6399
    %v6592 = vpack.c.bf16 %v6416, %v6400
    %v6593 = vpack.c.bf16 %v6417, %v6401
    %v6594 = vpack.c.bf16 %v6418, %v6402
    %v6595 = vpack.c.bf16 %v6419, %v6403
    %v6596 = vpack.c.bf16 %v6420, %v6404
    %v6597 = vpack.c.bf16 %v6421, %v6405
    %v6598 = vpack.c.bf16 %v6422, %v6406
    %v6599 = vpack.c.bf16 %v6423, %v6407
    %v6600 = vpack.c.bf16 %v6424, %v6408
    %v6601 = vpack.c.bf16 %v6441, %v6425
    %v6602 = vpack.c.bf16 %v6442, %v6426
    %v6603 = vpack.c.bf16 %v6443, %v6427
    %v6604 = vpack.c.bf16 %v6444, %v6428
    %v6605 = vpack.c.bf16 %v6445, %v6429
    %v6606 = vpack.c.bf16 %v6446, %v6430
    %v6607 = vpack.c.bf16 %v6447, %v6431
    %v6608 = vpack.c.bf16 %v6448, %v6432
    %v6609 = vpack.c.bf16 %v6449, %v6433
    %v6610 = vpack.c.bf16 %v6450, %v6434
    %v6611 = vpack.c.bf16 %v6451, %v6435
    %v6612 = vpack.c.bf16 %v6452, %v6436
    %v6613 = vpack.c.bf16 %v6453, %v6437
    %v6614 = vpack.c.bf16 %v6454, %v6438
    %v6615 = vpack.c.bf16 %v6455, %v6439
    %v6616 = vpack.c.bf16 %v6456, %v6440
    %v6617 = vpack.c.bf16 %v6473, %v6457
    %v6618 = vpack.c.bf16 %v6474, %v6458
    %v6619 = vpack.c.bf16 %v6475, %v6459
    %v6620 = vpack.c.bf16 %v6476, %v6460
    %v6621 = vpack.c.bf16 %v6477, %v6461
    %v6622 = vpack.c.bf16 %v6478, %v6462
    %v6623 = vpack.c.bf16 %v6479, %v6463
    %v6624 = vpack.c.bf16 %v6480, %v6464
    %v6625 = vpack.c.bf16 %v6481, %v6465
    %v6626 = vpack.c.bf16 %v6482, %v6466
    %v6627 = vpack.c.bf16 %v6483, %v6467
    %v6628 = vpack.c.bf16 %v6484, %v6468
    %v6629 = vpack.c.bf16 %v6485, %v6469
    %v6630 = vpack.c.bf16 %v6486, %v6470
    %v6631 = vpack.c.bf16 %v6487, %v6471
    %v6632 = vpack.c.bf16 %v6488, %v6472
    %v6633 = vpack.c.bf16 %v6505, %v6489
    %v6634 = vpack.c.bf16 %v6506, %v6490
    %v6635 = vpack.c.bf16 %v6507, %v6491
    %v6636 = vpack.c.bf16 %v6508, %v6492
    %v6637 = vpack.c.bf16 %v6509, %v6493
    %v6638 = vpack.c.bf16 %v6510, %v6494
    %v6639 = vpack.c.bf16 %v6511, %v6495
    %v6640 = vpack.c.bf16 %v6512, %v6496
    %v6641 = vpack.c.bf16 %v6513, %v6497
    %v6642 = vpack.c.bf16 %v6514, %v6498
    %v6643 = vpack.c.bf16 %v6515, %v6499
    %v6644 = vpack.c.bf16 %v6516, %v6500
    %v6645 = vpack.c.bf16 %v6517, %v6501
    %v6646 = vpack.c.bf16 %v6518, %v6502
    %v6647 = vpack.c.bf16 %v6519, %v6503
    %v6648 = vpack.c.bf16 %v6520, %v6504
    %v6649 = vld [vmem:[#allocation8] sm:$0xff]
    %v6650 = vld [vmem:[#allocation8 + $0x8] sm:$0xff]
    %v6651 = vld [vmem:[#allocation8 + $0x10] sm:$0xff]
    %v6652 = vld [vmem:[#allocation8 + $0x18] sm:$0xff]
    %v6653 = vld [vmem:[#allocation8 + $0x20] sm:$0xff]
    %v6654 = vld [vmem:[#allocation8 + $0x28] sm:$0xff]
    %v6655 = vld [vmem:[#allocation8 + $0x30] sm:$0xff]
    %v6656 = vld [vmem:[#allocation8 + $0x38] sm:$0xff]
    %v6657 = vld [vmem:[#allocation8 + $0x40] sm:$0xff]
    %v6658 = vld [vmem:[#allocation8 + $0x48] sm:$0xff]
    %v6659 = vld [vmem:[#allocation8 + $0x50] sm:$0xff]
    %v6660 = vld [vmem:[#allocation8 + $0x58] sm:$0xff]
    %v6661 = vld [vmem:[#allocation8 + $0x60] sm:$0xff]
    %v6662 = vld [vmem:[#allocation8 + $0x68] sm:$0xff]
    %v6663 = vld [vmem:[#allocation8 + $0x70] sm:$0xff]
    %v6664 = vld [vmem:[#allocation8 + $0x78] sm:$0xff]
    %v6665 = vld [vmem:[#allocation8 + $0x80] sm:$0xff]
    %v6666 = vld [vmem:[#allocation8 + $0x88] sm:$0xff]
    %v6667 = vld [vmem:[#allocation8 + $0x90] sm:$0xff]
    %v6668 = vld [vmem:[#allocation8 + $0x98] sm:$0xff]
    %v6669 = vld [vmem:[#allocation8 + $0xa0] sm:$0xff]
    %v6670 = vld [vmem:[#allocation8 + $0xa8] sm:$0xff]
    %v6671 = vld [vmem:[#allocation8 + $0xb0] sm:$0xff]
    %v6672 = vld [vmem:[#allocation8 + $0xb8] sm:$0xff]
    %v6673 = vld [vmem:[#allocation8 + $0xc0] sm:$0xff]
    %v6674 = vld [vmem:[#allocation8 + $0xc8] sm:$0xff]
    %v6675 = vld [vmem:[#allocation8 + $0xd0] sm:$0xff]
    %v6676 = vld [vmem:[#allocation8 + $0xd8] sm:$0xff]
    %v6677 = vld [vmem:[#allocation8 + $0xe0] sm:$0xff]
    %v6678 = vld [vmem:[#allocation8 + $0xe8] sm:$0xff]
    %v6679 = vld [vmem:[#allocation8 + $0xf0] sm:$0xff]
    %v6680 = vld [vmem:[#allocation8 + $0xf8] sm:$0xff]
    %v6681 = vld [vmem:[#allocation8 + $0x100] sm:$0xff]
    %v6682 = vld [vmem:[#allocation8 + $0x108] sm:$0xff]
    %v6683 = vld [vmem:[#allocation8 + $0x110] sm:$0xff]
    %v6684 = vld [vmem:[#allocation8 + $0x118] sm:$0xff]
    %v6685 = vld [vmem:[#allocation8 + $0x120] sm:$0xff]
    %v6686 = vld [vmem:[#allocation8 + $0x128] sm:$0xff]
    %v6687 = vld [vmem:[#allocation8 + $0x130] sm:$0xff]
    %v6688 = vld [vmem:[#allocation8 + $0x138] sm:$0xff]
    %v6689 = vld [vmem:[#allocation8 + $0x140] sm:$0xff]
    %v6690 = vld [vmem:[#allocation8 + $0x148] sm:$0xff]
    %v6691 = vld [vmem:[#allocation8 + $0x150] sm:$0xff]
    %v6692 = vld [vmem:[#allocation8 + $0x158] sm:$0xff]
    %v6693 = vld [vmem:[#allocation8 + $0x160] sm:$0xff]
    %v6694 = vld [vmem:[#allocation8 + $0x168] sm:$0xff]
    %v6695 = vld [vmem:[#allocation8 + $0x170] sm:$0xff]
    %v6696 = vld [vmem:[#allocation8 + $0x178] sm:$0xff]
    %v6697 = vld [vmem:[#allocation8 + $0x180] sm:$0xff]
    %v6698 = vld [vmem:[#allocation8 + $0x188] sm:$0xff]
    %v6699 = vld [vmem:[#allocation8 + $0x190] sm:$0xff]
    %v6700 = vld [vmem:[#allocation8 + $0x198] sm:$0xff]
    %v6701 = vld [vmem:[#allocation8 + $0x1a0] sm:$0xff]
    %v6702 = vld [vmem:[#allocation8 + $0x1a8] sm:$0xff]
    %v6703 = vld [vmem:[#allocation8 + $0x1b0] sm:$0xff]
    %v6704 = vld [vmem:[#allocation8 + $0x1b8] sm:$0xff]
    %v6705 = vld [vmem:[#allocation8 + $0x1c0] sm:$0xff]
    %v6706 = vld [vmem:[#allocation8 + $0x1c8] sm:$0xff]
    %v6707 = vld [vmem:[#allocation8 + $0x1d0] sm:$0xff]
    %v6708 = vld [vmem:[#allocation8 + $0x1d8] sm:$0xff]
    %v6709 = vld [vmem:[#allocation8 + $0x1e0] sm:$0xff]
    %v6710 = vld [vmem:[#allocation8 + $0x1e8] sm:$0xff]
    %v6711 = vld [vmem:[#allocation8 + $0x1f0] sm:$0xff]
    %v6712 = vld [vmem:[#allocation8 + $0x1f8] sm:$0xff]
    %v6713 = vld [vmem:[#allocation8 + $0x200] sm:$0xff]
    %v6714 = vld [vmem:[#allocation8 + $0x208] sm:$0xff]
    %v6715 = vld [vmem:[#allocation8 + $0x210] sm:$0xff]
    %v6716 = vld [vmem:[#allocation8 + $0x218] sm:$0xff]
    %v6717 = vld [vmem:[#allocation8 + $0x220] sm:$0xff]
    %v6718 = vld [vmem:[#allocation8 + $0x228] sm:$0xff]
    %v6719 = vld [vmem:[#allocation8 + $0x230] sm:$0xff]
    %v6720 = vld [vmem:[#allocation8 + $0x238] sm:$0xff]
    %v6721 = vld [vmem:[#allocation8 + $0x240] sm:$0xff]
    %v6722 = vld [vmem:[#allocation8 + $0x248] sm:$0xff]
    %v6723 = vld [vmem:[#allocation8 + $0x250] sm:$0xff]
    %v6724 = vld [vmem:[#allocation8 + $0x258] sm:$0xff]
    %v6725 = vld [vmem:[#allocation8 + $0x260] sm:$0xff]
    %v6726 = vld [vmem:[#allocation8 + $0x268] sm:$0xff]
    %v6727 = vld [vmem:[#allocation8 + $0x270] sm:$0xff]
    %v6728 = vld [vmem:[#allocation8 + $0x278] sm:$0xff]
    %v6729 = vld [vmem:[#allocation8 + $0x280] sm:$0xff]
    %v6730 = vld [vmem:[#allocation8 + $0x288] sm:$0xff]
    %v6731 = vld [vmem:[#allocation8 + $0x290] sm:$0xff]
    %v6732 = vld [vmem:[#allocation8 + $0x298] sm:$0xff]
    %v6733 = vld [vmem:[#allocation8 + $0x2a0] sm:$0xff]
    %v6734 = vld [vmem:[#allocation8 + $0x2a8] sm:$0xff]
    %v6735 = vld [vmem:[#allocation8 + $0x2b0] sm:$0xff]
    %v6736 = vld [vmem:[#allocation8 + $0x2b8] sm:$0xff]
    %v6737 = vld [vmem:[#allocation8 + $0x2c0] sm:$0xff]
    %v6738 = vld [vmem:[#allocation8 + $0x2c8] sm:$0xff]
    %v6739 = vld [vmem:[#allocation8 + $0x2d0] sm:$0xff]
    %v6740 = vld [vmem:[#allocation8 + $0x2d8] sm:$0xff]
    %v6741 = vld [vmem:[#allocation8 + $0x2e0] sm:$0xff]
    %v6742 = vld [vmem:[#allocation8 + $0x2e8] sm:$0xff]
    %v6743 = vld [vmem:[#allocation8 + $0x2f0] sm:$0xff]
    %v6744 = vld [vmem:[#allocation8 + $0x2f8] sm:$0xff]
    %v6745 = vld [vmem:[#allocation8 + $0x300] sm:$0xff]
    %v6746 = vld [vmem:[#allocation8 + $0x308] sm:$0xff]
    %v6747 = vld [vmem:[#allocation8 + $0x310] sm:$0xff]
    %v6748 = vld [vmem:[#allocation8 + $0x318] sm:$0xff]
    %v6749 = vld [vmem:[#allocation8 + $0x320] sm:$0xff]
    %v6750 = vld [vmem:[#allocation8 + $0x328] sm:$0xff]
    %v6751 = vld [vmem:[#allocation8 + $0x330] sm:$0xff]
    %v6752 = vld [vmem:[#allocation8 + $0x338] sm:$0xff]
    %v6753 = vld [vmem:[#allocation8 + $0x340] sm:$0xff]
    %v6754 = vld [vmem:[#allocation8 + $0x348] sm:$0xff]
    %v6755 = vld [vmem:[#allocation8 + $0x350] sm:$0xff]
    %v6756 = vld [vmem:[#allocation8 + $0x358] sm:$0xff]
    %v6757 = vld [vmem:[#allocation8 + $0x360] sm:$0xff]
    %v6758 = vld [vmem:[#allocation8 + $0x368] sm:$0xff]
    %v6759 = vld [vmem:[#allocation8 + $0x370] sm:$0xff]
    %v6760 = vld [vmem:[#allocation8 + $0x378] sm:$0xff]
    %v6761 = vld [vmem:[#allocation8 + $0x380] sm:$0xff]
    %v6762 = vld [vmem:[#allocation8 + $0x388] sm:$0xff]
    %v6763 = vld [vmem:[#allocation8 + $0x390] sm:$0xff]
    %v6764 = vld [vmem:[#allocation8 + $0x398] sm:$0xff]
    %v6765 = vld [vmem:[#allocation8 + $0x3a0] sm:$0xff]
    %v6766 = vld [vmem:[#allocation8 + $0x3a8] sm:$0xff]
    %v6767 = vld [vmem:[#allocation8 + $0x3b0] sm:$0xff]
    %v6768 = vld [vmem:[#allocation8 + $0x3b8] sm:$0xff]
    %v6769 = vld [vmem:[#allocation8 + $0x3c0] sm:$0xff]
    %v6770 = vld [vmem:[#allocation8 + $0x3c8] sm:$0xff]
    %v6771 = vld [vmem:[#allocation8 + $0x3d0] sm:$0xff]
    %v6772 = vld [vmem:[#allocation8 + $0x3d8] sm:$0xff]
    %v6773 = vld [vmem:[#allocation8 + $0x3e0] sm:$0xff]
    %v6774 = vld [vmem:[#allocation8 + $0x3e8] sm:$0xff]
    %v6775 = vld [vmem:[#allocation8 + $0x3f0] sm:$0xff]
    %v6776 = vld [vmem:[#allocation8 + $0x3f8] sm:$0xff]
    %v6777 = vld [vmem:[#allocation8 + $0x400] sm:$0xff]
    %v6778 = vld [vmem:[#allocation8 + $0x408] sm:$0xff]
    %v6779 = vld [vmem:[#allocation8 + $0x410] sm:$0xff]
    %v6780 = vld [vmem:[#allocation8 + $0x418] sm:$0xff]
    %v6781 = vld [vmem:[#allocation8 + $0x420] sm:$0xff]
    %v6782 = vld [vmem:[#allocation8 + $0x428] sm:$0xff]
    %v6783 = vld [vmem:[#allocation8 + $0x430] sm:$0xff]
    %v6784 = vld [vmem:[#allocation8 + $0x438] sm:$0xff]
    %v6785 = vld [vmem:[#allocation8 + $0x440] sm:$0xff]
    %v6786 = vld [vmem:[#allocation8 + $0x448] sm:$0xff]
    %v6787 = vld [vmem:[#allocation8 + $0x450] sm:$0xff]
    %v6788 = vld [vmem:[#allocation8 + $0x458] sm:$0xff]
    %v6789 = vld [vmem:[#allocation8 + $0x460] sm:$0xff]
    %v6790 = vld [vmem:[#allocation8 + $0x468] sm:$0xff]
    %v6791 = vld [vmem:[#allocation8 + $0x470] sm:$0xff]
    %v6792 = vld [vmem:[#allocation8 + $0x478] sm:$0xff]
    %v6793 = vld [vmem:[#allocation8 + $0x480] sm:$0xff]
    %v6794 = vld [vmem:[#allocation8 + $0x488] sm:$0xff]
    %v6795 = vld [vmem:[#allocation8 + $0x490] sm:$0xff]
    %v6796 = vld [vmem:[#allocation8 + $0x498] sm:$0xff]
    %v6797 = vld [vmem:[#allocation8 + $0x4a0] sm:$0xff]
    %v6798 = vld [vmem:[#allocation8 + $0x4a8] sm:$0xff]
    %v6799 = vld [vmem:[#allocation8 + $0x4b0] sm:$0xff]
    %v6800 = vld [vmem:[#allocation8 + $0x4b8] sm:$0xff]
    %v6801 = vld [vmem:[#allocation8 + $0x4c0] sm:$0xff]
    %v6802 = vld [vmem:[#allocation8 + $0x4c8] sm:$0xff]
    %v6803 = vld [vmem:[#allocation8 + $0x4d0] sm:$0xff]
    %v6804 = vld [vmem:[#allocation8 + $0x4d8] sm:$0xff]
    %v6805 = vld [vmem:[#allocation8 + $0x4e0] sm:$0xff]
    %v6806 = vld [vmem:[#allocation8 + $0x4e8] sm:$0xff]
    %v6807 = vld [vmem:[#allocation8 + $0x4f0] sm:$0xff]
    %v6808 = vld [vmem:[#allocation8 + $0x4f8] sm:$0xff]
    %v6809 = vld [vmem:[#allocation8 + $0x500] sm:$0xff]
    %v6810 = vld [vmem:[#allocation8 + $0x508] sm:$0xff]
    %v6811 = vld [vmem:[#allocation8 + $0x510] sm:$0xff]
    %v6812 = vld [vmem:[#allocation8 + $0x518] sm:$0xff]
    %v6813 = vld [vmem:[#allocation8 + $0x520] sm:$0xff]
    %v6814 = vld [vmem:[#allocation8 + $0x528] sm:$0xff]
    %v6815 = vld [vmem:[#allocation8 + $0x530] sm:$0xff]
    %v6816 = vld [vmem:[#allocation8 + $0x538] sm:$0xff]
    %v6817 = vld [vmem:[#allocation8 + $0x540] sm:$0xff]
    %v6818 = vld [vmem:[#allocation8 + $0x548] sm:$0xff]
    %v6819 = vld [vmem:[#allocation8 + $0x550] sm:$0xff]
    %v6820 = vld [vmem:[#allocation8 + $0x558] sm:$0xff]
    %v6821 = vld [vmem:[#allocation8 + $0x560] sm:$0xff]
    %v6822 = vld [vmem:[#allocation8 + $0x568] sm:$0xff]
    %v6823 = vld [vmem:[#allocation8 + $0x570] sm:$0xff]
    %v6824 = vld [vmem:[#allocation8 + $0x578] sm:$0xff]
    %v6825 = vld [vmem:[#allocation8 + $0x580] sm:$0xff]
    %v6826 = vld [vmem:[#allocation8 + $0x588] sm:$0xff]
    %v6827 = vld [vmem:[#allocation8 + $0x590] sm:$0xff]
    %v6828 = vld [vmem:[#allocation8 + $0x598] sm:$0xff]
    %v6829 = vld [vmem:[#allocation8 + $0x5a0] sm:$0xff]
    %v6830 = vld [vmem:[#allocation8 + $0x5a8] sm:$0xff]
    %v6831 = vld [vmem:[#allocation8 + $0x5b0] sm:$0xff]
    %v6832 = vld [vmem:[#allocation8 + $0x5b8] sm:$0xff]
    %v6833 = vld [vmem:[#allocation8 + $0x5c0] sm:$0xff]
    %v6834 = vld [vmem:[#allocation8 + $0x5c8] sm:$0xff]
    %v6835 = vld [vmem:[#allocation8 + $0x5d0] sm:$0xff]
    %v6836 = vld [vmem:[#allocation8 + $0x5d8] sm:$0xff]
    %v6837 = vld [vmem:[#allocation8 + $0x5e0] sm:$0xff]
    %v6838 = vld [vmem:[#allocation8 + $0x5e8] sm:$0xff]
    %v6839 = vld [vmem:[#allocation8 + $0x5f0] sm:$0xff]
    %v6840 = vld [vmem:[#allocation8 + $0x5f8] sm:$0xff]
    %v6841 = vld [vmem:[#allocation8 + $0x600] sm:$0xff]
    %v6842 = vld [vmem:[#allocation8 + $0x608] sm:$0xff]
    %v6843 = vld [vmem:[#allocation8 + $0x610] sm:$0xff]
    %v6844 = vld [vmem:[#allocation8 + $0x618] sm:$0xff]
    %v6845 = vld [vmem:[#allocation8 + $0x620] sm:$0xff]
    %v6846 = vld [vmem:[#allocation8 + $0x628] sm:$0xff]
    %v6847 = vld [vmem:[#allocation8 + $0x630] sm:$0xff]
    %v6848 = vld [vmem:[#allocation8 + $0x638] sm:$0xff]
    %v6849 = vld [vmem:[#allocation8 + $0x640] sm:$0xff]
    %v6850 = vld [vmem:[#allocation8 + $0x648] sm:$0xff]
    %v6851 = vld [vmem:[#allocation8 + $0x650] sm:$0xff]
    %v6852 = vld [vmem:[#allocation8 + $0x658] sm:$0xff]
    %v6853 = vld [vmem:[#allocation8 + $0x660] sm:$0xff]
    %v6854 = vld [vmem:[#allocation8 + $0x668] sm:$0xff]
    %v6855 = vld [vmem:[#allocation8 + $0x670] sm:$0xff]
    %v6856 = vld [vmem:[#allocation8 + $0x678] sm:$0xff]
    %v6857 = vld [vmem:[#allocation8 + $0x680] sm:$0xff]
    %v6858 = vld [vmem:[#allocation8 + $0x688] sm:$0xff]
    %v6859 = vld [vmem:[#allocation8 + $0x690] sm:$0xff]
    %v6860 = vld [vmem:[#allocation8 + $0x698] sm:$0xff]
    %v6861 = vld [vmem:[#allocation8 + $0x6a0] sm:$0xff]
    %v6862 = vld [vmem:[#allocation8 + $0x6a8] sm:$0xff]
    %v6863 = vld [vmem:[#allocation8 + $0x6b0] sm:$0xff]
    %v6864 = vld [vmem:[#allocation8 + $0x6b8] sm:$0xff]
    %v6865 = vld [vmem:[#allocation8 + $0x6c0] sm:$0xff]
    %v6866 = vld [vmem:[#allocation8 + $0x6c8] sm:$0xff]
    %v6867 = vld [vmem:[#allocation8 + $0x6d0] sm:$0xff]
    %v6868 = vld [vmem:[#allocation8 + $0x6d8] sm:$0xff]
    %v6869 = vld [vmem:[#allocation8 + $0x6e0] sm:$0xff]
    %v6870 = vld [vmem:[#allocation8 + $0x6e8] sm:$0xff]
    %v6871 = vld [vmem:[#allocation8 + $0x6f0] sm:$0xff]
    %v6872 = vld [vmem:[#allocation8 + $0x6f8] sm:$0xff]
    %v6873 = vld [vmem:[#allocation8 + $0x700] sm:$0xff]
    %v6874 = vld [vmem:[#allocation8 + $0x708] sm:$0xff]
    %v6875 = vld [vmem:[#allocation8 + $0x710] sm:$0xff]
    %v6876 = vld [vmem:[#allocation8 + $0x718] sm:$0xff]
    %v6877 = vld [vmem:[#allocation8 + $0x720] sm:$0xff]
    %v6878 = vld [vmem:[#allocation8 + $0x728] sm:$0xff]
    %v6879 = vld [vmem:[#allocation8 + $0x730] sm:$0xff]
    %v6880 = vld [vmem:[#allocation8 + $0x738] sm:$0xff]
    %v6881 = vld [vmem:[#allocation8 + $0x740] sm:$0xff]
    %v6882 = vld [vmem:[#allocation8 + $0x748] sm:$0xff]
    %v6883 = vld [vmem:[#allocation8 + $0x750] sm:$0xff]
    %v6884 = vld [vmem:[#allocation8 + $0x758] sm:$0xff]
    %v6885 = vld [vmem:[#allocation8 + $0x760] sm:$0xff]
    %v6886 = vld [vmem:[#allocation8 + $0x768] sm:$0xff]
    %v6887 = vld [vmem:[#allocation8 + $0x770] sm:$0xff]
    %v6888 = vld [vmem:[#allocation8 + $0x778] sm:$0xff]
    %v6889 = vld [vmem:[#allocation8 + $0x780] sm:$0xff]
    %v6890 = vld [vmem:[#allocation8 + $0x788] sm:$0xff]
    %v6891 = vld [vmem:[#allocation8 + $0x790] sm:$0xff]
    %v6892 = vld [vmem:[#allocation8 + $0x798] sm:$0xff]
    %v6893 = vld [vmem:[#allocation8 + $0x7a0] sm:$0xff]
    %v6894 = vld [vmem:[#allocation8 + $0x7a8] sm:$0xff]
    %v6895 = vld [vmem:[#allocation8 + $0x7b0] sm:$0xff]
    %v6896 = vld [vmem:[#allocation8 + $0x7b8] sm:$0xff]
    %v6897 = vld [vmem:[#allocation8 + $0x7c0] sm:$0xff]
    %v6898 = vld [vmem:[#allocation8 + $0x7c8] sm:$0xff]
    %v6899 = vld [vmem:[#allocation8 + $0x7d0] sm:$0xff]
    %v6900 = vld [vmem:[#allocation8 + $0x7d8] sm:$0xff]
    %v6901 = vld [vmem:[#allocation8 + $0x7e0] sm:$0xff]
    %v6902 = vld [vmem:[#allocation8 + $0x7e8] sm:$0xff]
    %v6903 = vld [vmem:[#allocation8 + $0x7f0] sm:$0xff]
    %v6904 = vld [vmem:[#allocation8 + $0x7f8] sm:$0xff]
    %v6905 = vld [vmem:[#allocation8 + $0x800] sm:$0xff]
    %v6906 = vld [vmem:[#allocation8 + $0x808] sm:$0xff]
    %v6907 = vld [vmem:[#allocation8 + $0x810] sm:$0xff]
    %v6908 = vld [vmem:[#allocation8 + $0x818] sm:$0xff]
    %v6909 = vld [vmem:[#allocation8 + $0x820] sm:$0xff]
    %v6910 = vld [vmem:[#allocation8 + $0x828] sm:$0xff]
    %v6911 = vld [vmem:[#allocation8 + $0x830] sm:$0xff]
    %v6912 = vld [vmem:[#allocation8 + $0x838] sm:$0xff]
    %v6913 = vld [vmem:[#allocation8 + $0x840] sm:$0xff]
    %v6914 = vld [vmem:[#allocation8 + $0x848] sm:$0xff]
    %v6915 = vld [vmem:[#allocation8 + $0x850] sm:$0xff]
    %v6916 = vld [vmem:[#allocation8 + $0x858] sm:$0xff]
    %v6917 = vld [vmem:[#allocation8 + $0x860] sm:$0xff]
    %v6918 = vld [vmem:[#allocation8 + $0x868] sm:$0xff]
    %v6919 = vld [vmem:[#allocation8 + $0x870] sm:$0xff]
    %v6920 = vld [vmem:[#allocation8 + $0x878] sm:$0xff]
    %v6921 = vld [vmem:[#allocation8 + $0x880] sm:$0xff]
    %v6922 = vld [vmem:[#allocation8 + $0x888] sm:$0xff]
    %v6923 = vld [vmem:[#allocation8 + $0x890] sm:$0xff]
    %v6924 = vld [vmem:[#allocation8 + $0x898] sm:$0xff]
    %v6925 = vld [vmem:[#allocation8 + $0x8a0] sm:$0xff]
    %v6926 = vld [vmem:[#allocation8 + $0x8a8] sm:$0xff]
    %v6927 = vld [vmem:[#allocation8 + $0x8b0] sm:$0xff]
    %v6928 = vld [vmem:[#allocation8 + $0x8b8] sm:$0xff]
    %v6929 = vld [vmem:[#allocation8 + $0x8c0] sm:$0xff]
    %v6930 = vld [vmem:[#allocation8 + $0x8c8] sm:$0xff]
    %v6931 = vld [vmem:[#allocation8 + $0x8d0] sm:$0xff]
    %v6932 = vld [vmem:[#allocation8 + $0x8d8] sm:$0xff]
    %v6933 = vld [vmem:[#allocation8 + $0x8e0] sm:$0xff]
    %v6934 = vld [vmem:[#allocation8 + $0x8e8] sm:$0xff]
    %v6935 = vld [vmem:[#allocation8 + $0x8f0] sm:$0xff]
    %v6936 = vld [vmem:[#allocation8 + $0x8f8] sm:$0xff]
    %v6937 = vld [vmem:[#allocation8 + $0x900] sm:$0xff]
    %v6938 = vld [vmem:[#allocation8 + $0x908] sm:$0xff]
    %v6939 = vld [vmem:[#allocation8 + $0x910] sm:$0xff]
    %v6940 = vld [vmem:[#allocation8 + $0x918] sm:$0xff]
    %v6941 = vld [vmem:[#allocation8 + $0x920] sm:$0xff]
    %v6942 = vld [vmem:[#allocation8 + $0x928] sm:$0xff]
    %v6943 = vld [vmem:[#allocation8 + $0x930] sm:$0xff]
    %v6944 = vld [vmem:[#allocation8 + $0x938] sm:$0xff]
    %v6945 = vld [vmem:[#allocation8 + $0x940] sm:$0xff]
    %v6946 = vld [vmem:[#allocation8 + $0x948] sm:$0xff]
    %v6947 = vld [vmem:[#allocation8 + $0x950] sm:$0xff]
    %v6948 = vld [vmem:[#allocation8 + $0x958] sm:$0xff]
    %v6949 = vld [vmem:[#allocation8 + $0x960] sm:$0xff]
    %v6950 = vld [vmem:[#allocation8 + $0x968] sm:$0xff]
    %v6951 = vld [vmem:[#allocation8 + $0x970] sm:$0xff]
    %v6952 = vld [vmem:[#allocation8 + $0x978] sm:$0xff]
    %v6953 = vld [vmem:[#allocation8 + $0x980] sm:$0xff]
    %v6954 = vld [vmem:[#allocation8 + $0x988] sm:$0xff]
    %v6955 = vld [vmem:[#allocation8 + $0x990] sm:$0xff]
    %v6956 = vld [vmem:[#allocation8 + $0x998] sm:$0xff]
    %v6957 = vld [vmem:[#allocation8 + $0x9a0] sm:$0xff]
    %v6958 = vld [vmem:[#allocation8 + $0x9a8] sm:$0xff]
    %v6959 = vld [vmem:[#allocation8 + $0x9b0] sm:$0xff]
    %v6960 = vld [vmem:[#allocation8 + $0x9b8] sm:$0xff]
    %v6961 = vld [vmem:[#allocation8 + $0x9c0] sm:$0xff]
    %v6962 = vld [vmem:[#allocation8 + $0x9c8] sm:$0xff]
    %v6963 = vld [vmem:[#allocation8 + $0x9d0] sm:$0xff]
    %v6964 = vld [vmem:[#allocation8 + $0x9d8] sm:$0xff]
    %v6965 = vld [vmem:[#allocation8 + $0x9e0] sm:$0xff]
    %v6966 = vld [vmem:[#allocation8 + $0x9e8] sm:$0xff]
    %v6967 = vld [vmem:[#allocation8 + $0x9f0] sm:$0xff]
    %v6968 = vld [vmem:[#allocation8 + $0x9f8] sm:$0xff]
    %v6969 = vld [vmem:[#allocation8 + $0xa00] sm:$0xff]
    %v6970 = vld [vmem:[#allocation8 + $0xa08] sm:$0xff]
    %v6971 = vld [vmem:[#allocation8 + $0xa10] sm:$0xff]
    %v6972 = vld [vmem:[#allocation8 + $0xa18] sm:$0xff]
    %v6973 = vld [vmem:[#allocation8 + $0xa20] sm:$0xff]
    %v6974 = vld [vmem:[#allocation8 + $0xa28] sm:$0xff]
    %v6975 = vld [vmem:[#allocation8 + $0xa30] sm:$0xff]
    %v6976 = vld [vmem:[#allocation8 + $0xa38] sm:$0xff]
    %v6977 = vld [vmem:[#allocation8 + $0xa40] sm:$0xff]
    %v6978 = vld [vmem:[#allocation8 + $0xa48] sm:$0xff]
    %v6979 = vld [vmem:[#allocation8 + $0xa50] sm:$0xff]
    %v6980 = vld [vmem:[#allocation8 + $0xa58] sm:$0xff]
    %v6981 = vld [vmem:[#allocation8 + $0xa60] sm:$0xff]
    %v6982 = vld [vmem:[#allocation8 + $0xa68] sm:$0xff]
    %v6983 = vld [vmem:[#allocation8 + $0xa70] sm:$0xff]
    %v6984 = vld [vmem:[#allocation8 + $0xa78] sm:$0xff]
    %v6985 = vld [vmem:[#allocation8 + $0xa80] sm:$0xff]
    %v6986 = vld [vmem:[#allocation8 + $0xa88] sm:$0xff]
    %v6987 = vld [vmem:[#allocation8 + $0xa90] sm:$0xff]
    %v6988 = vld [vmem:[#allocation8 + $0xa98] sm:$0xff]
    %v6989 = vld [vmem:[#allocation8 + $0xaa0] sm:$0xff]
    %v6990 = vld [vmem:[#allocation8 + $0xaa8] sm:$0xff]
    %v6991 = vld [vmem:[#allocation8 + $0xab0] sm:$0xff]
    %v6992 = vld [vmem:[#allocation8 + $0xab8] sm:$0xff]
    %v6993 = vld [vmem:[#allocation8 + $0xac0] sm:$0xff]
    %v6994 = vld [vmem:[#allocation8 + $0xac8] sm:$0xff]
    %v6995 = vld [vmem:[#allocation8 + $0xad0] sm:$0xff]
    %v6996 = vld [vmem:[#allocation8 + $0xad8] sm:$0xff]
    %v6997 = vld [vmem:[#allocation8 + $0xae0] sm:$0xff]
    %v6998 = vld [vmem:[#allocation8 + $0xae8] sm:$0xff]
    %v6999 = vld [vmem:[#allocation8 + $0xaf0] sm:$0xff]
    %v7000 = vld [vmem:[#allocation8 + $0xaf8] sm:$0xff]
    %v7001 = vld [vmem:[#allocation8 + $0xb00] sm:$0xff]
    %v7002 = vld [vmem:[#allocation8 + $0xb08] sm:$0xff]
    %v7003 = vld [vmem:[#allocation8 + $0xb10] sm:$0xff]
    %v7004 = vld [vmem:[#allocation8 + $0xb18] sm:$0xff]
    %v7005 = vld [vmem:[#allocation8 + $0xb20] sm:$0xff]
    %v7006 = vld [vmem:[#allocation8 + $0xb28] sm:$0xff]
    %v7007 = vld [vmem:[#allocation8 + $0xb30] sm:$0xff]
    %v7008 = vld [vmem:[#allocation8 + $0xb38] sm:$0xff]
    %v7009 = vld [vmem:[#allocation8 + $0xb40] sm:$0xff]
    %v7010 = vld [vmem:[#allocation8 + $0xb48] sm:$0xff]
    %v7011 = vld [vmem:[#allocation8 + $0xb50] sm:$0xff]
    %v7012 = vld [vmem:[#allocation8 + $0xb58] sm:$0xff]
    %v7013 = vld [vmem:[#allocation8 + $0xb60] sm:$0xff]
    %v7014 = vld [vmem:[#allocation8 + $0xb68] sm:$0xff]
    %v7015 = vld [vmem:[#allocation8 + $0xb70] sm:$0xff]
    %v7016 = vld [vmem:[#allocation8 + $0xb78] sm:$0xff]
    %v7017 = vld [vmem:[#allocation8 + $0xb80] sm:$0xff]
    %v7018 = vld [vmem:[#allocation8 + $0xb88] sm:$0xff]
    %v7019 = vld [vmem:[#allocation8 + $0xb90] sm:$0xff]
    %v7020 = vld [vmem:[#allocation8 + $0xb98] sm:$0xff]
    %v7021 = vld [vmem:[#allocation8 + $0xba0] sm:$0xff]
    %v7022 = vld [vmem:[#allocation8 + $0xba8] sm:$0xff]
    %v7023 = vld [vmem:[#allocation8 + $0xbb0] sm:$0xff]
    %v7024 = vld [vmem:[#allocation8 + $0xbb8] sm:$0xff]
    %v7025 = vld [vmem:[#allocation8 + $0xbc0] sm:$0xff]
    %v7026 = vld [vmem:[#allocation8 + $0xbc8] sm:$0xff]
    %v7027 = vld [vmem:[#allocation8 + $0xbd0] sm:$0xff]
    %v7028 = vld [vmem:[#allocation8 + $0xbd8] sm:$0xff]
    %v7029 = vld [vmem:[#allocation8 + $0xbe0] sm:$0xff]
    %v7030 = vld [vmem:[#allocation8 + $0xbe8] sm:$0xff]
    %v7031 = vld [vmem:[#allocation8 + $0xbf0] sm:$0xff]
    %v7032 = vld [vmem:[#allocation8 + $0xbf8] sm:$0xff]
    %v7033 = vld [vmem:[#allocation8 + $0xc00] sm:$0xff]
    %v7034 = vld [vmem:[#allocation8 + $0xc08] sm:$0xff]
    %v7035 = vld [vmem:[#allocation8 + $0xc10] sm:$0xff]
    %v7036 = vld [vmem:[#allocation8 + $0xc18] sm:$0xff]
    %v7037 = vld [vmem:[#allocation8 + $0xc20] sm:$0xff]
    %v7038 = vld [vmem:[#allocation8 + $0xc28] sm:$0xff]
    %v7039 = vld [vmem:[#allocation8 + $0xc30] sm:$0xff]
    %v7040 = vld [vmem:[#allocation8 + $0xc38] sm:$0xff]
    %v7041 = vld [vmem:[#allocation8 + $0xc40] sm:$0xff]
    %v7042 = vld [vmem:[#allocation8 + $0xc48] sm:$0xff]
    %v7043 = vld [vmem:[#allocation8 + $0xc50] sm:$0xff]
    %v7044 = vld [vmem:[#allocation8 + $0xc58] sm:$0xff]
    %v7045 = vld [vmem:[#allocation8 + $0xc60] sm:$0xff]
    %v7046 = vld [vmem:[#allocation8 + $0xc68] sm:$0xff]
    %v7047 = vld [vmem:[#allocation8 + $0xc70] sm:$0xff]
    %v7048 = vld [vmem:[#allocation8 + $0xc78] sm:$0xff]
    %v7049 = vld [vmem:[#allocation8 + $0xc80] sm:$0xff]
    %v7050 = vld [vmem:[#allocation8 + $0xc88] sm:$0xff]
    %v7051 = vld [vmem:[#allocation8 + $0xc90] sm:$0xff]
    %v7052 = vld [vmem:[#allocation8 + $0xc98] sm:$0xff]
    %v7053 = vld [vmem:[#allocation8 + $0xca0] sm:$0xff]
    %v7054 = vld [vmem:[#allocation8 + $0xca8] sm:$0xff]
    %v7055 = vld [vmem:[#allocation8 + $0xcb0] sm:$0xff]
    %v7056 = vld [vmem:[#allocation8 + $0xcb8] sm:$0xff]
    %v7057 = vld [vmem:[#allocation8 + $0xcc0] sm:$0xff]
    %v7058 = vld [vmem:[#allocation8 + $0xcc8] sm:$0xff]
    %v7059 = vld [vmem:[#allocation8 + $0xcd0] sm:$0xff]
    %v7060 = vld [vmem:[#allocation8 + $0xcd8] sm:$0xff]
    %v7061 = vld [vmem:[#allocation8 + $0xce0] sm:$0xff]
    %v7062 = vld [vmem:[#allocation8 + $0xce8] sm:$0xff]
    %v7063 = vld [vmem:[#allocation8 + $0xcf0] sm:$0xff]
    %v7064 = vld [vmem:[#allocation8 + $0xcf8] sm:$0xff]
    %v7065 = vld [vmem:[#allocation8 + $0xd00] sm:$0xff]
    %v7066 = vld [vmem:[#allocation8 + $0xd08] sm:$0xff]
    %v7067 = vld [vmem:[#allocation8 + $0xd10] sm:$0xff]
    %v7068 = vld [vmem:[#allocation8 + $0xd18] sm:$0xff]
    %v7069 = vld [vmem:[#allocation8 + $0xd20] sm:$0xff]
    %v7070 = vld [vmem:[#allocation8 + $0xd28] sm:$0xff]
    %v7071 = vld [vmem:[#allocation8 + $0xd30] sm:$0xff]
    %v7072 = vld [vmem:[#allocation8 + $0xd38] sm:$0xff]
    %v7073 = vld [vmem:[#allocation8 + $0xd40] sm:$0xff]
    %v7074 = vld [vmem:[#allocation8 + $0xd48] sm:$0xff]
    %v7075 = vld [vmem:[#allocation8 + $0xd50] sm:$0xff]
    %v7076 = vld [vmem:[#allocation8 + $0xd58] sm:$0xff]
    %v7077 = vld [vmem:[#allocation8 + $0xd60] sm:$0xff]
    %v7078 = vld [vmem:[#allocation8 + $0xd68] sm:$0xff]
    %v7079 = vld [vmem:[#allocation8 + $0xd70] sm:$0xff]
    %v7080 = vld [vmem:[#allocation8 + $0xd78] sm:$0xff]
    %v7081 = vld [vmem:[#allocation8 + $0xd80] sm:$0xff]
    %v7082 = vld [vmem:[#allocation8 + $0xd88] sm:$0xff]
    %v7083 = vld [vmem:[#allocation8 + $0xd90] sm:$0xff]
    %v7084 = vld [vmem:[#allocation8 + $0xd98] sm:$0xff]
    %v7085 = vld [vmem:[#allocation8 + $0xda0] sm:$0xff]
    %v7086 = vld [vmem:[#allocation8 + $0xda8] sm:$0xff]
    %v7087 = vld [vmem:[#allocation8 + $0xdb0] sm:$0xff]
    %v7088 = vld [vmem:[#allocation8 + $0xdb8] sm:$0xff]
    %v7089 = vld [vmem:[#allocation8 + $0xdc0] sm:$0xff]
    %v7090 = vld [vmem:[#allocation8 + $0xdc8] sm:$0xff]
    %v7091 = vld [vmem:[#allocation8 + $0xdd0] sm:$0xff]
    %v7092 = vld [vmem:[#allocation8 + $0xdd8] sm:$0xff]
    %v7093 = vld [vmem:[#allocation8 + $0xde0] sm:$0xff]
    %v7094 = vld [vmem:[#allocation8 + $0xde8] sm:$0xff]
    %v7095 = vld [vmem:[#allocation8 + $0xdf0] sm:$0xff]
    %v7096 = vld [vmem:[#allocation8 + $0xdf8] sm:$0xff]
    %v7097 = vld [vmem:[#allocation8 + $0xe00] sm:$0xff]
    %v7098 = vld [vmem:[#allocation8 + $0xe08] sm:$0xff]
    %v7099 = vld [vmem:[#allocation8 + $0xe10] sm:$0xff]
    %v7100 = vld [vmem:[#allocation8 + $0xe18] sm:$0xff]
    %v7101 = vld [vmem:[#allocation8 + $0xe20] sm:$0xff]
    %v7102 = vld [vmem:[#allocation8 + $0xe28] sm:$0xff]
    %v7103 = vld [vmem:[#allocation8 + $0xe30] sm:$0xff]
    %v7104 = vld [vmem:[#allocation8 + $0xe38] sm:$0xff]
    %v7105 = vld [vmem:[#allocation8 + $0xe40] sm:$0xff]
    %v7106 = vld [vmem:[#allocation8 + $0xe48] sm:$0xff]
    %v7107 = vld [vmem:[#allocation8 + $0xe50] sm:$0xff]
    %v7108 = vld [vmem:[#allocation8 + $0xe58] sm:$0xff]
    %v7109 = vld [vmem:[#allocation8 + $0xe60] sm:$0xff]
    %v7110 = vld [vmem:[#allocation8 + $0xe68] sm:$0xff]
    %v7111 = vld [vmem:[#allocation8 + $0xe70] sm:$0xff]
    %v7112 = vld [vmem:[#allocation8 + $0xe78] sm:$0xff]
    %v7113 = vld [vmem:[#allocation8 + $0xe80] sm:$0xff]
    %v7114 = vld [vmem:[#allocation8 + $0xe88] sm:$0xff]
    %v7115 = vld [vmem:[#allocation8 + $0xe90] sm:$0xff]
    %v7116 = vld [vmem:[#allocation8 + $0xe98] sm:$0xff]
    %v7117 = vld [vmem:[#allocation8 + $0xea0] sm:$0xff]
    %v7118 = vld [vmem:[#allocation8 + $0xea8] sm:$0xff]
    %v7119 = vld [vmem:[#allocation8 + $0xeb0] sm:$0xff]
    %v7120 = vld [vmem:[#allocation8 + $0xeb8] sm:$0xff]
    %v7121 = vld [vmem:[#allocation8 + $0xec0] sm:$0xff]
    %v7122 = vld [vmem:[#allocation8 + $0xec8] sm:$0xff]
    %v7123 = vld [vmem:[#allocation8 + $0xed0] sm:$0xff]
    %v7124 = vld [vmem:[#allocation8 + $0xed8] sm:$0xff]
    %v7125 = vld [vmem:[#allocation8 + $0xee0] sm:$0xff]
    %v7126 = vld [vmem:[#allocation8 + $0xee8] sm:$0xff]
    %v7127 = vld [vmem:[#allocation8 + $0xef0] sm:$0xff]
    %v7128 = vld [vmem:[#allocation8 + $0xef8] sm:$0xff]
    %v7129 = vld [vmem:[#allocation8 + $0xf00] sm:$0xff]
    %v7130 = vld [vmem:[#allocation8 + $0xf08] sm:$0xff]
    %v7131 = vld [vmem:[#allocation8 + $0xf10] sm:$0xff]
    %v7132 = vld [vmem:[#allocation8 + $0xf18] sm:$0xff]
    %v7133 = vld [vmem:[#allocation8 + $0xf20] sm:$0xff]
    %v7134 = vld [vmem:[#allocation8 + $0xf28] sm:$0xff]
    %v7135 = vld [vmem:[#allocation8 + $0xf30] sm:$0xff]
    %v7136 = vld [vmem:[#allocation8 + $0xf38] sm:$0xff]
    %v7137 = vld [vmem:[#allocation8 + $0xf40] sm:$0xff]
    %v7138 = vld [vmem:[#allocation8 + $0xf48] sm:$0xff]
    %v7139 = vld [vmem:[#allocation8 + $0xf50] sm:$0xff]
    %v7140 = vld [vmem:[#allocation8 + $0xf58] sm:$0xff]
    %v7141 = vld [vmem:[#allocation8 + $0xf60] sm:$0xff]
    %v7142 = vld [vmem:[#allocation8 + $0xf68] sm:$0xff]
    %v7143 = vld [vmem:[#allocation8 + $0xf70] sm:$0xff]
    %v7144 = vld [vmem:[#allocation8 + $0xf78] sm:$0xff]
    %v7145 = vld [vmem:[#allocation8 + $0xf80] sm:$0xff]
    %v7146 = vld [vmem:[#allocation8 + $0xf88] sm:$0xff]
    %v7147 = vld [vmem:[#allocation8 + $0xf90] sm:$0xff]
    %v7148 = vld [vmem:[#allocation8 + $0xf98] sm:$0xff]
    %v7149 = vld [vmem:[#allocation8 + $0xfa0] sm:$0xff]
    %v7150 = vld [vmem:[#allocation8 + $0xfa8] sm:$0xff]
    %v7151 = vld [vmem:[#allocation8 + $0xfb0] sm:$0xff]
    %v7152 = vld [vmem:[#allocation8 + $0xfb8] sm:$0xff]
    %v7153 = vld [vmem:[#allocation8 + $0xfc0] sm:$0xff]
    %v7154 = vld [vmem:[#allocation8 + $0xfc8] sm:$0xff]
    %v7155 = vld [vmem:[#allocation8 + $0xfd0] sm:$0xff]
    %v7156 = vld [vmem:[#allocation8 + $0xfd8] sm:$0xff]
    %v7157 = vld [vmem:[#allocation8 + $0xfe0] sm:$0xff]
    %v7158 = vld [vmem:[#allocation8 + $0xfe8] sm:$0xff]
    %v7159 = vld [vmem:[#allocation8 + $0xff0] sm:$0xff]
    %v7160 = vld [vmem:[#allocation8 + $0xff8] sm:$0xff]
    %v7161 = vld [vmem:[#allocation10] sm:$0xf]
    %v7163 = vlaneseq
    %v7164 = vshrl.u32 %v7163, 7
    %v7165 = vsub.s32 0, %v7164
    %v7166 = vrot.slane %v7161, %v7165
    %v7167 = vlaneseq
    %v7168 = vshrl.u32 %v7167, 7
    %v7169 = vsub.s32 1, %v7168
    %v7170 = vrot.slane %v7161, %v7169
    %v7171 = vlaneseq
    %v7172 = vshrl.u32 %v7171, 7
    %v7173 = vsub.s32 2, %v7172
    %v7174 = vrot.slane %v7161, %v7173
    %v7175 = vlaneseq
    %v7176 = vshrl.u32 %v7175, 7
    %v7177 = vsub.s32 3, %v7176
    %v7178 = vrot.slane %v7161, %v7177
    %v7695 = vunpack.c.l.b16 %v6649
    %v7696 = vunpack.c.h.b16 %v6649
    %v7697 = vunpack.c.l.b16 %v6650
    %v7698 = vunpack.c.h.b16 %v6650
    %v7699 = vunpack.c.l.b16 %v6651
    %v7700 = vunpack.c.h.b16 %v6651
    %v7701 = vunpack.c.l.b16 %v6652
    %v7702 = vunpack.c.h.b16 %v6652
    %v7703 = vunpack.c.l.b16 %v6653
    %v7704 = vunpack.c.h.b16 %v6653
    %v7705 = vunpack.c.l.b16 %v6654
    %v7706 = vunpack.c.h.b16 %v6654
    %v7707 = vunpack.c.l.b16 %v6655
    %v7708 = vunpack.c.h.b16 %v6655
    %v7709 = vunpack.c.l.b16 %v6656
    %v7710 = vunpack.c.h.b16 %v6656
    %v7711 = vunpack.c.l.b16 %v6657
    %v7712 = vunpack.c.h.b16 %v6657
    %v7713 = vunpack.c.l.b16 %v6658
    %v7714 = vunpack.c.h.b16 %v6658
    %v7715 = vunpack.c.l.b16 %v6659
    %v7716 = vunpack.c.h.b16 %v6659
    %v7717 = vunpack.c.l.b16 %v6660
    %v7718 = vunpack.c.h.b16 %v6660
    %v7719 = vunpack.c.l.b16 %v6661
    %v7720 = vunpack.c.h.b16 %v6661
    %v7721 = vunpack.c.l.b16 %v6662
    %v7722 = vunpack.c.h.b16 %v6662
    %v7723 = vunpack.c.l.b16 %v6663
    %v7724 = vunpack.c.h.b16 %v6663
    %v7725 = vunpack.c.l.b16 %v6664
    %v7726 = vunpack.c.h.b16 %v6664
    %v7727 = vunpack.c.l.b16 %v6665
    %v7728 = vunpack.c.h.b16 %v6665
    %v7729 = vunpack.c.l.b16 %v6666
    %v7730 = vunpack.c.h.b16 %v6666
    %v7731 = vunpack.c.l.b16 %v6667
    %v7732 = vunpack.c.h.b16 %v6667
    %v7733 = vunpack.c.l.b16 %v6668
    %v7734 = vunpack.c.h.b16 %v6668
    %v7735 = vunpack.c.l.b16 %v6669
    %v7736 = vunpack.c.h.b16 %v6669
    %v7737 = vunpack.c.l.b16 %v6670
    %v7738 = vunpack.c.h.b16 %v6670
    %v7739 = vunpack.c.l.b16 %v6671
    %v7740 = vunpack.c.h.b16 %v6671
    %v7741 = vunpack.c.l.b16 %v6672
    %v7742 = vunpack.c.h.b16 %v6672
    %v7743 = vunpack.c.l.b16 %v6673
    %v7744 = vunpack.c.h.b16 %v6673
    %v7745 = vunpack.c.l.b16 %v6674
    %v7746 = vunpack.c.h.b16 %v6674
    %v7747 = vunpack.c.l.b16 %v6675
    %v7748 = vunpack.c.h.b16 %v6675
    %v7749 = vunpack.c.l.b16 %v6676
    %v7750 = vunpack.c.h.b16 %v6676
    %v7751 = vunpack.c.l.b16 %v6677
    %v7752 = vunpack.c.h.b16 %v6677
    %v7753 = vunpack.c.l.b16 %v6678
    %v7754 = vunpack.c.h.b16 %v6678
    %v7755 = vunpack.c.l.b16 %v6679
    %v7756 = vunpack.c.h.b16 %v6679
    %v7757 = vunpack.c.l.b16 %v6680
    %v7758 = vunpack.c.h.b16 %v6680
    %v7759 = vunpack.c.l.b16 %v6681
    %v7760 = vunpack.c.h.b16 %v6681
    %v7761 = vunpack.c.l.b16 %v6682
    %v7762 = vunpack.c.h.b16 %v6682
    %v7763 = vunpack.c.l.b16 %v6683
    %v7764 = vunpack.c.h.b16 %v6683
    %v7765 = vunpack.c.l.b16 %v6684
    %v7766 = vunpack.c.h.b16 %v6684
    %v7767 = vunpack.c.l.b16 %v6685
    %v7768 = vunpack.c.h.b16 %v6685
    %v7769 = vunpack.c.l.b16 %v6686
    %v7770 = vunpack.c.h.b16 %v6686
    %v7771 = vunpack.c.l.b16 %v6687
    %v7772 = vunpack.c.h.b16 %v6687
    %v7773 = vunpack.c.l.b16 %v6688
    %v7774 = vunpack.c.h.b16 %v6688
    %v7775 = vunpack.c.l.b16 %v6689
    %v7776 = vunpack.c.h.b16 %v6689
    %v7777 = vunpack.c.l.b16 %v6690
    %v7778 = vunpack.c.h.b16 %v6690
    %v7779 = vunpack.c.l.b16 %v6691
    %v7780 = vunpack.c.h.b16 %v6691
    %v7781 = vunpack.c.l.b16 %v6692
    %v7782 = vunpack.c.h.b16 %v6692
    %v7783 = vunpack.c.l.b16 %v6693
    %v7784 = vunpack.c.h.b16 %v6693
    %v7785 = vunpack.c.l.b16 %v6694
    %v7786 = vunpack.c.h.b16 %v6694
    %v7787 = vunpack.c.l.b16 %v6695
    %v7788 = vunpack.c.h.b16 %v6695
    %v7789 = vunpack.c.l.b16 %v6696
    %v7790 = vunpack.c.h.b16 %v6696
    %v7791 = vunpack.c.l.b16 %v6697
    %v7792 = vunpack.c.h.b16 %v6697
    %v7793 = vunpack.c.l.b16 %v6698
    %v7794 = vunpack.c.h.b16 %v6698
    %v7795 = vunpack.c.l.b16 %v6699
    %v7796 = vunpack.c.h.b16 %v6699
    %v7797 = vunpack.c.l.b16 %v6700
    %v7798 = vunpack.c.h.b16 %v6700
    %v7799 = vunpack.c.l.b16 %v6701
    %v7800 = vunpack.c.h.b16 %v6701
    %v7801 = vunpack.c.l.b16 %v6702
    %v7802 = vunpack.c.h.b16 %v6702
    %v7803 = vunpack.c.l.b16 %v6703
    %v7804 = vunpack.c.h.b16 %v6703
    %v7805 = vunpack.c.l.b16 %v6704
    %v7806 = vunpack.c.h.b16 %v6704
    %v7807 = vunpack.c.l.b16 %v6705
    %v7808 = vunpack.c.h.b16 %v6705
    %v7809 = vunpack.c.l.b16 %v6706
    %v7810 = vunpack.c.h.b16 %v6706
    %v7811 = vunpack.c.l.b16 %v6707
    %v7812 = vunpack.c.h.b16 %v6707
    %v7813 = vunpack.c.l.b16 %v6708
    %v7814 = vunpack.c.h.b16 %v6708
    %v7815 = vunpack.c.l.b16 %v6709
    %v7816 = vunpack.c.h.b16 %v6709
    %v7817 = vunpack.c.l.b16 %v6710
    %v7818 = vunpack.c.h.b16 %v6710
    %v7819 = vunpack.c.l.b16 %v6711
    %v7820 = vunpack.c.h.b16 %v6711
    %v7821 = vunpack.c.l.b16 %v6712
    %v7822 = vunpack.c.h.b16 %v6712
    %v7823 = vunpack.c.l.b16 %v6713
    %v7824 = vunpack.c.h.b16 %v6713
    %v7825 = vunpack.c.l.b16 %v6714
    %v7826 = vunpack.c.h.b16 %v6714
    %v7827 = vunpack.c.l.b16 %v6715
    %v7828 = vunpack.c.h.b16 %v6715
    %v7829 = vunpack.c.l.b16 %v6716
    %v7830 = vunpack.c.h.b16 %v6716
    %v7831 = vunpack.c.l.b16 %v6717
    %v7832 = vunpack.c.h.b16 %v6717
    %v7833 = vunpack.c.l.b16 %v6718
    %v7834 = vunpack.c.h.b16 %v6718
    %v7835 = vunpack.c.l.b16 %v6719
    %v7836 = vunpack.c.h.b16 %v6719
    %v7837 = vunpack.c.l.b16 %v6720
    %v7838 = vunpack.c.h.b16 %v6720
    %v7839 = vunpack.c.l.b16 %v6721
    %v7840 = vunpack.c.h.b16 %v6721
    %v7841 = vunpack.c.l.b16 %v6722
    %v7842 = vunpack.c.h.b16 %v6722
    %v7843 = vunpack.c.l.b16 %v6723
    %v7844 = vunpack.c.h.b16 %v6723
    %v7845 = vunpack.c.l.b16 %v6724
    %v7846 = vunpack.c.h.b16 %v6724
    %v7847 = vunpack.c.l.b16 %v6725
    %v7848 = vunpack.c.h.b16 %v6725
    %v7849 = vunpack.c.l.b16 %v6726
    %v7850 = vunpack.c.h.b16 %v6726
    %v7851 = vunpack.c.l.b16 %v6727
    %v7852 = vunpack.c.h.b16 %v6727
    %v7853 = vunpack.c.l.b16 %v6728
    %v7854 = vunpack.c.h.b16 %v6728
    %v7855 = vunpack.c.l.b16 %v6729
    %v7856 = vunpack.c.h.b16 %v6729
    %v7857 = vunpack.c.l.b16 %v6730
    %v7858 = vunpack.c.h.b16 %v6730
    %v7859 = vunpack.c.l.b16 %v6731
    %v7860 = vunpack.c.h.b16 %v6731
    %v7861 = vunpack.c.l.b16 %v6732
    %v7862 = vunpack.c.h.b16 %v6732
    %v7863 = vunpack.c.l.b16 %v6733
    %v7864 = vunpack.c.h.b16 %v6733
    %v7865 = vunpack.c.l.b16 %v6734
    %v7866 = vunpack.c.h.b16 %v6734
    %v7867 = vunpack.c.l.b16 %v6735
    %v7868 = vunpack.c.h.b16 %v6735
    %v7869 = vunpack.c.l.b16 %v6736
    %v7870 = vunpack.c.h.b16 %v6736
    %v7871 = vunpack.c.l.b16 %v6737
    %v7872 = vunpack.c.h.b16 %v6737
    %v7873 = vunpack.c.l.b16 %v6738
    %v7874 = vunpack.c.h.b16 %v6738
    %v7875 = vunpack.c.l.b16 %v6739
    %v7876 = vunpack.c.h.b16 %v6739
    %v7877 = vunpack.c.l.b16 %v6740
    %v7878 = vunpack.c.h.b16 %v6740
    %v7879 = vunpack.c.l.b16 %v6741
    %v7880 = vunpack.c.h.b16 %v6741
    %v7881 = vunpack.c.l.b16 %v6742
    %v7882 = vunpack.c.h.b16 %v6742
    %v7883 = vunpack.c.l.b16 %v6743
    %v7884 = vunpack.c.h.b16 %v6743
    %v7885 = vunpack.c.l.b16 %v6744
    %v7886 = vunpack.c.h.b16 %v6744
    %v7887 = vunpack.c.l.b16 %v6745
    %v7888 = vunpack.c.h.b16 %v6745
    %v7889 = vunpack.c.l.b16 %v6746
    %v7890 = vunpack.c.h.b16 %v6746
    %v7891 = vunpack.c.l.b16 %v6747
    %v7892 = vunpack.c.h.b16 %v6747
    %v7893 = vunpack.c.l.b16 %v6748
    %v7894 = vunpack.c.h.b16 %v6748
    %v7895 = vunpack.c.l.b16 %v6749
    %v7896 = vunpack.c.h.b16 %v6749
    %v7897 = vunpack.c.l.b16 %v6750
    %v7898 = vunpack.c.h.b16 %v6750
    %v7899 = vunpack.c.l.b16 %v6751
    %v7900 = vunpack.c.h.b16 %v6751
    %v7901 = vunpack.c.l.b16 %v6752
    %v7902 = vunpack.c.h.b16 %v6752
    %v7903 = vunpack.c.l.b16 %v6753
    %v7904 = vunpack.c.h.b16 %v6753
    %v7905 = vunpack.c.l.b16 %v6754
    %v7906 = vunpack.c.h.b16 %v6754
    %v7907 = vunpack.c.l.b16 %v6755
    %v7908 = vunpack.c.h.b16 %v6755
    %v7909 = vunpack.c.l.b16 %v6756
    %v7910 = vunpack.c.h.b16 %v6756
    %v7911 = vunpack.c.l.b16 %v6757
    %v7912 = vunpack.c.h.b16 %v6757
    %v7913 = vunpack.c.l.b16 %v6758
    %v7914 = vunpack.c.h.b16 %v6758
    %v7915 = vunpack.c.l.b16 %v6759
    %v7916 = vunpack.c.h.b16 %v6759
    %v7917 = vunpack.c.l.b16 %v6760
    %v7918 = vunpack.c.h.b16 %v6760
    %v7919 = vunpack.c.l.b16 %v6761
    %v7920 = vunpack.c.h.b16 %v6761
    %v7921 = vunpack.c.l.b16 %v6762
    %v7922 = vunpack.c.h.b16 %v6762
    %v7923 = vunpack.c.l.b16 %v6763
    %v7924 = vunpack.c.h.b16 %v6763
    %v7925 = vunpack.c.l.b16 %v6764
    %v7926 = vunpack.c.h.b16 %v6764
    %v7927 = vunpack.c.l.b16 %v6765
    %v7928 = vunpack.c.h.b16 %v6765
    %v7929 = vunpack.c.l.b16 %v6766
    %v7930 = vunpack.c.h.b16 %v6766
    %v7931 = vunpack.c.l.b16 %v6767
    %v7932 = vunpack.c.h.b16 %v6767
    %v7933 = vunpack.c.l.b16 %v6768
    %v7934 = vunpack.c.h.b16 %v6768
    %v7935 = vunpack.c.l.b16 %v6769
    %v7936 = vunpack.c.h.b16 %v6769
    %v7937 = vunpack.c.l.b16 %v6770
    %v7938 = vunpack.c.h.b16 %v6770
    %v7939 = vunpack.c.l.b16 %v6771
    %v7940 = vunpack.c.h.b16 %v6771
    %v7941 = vunpack.c.l.b16 %v6772
    %v7942 = vunpack.c.h.b16 %v6772
    %v7943 = vunpack.c.l.b16 %v6773
    %v7944 = vunpack.c.h.b16 %v6773
    %v7945 = vunpack.c.l.b16 %v6774
    %v7946 = vunpack.c.h.b16 %v6774
    %v7947 = vunpack.c.l.b16 %v6775
    %v7948 = vunpack.c.h.b16 %v6775
    %v7949 = vunpack.c.l.b16 %v6776
    %v7950 = vunpack.c.h.b16 %v6776
    %v7951 = vunpack.c.l.b16 %v6777
    %v7952 = vunpack.c.h.b16 %v6777
    %v7953 = vunpack.c.l.b16 %v6778
    %v7954 = vunpack.c.h.b16 %v6778
    %v7955 = vunpack.c.l.b16 %v6779
    %v7956 = vunpack.c.h.b16 %v6779
    %v7957 = vunpack.c.l.b16 %v6780
    %v7958 = vunpack.c.h.b16 %v6780
    %v7959 = vunpack.c.l.b16 %v6781
    %v7960 = vunpack.c.h.b16 %v6781
    %v7961 = vunpack.c.l.b16 %v6782
    %v7962 = vunpack.c.h.b16 %v6782
    %v7963 = vunpack.c.l.b16 %v6783
    %v7964 = vunpack.c.h.b16 %v6783
    %v7965 = vunpack.c.l.b16 %v6784
    %v7966 = vunpack.c.h.b16 %v6784
    %v7967 = vunpack.c.l.b16 %v6785
    %v7968 = vunpack.c.h.b16 %v6785
    %v7969 = vunpack.c.l.b16 %v6786
    %v7970 = vunpack.c.h.b16 %v6786
    %v7971 = vunpack.c.l.b16 %v6787
    %v7972 = vunpack.c.h.b16 %v6787
    %v7973 = vunpack.c.l.b16 %v6788
    %v7974 = vunpack.c.h.b16 %v6788
    %v7975 = vunpack.c.l.b16 %v6789
    %v7976 = vunpack.c.h.b16 %v6789
    %v7977 = vunpack.c.l.b16 %v6790
    %v7978 = vunpack.c.h.b16 %v6790
    %v7979 = vunpack.c.l.b16 %v6791
    %v7980 = vunpack.c.h.b16 %v6791
    %v7981 = vunpack.c.l.b16 %v6792
    %v7982 = vunpack.c.h.b16 %v6792
    %v7983 = vunpack.c.l.b16 %v6793
    %v7984 = vunpack.c.h.b16 %v6793
    %v7985 = vunpack.c.l.b16 %v6794
    %v7986 = vunpack.c.h.b16 %v6794
    %v7987 = vunpack.c.l.b16 %v6795
    %v7988 = vunpack.c.h.b16 %v6795
    %v7989 = vunpack.c.l.b16 %v6796
    %v7990 = vunpack.c.h.b16 %v6796
    %v7991 = vunpack.c.l.b16 %v6797
    %v7992 = vunpack.c.h.b16 %v6797
    %v7993 = vunpack.c.l.b16 %v6798
    %v7994 = vunpack.c.h.b16 %v6798
    %v7995 = vunpack.c.l.b16 %v6799
    %v7996 = vunpack.c.h.b16 %v6799
    %v7997 = vunpack.c.l.b16 %v6800
    %v7998 = vunpack.c.h.b16 %v6800
    %v7999 = vunpack.c.l.b16 %v6801
    %v8000 = vunpack.c.h.b16 %v6801
    %v8001 = vunpack.c.l.b16 %v6802
    %v8002 = vunpack.c.h.b16 %v6802
    %v8003 = vunpack.c.l.b16 %v6803
    %v8004 = vunpack.c.h.b16 %v6803
    %v8005 = vunpack.c.l.b16 %v6804
    %v8006 = vunpack.c.h.b16 %v6804
    %v8007 = vunpack.c.l.b16 %v6805
    %v8008 = vunpack.c.h.b16 %v6805
    %v8009 = vunpack.c.l.b16 %v6806
    %v8010 = vunpack.c.h.b16 %v6806
    %v8011 = vunpack.c.l.b16 %v6807
    %v8012 = vunpack.c.h.b16 %v6807
    %v8013 = vunpack.c.l.b16 %v6808
    %v8014 = vunpack.c.h.b16 %v6808
    %v8015 = vunpack.c.l.b16 %v6809
    %v8016 = vunpack.c.h.b16 %v6809
    %v8017 = vunpack.c.l.b16 %v6810
    %v8018 = vunpack.c.h.b16 %v6810
    %v8019 = vunpack.c.l.b16 %v6811
    %v8020 = vunpack.c.h.b16 %v6811
    %v8021 = vunpack.c.l.b16 %v6812
    %v8022 = vunpack.c.h.b16 %v6812
    %v8023 = vunpack.c.l.b16 %v6813
    %v8024 = vunpack.c.h.b16 %v6813
    %v8025 = vunpack.c.l.b16 %v6814
    %v8026 = vunpack.c.h.b16 %v6814
    %v8027 = vunpack.c.l.b16 %v6815
    %v8028 = vunpack.c.h.b16 %v6815
    %v8029 = vunpack.c.l.b16 %v6816
    %v8030 = vunpack.c.h.b16 %v6816
    %v8031 = vunpack.c.l.b16 %v6817
    %v8032 = vunpack.c.h.b16 %v6817
    %v8033 = vunpack.c.l.b16 %v6818
    %v8034 = vunpack.c.h.b16 %v6818
    %v8035 = vunpack.c.l.b16 %v6819
    %v8036 = vunpack.c.h.b16 %v6819
    %v8037 = vunpack.c.l.b16 %v6820
    %v8038 = vunpack.c.h.b16 %v6820
    %v8039 = vunpack.c.l.b16 %v6821
    %v8040 = vunpack.c.h.b16 %v6821
    %v8041 = vunpack.c.l.b16 %v6822
    %v8042 = vunpack.c.h.b16 %v6822
    %v8043 = vunpack.c.l.b16 %v6823
    %v8044 = vunpack.c.h.b16 %v6823
    %v8045 = vunpack.c.l.b16 %v6824
    %v8046 = vunpack.c.h.b16 %v6824
    %v8047 = vunpack.c.l.b16 %v6825
    %v8048 = vunpack.c.h.b16 %v6825
    %v8049 = vunpack.c.l.b16 %v6826
    %v8050 = vunpack.c.h.b16 %v6826
    %v8051 = vunpack.c.l.b16 %v6827
    %v8052 = vunpack.c.h.b16 %v6827
    %v8053 = vunpack.c.l.b16 %v6828
    %v8054 = vunpack.c.h.b16 %v6828
    %v8055 = vunpack.c.l.b16 %v6829
    %v8056 = vunpack.c.h.b16 %v6829
    %v8057 = vunpack.c.l.b16 %v6830
    %v8058 = vunpack.c.h.b16 %v6830
    %v8059 = vunpack.c.l.b16 %v6831
    %v8060 = vunpack.c.h.b16 %v6831
    %v8061 = vunpack.c.l.b16 %v6832
    %v8062 = vunpack.c.h.b16 %v6832
    %v8063 = vunpack.c.l.b16 %v6833
    %v8064 = vunpack.c.h.b16 %v6833
    %v8065 = vunpack.c.l.b16 %v6834
    %v8066 = vunpack.c.h.b16 %v6834
    %v8067 = vunpack.c.l.b16 %v6835
    %v8068 = vunpack.c.h.b16 %v6835
    %v8069 = vunpack.c.l.b16 %v6836
    %v8070 = vunpack.c.h.b16 %v6836
    %v8071 = vunpack.c.l.b16 %v6837
    %v8072 = vunpack.c.h.b16 %v6837
    %v8073 = vunpack.c.l.b16 %v6838
    %v8074 = vunpack.c.h.b16 %v6838
    %v8075 = vunpack.c.l.b16 %v6839
    %v8076 = vunpack.c.h.b16 %v6839
    %v8077 = vunpack.c.l.b16 %v6840
    %v8078 = vunpack.c.h.b16 %v6840
    %v8079 = vunpack.c.l.b16 %v6841
    %v8080 = vunpack.c.h.b16 %v6841
    %v8081 = vunpack.c.l.b16 %v6842
    %v8082 = vunpack.c.h.b16 %v6842
    %v8083 = vunpack.c.l.b16 %v6843
    %v8084 = vunpack.c.h.b16 %v6843
    %v8085 = vunpack.c.l.b16 %v6844
    %v8086 = vunpack.c.h.b16 %v6844
    %v8087 = vunpack.c.l.b16 %v6845
    %v8088 = vunpack.c.h.b16 %v6845
    %v8089 = vunpack.c.l.b16 %v6846
    %v8090 = vunpack.c.h.b16 %v6846
    %v8091 = vunpack.c.l.b16 %v6847
    %v8092 = vunpack.c.h.b16 %v6847
    %v8093 = vunpack.c.l.b16 %v6848
    %v8094 = vunpack.c.h.b16 %v6848
    %v8095 = vunpack.c.l.b16 %v6849
    %v8096 = vunpack.c.h.b16 %v6849
    %v8097 = vunpack.c.l.b16 %v6850
    %v8098 = vunpack.c.h.b16 %v6850
    %v8099 = vunpack.c.l.b16 %v6851
    %v8100 = vunpack.c.h.b16 %v6851
    %v8101 = vunpack.c.l.b16 %v6852
    %v8102 = vunpack.c.h.b16 %v6852
    %v8103 = vunpack.c.l.b16 %v6853
    %v8104 = vunpack.c.h.b16 %v6853
    %v8105 = vunpack.c.l.b16 %v6854
    %v8106 = vunpack.c.h.b16 %v6854
    %v8107 = vunpack.c.l.b16 %v6855
    %v8108 = vunpack.c.h.b16 %v6855
    %v8109 = vunpack.c.l.b16 %v6856
    %v8110 = vunpack.c.h.b16 %v6856
    %v8111 = vunpack.c.l.b16 %v6857
    %v8112 = vunpack.c.h.b16 %v6857
    %v8113 = vunpack.c.l.b16 %v6858
    %v8114 = vunpack.c.h.b16 %v6858
    %v8115 = vunpack.c.l.b16 %v6859
    %v8116 = vunpack.c.h.b16 %v6859
    %v8117 = vunpack.c.l.b16 %v6860
    %v8118 = vunpack.c.h.b16 %v6860
    %v8119 = vunpack.c.l.b16 %v6861
    %v8120 = vunpack.c.h.b16 %v6861
    %v8121 = vunpack.c.l.b16 %v6862
    %v8122 = vunpack.c.h.b16 %v6862
    %v8123 = vunpack.c.l.b16 %v6863
    %v8124 = vunpack.c.h.b16 %v6863
    %v8125 = vunpack.c.l.b16 %v6864
    %v8126 = vunpack.c.h.b16 %v6864
    %v8127 = vunpack.c.l.b16 %v6865
    %v8128 = vunpack.c.h.b16 %v6865
    %v8129 = vunpack.c.l.b16 %v6866
    %v8130 = vunpack.c.h.b16 %v6866
    %v8131 = vunpack.c.l.b16 %v6867
    %v8132 = vunpack.c.h.b16 %v6867
    %v8133 = vunpack.c.l.b16 %v6868
    %v8134 = vunpack.c.h.b16 %v6868
    %v8135 = vunpack.c.l.b16 %v6869
    %v8136 = vunpack.c.h.b16 %v6869
    %v8137 = vunpack.c.l.b16 %v6870
    %v8138 = vunpack.c.h.b16 %v6870
    %v8139 = vunpack.c.l.b16 %v6871
    %v8140 = vunpack.c.h.b16 %v6871
    %v8141 = vunpack.c.l.b16 %v6872
    %v8142 = vunpack.c.h.b16 %v6872
    %v8143 = vunpack.c.l.b16 %v6873
    %v8144 = vunpack.c.h.b16 %v6873
    %v8145 = vunpack.c.l.b16 %v6874
    %v8146 = vunpack.c.h.b16 %v6874
    %v8147 = vunpack.c.l.b16 %v6875
    %v8148 = vunpack.c.h.b16 %v6875
    %v8149 = vunpack.c.l.b16 %v6876
    %v8150 = vunpack.c.h.b16 %v6876
    %v8151 = vunpack.c.l.b16 %v6877
    %v8152 = vunpack.c.h.b16 %v6877
    %v8153 = vunpack.c.l.b16 %v6878
    %v8154 = vunpack.c.h.b16 %v6878
    %v8155 = vunpack.c.l.b16 %v6879
    %v8156 = vunpack.c.h.b16 %v6879
    %v8157 = vunpack.c.l.b16 %v6880
    %v8158 = vunpack.c.h.b16 %v6880
    %v8159 = vunpack.c.l.b16 %v6881
    %v8160 = vunpack.c.h.b16 %v6881
    %v8161 = vunpack.c.l.b16 %v6882
    %v8162 = vunpack.c.h.b16 %v6882
    %v8163 = vunpack.c.l.b16 %v6883
    %v8164 = vunpack.c.h.b16 %v6883
    %v8165 = vunpack.c.l.b16 %v6884
    %v8166 = vunpack.c.h.b16 %v6884
    %v8167 = vunpack.c.l.b16 %v6885
    %v8168 = vunpack.c.h.b16 %v6885
    %v8169 = vunpack.c.l.b16 %v6886
    %v8170 = vunpack.c.h.b16 %v6886
    %v8171 = vunpack.c.l.b16 %v6887
    %v8172 = vunpack.c.h.b16 %v6887
    %v8173 = vunpack.c.l.b16 %v6888
    %v8174 = vunpack.c.h.b16 %v6888
    %v8175 = vunpack.c.l.b16 %v6889
    %v8176 = vunpack.c.h.b16 %v6889
    %v8177 = vunpack.c.l.b16 %v6890
    %v8178 = vunpack.c.h.b16 %v6890
    %v8179 = vunpack.c.l.b16 %v6891
    %v8180 = vunpack.c.h.b16 %v6891
    %v8181 = vunpack.c.l.b16 %v6892
    %v8182 = vunpack.c.h.b16 %v6892
    %v8183 = vunpack.c.l.b16 %v6893
    %v8184 = vunpack.c.h.b16 %v6893
    %v8185 = vunpack.c.l.b16 %v6894
    %v8186 = vunpack.c.h.b16 %v6894
    %v8187 = vunpack.c.l.b16 %v6895
    %v8188 = vunpack.c.h.b16 %v6895
    %v8189 = vunpack.c.l.b16 %v6896
    %v8190 = vunpack.c.h.b16 %v6896
    %v8191 = vunpack.c.l.b16 %v6897
    %v8192 = vunpack.c.h.b16 %v6897
    %v8193 = vunpack.c.l.b16 %v6898
    %v8194 = vunpack.c.h.b16 %v6898
    %v8195 = vunpack.c.l.b16 %v6899
    %v8196 = vunpack.c.h.b16 %v6899
    %v8197 = vunpack.c.l.b16 %v6900
    %v8198 = vunpack.c.h.b16 %v6900
    %v8199 = vunpack.c.l.b16 %v6901
    %v8200 = vunpack.c.h.b16 %v6901
    %v8201 = vunpack.c.l.b16 %v6902
    %v8202 = vunpack.c.h.b16 %v6902
    %v8203 = vunpack.c.l.b16 %v6903
    %v8204 = vunpack.c.h.b16 %v6903
    %v8205 = vunpack.c.l.b16 %v6904
    %v8206 = vunpack.c.h.b16 %v6904
    %v8207 = vunpack.c.l.b16 %v6905
    %v8208 = vunpack.c.h.b16 %v6905
    %v8209 = vunpack.c.l.b16 %v6906
    %v8210 = vunpack.c.h.b16 %v6906
    %v8211 = vunpack.c.l.b16 %v6907
    %v8212 = vunpack.c.h.b16 %v6907
    %v8213 = vunpack.c.l.b16 %v6908
    %v8214 = vunpack.c.h.b16 %v6908
    %v8215 = vunpack.c.l.b16 %v6909
    %v8216 = vunpack.c.h.b16 %v6909
    %v8217 = vunpack.c.l.b16 %v6910
    %v8218 = vunpack.c.h.b16 %v6910
    %v8219 = vunpack.c.l.b16 %v6911
    %v8220 = vunpack.c.h.b16 %v6911
    %v8221 = vunpack.c.l.b16 %v6912
    %v8222 = vunpack.c.h.b16 %v6912
    %v8223 = vunpack.c.l.b16 %v6913
    %v8224 = vunpack.c.h.b16 %v6913
    %v8225 = vunpack.c.l.b16 %v6914
    %v8226 = vunpack.c.h.b16 %v6914
    %v8227 = vunpack.c.l.b16 %v6915
    %v8228 = vunpack.c.h.b16 %v6915
    %v8229 = vunpack.c.l.b16 %v6916
    %v8230 = vunpack.c.h.b16 %v6916
    %v8231 = vunpack.c.l.b16 %v6917
    %v8232 = vunpack.c.h.b16 %v6917
    %v8233 = vunpack.c.l.b16 %v6918
    %v8234 = vunpack.c.h.b16 %v6918
    %v8235 = vunpack.c.l.b16 %v6919
    %v8236 = vunpack.c.h.b16 %v6919
    %v8237 = vunpack.c.l.b16 %v6920
    %v8238 = vunpack.c.h.b16 %v6920
    %v8239 = vunpack.c.l.b16 %v6921
    %v8240 = vunpack.c.h.b16 %v6921
    %v8241 = vunpack.c.l.b16 %v6922
    %v8242 = vunpack.c.h.b16 %v6922
    %v8243 = vunpack.c.l.b16 %v6923
    %v8244 = vunpack.c.h.b16 %v6923
    %v8245 = vunpack.c.l.b16 %v6924
    %v8246 = vunpack.c.h.b16 %v6924
    %v8247 = vunpack.c.l.b16 %v6925
    %v8248 = vunpack.c.h.b16 %v6925
    %v8249 = vunpack.c.l.b16 %v6926
    %v8250 = vunpack.c.h.b16 %v6926
    %v8251 = vunpack.c.l.b16 %v6927
    %v8252 = vunpack.c.h.b16 %v6927
    %v8253 = vunpack.c.l.b16 %v6928
    %v8254 = vunpack.c.h.b16 %v6928
    %v8255 = vunpack.c.l.b16 %v6929
    %v8256 = vunpack.c.h.b16 %v6929
    %v8257 = vunpack.c.l.b16 %v6930
    %v8258 = vunpack.c.h.b16 %v6930
    %v8259 = vunpack.c.l.b16 %v6931
    %v8260 = vunpack.c.h.b16 %v6931
    %v8261 = vunpack.c.l.b16 %v6932
    %v8262 = vunpack.c.h.b16 %v6932
    %v8263 = vunpack.c.l.b16 %v6933
    %v8264 = vunpack.c.h.b16 %v6933
    %v8265 = vunpack.c.l.b16 %v6934
    %v8266 = vunpack.c.h.b16 %v6934
    %v8267 = vunpack.c.l.b16 %v6935
    %v8268 = vunpack.c.h.b16 %v6935
    %v8269 = vunpack.c.l.b16 %v6936
    %v8270 = vunpack.c.h.b16 %v6936
    %v8271 = vunpack.c.l.b16 %v6937
    %v8272 = vunpack.c.h.b16 %v6937
    %v8273 = vunpack.c.l.b16 %v6938
    %v8274 = vunpack.c.h.b16 %v6938
    %v8275 = vunpack.c.l.b16 %v6939
    %v8276 = vunpack.c.h.b16 %v6939
    %v8277 = vunpack.c.l.b16 %v6940
    %v8278 = vunpack.c.h.b16 %v6940
    %v8279 = vunpack.c.l.b16 %v6941
    %v8280 = vunpack.c.h.b16 %v6941
    %v8281 = vunpack.c.l.b16 %v6942
    %v8282 = vunpack.c.h.b16 %v6942
    %v8283 = vunpack.c.l.b16 %v6943
    %v8284 = vunpack.c.h.b16 %v6943
    %v8285 = vunpack.c.l.b16 %v6944
    %v8286 = vunpack.c.h.b16 %v6944
    %v8287 = vunpack.c.l.b16 %v6945
    %v8288 = vunpack.c.h.b16 %v6945
    %v8289 = vunpack.c.l.b16 %v6946
    %v8290 = vunpack.c.h.b16 %v6946
    %v8291 = vunpack.c.l.b16 %v6947
    %v8292 = vunpack.c.h.b16 %v6947
    %v8293 = vunpack.c.l.b16 %v6948
    %v8294 = vunpack.c.h.b16 %v6948
    %v8295 = vunpack.c.l.b16 %v6949
    %v8296 = vunpack.c.h.b16 %v6949
    %v8297 = vunpack.c.l.b16 %v6950
    %v8298 = vunpack.c.h.b16 %v6950
    %v8299 = vunpack.c.l.b16 %v6951
    %v8300 = vunpack.c.h.b16 %v6951
    %v8301 = vunpack.c.l.b16 %v6952
    %v8302 = vunpack.c.h.b16 %v6952
    %v8303 = vunpack.c.l.b16 %v6953
    %v8304 = vunpack.c.h.b16 %v6953
    %v8305 = vunpack.c.l.b16 %v6954
    %v8306 = vunpack.c.h.b16 %v6954
    %v8307 = vunpack.c.l.b16 %v6955
    %v8308 = vunpack.c.h.b16 %v6955
    %v8309 = vunpack.c.l.b16 %v6956
    %v8310 = vunpack.c.h.b16 %v6956
    %v8311 = vunpack.c.l.b16 %v6957
    %v8312 = vunpack.c.h.b16 %v6957
    %v8313 = vunpack.c.l.b16 %v6958
    %v8314 = vunpack.c.h.b16 %v6958
    %v8315 = vunpack.c.l.b16 %v6959
    %v8316 = vunpack.c.h.b16 %v6959
    %v8317 = vunpack.c.l.b16 %v6960
    %v8318 = vunpack.c.h.b16 %v6960
    %v8319 = vunpack.c.l.b16 %v6961
    %v8320 = vunpack.c.h.b16 %v6961
    %v8321 = vunpack.c.l.b16 %v6962
    %v8322 = vunpack.c.h.b16 %v6962
    %v8323 = vunpack.c.l.b16 %v6963
    %v8324 = vunpack.c.h.b16 %v6963
    %v8325 = vunpack.c.l.b16 %v6964
    %v8326 = vunpack.c.h.b16 %v6964
    %v8327 = vunpack.c.l.b16 %v6965
    %v8328 = vunpack.c.h.b16 %v6965
    %v8329 = vunpack.c.l.b16 %v6966
    %v8330 = vunpack.c.h.b16 %v6966
    %v8331 = vunpack.c.l.b16 %v6967
    %v8332 = vunpack.c.h.b16 %v6967
    %v8333 = vunpack.c.l.b16 %v6968
    %v8334 = vunpack.c.h.b16 %v6968
    %v8335 = vunpack.c.l.b16 %v6969
    %v8336 = vunpack.c.h.b16 %v6969
    %v8337 = vunpack.c.l.b16 %v6970
    %v8338 = vunpack.c.h.b16 %v6970
    %v8339 = vunpack.c.l.b16 %v6971
    %v8340 = vunpack.c.h.b16 %v6971
    %v8341 = vunpack.c.l.b16 %v6972
    %v8342 = vunpack.c.h.b16 %v6972
    %v8343 = vunpack.c.l.b16 %v6973
    %v8344 = vunpack.c.h.b16 %v6973
    %v8345 = vunpack.c.l.b16 %v6974
    %v8346 = vunpack.c.h.b16 %v6974
    %v8347 = vunpack.c.l.b16 %v6975
    %v8348 = vunpack.c.h.b16 %v6975
    %v8349 = vunpack.c.l.b16 %v6976
    %v8350 = vunpack.c.h.b16 %v6976
    %v8351 = vunpack.c.l.b16 %v6977
    %v8352 = vunpack.c.h.b16 %v6977
    %v8353 = vunpack.c.l.b16 %v6978
    %v8354 = vunpack.c.h.b16 %v6978
    %v8355 = vunpack.c.l.b16 %v6979
    %v8356 = vunpack.c.h.b16 %v6979
    %v8357 = vunpack.c.l.b16 %v6980
    %v8358 = vunpack.c.h.b16 %v6980
    %v8359 = vunpack.c.l.b16 %v6981
    %v8360 = vunpack.c.h.b16 %v6981
    %v8361 = vunpack.c.l.b16 %v6982
    %v8362 = vunpack.c.h.b16 %v6982
    %v8363 = vunpack.c.l.b16 %v6983
    %v8364 = vunpack.c.h.b16 %v6983
    %v8365 = vunpack.c.l.b16 %v6984
    %v8366 = vunpack.c.h.b16 %v6984
    %v8367 = vunpack.c.l.b16 %v6985
    %v8368 = vunpack.c.h.b16 %v6985
    %v8369 = vunpack.c.l.b16 %v6986
    %v8370 = vunpack.c.h.b16 %v6986
    %v8371 = vunpack.c.l.b16 %v6987
    %v8372 = vunpack.c.h.b16 %v6987
    %v8373 = vunpack.c.l.b16 %v6988
    %v8374 = vunpack.c.h.b16 %v6988
    %v8375 = vunpack.c.l.b16 %v6989
    %v8376 = vunpack.c.h.b16 %v6989
    %v8377 = vunpack.c.l.b16 %v6990
    %v8378 = vunpack.c.h.b16 %v6990
    %v8379 = vunpack.c.l.b16 %v6991
    %v8380 = vunpack.c.h.b16 %v6991
    %v8381 = vunpack.c.l.b16 %v6992
    %v8382 = vunpack.c.h.b16 %v6992
    %v8383 = vunpack.c.l.b16 %v6993
    %v8384 = vunpack.c.h.b16 %v6993
    %v8385 = vunpack.c.l.b16 %v6994
    %v8386 = vunpack.c.h.b16 %v6994
    %v8387 = vunpack.c.l.b16 %v6995
    %v8388 = vunpack.c.h.b16 %v6995
    %v8389 = vunpack.c.l.b16 %v6996
    %v8390 = vunpack.c.h.b16 %v6996
    %v8391 = vunpack.c.l.b16 %v6997
    %v8392 = vunpack.c.h.b16 %v6997
    %v8393 = vunpack.c.l.b16 %v6998
    %v8394 = vunpack.c.h.b16 %v6998
    %v8395 = vunpack.c.l.b16 %v6999
    %v8396 = vunpack.c.h.b16 %v6999
    %v8397 = vunpack.c.l.b16 %v7000
    %v8398 = vunpack.c.h.b16 %v7000
    %v8399 = vunpack.c.l.b16 %v7001
    %v8400 = vunpack.c.h.b16 %v7001
    %v8401 = vunpack.c.l.b16 %v7002
    %v8402 = vunpack.c.h.b16 %v7002
    %v8403 = vunpack.c.l.b16 %v7003
    %v8404 = vunpack.c.h.b16 %v7003
    %v8405 = vunpack.c.l.b16 %v7004
    %v8406 = vunpack.c.h.b16 %v7004
    %v8407 = vunpack.c.l.b16 %v7005
    %v8408 = vunpack.c.h.b16 %v7005
    %v8409 = vunpack.c.l.b16 %v7006
    %v8410 = vunpack.c.h.b16 %v7006
    %v8411 = vunpack.c.l.b16 %v7007
    %v8412 = vunpack.c.h.b16 %v7007
    %v8413 = vunpack.c.l.b16 %v7008
    %v8414 = vunpack.c.h.b16 %v7008
    %v8415 = vunpack.c.l.b16 %v7009
    %v8416 = vunpack.c.h.b16 %v7009
    %v8417 = vunpack.c.l.b16 %v7010
    %v8418 = vunpack.c.h.b16 %v7010
    %v8419 = vunpack.c.l.b16 %v7011
    %v8420 = vunpack.c.h.b16 %v7011
    %v8421 = vunpack.c.l.b16 %v7012
    %v8422 = vunpack.c.h.b16 %v7012
    %v8423 = vunpack.c.l.b16 %v7013
    %v8424 = vunpack.c.h.b16 %v7013
    %v8425 = vunpack.c.l.b16 %v7014
    %v8426 = vunpack.c.h.b16 %v7014
    %v8427 = vunpack.c.l.b16 %v7015
    %v8428 = vunpack.c.h.b16 %v7015
    %v8429 = vunpack.c.l.b16 %v7016
    %v8430 = vunpack.c.h.b16 %v7016
    %v8431 = vunpack.c.l.b16 %v7017
    %v8432 = vunpack.c.h.b16 %v7017
    %v8433 = vunpack.c.l.b16 %v7018
    %v8434 = vunpack.c.h.b16 %v7018
    %v8435 = vunpack.c.l.b16 %v7019
    %v8436 = vunpack.c.h.b16 %v7019
    %v8437 = vunpack.c.l.b16 %v7020
    %v8438 = vunpack.c.h.b16 %v7020
    %v8439 = vunpack.c.l.b16 %v7021
    %v8440 = vunpack.c.h.b16 %v7021
    %v8441 = vunpack.c.l.b16 %v7022
    %v8442 = vunpack.c.h.b16 %v7022
    %v8443 = vunpack.c.l.b16 %v7023
    %v8444 = vunpack.c.h.b16 %v7023
    %v8445 = vunpack.c.l.b16 %v7024
    %v8446 = vunpack.c.h.b16 %v7024
    %v8447 = vunpack.c.l.b16 %v7025
    %v8448 = vunpack.c.h.b16 %v7025
    %v8449 = vunpack.c.l.b16 %v7026
    %v8450 = vunpack.c.h.b16 %v7026
    %v8451 = vunpack.c.l.b16 %v7027
    %v8452 = vunpack.c.h.b16 %v7027
    %v8453 = vunpack.c.l.b16 %v7028
    %v8454 = vunpack.c.h.b16 %v7028
    %v8455 = vunpack.c.l.b16 %v7029
    %v8456 = vunpack.c.h.b16 %v7029
    %v8457 = vunpack.c.l.b16 %v7030
    %v8458 = vunpack.c.h.b16 %v7030
    %v8459 = vunpack.c.l.b16 %v7031
    %v8460 = vunpack.c.h.b16 %v7031
    %v8461 = vunpack.c.l.b16 %v7032
    %v8462 = vunpack.c.h.b16 %v7032
    %v8463 = vunpack.c.l.b16 %v7033
    %v8464 = vunpack.c.h.b16 %v7033
    %v8465 = vunpack.c.l.b16 %v7034
    %v8466 = vunpack.c.h.b16 %v7034
    %v8467 = vunpack.c.l.b16 %v7035
    %v8468 = vunpack.c.h.b16 %v7035
    %v8469 = vunpack.c.l.b16 %v7036
    %v8470 = vunpack.c.h.b16 %v7036
    %v8471 = vunpack.c.l.b16 %v7037
    %v8472 = vunpack.c.h.b16 %v7037
    %v8473 = vunpack.c.l.b16 %v7038
    %v8474 = vunpack.c.h.b16 %v7038
    %v8475 = vunpack.c.l.b16 %v7039
    %v8476 = vunpack.c.h.b16 %v7039
    %v8477 = vunpack.c.l.b16 %v7040
    %v8478 = vunpack.c.h.b16 %v7040
    %v8479 = vunpack.c.l.b16 %v7041
    %v8480 = vunpack.c.h.b16 %v7041
    %v8481 = vunpack.c.l.b16 %v7042
    %v8482 = vunpack.c.h.b16 %v7042
    %v8483 = vunpack.c.l.b16 %v7043
    %v8484 = vunpack.c.h.b16 %v7043
    %v8485 = vunpack.c.l.b16 %v7044
    %v8486 = vunpack.c.h.b16 %v7044
    %v8487 = vunpack.c.l.b16 %v7045
    %v8488 = vunpack.c.h.b16 %v7045
    %v8489 = vunpack.c.l.b16 %v7046
    %v8490 = vunpack.c.h.b16 %v7046
    %v8491 = vunpack.c.l.b16 %v7047
    %v8492 = vunpack.c.h.b16 %v7047
    %v8493 = vunpack.c.l.b16 %v7048
    %v8494 = vunpack.c.h.b16 %v7048
    %v8495 = vunpack.c.l.b16 %v7049
    %v8496 = vunpack.c.h.b16 %v7049
    %v8497 = vunpack.c.l.b16 %v7050
    %v8498 = vunpack.c.h.b16 %v7050
    %v8499 = vunpack.c.l.b16 %v7051
    %v8500 = vunpack.c.h.b16 %v7051
    %v8501 = vunpack.c.l.b16 %v7052
    %v8502 = vunpack.c.h.b16 %v7052
    %v8503 = vunpack.c.l.b16 %v7053
    %v8504 = vunpack.c.h.b16 %v7053
    %v8505 = vunpack.c.l.b16 %v7054
    %v8506 = vunpack.c.h.b16 %v7054
    %v8507 = vunpack.c.l.b16 %v7055
    %v8508 = vunpack.c.h.b16 %v7055
    %v8509 = vunpack.c.l.b16 %v7056
    %v8510 = vunpack.c.h.b16 %v7056
    %v8511 = vunpack.c.l.b16 %v7057
    %v8512 = vunpack.c.h.b16 %v7057
    %v8513 = vunpack.c.l.b16 %v7058
    %v8514 = vunpack.c.h.b16 %v7058
    %v8515 = vunpack.c.l.b16 %v7059
    %v8516 = vunpack.c.h.b16 %v7059
    %v8517 = vunpack.c.l.b16 %v7060
    %v8518 = vunpack.c.h.b16 %v7060
    %v8519 = vunpack.c.l.b16 %v7061
    %v8520 = vunpack.c.h.b16 %v7061
    %v8521 = vunpack.c.l.b16 %v7062
    %v8522 = vunpack.c.h.b16 %v7062
    %v8523 = vunpack.c.l.b16 %v7063
    %v8524 = vunpack.c.h.b16 %v7063
    %v8525 = vunpack.c.l.b16 %v7064
    %v8526 = vunpack.c.h.b16 %v7064
    %v8527 = vunpack.c.l.b16 %v7065
    %v8528 = vunpack.c.h.b16 %v7065
    %v8529 = vunpack.c.l.b16 %v7066
    %v8530 = vunpack.c.h.b16 %v7066
    %v8531 = vunpack.c.l.b16 %v7067
    %v8532 = vunpack.c.h.b16 %v7067
    %v8533 = vunpack.c.l.b16 %v7068
    %v8534 = vunpack.c.h.b16 %v7068
    %v8535 = vunpack.c.l.b16 %v7069
    %v8536 = vunpack.c.h.b16 %v7069
    %v8537 = vunpack.c.l.b16 %v7070
    %v8538 = vunpack.c.h.b16 %v7070
    %v8539 = vunpack.c.l.b16 %v7071
    %v8540 = vunpack.c.h.b16 %v7071
    %v8541 = vunpack.c.l.b16 %v7072
    %v8542 = vunpack.c.h.b16 %v7072
    %v8543 = vunpack.c.l.b16 %v7073
    %v8544 = vunpack.c.h.b16 %v7073
    %v8545 = vunpack.c.l.b16 %v7074
    %v8546 = vunpack.c.h.b16 %v7074
    %v8547 = vunpack.c.l.b16 %v7075
    %v8548 = vunpack.c.h.b16 %v7075
    %v8549 = vunpack.c.l.b16 %v7076
    %v8550 = vunpack.c.h.b16 %v7076
    %v8551 = vunpack.c.l.b16 %v7077
    %v8552 = vunpack.c.h.b16 %v7077
    %v8553 = vunpack.c.l.b16 %v7078
    %v8554 = vunpack.c.h.b16 %v7078
    %v8555 = vunpack.c.l.b16 %v7079
    %v8556 = vunpack.c.h.b16 %v7079
    %v8557 = vunpack.c.l.b16 %v7080
    %v8558 = vunpack.c.h.b16 %v7080
    %v8559 = vunpack.c.l.b16 %v7081
    %v8560 = vunpack.c.h.b16 %v7081
    %v8561 = vunpack.c.l.b16 %v7082
    %v8562 = vunpack.c.h.b16 %v7082
    %v8563 = vunpack.c.l.b16 %v7083
    %v8564 = vunpack.c.h.b16 %v7083
    %v8565 = vunpack.c.l.b16 %v7084
    %v8566 = vunpack.c.h.b16 %v7084
    %v8567 = vunpack.c.l.b16 %v7085
    %v8568 = vunpack.c.h.b16 %v7085
    %v8569 = vunpack.c.l.b16 %v7086
    %v8570 = vunpack.c.h.b16 %v7086
    %v8571 = vunpack.c.l.b16 %v7087
    %v8572 = vunpack.c.h.b16 %v7087
    %v8573 = vunpack.c.l.b16 %v7088
    %v8574 = vunpack.c.h.b16 %v7088
    %v8575 = vunpack.c.l.b16 %v7089
    %v8576 = vunpack.c.h.b16 %v7089
    %v8577 = vunpack.c.l.b16 %v7090
    %v8578 = vunpack.c.h.b16 %v7090
    %v8579 = vunpack.c.l.b16 %v7091
    %v8580 = vunpack.c.h.b16 %v7091
    %v8581 = vunpack.c.l.b16 %v7092
    %v8582 = vunpack.c.h.b16 %v7092
    %v8583 = vunpack.c.l.b16 %v7093
    %v8584 = vunpack.c.h.b16 %v7093
    %v8585 = vunpack.c.l.b16 %v7094
    %v8586 = vunpack.c.h.b16 %v7094
    %v8587 = vunpack.c.l.b16 %v7095
    %v8588 = vunpack.c.h.b16 %v7095
    %v8589 = vunpack.c.l.b16 %v7096
    %v8590 = vunpack.c.h.b16 %v7096
    %v8591 = vunpack.c.l.b16 %v7097
    %v8592 = vunpack.c.h.b16 %v7097
    %v8593 = vunpack.c.l.b16 %v7098
    %v8594 = vunpack.c.h.b16 %v7098
    %v8595 = vunpack.c.l.b16 %v7099
    %v8596 = vunpack.c.h.b16 %v7099
    %v8597 = vunpack.c.l.b16 %v7100
    %v8598 = vunpack.c.h.b16 %v7100
    %v8599 = vunpack.c.l.b16 %v7101
    %v8600 = vunpack.c.h.b16 %v7101
    %v8601 = vunpack.c.l.b16 %v7102
    %v8602 = vunpack.c.h.b16 %v7102
    %v8603 = vunpack.c.l.b16 %v7103
    %v8604 = vunpack.c.h.b16 %v7103
    %v8605 = vunpack.c.l.b16 %v7104
    %v8606 = vunpack.c.h.b16 %v7104
    %v8607 = vunpack.c.l.b16 %v7105
    %v8608 = vunpack.c.h.b16 %v7105
    %v8609 = vunpack.c.l.b16 %v7106
    %v8610 = vunpack.c.h.b16 %v7106
    %v8611 = vunpack.c.l.b16 %v7107
    %v8612 = vunpack.c.h.b16 %v7107
    %v8613 = vunpack.c.l.b16 %v7108
    %v8614 = vunpack.c.h.b16 %v7108
    %v8615 = vunpack.c.l.b16 %v7109
    %v8616 = vunpack.c.h.b16 %v7109
    %v8617 = vunpack.c.l.b16 %v7110
    %v8618 = vunpack.c.h.b16 %v7110
    %v8619 = vunpack.c.l.b16 %v7111
    %v8620 = vunpack.c.h.b16 %v7111
    %v8621 = vunpack.c.l.b16 %v7112
    %v8622 = vunpack.c.h.b16 %v7112
    %v8623 = vunpack.c.l.b16 %v7113
    %v8624 = vunpack.c.h.b16 %v7113
    %v8625 = vunpack.c.l.b16 %v7114
    %v8626 = vunpack.c.h.b16 %v7114
    %v8627 = vunpack.c.l.b16 %v7115
    %v8628 = vunpack.c.h.b16 %v7115
    %v8629 = vunpack.c.l.b16 %v7116
    %v8630 = vunpack.c.h.b16 %v7116
    %v8631 = vunpack.c.l.b16 %v7117
    %v8632 = vunpack.c.h.b16 %v7117
    %v8633 = vunpack.c.l.b16 %v7118
    %v8634 = vunpack.c.h.b16 %v7118
    %v8635 = vunpack.c.l.b16 %v7119
    %v8636 = vunpack.c.h.b16 %v7119
    %v8637 = vunpack.c.l.b16 %v7120
    %v8638 = vunpack.c.h.b16 %v7120
    %v8639 = vunpack.c.l.b16 %v7121
    %v8640 = vunpack.c.h.b16 %v7121
    %v8641 = vunpack.c.l.b16 %v7122
    %v8642 = vunpack.c.h.b16 %v7122
    %v8643 = vunpack.c.l.b16 %v7123
    %v8644 = vunpack.c.h.b16 %v7123
    %v8645 = vunpack.c.l.b16 %v7124
    %v8646 = vunpack.c.h.b16 %v7124
    %v8647 = vunpack.c.l.b16 %v7125
    %v8648 = vunpack.c.h.b16 %v7125
    %v8649 = vunpack.c.l.b16 %v7126
    %v8650 = vunpack.c.h.b16 %v7126
    %v8651 = vunpack.c.l.b16 %v7127
    %v8652 = vunpack.c.h.b16 %v7127
    %v8653 = vunpack.c.l.b16 %v7128
    %v8654 = vunpack.c.h.b16 %v7128
    %v8655 = vunpack.c.l.b16 %v7129
    %v8656 = vunpack.c.h.b16 %v7129
    %v8657 = vunpack.c.l.b16 %v7130
    %v8658 = vunpack.c.h.b16 %v7130
    %v8659 = vunpack.c.l.b16 %v7131
    %v8660 = vunpack.c.h.b16 %v7131
    %v8661 = vunpack.c.l.b16 %v7132
    %v8662 = vunpack.c.h.b16 %v7132
    %v8663 = vunpack.c.l.b16 %v7133
    %v8664 = vunpack.c.h.b16 %v7133
    %v8665 = vunpack.c.l.b16 %v7134
    %v8666 = vunpack.c.h.b16 %v7134
    %v8667 = vunpack.c.l.b16 %v7135
    %v8668 = vunpack.c.h.b16 %v7135
    %v8669 = vunpack.c.l.b16 %v7136
    %v8670 = vunpack.c.h.b16 %v7136
    %v8671 = vunpack.c.l.b16 %v7137
    %v8672 = vunpack.c.h.b16 %v7137
    %v8673 = vunpack.c.l.b16 %v7138
    %v8674 = vunpack.c.h.b16 %v7138
    %v8675 = vunpack.c.l.b16 %v7139
    %v8676 = vunpack.c.h.b16 %v7139
    %v8677 = vunpack.c.l.b16 %v7140
    %v8678 = vunpack.c.h.b16 %v7140
    %v8679 = vunpack.c.l.b16 %v7141
    %v8680 = vunpack.c.h.b16 %v7141
    %v8681 = vunpack.c.l.b16 %v7142
    %v8682 = vunpack.c.h.b16 %v7142
    %v8683 = vunpack.c.l.b16 %v7143
    %v8684 = vunpack.c.h.b16 %v7143
    %v8685 = vunpack.c.l.b16 %v7144
    %v8686 = vunpack.c.h.b16 %v7144
    %v8687 = vunpack.c.l.b16 %v7145
    %v8688 = vunpack.c.h.b16 %v7145
    %v8689 = vunpack.c.l.b16 %v7146
    %v8690 = vunpack.c.h.b16 %v7146
    %v8691 = vunpack.c.l.b16 %v7147
    %v8692 = vunpack.c.h.b16 %v7147
    %v8693 = vunpack.c.l.b16 %v7148
    %v8694 = vunpack.c.h.b16 %v7148
    %v8695 = vunpack.c.l.b16 %v7149
    %v8696 = vunpack.c.h.b16 %v7149
    %v8697 = vunpack.c.l.b16 %v7150
    %v8698 = vunpack.c.h.b16 %v7150
    %v8699 = vunpack.c.l.b16 %v7151
    %v8700 = vunpack.c.h.b16 %v7151
    %v8701 = vunpack.c.l.b16 %v7152
    %v8702 = vunpack.c.h.b16 %v7152
    %v8703 = vunpack.c.l.b16 %v7153
    %v8704 = vunpack.c.h.b16 %v7153
    %v8705 = vunpack.c.l.b16 %v7154
    %v8706 = vunpack.c.h.b16 %v7154
    %v8707 = vunpack.c.l.b16 %v7155
    %v8708 = vunpack.c.h.b16 %v7155
    %v8709 = vunpack.c.l.b16 %v7156
    %v8710 = vunpack.c.h.b16 %v7156
    %v8711 = vunpack.c.l.b16 %v7157
    %v8712 = vunpack.c.h.b16 %v7157
    %v8713 = vunpack.c.l.b16 %v7158
    %v8714 = vunpack.c.h.b16 %v7158
    %v8715 = vunpack.c.l.b16 %v7159
    %v8716 = vunpack.c.h.b16 %v7159
    %v8717 = vunpack.c.l.b16 %v7160
    %v8718 = vunpack.c.h.b16 %v7160
    %v8719 = vpack.c.b16 %v7699, %v7695
    %v8720 = vpack.c.b16 %v7700, %v7696
    %v8721 = vpack.c.b16 %v7701, %v7697
    %v8722 = vpack.c.b16 %v7702, %v7698
    %v8723 = vpack.c.b16 %v7707, %v7703
    %v8724 = vpack.c.b16 %v7708, %v7704
    %v8725 = vpack.c.b16 %v7709, %v7705
    %v8726 = vpack.c.b16 %v7710, %v7706
    %v8727 = vpack.c.b16 %v7715, %v7711
    %v8728 = vpack.c.b16 %v7716, %v7712
    %v8729 = vpack.c.b16 %v7717, %v7713
    %v8730 = vpack.c.b16 %v7718, %v7714
    %v8731 = vpack.c.b16 %v7723, %v7719
    %v8732 = vpack.c.b16 %v7724, %v7720
    %v8733 = vpack.c.b16 %v7725, %v7721
    %v8734 = vpack.c.b16 %v7726, %v7722
    %v8735 = vpack.c.b16 %v7731, %v7727
    %v8736 = vpack.c.b16 %v7732, %v7728
    %v8737 = vpack.c.b16 %v7733, %v7729
    %v8738 = vpack.c.b16 %v7734, %v7730
    %v8739 = vpack.c.b16 %v7739, %v7735
    %v8740 = vpack.c.b16 %v7740, %v7736
    %v8741 = vpack.c.b16 %v7741, %v7737
    %v8742 = vpack.c.b16 %v7742, %v7738
    %v8743 = vpack.c.b16 %v7747, %v7743
    %v8744 = vpack.c.b16 %v7748, %v7744
    %v8745 = vpack.c.b16 %v7749, %v7745
    %v8746 = vpack.c.b16 %v7750, %v7746
    %v8747 = vpack.c.b16 %v7755, %v7751
    %v8748 = vpack.c.b16 %v7756, %v7752
    %v8749 = vpack.c.b16 %v7757, %v7753
    %v8750 = vpack.c.b16 %v7758, %v7754
    %v8751 = vpack.c.b16 %v7763, %v7759
    %v8752 = vpack.c.b16 %v7764, %v7760
    %v8753 = vpack.c.b16 %v7765, %v7761
    %v8754 = vpack.c.b16 %v7766, %v7762
    %v8755 = vpack.c.b16 %v7771, %v7767
    %v8756 = vpack.c.b16 %v7772, %v7768
    %v8757 = vpack.c.b16 %v7773, %v7769
    %v8758 = vpack.c.b16 %v7774, %v7770
    %v8759 = vpack.c.b16 %v7779, %v7775
    %v8760 = vpack.c.b16 %v7780, %v7776
    %v8761 = vpack.c.b16 %v7781, %v7777
    %v8762 = vpack.c.b16 %v7782, %v7778
    %v8763 = vpack.c.b16 %v7787, %v7783
    %v8764 = vpack.c.b16 %v7788, %v7784
    %v8765 = vpack.c.b16 %v7789, %v7785
    %v8766 = vpack.c.b16 %v7790, %v7786
    %v8767 = vpack.c.b16 %v7795, %v7791
    %v8768 = vpack.c.b16 %v7796, %v7792
    %v8769 = vpack.c.b16 %v7797, %v7793
    %v8770 = vpack.c.b16 %v7798, %v7794
    %v8771 = vpack.c.b16 %v7803, %v7799
    %v8772 = vpack.c.b16 %v7804, %v7800
    %v8773 = vpack.c.b16 %v7805, %v7801
    %v8774 = vpack.c.b16 %v7806, %v7802
    %v8775 = vpack.c.b16 %v7811, %v7807
    %v8776 = vpack.c.b16 %v7812, %v7808
    %v8777 = vpack.c.b16 %v7813, %v7809
    %v8778 = vpack.c.b16 %v7814, %v7810
    %v8779 = vpack.c.b16 %v7819, %v7815
    %v8780 = vpack.c.b16 %v7820, %v7816
    %v8781 = vpack.c.b16 %v7821, %v7817
    %v8782 = vpack.c.b16 %v7822, %v7818
    %v8783 = vpack.c.b16 %v7827, %v7823
    %v8784 = vpack.c.b16 %v7828, %v7824
    %v8785 = vpack.c.b16 %v7829, %v7825
    %v8786 = vpack.c.b16 %v7830, %v7826
    %v8787 = vpack.c.b16 %v7835, %v7831
    %v8788 = vpack.c.b16 %v7836, %v7832
    %v8789 = vpack.c.b16 %v7837, %v7833
    %v8790 = vpack.c.b16 %v7838, %v7834
    %v8791 = vpack.c.b16 %v7843, %v7839
    %v8792 = vpack.c.b16 %v7844, %v7840
    %v8793 = vpack.c.b16 %v7845, %v7841
    %v8794 = vpack.c.b16 %v7846, %v7842
    %v8795 = vpack.c.b16 %v7851, %v7847
    %v8796 = vpack.c.b16 %v7852, %v7848
    %v8797 = vpack.c.b16 %v7853, %v7849
    %v8798 = vpack.c.b16 %v7854, %v7850
    %v8799 = vpack.c.b16 %v7859, %v7855
    %v8800 = vpack.c.b16 %v7860, %v7856
    %v8801 = vpack.c.b16 %v7861, %v7857
    %v8802 = vpack.c.b16 %v7862, %v7858
    %v8803 = vpack.c.b16 %v7867, %v7863
    %v8804 = vpack.c.b16 %v7868, %v7864
    %v8805 = vpack.c.b16 %v7869, %v7865
    %v8806 = vpack.c.b16 %v7870, %v7866
    %v8807 = vpack.c.b16 %v7875, %v7871
    %v8808 = vpack.c.b16 %v7876, %v7872
    %v8809 = vpack.c.b16 %v7877, %v7873
    %v8810 = vpack.c.b16 %v7878, %v7874
    %v8811 = vpack.c.b16 %v7883, %v7879
    %v8812 = vpack.c.b16 %v7884, %v7880
    %v8813 = vpack.c.b16 %v7885, %v7881
    %v8814 = vpack.c.b16 %v7886, %v7882
    %v8815 = vpack.c.b16 %v7891, %v7887
    %v8816 = vpack.c.b16 %v7892, %v7888
    %v8817 = vpack.c.b16 %v7893, %v7889
    %v8818 = vpack.c.b16 %v7894, %v7890
    %v8819 = vpack.c.b16 %v7899, %v7895
    %v8820 = vpack.c.b16 %v7900, %v7896
    %v8821 = vpack.c.b16 %v7901, %v7897
    %v8822 = vpack.c.b16 %v7902, %v7898
    %v8823 = vpack.c.b16 %v7907, %v7903
    %v8824 = vpack.c.b16 %v7908, %v7904
    %v8825 = vpack.c.b16 %v7909, %v7905
    %v8826 = vpack.c.b16 %v7910, %v7906
    %v8827 = vpack.c.b16 %v7915, %v7911
    %v8828 = vpack.c.b16 %v7916, %v7912
    %v8829 = vpack.c.b16 %v7917, %v7913
    %v8830 = vpack.c.b16 %v7918, %v7914
    %v8831 = vpack.c.b16 %v7923, %v7919
    %v8832 = vpack.c.b16 %v7924, %v7920
    %v8833 = vpack.c.b16 %v7925, %v7921
    %v8834 = vpack.c.b16 %v7926, %v7922
    %v8835 = vpack.c.b16 %v7931, %v7927
    %v8836 = vpack.c.b16 %v7932, %v7928
    %v8837 = vpack.c.b16 %v7933, %v7929
    %v8838 = vpack.c.b16 %v7934, %v7930
    %v8839 = vpack.c.b16 %v7939, %v7935
    %v8840 = vpack.c.b16 %v7940, %v7936
    %v8841 = vpack.c.b16 %v7941, %v7937
    %v8842 = vpack.c.b16 %v7942, %v7938
    %v8843 = vpack.c.b16 %v7947, %v7943
    %v8844 = vpack.c.b16 %v7948, %v7944
    %v8845 = vpack.c.b16 %v7949, %v7945
    %v8846 = vpack.c.b16 %v7950, %v7946
    %v8847 = vpack.c.b16 %v7955, %v7951
    %v8848 = vpack.c.b16 %v7956, %v7952
    %v8849 = vpack.c.b16 %v7957, %v7953
    %v8850 = vpack.c.b16 %v7958, %v7954
    %v8851 = vpack.c.b16 %v7963, %v7959
    %v8852 = vpack.c.b16 %v7964, %v7960
    %v8853 = vpack.c.b16 %v7965, %v7961
    %v8854 = vpack.c.b16 %v7966, %v7962
    %v8855 = vpack.c.b16 %v7971, %v7967
    %v8856 = vpack.c.b16 %v7972, %v7968
    %v8857 = vpack.c.b16 %v7973, %v7969
    %v8858 = vpack.c.b16 %v7974, %v7970
    %v8859 = vpack.c.b16 %v7979, %v7975
    %v8860 = vpack.c.b16 %v7980, %v7976
    %v8861 = vpack.c.b16 %v7981, %v7977
    %v8862 = vpack.c.b16 %v7982, %v7978
    %v8863 = vpack.c.b16 %v7987, %v7983
    %v8864 = vpack.c.b16 %v7988, %v7984
    %v8865 = vpack.c.b16 %v7989, %v7985
    %v8866 = vpack.c.b16 %v7990, %v7986
    %v8867 = vpack.c.b16 %v7995, %v7991
    %v8868 = vpack.c.b16 %v7996, %v7992
    %v8869 = vpack.c.b16 %v7997, %v7993
    %v8870 = vpack.c.b16 %v7998, %v7994
    %v8871 = vpack.c.b16 %v8003, %v7999
    %v8872 = vpack.c.b16 %v8004, %v8000
    %v8873 = vpack.c.b16 %v8005, %v8001
    %v8874 = vpack.c.b16 %v8006, %v8002
    %v8875 = vpack.c.b16 %v8011, %v8007
    %v8876 = vpack.c.b16 %v8012, %v8008
    %v8877 = vpack.c.b16 %v8013, %v8009
    %v8878 = vpack.c.b16 %v8014, %v8010
    %v8879 = vpack.c.b16 %v8019, %v8015
    %v8880 = vpack.c.b16 %v8020, %v8016
    %v8881 = vpack.c.b16 %v8021, %v8017
    %v8882 = vpack.c.b16 %v8022, %v8018
    %v8883 = vpack.c.b16 %v8027, %v8023
    %v8884 = vpack.c.b16 %v8028, %v8024
    %v8885 = vpack.c.b16 %v8029, %v8025
    %v8886 = vpack.c.b16 %v8030, %v8026
    %v8887 = vpack.c.b16 %v8035, %v8031
    %v8888 = vpack.c.b16 %v8036, %v8032
    %v8889 = vpack.c.b16 %v8037, %v8033
    %v8890 = vpack.c.b16 %v8038, %v8034
    %v8891 = vpack.c.b16 %v8043, %v8039
    %v8892 = vpack.c.b16 %v8044, %v8040
    %v8893 = vpack.c.b16 %v8045, %v8041
    %v8894 = vpack.c.b16 %v8046, %v8042
    %v8895 = vpack.c.b16 %v8051, %v8047
    %v8896 = vpack.c.b16 %v8052, %v8048
    %v8897 = vpack.c.b16 %v8053, %v8049
    %v8898 = vpack.c.b16 %v8054, %v8050
    %v8899 = vpack.c.b16 %v8059, %v8055
    %v8900 = vpack.c.b16 %v8060, %v8056
    %v8901 = vpack.c.b16 %v8061, %v8057
    %v8902 = vpack.c.b16 %v8062, %v8058
    %v8903 = vpack.c.b16 %v8067, %v8063
    %v8904 = vpack.c.b16 %v8068, %v8064
    %v8905 = vpack.c.b16 %v8069, %v8065
    %v8906 = vpack.c.b16 %v8070, %v8066
    %v8907 = vpack.c.b16 %v8075, %v8071
    %v8908 = vpack.c.b16 %v8076, %v8072
    %v8909 = vpack.c.b16 %v8077, %v8073
    %v8910 = vpack.c.b16 %v8078, %v8074
    %v8911 = vpack.c.b16 %v8083, %v8079
    %v8912 = vpack.c.b16 %v8084, %v8080
    %v8913 = vpack.c.b16 %v8085, %v8081
    %v8914 = vpack.c.b16 %v8086, %v8082
    %v8915 = vpack.c.b16 %v8091, %v8087
    %v8916 = vpack.c.b16 %v8092, %v8088
    %v8917 = vpack.c.b16 %v8093, %v8089
    %v8918 = vpack.c.b16 %v8094, %v8090
    %v8919 = vpack.c.b16 %v8099, %v8095
    %v8920 = vpack.c.b16 %v8100, %v8096
    %v8921 = vpack.c.b16 %v8101, %v8097
    %v8922 = vpack.c.b16 %v8102, %v8098
    %v8923 = vpack.c.b16 %v8107, %v8103
    %v8924 = vpack.c.b16 %v8108, %v8104
    %v8925 = vpack.c.b16 %v8109, %v8105
    %v8926 = vpack.c.b16 %v8110, %v8106
    %v8927 = vpack.c.b16 %v8115, %v8111
    %v8928 = vpack.c.b16 %v8116, %v8112
    %v8929 = vpack.c.b16 %v8117, %v8113
    %v8930 = vpack.c.b16 %v8118, %v8114
    %v8931 = vpack.c.b16 %v8123, %v8119
    %v8932 = vpack.c.b16 %v8124, %v8120
    %v8933 = vpack.c.b16 %v8125, %v8121
    %v8934 = vpack.c.b16 %v8126, %v8122
    %v8935 = vpack.c.b16 %v8131, %v8127
    %v8936 = vpack.c.b16 %v8132, %v8128
    %v8937 = vpack.c.b16 %v8133, %v8129
    %v8938 = vpack.c.b16 %v8134, %v8130
    %v8939 = vpack.c.b16 %v8139, %v8135
    %v8940 = vpack.c.b16 %v8140, %v8136
    %v8941 = vpack.c.b16 %v8141, %v8137
    %v8942 = vpack.c.b16 %v8142, %v8138
    %v8943 = vpack.c.b16 %v8147, %v8143
    %v8944 = vpack.c.b16 %v8148, %v8144
    %v8945 = vpack.c.b16 %v8149, %v8145
    %v8946 = vpack.c.b16 %v8150, %v8146
    %v8947 = vpack.c.b16 %v8155, %v8151
    %v8948 = vpack.c.b16 %v8156, %v8152
    %v8949 = vpack.c.b16 %v8157, %v8153
    %v8950 = vpack.c.b16 %v8158, %v8154
    %v8951 = vpack.c.b16 %v8163, %v8159
    %v8952 = vpack.c.b16 %v8164, %v8160
    %v8953 = vpack.c.b16 %v8165, %v8161
    %v8954 = vpack.c.b16 %v8166, %v8162
    %v8955 = vpack.c.b16 %v8171, %v8167
    %v8956 = vpack.c.b16 %v8172, %v8168
    %v8957 = vpack.c.b16 %v8173, %v8169
    %v8958 = vpack.c.b16 %v8174, %v8170
    %v8959 = vpack.c.b16 %v8179, %v8175
    %v8960 = vpack.c.b16 %v8180, %v8176
    %v8961 = vpack.c.b16 %v8181, %v8177
    %v8962 = vpack.c.b16 %v8182, %v8178
    %v8963 = vpack.c.b16 %v8187, %v8183
    %v8964 = vpack.c.b16 %v8188, %v8184
    %v8965 = vpack.c.b16 %v8189, %v8185
    %v8966 = vpack.c.b16 %v8190, %v8186
    %v8967 = vpack.c.b16 %v8195, %v8191
    %v8968 = vpack.c.b16 %v8196, %v8192
    %v8969 = vpack.c.b16 %v8197, %v8193
    %v8970 = vpack.c.b16 %v8198, %v8194
    %v8971 = vpack.c.b16 %v8203, %v8199
    %v8972 = vpack.c.b16 %v8204, %v8200
    %v8973 = vpack.c.b16 %v8205, %v8201
    %v8974 = vpack.c.b16 %v8206, %v8202
    %v8975 = vpack.c.b16 %v8211, %v8207
    %v8976 = vpack.c.b16 %v8212, %v8208
    %v8977 = vpack.c.b16 %v8213, %v8209
    %v8978 = vpack.c.b16 %v8214, %v8210
    %v8979 = vpack.c.b16 %v8219, %v8215
    %v8980 = vpack.c.b16 %v8220, %v8216
    %v8981 = vpack.c.b16 %v8221, %v8217
    %v8982 = vpack.c.b16 %v8222, %v8218
    %v8983 = vpack.c.b16 %v8227, %v8223
    %v8984 = vpack.c.b16 %v8228, %v8224
    %v8985 = vpack.c.b16 %v8229, %v8225
    %v8986 = vpack.c.b16 %v8230, %v8226
    %v8987 = vpack.c.b16 %v8235, %v8231
    %v8988 = vpack.c.b16 %v8236, %v8232
    %v8989 = vpack.c.b16 %v8237, %v8233
    %v8990 = vpack.c.b16 %v8238, %v8234
    %v8991 = vpack.c.b16 %v8243, %v8239
    %v8992 = vpack.c.b16 %v8244, %v8240
    %v8993 = vpack.c.b16 %v8245, %v8241
    %v8994 = vpack.c.b16 %v8246, %v8242
    %v8995 = vpack.c.b16 %v8251, %v8247
    %v8996 = vpack.c.b16 %v8252, %v8248
    %v8997 = vpack.c.b16 %v8253, %v8249
    %v8998 = vpack.c.b16 %v8254, %v8250
    %v8999 = vpack.c.b16 %v8259, %v8255
    %v9000 = vpack.c.b16 %v8260, %v8256
    %v9001 = vpack.c.b16 %v8261, %v8257
    %v9002 = vpack.c.b16 %v8262, %v8258
    %v9003 = vpack.c.b16 %v8267, %v8263
    %v9004 = vpack.c.b16 %v8268, %v8264
    %v9005 = vpack.c.b16 %v8269, %v8265
    %v9006 = vpack.c.b16 %v8270, %v8266
    %v9007 = vpack.c.b16 %v8275, %v8271
    %v9008 = vpack.c.b16 %v8276, %v8272
    %v9009 = vpack.c.b16 %v8277, %v8273
    %v9010 = vpack.c.b16 %v8278, %v8274
    %v9011 = vpack.c.b16 %v8283, %v8279
    %v9012 = vpack.c.b16 %v8284, %v8280
    %v9013 = vpack.c.b16 %v8285, %v8281
    %v9014 = vpack.c.b16 %v8286, %v8282
    %v9015 = vpack.c.b16 %v8291, %v8287
    %v9016 = vpack.c.b16 %v8292, %v8288
    %v9017 = vpack.c.b16 %v8293, %v8289
    %v9018 = vpack.c.b16 %v8294, %v8290
    %v9019 = vpack.c.b16 %v8299, %v8295
    %v9020 = vpack.c.b16 %v8300, %v8296
    %v9021 = vpack.c.b16 %v8301, %v8297
    %v9022 = vpack.c.b16 %v8302, %v8298
    %v9023 = vpack.c.b16 %v8307, %v8303
    %v9024 = vpack.c.b16 %v8308, %v8304
    %v9025 = vpack.c.b16 %v8309, %v8305
    %v9026 = vpack.c.b16 %v8310, %v8306
    %v9027 = vpack.c.b16 %v8315, %v8311
    %v9028 = vpack.c.b16 %v8316, %v8312
    %v9029 = vpack.c.b16 %v8317, %v8313
    %v9030 = vpack.c.b16 %v8318, %v8314
    %v9031 = vpack.c.b16 %v8323, %v8319
    %v9032 = vpack.c.b16 %v8324, %v8320
    %v9033 = vpack.c.b16 %v8325, %v8321
    %v9034 = vpack.c.b16 %v8326, %v8322
    %v9035 = vpack.c.b16 %v8331, %v8327
    %v9036 = vpack.c.b16 %v8332, %v8328
    %v9037 = vpack.c.b16 %v8333, %v8329
    %v9038 = vpack.c.b16 %v8334, %v8330
    %v9039 = vpack.c.b16 %v8339, %v8335
    %v9040 = vpack.c.b16 %v8340, %v8336
    %v9041 = vpack.c.b16 %v8341, %v8337
    %v9042 = vpack.c.b16 %v8342, %v8338
    %v9043 = vpack.c.b16 %v8347, %v8343
    %v9044 = vpack.c.b16 %v8348, %v8344
    %v9045 = vpack.c.b16 %v8349, %v8345
    %v9046 = vpack.c.b16 %v8350, %v8346
    %v9047 = vpack.c.b16 %v8355, %v8351
    %v9048 = vpack.c.b16 %v8356, %v8352
    %v9049 = vpack.c.b16 %v8357, %v8353
    %v9050 = vpack.c.b16 %v8358, %v8354
    %v9051 = vpack.c.b16 %v8363, %v8359
    %v9052 = vpack.c.b16 %v8364, %v8360
    %v9053 = vpack.c.b16 %v8365, %v8361
    %v9054 = vpack.c.b16 %v8366, %v8362
    %v9055 = vpack.c.b16 %v8371, %v8367
    %v9056 = vpack.c.b16 %v8372, %v8368
    %v9057 = vpack.c.b16 %v8373, %v8369
    %v9058 = vpack.c.b16 %v8374, %v8370
    %v9059 = vpack.c.b16 %v8379, %v8375
    %v9060 = vpack.c.b16 %v8380, %v8376
    %v9061 = vpack.c.b16 %v8381, %v8377
    %v9062 = vpack.c.b16 %v8382, %v8378
    %v9063 = vpack.c.b16 %v8387, %v8383
    %v9064 = vpack.c.b16 %v8388, %v8384
    %v9065 = vpack.c.b16 %v8389, %v8385
    %v9066 = vpack.c.b16 %v8390, %v8386
    %v9067 = vpack.c.b16 %v8395, %v8391
    %v9068 = vpack.c.b16 %v8396, %v8392
    %v9069 = vpack.c.b16 %v8397, %v8393
    %v9070 = vpack.c.b16 %v8398, %v8394
    %v9071 = vpack.c.b16 %v8403, %v8399
    %v9072 = vpack.c.b16 %v8404, %v8400
    %v9073 = vpack.c.b16 %v8405, %v8401
    %v9074 = vpack.c.b16 %v8406, %v8402
    %v9075 = vpack.c.b16 %v8411, %v8407
    %v9076 = vpack.c.b16 %v8412, %v8408
    %v9077 = vpack.c.b16 %v8413, %v8409
    %v9078 = vpack.c.b16 %v8414, %v8410
    %v9079 = vpack.c.b16 %v8419, %v8415
    %v9080 = vpack.c.b16 %v8420, %v8416
    %v9081 = vpack.c.b16 %v8421, %v8417
    %v9082 = vpack.c.b16 %v8422, %v8418
    %v9083 = vpack.c.b16 %v8427, %v8423
    %v9084 = vpack.c.b16 %v8428, %v8424
    %v9085 = vpack.c.b16 %v8429, %v8425
    %v9086 = vpack.c.b16 %v8430, %v8426
    %v9087 = vpack.c.b16 %v8435, %v8431
    %v9088 = vpack.c.b16 %v8436, %v8432
    %v9089 = vpack.c.b16 %v8437, %v8433
    %v9090 = vpack.c.b16 %v8438, %v8434
    %v9091 = vpack.c.b16 %v8443, %v8439
    %v9092 = vpack.c.b16 %v8444, %v8440
    %v9093 = vpack.c.b16 %v8445, %v8441
    %v9094 = vpack.c.b16 %v8446, %v8442
    %v9095 = vpack.c.b16 %v8451, %v8447
    %v9096 = vpack.c.b16 %v8452, %v8448
    %v9097 = vpack.c.b16 %v8453, %v8449
    %v9098 = vpack.c.b16 %v8454, %v8450
    %v9099 = vpack.c.b16 %v8459, %v8455
    %v9100 = vpack.c.b16 %v8460, %v8456
    %v9101 = vpack.c.b16 %v8461, %v8457
    %v9102 = vpack.c.b16 %v8462, %v8458
    %v9103 = vpack.c.b16 %v8467, %v8463
    %v9104 = vpack.c.b16 %v8468, %v8464
    %v9105 = vpack.c.b16 %v8469, %v8465
    %v9106 = vpack.c.b16 %v8470, %v8466
    %v9107 = vpack.c.b16 %v8475, %v8471
    %v9108 = vpack.c.b16 %v8476, %v8472
    %v9109 = vpack.c.b16 %v8477, %v8473
    %v9110 = vpack.c.b16 %v8478, %v8474
    %v9111 = vpack.c.b16 %v8483, %v8479
    %v9112 = vpack.c.b16 %v8484, %v8480
    %v9113 = vpack.c.b16 %v8485, %v8481
    %v9114 = vpack.c.b16 %v8486, %v8482
    %v9115 = vpack.c.b16 %v8491, %v8487
    %v9116 = vpack.c.b16 %v8492, %v8488
    %v9117 = vpack.c.b16 %v8493, %v8489
    %v9118 = vpack.c.b16 %v8494, %v8490
    %v9119 = vpack.c.b16 %v8499, %v8495
    %v9120 = vpack.c.b16 %v8500, %v8496
    %v9121 = vpack.c.b16 %v8501, %v8497
    %v9122 = vpack.c.b16 %v8502, %v8498
    %v9123 = vpack.c.b16 %v8507, %v8503
    %v9124 = vpack.c.b16 %v8508, %v8504
    %v9125 = vpack.c.b16 %v8509, %v8505
    %v9126 = vpack.c.b16 %v8510, %v8506
    %v9127 = vpack.c.b16 %v8515, %v8511
    %v9128 = vpack.c.b16 %v8516, %v8512
    %v9129 = vpack.c.b16 %v8517, %v8513
    %v9130 = vpack.c.b16 %v8518, %v8514
    %v9131 = vpack.c.b16 %v8523, %v8519
    %v9132 = vpack.c.b16 %v8524, %v8520
    %v9133 = vpack.c.b16 %v8525, %v8521
    %v9134 = vpack.c.b16 %v8526, %v8522
    %v9135 = vpack.c.b16 %v8531, %v8527
    %v9136 = vpack.c.b16 %v8532, %v8528
    %v9137 = vpack.c.b16 %v8533, %v8529
    %v9138 = vpack.c.b16 %v8534, %v8530
    %v9139 = vpack.c.b16 %v8539, %v8535
    %v9140 = vpack.c.b16 %v8540, %v8536
    %v9141 = vpack.c.b16 %v8541, %v8537
    %v9142 = vpack.c.b16 %v8542, %v8538
    %v9143 = vpack.c.b16 %v8547, %v8543
    %v9144 = vpack.c.b16 %v8548, %v8544
    %v9145 = vpack.c.b16 %v8549, %v8545
    %v9146 = vpack.c.b16 %v8550, %v8546
    %v9147 = vpack.c.b16 %v8555, %v8551
    %v9148 = vpack.c.b16 %v8556, %v8552
    %v9149 = vpack.c.b16 %v8557, %v8553
    %v9150 = vpack.c.b16 %v8558, %v8554
    %v9151 = vpack.c.b16 %v8563, %v8559
    %v9152 = vpack.c.b16 %v8564, %v8560
    %v9153 = vpack.c.b16 %v8565, %v8561
    %v9154 = vpack.c.b16 %v8566, %v8562
    %v9155 = vpack.c.b16 %v8571, %v8567
    %v9156 = vpack.c.b16 %v8572, %v8568
    %v9157 = vpack.c.b16 %v8573, %v8569
    %v9158 = vpack.c.b16 %v8574, %v8570
    %v9159 = vpack.c.b16 %v8579, %v8575
    %v9160 = vpack.c.b16 %v8580, %v8576
    %v9161 = vpack.c.b16 %v8581, %v8577
    %v9162 = vpack.c.b16 %v8582, %v8578
    %v9163 = vpack.c.b16 %v8587, %v8583
    %v9164 = vpack.c.b16 %v8588, %v8584
    %v9165 = vpack.c.b16 %v8589, %v8585
    %v9166 = vpack.c.b16 %v8590, %v8586
    %v9167 = vpack.c.b16 %v8595, %v8591
    %v9168 = vpack.c.b16 %v8596, %v8592
    %v9169 = vpack.c.b16 %v8597, %v8593
    %v9170 = vpack.c.b16 %v8598, %v8594
    %v9171 = vpack.c.b16 %v8603, %v8599
    %v9172 = vpack.c.b16 %v8604, %v8600
    %v9173 = vpack.c.b16 %v8605, %v8601
    %v9174 = vpack.c.b16 %v8606, %v8602
    %v9175 = vpack.c.b16 %v8611, %v8607
    %v9176 = vpack.c.b16 %v8612, %v8608
    %v9177 = vpack.c.b16 %v8613, %v8609
    %v9178 = vpack.c.b16 %v8614, %v8610
    %v9179 = vpack.c.b16 %v8619, %v8615
    %v9180 = vpack.c.b16 %v8620, %v8616
    %v9181 = vpack.c.b16 %v8621, %v8617
    %v9182 = vpack.c.b16 %v8622, %v8618
    %v9183 = vpack.c.b16 %v8627, %v8623
    %v9184 = vpack.c.b16 %v8628, %v8624
    %v9185 = vpack.c.b16 %v8629, %v8625
    %v9186 = vpack.c.b16 %v8630, %v8626
    %v9187 = vpack.c.b16 %v8635, %v8631
    %v9188 = vpack.c.b16 %v8636, %v8632
    %v9189 = vpack.c.b16 %v8637, %v8633
    %v9190 = vpack.c.b16 %v8638, %v8634
    %v9191 = vpack.c.b16 %v8643, %v8639
    %v9192 = vpack.c.b16 %v8644, %v8640
    %v9193 = vpack.c.b16 %v8645, %v8641
    %v9194 = vpack.c.b16 %v8646, %v8642
    %v9195 = vpack.c.b16 %v8651, %v8647
    %v9196 = vpack.c.b16 %v8652, %v8648
    %v9197 = vpack.c.b16 %v8653, %v8649
    %v9198 = vpack.c.b16 %v8654, %v8650
    %v9199 = vpack.c.b16 %v8659, %v8655
    %v9200 = vpack.c.b16 %v8660, %v8656
    %v9201 = vpack.c.b16 %v8661, %v8657
    %v9202 = vpack.c.b16 %v8662, %v8658
    %v9203 = vpack.c.b16 %v8667, %v8663
    %v9204 = vpack.c.b16 %v8668, %v8664
    %v9205 = vpack.c.b16 %v8669, %v8665
    %v9206 = vpack.c.b16 %v8670, %v8666
    %v9207 = vpack.c.b16 %v8675, %v8671
    %v9208 = vpack.c.b16 %v8676, %v8672
    %v9209 = vpack.c.b16 %v8677, %v8673
    %v9210 = vpack.c.b16 %v8678, %v8674
    %v9211 = vpack.c.b16 %v8683, %v8679
    %v9212 = vpack.c.b16 %v8684, %v8680
    %v9213 = vpack.c.b16 %v8685, %v8681
    %v9214 = vpack.c.b16 %v8686, %v8682
    %v9215 = vpack.c.b16 %v8691, %v8687
    %v9216 = vpack.c.b16 %v8692, %v8688
    %v9217 = vpack.c.b16 %v8693, %v8689
    %v9218 = vpack.c.b16 %v8694, %v8690
    %v9219 = vpack.c.b16 %v8699, %v8695
    %v9220 = vpack.c.b16 %v8700, %v8696
    %v9221 = vpack.c.b16 %v8701, %v8697
    %v9222 = vpack.c.b16 %v8702, %v8698
    %v9223 = vpack.c.b16 %v8707, %v8703
    %v9224 = vpack.c.b16 %v8708, %v8704
    %v9225 = vpack.c.b16 %v8709, %v8705
    %v9226 = vpack.c.b16 %v8710, %v8706
    %v9227 = vpack.c.b16 %v8715, %v8711
    %v9228 = vpack.c.b16 %v8716, %v8712
    %v9229 = vpack.c.b16 %v8717, %v8713
    %v9230 = vpack.c.b16 %v8718, %v8714
    %9743 = vmatprep.subr.bf16.mxu0 %v8720
    %9744 = vmatpush1.bf16.msra.mxu0 %v8719
    %9745 = vmatprep.subr.bf16.mxu0 %v8724
    %9746 = vmatpush1.bf16.msra.mxu0 %v8723
    %9747 = vmatprep.subr.bf16.mxu0 %v8728
    %9748 = vmatpush1.bf16.msra.mxu0 %v8727
    %9749 = vmatprep.subr.bf16.mxu0 %v8732
    %9750 = vmatpush1.bf16.msra.mxu0 %v8731
    %9751 = vmatprep.subr.bf16.mxu0 %v8736
    %9752 = vmatpush1.bf16.msra.mxu0 %v8735
    %9753 = vmatprep.subr.bf16.mxu0 %v8740
    %9754 = vmatpush1.bf16.msra.mxu0 %v8739
    %9755 = vmatprep.subr.bf16.mxu0 %v8744
    %9756 = vmatpush1.bf16.msra.mxu0 %v8743
    %9757 = vmatprep.subr.bf16.mxu0 %v8748
    %9758 = vmatpush1.bf16.msra.mxu0 %v8747
    %9759 = vmatprep.subr.bf16.mxu0 %v8752
    %9760 = vmatpush1.bf16.msra.mxu0 %v8751
    %9761 = vmatprep.subr.bf16.mxu0 %v8756
    %9762 = vmatpush1.bf16.msra.mxu0 %v8755
    %9763 = vmatprep.subr.bf16.mxu0 %v8760
    %9764 = vmatpush1.bf16.msra.mxu0 %v8759
    %9765 = vmatprep.subr.bf16.mxu0 %v8764
    %9766 = vmatpush1.bf16.msra.mxu0 %v8763
    %9767 = vmatprep.subr.bf16.mxu0 %v8768
    %9768 = vmatpush1.bf16.msra.mxu0 %v8767
    %9769 = vmatprep.subr.bf16.mxu0 %v8772
    %9770 = vmatpush1.bf16.msra.mxu0 %v8771
    %9771 = vmatprep.subr.bf16.mxu0 %v8776
    %9772 = vmatpush1.bf16.msra.mxu0 %v8775
    %9773 = vmatprep.subr.bf16.mxu0 %v8780
    %9774 = vmatpush1.bf16.msra.mxu0 %v8779
    %9775 = vmatprep.mubr.bf16.mxu0 %v6522
    %9776 = vmatmul.mubr.bf16.gmra.mrb[0].mxu0 %v6521
    %v9777 = vpop.f32.mrb[0].mxu0
    %v9778 = vadd.f32 %v7166, %v9777
    %v9779 = vpop.f32.mrb[0].mxu0
    %v9780 = vadd.f32 %v7170, %v9779
    %v9781 = vpop.f32.mrb[0].mxu0
    %v9782 = vadd.f32 %v7166, %v9781
    %v9783 = vpop.f32.mrb[0].mxu0
    %v9784 = vadd.f32 %v7170, %v9783
    %9785 = vmatprep.mubr.bf16.mxu0 %v6538
    %9786 = vmatmul.mubr.bf16.gmra.mrb[0].mxu0 %v6537
    %v9787 = vpop.f32.mrb[0].mxu0
    %v9788 = vadd.f32 %v7166, %v9787
    %v9789 = vpop.f32.mrb[0].mxu0
    %v9790 = vadd.f32 %v7170, %v9789
    %v9791 = vpop.f32.mrb[0].mxu0
    %v9792 = vadd.f32 %v7166, %v9791
    %v9793 = vpop.f32.mrb[0].mxu0
    %v9794 = vadd.f32 %v7170, %v9793
    %9795 = vmatprep.mubr.bf16.mxu0 %v6554
    %9796 = vmatmul.mubr.bf16.gmra.mrb[0].mxu0 %v6553
    %v9797 = vpop.f32.mrb[0].mxu0
    %v9798 = vadd.f32 %v7166, %v9797
    %v9799 = vpop.f32.mrb[0].mxu0
    %v9800 = vadd.f32 %v7170, %v9799
    %v9801 = vpop.f32.mrb[0].mxu0
    %v9802 = vadd.f32 %v7166, %v9801
    %v9803 = vpop.f32.mrb[0].mxu0
    %v9804 = vadd.f32 %v7170, %v9803
    %9805 = vmatprep.mubr.bf16.mxu0 %v6570
    %9806 = vmatmul.mubr.bf16.gmra.mrb[0].mxu0 %v6569
    %v9807 = vpop.f32.mrb[0].mxu0
    %v9808 = vadd.f32 %v7166, %v9807
    %v9809 = vpop.f32.mrb[0].mxu0
    %v9810 = vadd.f32 %v7170, %v9809
    %v9811 = vpop.f32.mrb[0].mxu0
    %v9812 = vadd.f32 %v7166, %v9811
    %v9813 = vpop.f32.mrb[0].mxu0
    %v9814 = vadd.f32 %v7170, %v9813
    %9815 = vmatprep.mubr.bf16.mxu0 %v6586
    %9816 = vmatmul.mubr.bf16.gmra.mrb[0].mxu0 %v6585
    %v9817 = vpop.f32.mrb[0].mxu0
    %v9818 = vadd.f32 %v7166, %v9817
    %v9819 = vpop.f32.mrb[0].mxu0
    %v9820 = vadd.f32 %v7170, %v9819
    %v9821 = vpop.f32.mrb[0].mxu0
    %v9822 = vadd.f32 %v7166, %v9821
    %v9823 = vpop.f32.mrb[0].mxu0
    %v9824 = vadd.f32 %v7170, %v9823
    %9825 = vmatprep.mubr.bf16.mxu0 %v6602
    %9826 = vmatmul.mubr.bf16.gmra.mrb[0].mxu0 %v6601
    %v9827 = vpop.f32.mrb[0].mxu0
    %v9828 = vadd.f32 %v7166, %v9827
    %v9829 = vpop.f32.mrb[0].mxu0
    %v9830 = vadd.f32 %v7170, %v9829
    %v9831 = vpop.f32.mrb[0].mxu0
    %v9832 = vadd.f32 %v7166, %v9831
    %v9833 = vpop.f32.mrb[0].mxu0
    %v9834 = vadd.f32 %v7170, %v9833
    %9835 = vmatprep.mubr.bf16.mxu0 %v6618
    %9836 = vmatmul.mubr.bf16.gmra.mrb[0].mxu0 %v6617
    %v9837 = vpop.f32.mrb[0].mxu0
    %v9838 = vadd.f32 %v7166, %v9837
    %v9839 = vpop.f32.mrb[0].mxu0
    %v9840 = vadd.f32 %v7170, %v9839
    %v9841 = vpop.f32.mrb[0].mxu0
    %v9842 = vadd.f32 %v7166, %v9841
    %v9843 = vpop.f32.mrb[0].mxu0
    %v9844 = vadd.f32 %v7170, %v9843
    %9845 = vmatprep.mubr.bf16.mxu0 %v6634
    %9846 = vmatmul.mubr.bf16.gmra.mrb[0].mxu0 %v6633
    %v9847 = vpop.f32.mrb[0].mxu0
    %v9848 = vadd.f32 %v7166, %v9847
    %v9849 = vpop.f32.mrb[0].mxu0
    %v9850 = vadd.f32 %v7170, %v9849
    %v9851 = vpop.f32.mrb[0].mxu0
    %v9852 = vadd.f32 %v7166, %v9851
    %v9853 = vpop.f32.mrb[0].mxu0
    %v9854 = vadd.f32 %v7170, %v9853
    %9855 = vdwg.mxu0
    %9856 = vmatprep.subr.bf16.mxu0 %v8784
    %9857 = vmatpush1.bf16.msra.mxu0 %v8783
    %9858 = vmatprep.subr.bf16.mxu0 %v8788
    %9859 = vmatpush1.bf16.msra.mxu0 %v8787
    %9860 = vmatprep.subr.bf16.mxu0 %v8792
    %9861 = vmatpush1.bf16.msra.mxu0 %v8791
    %9862 = vmatprep.subr.bf16.mxu0 %v8796
    %9863 = vmatpush1.bf16.msra.mxu0 %v8795
    %9864 = vmatprep.subr.bf16.mxu0 %v8800
    %9865 = vmatpush1.bf16.msra.mxu0 %v8799
    %9866 = vmatprep.subr.bf16.mxu0 %v8804
    %9867 = vmatpush1.bf16.msra.mxu0 %v8803
    %9868 = vmatprep.subr.bf16.mxu0 %v8808
    %9869 = vmatpush1.bf16.msra.mxu0 %v8807
    %9870 = vmatprep.subr.bf16.mxu0 %v8812
    %9871 = vmatpush1.bf16.msra.mxu0 %v8811
    %9872 = vmatprep.subr.bf16.mxu0 %v8816
    %9873 = vmatpush1.bf16.msra.mxu0 %v8815
    %9874 = vmatprep.subr.bf16.mxu0 %v8820
    %9875 = vmatpush1.bf16.msra.mxu0 %v8819
    %9876 = vmatprep.subr.bf16.mxu0 %v8824
    %9877 = vmatpush1.bf16.msra.mxu0 %v8823
    %9878 = vmatprep.subr.bf16.mxu0 %v8828
    %9879 = vmatpush1.bf16.msra.mxu0 %v8827
    %9880 = vmatprep.subr.bf16.mxu0 %v8832
    %9881 = vmatpush1.bf16.msra.mxu0 %v8831
    %9882 = vmatprep.subr.bf16.mxu0 %v8836
    %9883 = vmatpush1.bf16.msra.mxu0 %v8835
    %9884 = vmatprep.subr.bf16.mxu0 %v8840
    %9885 = vmatpush1.bf16.msra.mxu0 %v8839
    %9886 = vmatprep.subr.bf16.mxu0 %v8844
    %9887 = vmatpush1.bf16.msra.mxu0 %v8843
    %9888 = vmatprep.mubr.bf16.mxu0 %v6524
    %9889 = vmatmul.mubr.bf16.gmra.mrb[0].mxu0 %v6523
    %v9890 = vpop.f32.mrb[0].mxu0
    %v9891 = vadd.f32 %v9778, %v9890
    %v9892 = vpop.f32.mrb[0].mxu0
    %v9893 = vadd.f32 %v9780, %v9892
    %v9894 = vpop.f32.mrb[0].mxu0
    %v9895 = vadd.f32 %v9782, %v9894
    %v9896 = vpop.f32.mrb[0].mxu0
    %v9897 = vadd.f32 %v9784, %v9896
    %9898 = vmatprep.mubr.bf16.mxu0 %v6540
    %9899 = vmatmul.mubr.bf16.gmra.mrb[0].mxu0 %v6539
    %v9900 = vpop.f32.mrb[0].mxu0
    %v9901 = vadd.f32 %v9788, %v9900
    %v9902 = vpop.f32.mrb[0].mxu0
    %v9903 = vadd.f32 %v9790, %v9902
    %v9904 = vpop.f32.mrb[0].mxu0
    %v9905 = vadd.f32 %v9792, %v9904
    %v9906 = vpop.f32.mrb[0].mxu0
    %v9907 = vadd.f32 %v9794, %v9906
    %9908 = vmatprep.mubr.bf16.mxu0 %v6556
    %9909 = vmatmul.mubr.bf16.gmra.mrb[0].mxu0 %v6555
    %v9910 = vpop.f32.mrb[0].mxu0
    %v9911 = vadd.f32 %v9798, %v9910
    %v9912 = vpop.f32.mrb[0].mxu0
    %v9913 = vadd.f32 %v9800, %v9912
    %v9914 = vpop.f32.mrb[0].mxu0
    %v9915 = vadd.f32 %v9802, %v9914
    %v9916 = vpop.f32.mrb[0].mxu0
    %v9917 = vadd.f32 %v9804, %v9916
    %9918 = vmatprep.mubr.bf16.mxu0 %v6572
    %9919 = vmatmul.mubr.bf16.gmra.mrb[0].mxu0 %v6571
    %v9920 = vpop.f32.mrb[0].mxu0
    %v9921 = vadd.f32 %v9808, %v9920
    %v9922 = vpop.f32.mrb[0].mxu0
    %v9923 = vadd.f32 %v9810, %v9922
    %v9924 = vpop.f32.mrb[0].mxu0
    %v9925 = vadd.f32 %v9812, %v9924
    %v9926 = vpop.f32.mrb[0].mxu0
    %v9927 = vadd.f32 %v9814, %v9926
    %9928 = vmatprep.mubr.bf16.mxu0 %v6588
    %9929 = vmatmul.mubr.bf16.gmra.mrb[0].mxu0 %v6587
    %v9930 = vpop.f32.mrb[0].mxu0
    %v9931 = vadd.f32 %v9818, %v9930
    %v9932 = vpop.f32.mrb[0].mxu0
    %v9933 = vadd.f32 %v9820, %v9932
    %v9934 = vpop.f32.mrb[0].mxu0
    %v9935 = vadd.f32 %v9822, %v9934
    %v9936 = vpop.f32.mrb[0].mxu0
    %v9937 = vadd.f32 %v9824, %v9936
    %9938 = vmatprep.mubr.bf16.mxu0 %v6604
    %9939 = vmatmul.mubr.bf16.gmra.mrb[0].mxu0 %v6603
    %v9940 = vpop.f32.mrb[0].mxu0
    %v9941 = vadd.f32 %v9828, %v9940
    %v9942 = vpop.f32.mrb[0].mxu0
    %v9943 = vadd.f32 %v9830, %v9942
    %v9944 = vpop.f32.mrb[0].mxu0
    %v9945 = vadd.f32 %v9832, %v9944
    %v9946 = vpop.f32.mrb[0].mxu0
    %v9947 = vadd.f32 %v9834, %v9946
    %9948 = vmatprep.mubr.bf16.mxu0 %v6620
    %9949 = vmatmul.mubr.bf16.gmra.mrb[0].mxu0 %v6619
    %v9950 = vpop.f32.mrb[0].mxu0
    %v9951 = vadd.f32 %v9838, %v9950
    %v9952 = vpop.f32.mrb[0].mxu0
    %v9953 = vadd.f32 %v9840, %v9952
    %v9954 = vpop.f32.mrb[0].mxu0
    %v9955 = vadd.f32 %v9842, %v9954
    %v9956 = vpop.f32.mrb[0].mxu0
    %v9957 = vadd.f32 %v9844, %v9956
    %9958 = vmatprep.mubr.bf16.mxu0 %v6636
    %9959 = vmatmul.mubr.bf16.gmra.mrb[0].mxu0 %v6635
    %v9960 = vpop.f32.mrb[0].mxu0
    %v9961 = vadd.f32 %v9848, %v9960
    %v9962 = vpop.f32.mrb[0].mxu0
    %v9963 = vadd.f32 %v9850, %v9962
    %v9964 = vpop.f32.mrb[0].mxu0
    %v9965 = vadd.f32 %v9852, %v9964
    %v9966 = vpop.f32.mrb[0].mxu0
    %v9967 = vadd.f32 %v9854, %v9966
    %9968 = vdwg.mxu0
    %9969 = vmatprep.subr.bf16.mxu0 %v8848
    %9970 = vmatpush1.bf16.msra.mxu0 %v8847
    %9971 = vmatprep.subr.bf16.mxu0 %v8852
    %9972 = vmatpush1.bf16.msra.mxu0 %v8851
    %9973 = vmatprep.subr.bf16.mxu0 %v8856
    %9974 = vmatpush1.bf16.msra.mxu0 %v8855
    %9975 = vmatprep.subr.bf16.mxu0 %v8860
    %9976 = vmatpush1.bf16.msra.mxu0 %v8859
    %9977 = vmatprep.subr.bf16.mxu0 %v8864
    %9978 = vmatpush1.bf16.msra.mxu0 %v8863
    %9979 = vmatprep.subr.bf16.mxu0 %v8868
    %9980 = vmatpush1.bf16.msra.mxu0 %v8867
    %9981 = vmatprep.subr.bf16.mxu0 %v8872
    %9982 = vmatpush1.bf16.msra.mxu0 %v8871
    %9983 = vmatprep.subr.bf16.mxu0 %v8876
    %9984 = vmatpush1.bf16.msra.mxu0 %v8875
    %9985 = vmatprep.subr.bf16.mxu0 %v8880
    %9986 = vmatpush1.bf16.msra.mxu0 %v8879
    %9987 = vmatprep.subr.bf16.mxu0 %v8884
    %9988 = vmatpush1.bf16.msra.mxu0 %v8883
    %9989 = vmatprep.subr.bf16.mxu0 %v8888
    %9990 = vmatpush1.bf16.msra.mxu0 %v8887
    %9991 = vmatprep.subr.bf16.mxu0 %v8892
    %9992 = vmatpush1.bf16.msra.mxu0 %v8891
    %9993 = vmatprep.subr.bf16.mxu0 %v8896
    %9994 = vmatpush1.bf16.msra.mxu0 %v8895
    %9995 = vmatprep.subr.bf16.mxu0 %v8900
    %9996 = vmatpush1.bf16.msra.mxu0 %v8899
    %9997 = vmatprep.subr.bf16.mxu0 %v8904
    %9998 = vmatpush1.bf16.msra.mxu0 %v8903
    %9999 = vmatprep.subr.bf16.mxu0 %v8908
    %10000 = vmatpush1.bf16.msra.mxu0 %v8907
    %10001 = vmatprep.mubr.bf16.mxu0 %v6526
    %10002 = vmatmul.mubr.bf16.gmra.mrb[0].mxu0 %v6525
    %v10003 = vpop.f32.mrb[0].mxu0
    %v10004 = vadd.f32 %v9891, %v10003
    %v10005 = vpop.f32.mrb[0].mxu0
    %v10006 = vadd.f32 %v9893, %v10005
    %v10007 = vpop.f32.mrb[0].mxu0
    %v10008 = vadd.f32 %v9895, %v10007
    %v10009 = vpop.f32.mrb[0].mxu0
    %v10010 = vadd.f32 %v9897, %v10009
    %10011 = vmatprep.mubr.bf16.mxu0 %v6542
    %10012 = vmatmul.mubr.bf16.gmra.mrb[0].mxu0 %v6541
    %v10013 = vpop.f32.mrb[0].mxu0
    %v10014 = vadd.f32 %v9901, %v10013
    %v10015 = vpop.f32.mrb[0].mxu0
    %v10016 = vadd.f32 %v9903, %v10015
    %v10017 = vpop.f32.mrb[0].mxu0
    %v10018 = vadd.f32 %v9905, %v10017
    %v10019 = vpop.f32.mrb[0].mxu0
    %v10020 = vadd.f32 %v9907, %v10019
    %10021 = vmatprep.mubr.bf16.mxu0 %v6558
    %10022 = vmatmul.mubr.bf16.gmra.mrb[0].mxu0 %v6557
    %v10023 = vpop.f32.mrb[0].mxu0
    %v10024 = vadd.f32 %v9911, %v10023
    %v10025 = vpop.f32.mrb[0].mxu0
    %v10026 = vadd.f32 %v9913, %v10025
    %v10027 = vpop.f32.mrb[0].mxu0
    %v10028 = vadd.f32 %v9915, %v10027
    %v10029 = vpop.f32.mrb[0].mxu0
    %v10030 = vadd.f32 %v9917, %v10029
    %10031 = vmatprep.mubr.bf16.mxu0 %v6574
    %10032 = vmatmul.mubr.bf16.gmra.mrb[0].mxu0 %v6573
    %v10033 = vpop.f32.mrb[0].mxu0
    %v10034 = vadd.f32 %v9921, %v10033
    %v10035 = vpop.f32.mrb[0].mxu0
    %v10036 = vadd.f32 %v9923, %v10035
    %v10037 = vpop.f32.mrb[0].mxu0
    %v10038 = vadd.f32 %v9925, %v10037
    %v10039 = vpop.f32.mrb[0].mxu0
    %v10040 = vadd.f32 %v9927, %v10039
    %10041 = vmatprep.mubr.bf16.mxu0 %v6590
    %10042 = vmatmul.mubr.bf16.gmra.mrb[0].mxu0 %v6589
    %v10043 = vpop.f32.mrb[0].mxu0
    %v10044 = vadd.f32 %v9931, %v10043
    %v10045 = vpop.f32.mrb[0].mxu0
    %v10046 = vadd.f32 %v9933, %v10045
    %v10047 = vpop.f32.mrb[0].mxu0
    %v10048 = vadd.f32 %v9935, %v10047
    %v10049 = vpop.f32.mrb[0].mxu0
    %v10050 = vadd.f32 %v9937, %v10049
    %10051 = vmatprep.mubr.bf16.mxu0 %v6606
    %10052 = vmatmul.mubr.bf16.gmra.mrb[0].mxu0 %v6605
    %v10053 = vpop.f32.mrb[0].mxu0
    %v10054 = vadd.f32 %v9941, %v10053
    %v10055 = vpop.f32.mrb[0].mxu0
    %v10056 = vadd.f32 %v9943, %v10055
    %v10057 = vpop.f32.mrb[0].mxu0
    %v10058 = vadd.f32 %v9945, %v10057
    %v10059 = vpop.f32.mrb[0].mxu0
    %v10060 = vadd.f32 %v9947, %v10059
    %10061 = vmatprep.mubr.bf16.mxu0 %v6622
    %10062 = vmatmul.mubr.bf16.gmra.mrb[0].mxu0 %v6621
    %v10063 = vpop.f32.mrb[0].mxu0
    %v10064 = vadd.f32 %v9951, %v10063
    %v10065 = vpop.f32.mrb[0].mxu0
    %v10066 = vadd.f32 %v9953, %v10065
    %v10067 = vpop.f32.mrb[0].mxu0
    %v10068 = vadd.f32 %v9955, %v10067
    %v10069 = vpop.f32.mrb[0].mxu0
    %v10070 = vadd.f32 %v9957, %v10069
    %10071 = vmatprep.mubr.bf16.mxu0 %v6638
    %10072 = vmatmul.mubr.bf16.gmra.mrb[0].mxu0 %v6637
    %v10073 = vpop.f32.mrb[0].mxu0
    %v10074 = vadd.f32 %v9961, %v10073
    %v10075 = vpop.f32.mrb[0].mxu0
    %v10076 = vadd.f32 %v9963, %v10075
    %v10077 = vpop.f32.mrb[0].mxu0
    %v10078 = vadd.f32 %v9965, %v10077
    %v10079 = vpop.f32.mrb[0].mxu0
    %v10080 = vadd.f32 %v9967, %v10079
    %10081 = vdwg.mxu0
    %10082 = vmatprep.subr.bf16.mxu0 %v8912
    %10083 = vmatpush1.bf16.msra.mxu0 %v8911
    %10084 = vmatprep.subr.bf16.mxu0 %v8916
    %10085 = vmatpush1.bf16.msra.mxu0 %v8915
    %10086 = vmatprep.subr.bf16.mxu0 %v8920
    %10087 = vmatpush1.bf16.msra.mxu0 %v8919
    %10088 = vmatprep.subr.bf16.mxu0 %v8924
    %10089 = vmatpush1.bf16.msra.mxu0 %v8923
    %10090 = vmatprep.subr.bf16.mxu0 %v8928
    %10091 = vmatpush1.bf16.msra.mxu0 %v8927
    %10092 = vmatprep.subr.bf16.mxu0 %v8932
    %10093 = vmatpush1.bf16.msra.mxu0 %v8931
    %10094 = vmatprep.subr.bf16.mxu0 %v8936
    %10095 = vmatpush1.bf16.msra.mxu0 %v8935
    %10096 = vmatprep.subr.bf16.mxu0 %v8940
    %10097 = vmatpush1.bf16.msra.mxu0 %v8939
    %10098 = vmatprep.subr.bf16.mxu0 %v8944
    %10099 = vmatpush1.bf16.msra.mxu0 %v8943
    %10100 = vmatprep.subr.bf16.mxu0 %v8948
    %10101 = vmatpush1.bf16.msra.mxu0 %v8947
    %10102 = vmatprep.subr.bf16.mxu0 %v8952
    %10103 = vmatpush1.bf16.msra.mxu0 %v8951
    %10104 = vmatprep.subr.bf16.mxu0 %v8956
    %10105 = vmatpush1.bf16.msra.mxu0 %v8955
    %10106 = vmatprep.subr.bf16.mxu0 %v8960
    %10107 = vmatpush1.bf16.msra.mxu0 %v8959
    %10108 = vmatprep.subr.bf16.mxu0 %v8964
    %10109 = vmatpush1.bf16.msra.mxu0 %v8963
    %10110 = vmatprep.subr.bf16.mxu0 %v8968
    %10111 = vmatpush1.bf16.msra.mxu0 %v8967
    %10112 = vmatprep.subr.bf16.mxu0 %v8972
    %10113 = vmatpush1.bf16.msra.mxu0 %v8971
    %10114 = vmatprep.mubr.bf16.mxu0 %v6528
    %10115 = vmatmul.mubr.bf16.gmra.mrb[0].mxu0 %v6527
    %v10116 = vpop.f32.mrb[0].mxu0
    %v10117 = vadd.f32 %v10004, %v10116
    %v10118 = vpop.f32.mrb[0].mxu0
    %v10119 = vadd.f32 %v10006, %v10118
    %v10120 = vpop.f32.mrb[0].mxu0
    %v10121 = vadd.f32 %v10008, %v10120
    %v10122 = vpop.f32.mrb[0].mxu0
    %v10123 = vadd.f32 %v10010, %v10122
    %10124 = vmatprep.mubr.bf16.mxu0 %v6544
    %10125 = vmatmul.mubr.bf16.gmra.mrb[0].mxu0 %v6543
    %v10126 = vpop.f32.mrb[0].mxu0
    %v10127 = vadd.f32 %v10014, %v10126
    %v10128 = vpop.f32.mrb[0].mxu0
    %v10129 = vadd.f32 %v10016, %v10128
    %v10130 = vpop.f32.mrb[0].mxu0
    %v10131 = vadd.f32 %v10018, %v10130
    %v10132 = vpop.f32.mrb[0].mxu0
    %v10133 = vadd.f32 %v10020, %v10132
    %10134 = vmatprep.mubr.bf16.mxu0 %v6560
    %10135 = vmatmul.mubr.bf16.gmra.mrb[0].mxu0 %v6559
    %v10136 = vpop.f32.mrb[0].mxu0
    %v10137 = vadd.f32 %v10024, %v10136
    %v10138 = vpop.f32.mrb[0].mxu0
    %v10139 = vadd.f32 %v10026, %v10138
    %v10140 = vpop.f32.mrb[0].mxu0
    %v10141 = vadd.f32 %v10028, %v10140
    %v10142 = vpop.f32.mrb[0].mxu0
    %v10143 = vadd.f32 %v10030, %v10142
    %10144 = vmatprep.mubr.bf16.mxu0 %v6576
    %10145 = vmatmul.mubr.bf16.gmra.mrb[0].mxu0 %v6575
    %v10146 = vpop.f32.mrb[0].mxu0
    %v10147 = vadd.f32 %v10034, %v10146
    %v10148 = vpop.f32.mrb[0].mxu0
    %v10149 = vadd.f32 %v10036, %v10148
    %v10150 = vpop.f32.mrb[0].mxu0
    %v10151 = vadd.f32 %v10038, %v10150
    %v10152 = vpop.f32.mrb[0].mxu0
    %v10153 = vadd.f32 %v10040, %v10152
    %10154 = vmatprep.mubr.bf16.mxu0 %v6592
    %10155 = vmatmul.mubr.bf16.gmra.mrb[0].mxu0 %v6591
    %v10156 = vpop.f32.mrb[0].mxu0
    %v10157 = vadd.f32 %v10044, %v10156
    %v10158 = vpop.f32.mrb[0].mxu0
    %v10159 = vadd.f32 %v10046, %v10158
    %v10160 = vpop.f32.mrb[0].mxu0
    %v10161 = vadd.f32 %v10048, %v10160
    %v10162 = vpop.f32.mrb[0].mxu0
    %v10163 = vadd.f32 %v10050, %v10162
    %10164 = vmatprep.mubr.bf16.mxu0 %v6608
    %10165 = vmatmul.mubr.bf16.gmra.mrb[0].mxu0 %v6607
    %v10166 = vpop.f32.mrb[0].mxu0
    %v10167 = vadd.f32 %v10054, %v10166
    %v10168 = vpop.f32.mrb[0].mxu0
    %v10169 = vadd.f32 %v10056, %v10168
    %v10170 = vpop.f32.mrb[0].mxu0
    %v10171 = vadd.f32 %v10058, %v10170
    %v10172 = vpop.f32.mrb[0].mxu0
    %v10173 = vadd.f32 %v10060, %v10172
    %10174 = vmatprep.mubr.bf16.mxu0 %v6624
    %10175 = vmatmul.mubr.bf16.gmra.mrb[0].mxu0 %v6623
    %v10176 = vpop.f32.mrb[0].mxu0
    %v10177 = vadd.f32 %v10064, %v10176
    %v10178 = vpop.f32.mrb[0].mxu0
    %v10179 = vadd.f32 %v10066, %v10178
    %v10180 = vpop.f32.mrb[0].mxu0
    %v10181 = vadd.f32 %v10068, %v10180
    %v10182 = vpop.f32.mrb[0].mxu0
    %v10183 = vadd.f32 %v10070, %v10182
    %10184 = vmatprep.mubr.bf16.mxu0 %v6640
    %10185 = vmatmul.mubr.bf16.gmra.mrb[0].mxu0 %v6639
    %v10186 = vpop.f32.mrb[0].mxu0
    %v10187 = vadd.f32 %v10074, %v10186
    %v10188 = vpop.f32.mrb[0].mxu0
    %v10189 = vadd.f32 %v10076, %v10188
    %v10190 = vpop.f32.mrb[0].mxu0
    %v10191 = vadd.f32 %v10078, %v10190
    %v10192 = vpop.f32.mrb[0].mxu0
    %v10193 = vadd.f32 %v10080, %v10192
    %10194 = vdwg.mxu0
    %10195 = vmatprep.subr.bf16.mxu0 %v8976
    %10196 = vmatpush1.bf16.msra.mxu0 %v8975
    %10197 = vmatprep.subr.bf16.mxu0 %v8980
    %10198 = vmatpush1.bf16.msra.mxu0 %v8979
    %10199 = vmatprep.subr.bf16.mxu0 %v8984
    %10200 = vmatpush1.bf16.msra.mxu0 %v8983
    %10201 = vmatprep.subr.bf16.mxu0 %v8988
    %10202 = vmatpush1.bf16.msra.mxu0 %v8987
    %10203 = vmatprep.subr.bf16.mxu0 %v8992
    %10204 = vmatpush1.bf16.msra.mxu0 %v8991
    %10205 = vmatprep.subr.bf16.mxu0 %v8996
    %10206 = vmatpush1.bf16.msra.mxu0 %v8995
    %10207 = vmatprep.subr.bf16.mxu0 %v9000
    %10208 = vmatpush1.bf16.msra.mxu0 %v8999
    %10209 = vmatprep.subr.bf16.mxu0 %v9004
    %10210 = vmatpush1.bf16.msra.mxu0 %v9003
    %10211 = vmatprep.subr.bf16.mxu0 %v9008
    %10212 = vmatpush1.bf16.msra.mxu0 %v9007
    %10213 = vmatprep.subr.bf16.mxu0 %v9012
    %10214 = vmatpush1.bf16.msra.mxu0 %v9011
    %10215 = vmatprep.subr.bf16.mxu0 %v9016
    %10216 = vmatpush1.bf16.msra.mxu0 %v9015
    %10217 = vmatprep.subr.bf16.mxu0 %v9020
    %10218 = vmatpush1.bf16.msra.mxu0 %v9019
    %10219 = vmatprep.subr.bf16.mxu0 %v9024
    %10220 = vmatpush1.bf16.msra.mxu0 %v9023
    %10221 = vmatprep.subr.bf16.mxu0 %v9028
    %10222 = vmatpush1.bf16.msra.mxu0 %v9027
    %10223 = vmatprep.subr.bf16.mxu0 %v9032
    %10224 = vmatpush1.bf16.msra.mxu0 %v9031
    %10225 = vmatprep.subr.bf16.mxu0 %v9036
    %10226 = vmatpush1.bf16.msra.mxu0 %v9035
    %10227 = vmatprep.mubr.bf16.mxu0 %v6530
    %10228 = vmatmul.mubr.bf16.gmra.mrb[0].mxu0 %v6529
    %v10229 = vpop.f32.mrb[0].mxu0
    %v10230 = vadd.f32 %v10117, %v10229
    %v10231 = vpop.f32.mrb[0].mxu0
    %v10232 = vadd.f32 %v10119, %v10231
    %v10233 = vpop.f32.mrb[0].mxu0
    %v10234 = vadd.f32 %v10121, %v10233
    %v10235 = vpop.f32.mrb[0].mxu0
    %v10236 = vadd.f32 %v10123, %v10235
    %10237 = vmatprep.mubr.bf16.mxu0 %v6546
    %10238 = vmatmul.mubr.bf16.gmra.mrb[0].mxu0 %v6545
    %v10239 = vpop.f32.mrb[0].mxu0
    %v10240 = vadd.f32 %v10127, %v10239
    %v10241 = vpop.f32.mrb[0].mxu0
    %v10242 = vadd.f32 %v10129, %v10241
    %v10243 = vpop.f32.mrb[0].mxu0
    %v10244 = vadd.f32 %v10131, %v10243
    %v10245 = vpop.f32.mrb[0].mxu0
    %v10246 = vadd.f32 %v10133, %v10245
    %10247 = vmatprep.mubr.bf16.mxu0 %v6562
    %10248 = vmatmul.mubr.bf16.gmra.mrb[0].mxu0 %v6561
    %v10249 = vpop.f32.mrb[0].mxu0
    %v10250 = vadd.f32 %v10137, %v10249
    %v10251 = vpop.f32.mrb[0].mxu0
    %v10252 = vadd.f32 %v10139, %v10251
    %v10253 = vpop.f32.mrb[0].mxu0
    %v10254 = vadd.f32 %v10141, %v10253
    %v10255 = vpop.f32.mrb[0].mxu0
    %v10256 = vadd.f32 %v10143, %v10255
    %10257 = vmatprep.mubr.bf16.mxu0 %v6578
    %10258 = vmatmul.mubr.bf16.gmra.mrb[0].mxu0 %v6577
    %v10259 = vpop.f32.mrb[0].mxu0
    %v10260 = vadd.f32 %v10147, %v10259
    %v10261 = vpop.f32.mrb[0].mxu0
    %v10262 = vadd.f32 %v10149, %v10261
    %v10263 = vpop.f32.mrb[0].mxu0
    %v10264 = vadd.f32 %v10151, %v10263
    %v10265 = vpop.f32.mrb[0].mxu0
    %v10266 = vadd.f32 %v10153, %v10265
    %10267 = vmatprep.mubr.bf16.mxu0 %v6594
    %10268 = vmatmul.mubr.bf16.gmra.mrb[0].mxu0 %v6593
    %v10269 = vpop.f32.mrb[0].mxu0
    %v10270 = vadd.f32 %v10157, %v10269
    %v10271 = vpop.f32.mrb[0].mxu0
    %v10272 = vadd.f32 %v10159, %v10271
    %v10273 = vpop.f32.mrb[0].mxu0
    %v10274 = vadd.f32 %v10161, %v10273
    %v10275 = vpop.f32.mrb[0].mxu0
    %v10276 = vadd.f32 %v10163, %v10275
    %10277 = vmatprep.mubr.bf16.mxu0 %v6610
    %10278 = vmatmul.mubr.bf16.gmra.mrb[0].mxu0 %v6609
    %v10279 = vpop.f32.mrb[0].mxu0
    %v10280 = vadd.f32 %v10167, %v10279
    %v10281 = vpop.f32.mrb[0].mxu0
    %v10282 = vadd.f32 %v10169, %v10281
    %v10283 = vpop.f32.mrb[0].mxu0
    %v10284 = vadd.f32 %v10171, %v10283
    %v10285 = vpop.f32.mrb[0].mxu0
    %v10286 = vadd.f32 %v10173, %v10285
    %10287 = vmatprep.mubr.bf16.mxu0 %v6626
    %10288 = vmatmul.mubr.bf16.gmra.mrb[0].mxu0 %v6625
    %v10289 = vpop.f32.mrb[0].mxu0
    %v10290 = vadd.f32 %v10177, %v10289
    %v10291 = vpop.f32.mrb[0].mxu0
    %v10292 = vadd.f32 %v10179, %v10291
    %v10293 = vpop.f32.mrb[0].mxu0
    %v10294 = vadd.f32 %v10181, %v10293
    %v10295 = vpop.f32.mrb[0].mxu0
    %v10296 = vadd.f32 %v10183, %v10295
    %10297 = vmatprep.mubr.bf16.mxu0 %v6642
    %10298 = vmatmul.mubr.bf16.gmra.mrb[0].mxu0 %v6641
    %v10299 = vpop.f32.mrb[0].mxu0
    %v10300 = vadd.f32 %v10187, %v10299
    %v10301 = vpop.f32.mrb[0].mxu0
    %v10302 = vadd.f32 %v10189, %v10301
    %v10303 = vpop.f32.mrb[0].mxu0
    %v10304 = vadd.f32 %v10191, %v10303
    %v10305 = vpop.f32.mrb[0].mxu0
    %v10306 = vadd.f32 %v10193, %v10305
    %10307 = vdwg.mxu0
    %10308 = vmatprep.subr.bf16.mxu0 %v9040
    %10309 = vmatpush1.bf16.msra.mxu0 %v9039
    %10310 = vmatprep.subr.bf16.mxu0 %v9044
    %10311 = vmatpush1.bf16.msra.mxu0 %v9043
    %10312 = vmatprep.subr.bf16.mxu0 %v9048
    %10313 = vmatpush1.bf16.msra.mxu0 %v9047
    %10314 = vmatprep.subr.bf16.mxu0 %v9052
    %10315 = vmatpush1.bf16.msra.mxu0 %v9051
    %10316 = vmatprep.subr.bf16.mxu0 %v9056
    %10317 = vmatpush1.bf16.msra.mxu0 %v9055
    %10318 = vmatprep.subr.bf16.mxu0 %v9060
    %10319 = vmatpush1.bf16.msra.mxu0 %v9059
    %10320 = vmatprep.subr.bf16.mxu0 %v9064
    %10321 = vmatpush1.bf16.msra.mxu0 %v9063
    %10322 = vmatprep.subr.bf16.mxu0 %v9068
    %10323 = vmatpush1.bf16.msra.mxu0 %v9067
    %10324 = vmatprep.subr.bf16.mxu0 %v9072
    %10325 = vmatpush1.bf16.msra.mxu0 %v9071
    %10326 = vmatprep.subr.bf16.mxu0 %v9076
    %10327 = vmatpush1.bf16.msra.mxu0 %v9075
    %10328 = vmatprep.subr.bf16.mxu0 %v9080
    %10329 = vmatpush1.bf16.msra.mxu0 %v9079
    %10330 = vmatprep.subr.bf16.mxu0 %v9084
    %10331 = vmatpush1.bf16.msra.mxu0 %v9083
    %10332 = vmatprep.subr.bf16.mxu0 %v9088
    %10333 = vmatpush1.bf16.msra.mxu0 %v9087
    %10334 = vmatprep.subr.bf16.mxu0 %v9092
    %10335 = vmatpush1.bf16.msra.mxu0 %v9091
    %10336 = vmatprep.subr.bf16.mxu0 %v9096
    %10337 = vmatpush1.bf16.msra.mxu0 %v9095
    %10338 = vmatprep.subr.bf16.mxu0 %v9100
    %10339 = vmatpush1.bf16.msra.mxu0 %v9099
    %10340 = vmatprep.mubr.bf16.mxu0 %v6532
    %10341 = vmatmul.mubr.bf16.gmra.mrb[0].mxu0 %v6531
    %v10342 = vpop.f32.mrb[0].mxu0
    %v10343 = vadd.f32 %v10230, %v10342
    %v10344 = vpop.f32.mrb[0].mxu0
    %v10345 = vadd.f32 %v10232, %v10344
    %v10346 = vpop.f32.mrb[0].mxu0
    %v10347 = vadd.f32 %v10234, %v10346
    %v10348 = vpop.f32.mrb[0].mxu0
    %v10349 = vadd.f32 %v10236, %v10348
    %10350 = vmatprep.mubr.bf16.mxu0 %v6548
    %10351 = vmatmul.mubr.bf16.gmra.mrb[0].mxu0 %v6547
    %v10352 = vpop.f32.mrb[0].mxu0
    %v10353 = vadd.f32 %v10240, %v10352
    %v10354 = vpop.f32.mrb[0].mxu0
    %v10355 = vadd.f32 %v10242, %v10354
    %v10356 = vpop.f32.mrb[0].mxu0
    %v10357 = vadd.f32 %v10244, %v10356
    %v10358 = vpop.f32.mrb[0].mxu0
    %v10359 = vadd.f32 %v10246, %v10358
    %10360 = vmatprep.mubr.bf16.mxu0 %v6564
    %10361 = vmatmul.mubr.bf16.gmra.mrb[0].mxu0 %v6563
    %v10362 = vpop.f32.mrb[0].mxu0
    %v10363 = vadd.f32 %v10250, %v10362
    %v10364 = vpop.f32.mrb[0].mxu0
    %v10365 = vadd.f32 %v10252, %v10364
    %v10366 = vpop.f32.mrb[0].mxu0
    %v10367 = vadd.f32 %v10254, %v10366
    %v10368 = vpop.f32.mrb[0].mxu0
    %v10369 = vadd.f32 %v10256, %v10368
    %10370 = vmatprep.mubr.bf16.mxu0 %v6580
    %10371 = vmatmul.mubr.bf16.gmra.mrb[0].mxu0 %v6579
    %v10372 = vpop.f32.mrb[0].mxu0
    %v10373 = vadd.f32 %v10260, %v10372
    %v10374 = vpop.f32.mrb[0].mxu0
    %v10375 = vadd.f32 %v10262, %v10374
    %v10376 = vpop.f32.mrb[0].mxu0
    %v10377 = vadd.f32 %v10264, %v10376
    %v10378 = vpop.f32.mrb[0].mxu0
    %v10379 = vadd.f32 %v10266, %v10378
    %10380 = vmatprep.mubr.bf16.mxu0 %v6596
    %10381 = vmatmul.mubr.bf16.gmra.mrb[0].mxu0 %v6595
    %v10382 = vpop.f32.mrb[0].mxu0
    %v10383 = vadd.f32 %v10270, %v10382
    %v10384 = vpop.f32.mrb[0].mxu0
    %v10385 = vadd.f32 %v10272, %v10384
    %v10386 = vpop.f32.mrb[0].mxu0
    %v10387 = vadd.f32 %v10274, %v10386
    %v10388 = vpop.f32.mrb[0].mxu0
    %v10389 = vadd.f32 %v10276, %v10388
    %10390 = vmatprep.mubr.bf16.mxu0 %v6612
    %10391 = vmatmul.mubr.bf16.gmra.mrb[0].mxu0 %v6611
    %v10392 = vpop.f32.mrb[0].mxu0
    %v10393 = vadd.f32 %v10280, %v10392
    %v10394 = vpop.f32.mrb[0].mxu0
    %v10395 = vadd.f32 %v10282, %v10394
    %v10396 = vpop.f32.mrb[0].mxu0
    %v10397 = vadd.f32 %v10284, %v10396
    %v10398 = vpop.f32.mrb[0].mxu0
    %v10399 = vadd.f32 %v10286, %v10398
    %10400 = vmatprep.mubr.bf16.mxu0 %v6628
    %10401 = vmatmul.mubr.bf16.gmra.mrb[0].mxu0 %v6627
    %v10402 = vpop.f32.mrb[0].mxu0
    %v10403 = vadd.f32 %v10290, %v10402
    %v10404 = vpop.f32.mrb[0].mxu0
    %v10405 = vadd.f32 %v10292, %v10404
    %v10406 = vpop.f32.mrb[0].mxu0
    %v10407 = vadd.f32 %v10294, %v10406
    %v10408 = vpop.f32.mrb[0].mxu0
    %v10409 = vadd.f32 %v10296, %v10408
    %10410 = vmatprep.mubr.bf16.mxu0 %v6644
    %10411 = vmatmul.mubr.bf16.gmra.mrb[0].mxu0 %v6643
    %v10412 = vpop.f32.mrb[0].mxu0
    %v10413 = vadd.f32 %v10300, %v10412
    %v10414 = vpop.f32.mrb[0].mxu0
    %v10415 = vadd.f32 %v10302, %v10414
    %v10416 = vpop.f32.mrb[0].mxu0
    %v10417 = vadd.f32 %v10304, %v10416
    %v10418 = vpop.f32.mrb[0].mxu0
    %v10419 = vadd.f32 %v10306, %v10418
    %10420 = vdwg.mxu0
    %10421 = vmatprep.subr.bf16.mxu0 %v9104
    %10422 = vmatpush1.bf16.msra.mxu0 %v9103
    %10423 = vmatprep.subr.bf16.mxu0 %v9108
    %10424 = vmatpush1.bf16.msra.mxu0 %v9107
    %10425 = vmatprep.subr.bf16.mxu0 %v9112
    %10426 = vmatpush1.bf16.msra.mxu0 %v9111
    %10427 = vmatprep.subr.bf16.mxu0 %v9116
    %10428 = vmatpush1.bf16.msra.mxu0 %v9115
    %10429 = vmatprep.subr.bf16.mxu0 %v9120
    %10430 = vmatpush1.bf16.msra.mxu0 %v9119
    %10431 = vmatprep.subr.bf16.mxu0 %v9124
    %10432 = vmatpush1.bf16.msra.mxu0 %v9123
    %10433 = vmatprep.subr.bf16.mxu0 %v9128
    %10434 = vmatpush1.bf16.msra.mxu0 %v9127
    %10435 = vmatprep.subr.bf16.mxu0 %v9132
    %10436 = vmatpush1.bf16.msra.mxu0 %v9131
    %10437 = vmatprep.subr.bf16.mxu0 %v9136
    %10438 = vmatpush1.bf16.msra.mxu0 %v9135
    %10439 = vmatprep.subr.bf16.mxu0 %v9140
    %10440 = vmatpush1.bf16.msra.mxu0 %v9139
    %10441 = vmatprep.subr.bf16.mxu0 %v9144
    %10442 = vmatpush1.bf16.msra.mxu0 %v9143
    %10443 = vmatprep.subr.bf16.mxu0 %v9148
    %10444 = vmatpush1.bf16.msra.mxu0 %v9147
    %10445 = vmatprep.subr.bf16.mxu0 %v9152
    %10446 = vmatpush1.bf16.msra.mxu0 %v9151
    %10447 = vmatprep.subr.bf16.mxu0 %v9156
    %10448 = vmatpush1.bf16.msra.mxu0 %v9155
    %10449 = vmatprep.subr.bf16.mxu0 %v9160
    %10450 = vmatpush1.bf16.msra.mxu0 %v9159
    %10451 = vmatprep.subr.bf16.mxu0 %v9164
    %10452 = vmatpush1.bf16.msra.mxu0 %v9163
    %10453 = vmatprep.mubr.bf16.mxu0 %v6534
    %10454 = vmatmul.mubr.bf16.gmra.mrb[0].mxu0 %v6533
    %v10455 = vpop.f32.mrb[0].mxu0
    %v10456 = vadd.f32 %v10343, %v10455
    %v10457 = vpop.f32.mrb[0].mxu0
    %v10458 = vadd.f32 %v10345, %v10457
    %v10459 = vpop.f32.mrb[0].mxu0
    %v10460 = vadd.f32 %v10347, %v10459
    %v10461 = vpop.f32.mrb[0].mxu0
    %v10462 = vadd.f32 %v10349, %v10461
    %10463 = vmatprep.mubr.bf16.mxu0 %v6550
    %10464 = vmatmul.mubr.bf16.gmra.mrb[0].mxu0 %v6549
    %v10465 = vpop.f32.mrb[0].mxu0
    %v10466 = vadd.f32 %v10353, %v10465
    %v10467 = vpop.f32.mrb[0].mxu0
    %v10468 = vadd.f32 %v10355, %v10467
    %v10469 = vpop.f32.mrb[0].mxu0
    %v10470 = vadd.f32 %v10357, %v10469
    %v10471 = vpop.f32.mrb[0].mxu0
    %v10472 = vadd.f32 %v10359, %v10471
    %10473 = vmatprep.mubr.bf16.mxu0 %v6566
    %10474 = vmatmul.mubr.bf16.gmra.mrb[0].mxu0 %v6565
    %v10475 = vpop.f32.mrb[0].mxu0
    %v10476 = vadd.f32 %v10363, %v10475
    %v10477 = vpop.f32.mrb[0].mxu0
    %v10478 = vadd.f32 %v10365, %v10477
    %v10479 = vpop.f32.mrb[0].mxu0
    %v10480 = vadd.f32 %v10367, %v10479
    %v10481 = vpop.f32.mrb[0].mxu0
    %v10482 = vadd.f32 %v10369, %v10481
    %10483 = vmatprep.mubr.bf16.mxu0 %v6582
    %10484 = vmatmul.mubr.bf16.gmra.mrb[0].mxu0 %v6581
    %v10485 = vpop.f32.mrb[0].mxu0
    %v10486 = vadd.f32 %v10373, %v10485
    %v10487 = vpop.f32.mrb[0].mxu0
    %v10488 = vadd.f32 %v10375, %v10487
    %v10489 = vpop.f32.mrb[0].mxu0
    %v10490 = vadd.f32 %v10377, %v10489
    %v10491 = vpop.f32.mrb[0].mxu0
    %v10492 = vadd.f32 %v10379, %v10491
    %10493 = vmatprep.mubr.bf16.mxu0 %v6598
    %10494 = vmatmul.mubr.bf16.gmra.mrb[0].mxu0 %v6597
    %v10495 = vpop.f32.mrb[0].mxu0
    %v10496 = vadd.f32 %v10383, %v10495
    %v10497 = vpop.f32.mrb[0].mxu0
    %v10498 = vadd.f32 %v10385, %v10497
    %v10499 = vpop.f32.mrb[0].mxu0
    %v10500 = vadd.f32 %v10387, %v10499
    %v10501 = vpop.f32.mrb[0].mxu0
    %v10502 = vadd.f32 %v10389, %v10501
    %10503 = vmatprep.mubr.bf16.mxu0 %v6614
    %10504 = vmatmul.mubr.bf16.gmra.mrb[0].mxu0 %v6613
    %v10505 = vpop.f32.mrb[0].mxu0
    %v10506 = vadd.f32 %v10393, %v10505
    %v10507 = vpop.f32.mrb[0].mxu0
    %v10508 = vadd.f32 %v10395, %v10507
    %v10509 = vpop.f32.mrb[0].mxu0
    %v10510 = vadd.f32 %v10397, %v10509
    %v10511 = vpop.f32.mrb[0].mxu0
    %v10512 = vadd.f32 %v10399, %v10511
    %10513 = vmatprep.mubr.bf16.mxu0 %v6630
    %10514 = vmatmul.mubr.bf16.gmra.mrb[0].mxu0 %v6629
    %v10515 = vpop.f32.mrb[0].mxu0
    %v10516 = vadd.f32 %v10403, %v10515
    %v10517 = vpop.f32.mrb[0].mxu0
    %v10518 = vadd.f32 %v10405, %v10517
    %v10519 = vpop.f32.mrb[0].mxu0
    %v10520 = vadd.f32 %v10407, %v10519
    %v10521 = vpop.f32.mrb[0].mxu0
    %v10522 = vadd.f32 %v10409, %v10521
    %10523 = vmatprep.mubr.bf16.mxu0 %v6646
    %10524 = vmatmul.mubr.bf16.gmra.mrb[0].mxu0 %v6645
    %v10525 = vpop.f32.mrb[0].mxu0
    %v10526 = vadd.f32 %v10413, %v10525
    %v10527 = vpop.f32.mrb[0].mxu0
    %v10528 = vadd.f32 %v10415, %v10527
    %v10529 = vpop.f32.mrb[0].mxu0
    %v10530 = vadd.f32 %v10417, %v10529
    %v10531 = vpop.f32.mrb[0].mxu0
    %v10532 = vadd.f32 %v10419, %v10531
    %10533 = vdwg.mxu0
    %10534 = vmatprep.subr.bf16.mxu0 %v9168
    %10535 = vmatpush1.bf16.msra.mxu0 %v9167
    %10536 = vmatprep.subr.bf16.mxu0 %v9172
    %10537 = vmatpush1.bf16.msra.mxu0 %v9171
    %10538 = vmatprep.subr.bf16.mxu0 %v9176
    %10539 = vmatpush1.bf16.msra.mxu0 %v9175
    %10540 = vmatprep.subr.bf16.mxu0 %v9180
    %10541 = vmatpush1.bf16.msra.mxu0 %v9179
    %10542 = vmatprep.subr.bf16.mxu0 %v9184
    %10543 = vmatpush1.bf16.msra.mxu0 %v9183
    %10544 = vmatprep.subr.bf16.mxu0 %v9188
    %10545 = vmatpush1.bf16.msra.mxu0 %v9187
    %10546 = vmatprep.subr.bf16.mxu0 %v9192
    %10547 = vmatpush1.bf16.msra.mxu0 %v9191
    %10548 = vmatprep.subr.bf16.mxu0 %v9196
    %10549 = vmatpush1.bf16.msra.mxu0 %v9195
    %10550 = vmatprep.subr.bf16.mxu0 %v9200
    %10551 = vmatpush1.bf16.msra.mxu0 %v9199
    %10552 = vmatprep.subr.bf16.mxu0 %v9204
    %10553 = vmatpush1.bf16.msra.mxu0 %v9203
    %10554 = vmatprep.subr.bf16.mxu0 %v9208
    %10555 = vmatpush1.bf16.msra.mxu0 %v9207
    %10556 = vmatprep.subr.bf16.mxu0 %v9212
    %10557 = vmatpush1.bf16.msra.mxu0 %v9211
    %10558 = vmatprep.subr.bf16.mxu0 %v9216
    %10559 = vmatpush1.bf16.msra.mxu0 %v9215
    %10560 = vmatprep.subr.bf16.mxu0 %v9220
    %10561 = vmatpush1.bf16.msra.mxu0 %v9219
    %10562 = vmatprep.subr.bf16.mxu0 %v9224
    %10563 = vmatpush1.bf16.msra.mxu0 %v9223
    %10564 = vmatprep.subr.bf16.mxu0 %v9228
    %10565 = vmatpush1.bf16.msra.mxu0 %v9227
    %10566 = vmatprep.mubr.bf16.mxu0 %v6536
    %10567 = vmatmul.mubr.bf16.gmra.mrb[0].mxu0 %v6535
    %v10568 = vpop.f32.mrb[0].mxu0
    %v10569 = vadd.f32 %v10456, %v10568
    %v10570 = vpop.f32.mrb[0].mxu0
    %v10571 = vadd.f32 %v10458, %v10570
    %v10572 = vpop.f32.mrb[0].mxu0
    %v10573 = vadd.f32 %v10460, %v10572
    %v10574 = vpop.f32.mrb[0].mxu0
    %v10575 = vadd.f32 %v10462, %v10574
    %10576 = vmatprep.mubr.bf16.mxu0 %v6552
    %10577 = vmatmul.mubr.bf16.gmra.mrb[0].mxu0 %v6551
    %v10578 = vpop.f32.mrb[0].mxu0
    %v10579 = vadd.f32 %v10466, %v10578
    %v10580 = vpop.f32.mrb[0].mxu0
    %v10581 = vadd.f32 %v10468, %v10580
    %v10582 = vpop.f32.mrb[0].mxu0
    %v10583 = vadd.f32 %v10470, %v10582
    %v10584 = vpop.f32.mrb[0].mxu0
    %v10585 = vadd.f32 %v10472, %v10584
    %10586 = vmatprep.mubr.bf16.mxu0 %v6568
    %10587 = vmatmul.mubr.bf16.gmra.mrb[0].mxu0 %v6567
    %v10588 = vpop.f32.mrb[0].mxu0
    %v10589 = vadd.f32 %v10476, %v10588
    %v10590 = vpop.f32.mrb[0].mxu0
    %v10591 = vadd.f32 %v10478, %v10590
    %v10592 = vpop.f32.mrb[0].mxu0
    %v10593 = vadd.f32 %v10480, %v10592
    %v10594 = vpop.f32.mrb[0].mxu0
    %v10595 = vadd.f32 %v10482, %v10594
    %10596 = vmatprep.mubr.bf16.mxu0 %v6584
    %10597 = vmatmul.mubr.bf16.gmra.mrb[0].mxu0 %v6583
    %v10598 = vpop.f32.mrb[0].mxu0
    %v10599 = vadd.f32 %v10486, %v10598
    %v10600 = vpop.f32.mrb[0].mxu0
    %v10601 = vadd.f32 %v10488, %v10600
    %v10602 = vpop.f32.mrb[0].mxu0
    %v10603 = vadd.f32 %v10490, %v10602
    %v10604 = vpop.f32.mrb[0].mxu0
    %v10605 = vadd.f32 %v10492, %v10604
    %10606 = vmatprep.mubr.bf16.mxu0 %v6600
    %10607 = vmatmul.mubr.bf16.gmra.mrb[0].mxu0 %v6599
    %v10608 = vpop.f32.mrb[0].mxu0
    %v10609 = vadd.f32 %v10496, %v10608
    %v10610 = vpop.f32.mrb[0].mxu0
    %v10611 = vadd.f32 %v10498, %v10610
    %v10612 = vpop.f32.mrb[0].mxu0
    %v10613 = vadd.f32 %v10500, %v10612
    %v10614 = vpop.f32.mrb[0].mxu0
    %v10615 = vadd.f32 %v10502, %v10614
    %10616 = vmatprep.mubr.bf16.mxu0 %v6616
    %10617 = vmatmul.mubr.bf16.gmra.mrb[0].mxu0 %v6615
    %v10618 = vpop.f32.mrb[0].mxu0
    %v10619 = vadd.f32 %v10506, %v10618
    %v10620 = vpop.f32.mrb[0].mxu0
    %v10621 = vadd.f32 %v10508, %v10620
    %v10622 = vpop.f32.mrb[0].mxu0
    %v10623 = vadd.f32 %v10510, %v10622
    %v10624 = vpop.f32.mrb[0].mxu0
    %v10625 = vadd.f32 %v10512, %v10624
    %10626 = vmatprep.mubr.bf16.mxu0 %v6632
    %10627 = vmatmul.mubr.bf16.gmra.mrb[0].mxu0 %v6631
    %v10628 = vpop.f32.mrb[0].mxu0
    %v10629 = vadd.f32 %v10516, %v10628
    %v10630 = vpop.f32.mrb[0].mxu0
    %v10631 = vadd.f32 %v10518, %v10630
    %v10632 = vpop.f32.mrb[0].mxu0
    %v10633 = vadd.f32 %v10520, %v10632
    %v10634 = vpop.f32.mrb[0].mxu0
    %v10635 = vadd.f32 %v10522, %v10634
    %10636 = vmatprep.mubr.bf16.mxu0 %v6648
    %10637 = vmatmul.mubr.bf16.gmra.mrb[0].mxu0 %v6647
    %v10638 = vpop.f32.mrb[0].mxu0
    %v10639 = vadd.f32 %v10526, %v10638
    %v10640 = vpop.f32.mrb[0].mxu0
    %v10641 = vadd.f32 %v10528, %v10640
    %v10642 = vpop.f32.mrb[0].mxu0
    %v10643 = vadd.f32 %v10530, %v10642
    %v10644 = vpop.f32.mrb[0].mxu0
    %v10645 = vadd.f32 %v10532, %v10644
    %10646 = vdwg.mxu0
    %10647 = vmatprep.subr.bf16.mxu0 %v8722
    %10648 = vmatpush1.bf16.msra.mxu0 %v8721
    %10649 = vmatprep.subr.bf16.mxu0 %v8726
    %10650 = vmatpush1.bf16.msra.mxu0 %v8725
    %10651 = vmatprep.subr.bf16.mxu0 %v8730
    %10652 = vmatpush1.bf16.msra.mxu0 %v8729
    %10653 = vmatprep.subr.bf16.mxu0 %v8734
    %10654 = vmatpush1.bf16.msra.mxu0 %v8733
    %10655 = vmatprep.subr.bf16.mxu0 %v8738
    %10656 = vmatpush1.bf16.msra.mxu0 %v8737
    %10657 = vmatprep.subr.bf16.mxu0 %v8742
    %10658 = vmatpush1.bf16.msra.mxu0 %v8741
    %10659 = vmatprep.subr.bf16.mxu0 %v8746
    %10660 = vmatpush1.bf16.msra.mxu0 %v8745
    %10661 = vmatprep.subr.bf16.mxu0 %v8750
    %10662 = vmatpush1.bf16.msra.mxu0 %v8749
    %10663 = vmatprep.subr.bf16.mxu0 %v8754
    %10664 = vmatpush1.bf16.msra.mxu0 %v8753
    %10665 = vmatprep.subr.bf16.mxu0 %v8758
    %10666 = vmatpush1.bf16.msra.mxu0 %v8757
    %10667 = vmatprep.subr.bf16.mxu0 %v8762
    %10668 = vmatpush1.bf16.msra.mxu0 %v8761
    %10669 = vmatprep.subr.bf16.mxu0 %v8766
    %10670 = vmatpush1.bf16.msra.mxu0 %v8765
    %10671 = vmatprep.subr.bf16.mxu0 %v8770
    %10672 = vmatpush1.bf16.msra.mxu0 %v8769
    %10673 = vmatprep.subr.bf16.mxu0 %v8774
    %10674 = vmatpush1.bf16.msra.mxu0 %v8773
    %10675 = vmatprep.subr.bf16.mxu0 %v8778
    %10676 = vmatpush1.bf16.msra.mxu0 %v8777
    %10677 = vmatprep.subr.bf16.mxu0 %v8782
    %10678 = vmatpush1.bf16.msra.mxu0 %v8781
    %10679 = vmatprep.mubr.bf16.mxu0 %v6522
    %10680 = vmatmul.mubr.bf16.gmra.mrb[0].mxu0 %v6521
    %v10681 = vpop.f32.mrb[0].mxu0
    %v10682 = vadd.f32 %v7174, %v10681
    %v10683 = vpop.f32.mrb[0].mxu0
    %v10684 = vadd.f32 %v7178, %v10683
    %v10685 = vpop.f32.mrb[0].mxu0
    %v10686 = vadd.f32 %v7174, %v10685
    %v10687 = vpop.f32.mrb[0].mxu0
    %v10688 = vadd.f32 %v7178, %v10687
    %10689 = vmatprep.mubr.bf16.mxu0 %v6538
    %10690 = vmatmul.mubr.bf16.gmra.mrb[0].mxu0 %v6537
    %v10691 = vpop.f32.mrb[0].mxu0
    %v10692 = vadd.f32 %v7174, %v10691
    %v10693 = vpop.f32.mrb[0].mxu0
    %v10694 = vadd.f32 %v7178, %v10693
    %v10695 = vpop.f32.mrb[0].mxu0
    %v10696 = vadd.f32 %v7174, %v10695
    %v10697 = vpop.f32.mrb[0].mxu0
    %v10698 = vadd.f32 %v7178, %v10697
    %10699 = vmatprep.mubr.bf16.mxu0 %v6554
    %10700 = vmatmul.mubr.bf16.gmra.mrb[0].mxu0 %v6553
    %v10701 = vpop.f32.mrb[0].mxu0
    %v10702 = vadd.f32 %v7174, %v10701
    %v10703 = vpop.f32.mrb[0].mxu0
    %v10704 = vadd.f32 %v7178, %v10703
    %v10705 = vpop.f32.mrb[0].mxu0
    %v10706 = vadd.f32 %v7174, %v10705
    %v10707 = vpop.f32.mrb[0].mxu0
    %v10708 = vadd.f32 %v7178, %v10707
    %10709 = vmatprep.mubr.bf16.mxu0 %v6570
    %10710 = vmatmul.mubr.bf16.gmra.mrb[0].mxu0 %v6569
    %v10711 = vpop.f32.mrb[0].mxu0
    %v10712 = vadd.f32 %v7174, %v10711
    %v10713 = vpop.f32.mrb[0].mxu0
    %v10714 = vadd.f32 %v7178, %v10713
    %v10715 = vpop.f32.mrb[0].mxu0
    %v10716 = vadd.f32 %v7174, %v10715
    %v10717 = vpop.f32.mrb[0].mxu0
    %v10718 = vadd.f32 %v7178, %v10717
    %10719 = vmatprep.mubr.bf16.mxu0 %v6586
    %10720 = vmatmul.mubr.bf16.gmra.mrb[0].mxu0 %v6585
    %v10721 = vpop.f32.mrb[0].mxu0
    %v10722 = vadd.f32 %v7174, %v10721
    %v10723 = vpop.f32.mrb[0].mxu0
    %v10724 = vadd.f32 %v7178, %v10723
    %v10725 = vpop.f32.mrb[0].mxu0
    %v10726 = vadd.f32 %v7174, %v10725
    %v10727 = vpop.f32.mrb[0].mxu0
    %v10728 = vadd.f32 %v7178, %v10727
    %10729 = vmatprep.mubr.bf16.mxu0 %v6602
    %10730 = vmatmul.mubr.bf16.gmra.mrb[0].mxu0 %v6601
    %v10731 = vpop.f32.mrb[0].mxu0
    %v10732 = vadd.f32 %v7174, %v10731
    %v10733 = vpop.f32.mrb[0].mxu0
    %v10734 = vadd.f32 %v7178, %v10733
    %v10735 = vpop.f32.mrb[0].mxu0
    %v10736 = vadd.f32 %v7174, %v10735
    %v10737 = vpop.f32.mrb[0].mxu0
    %v10738 = vadd.f32 %v7178, %v10737
    %10739 = vmatprep.mubr.bf16.mxu0 %v6618
    %10740 = vmatmul.mubr.bf16.gmra.mrb[0].mxu0 %v6617
    %v10741 = vpop.f32.mrb[0].mxu0
    %v10742 = vadd.f32 %v7174, %v10741
    %v10743 = vpop.f32.mrb[0].mxu0
    %v10744 = vadd.f32 %v7178, %v10743
    %v10745 = vpop.f32.mrb[0].mxu0
    %v10746 = vadd.f32 %v7174, %v10745
    %v10747 = vpop.f32.mrb[0].mxu0
    %v10748 = vadd.f32 %v7178, %v10747
    %10749 = vmatprep.mubr.bf16.mxu0 %v6634
    %10750 = vmatmul.mubr.bf16.gmra.mrb[0].mxu0 %v6633
    %v10751 = vpop.f32.mrb[0].mxu0
    %v10752 = vadd.f32 %v7174, %v10751
    %v10753 = vpop.f32.mrb[0].mxu0
    %v10754 = vadd.f32 %v7178, %v10753
    %v10755 = vpop.f32.mrb[0].mxu0
    %v10756 = vadd.f32 %v7174, %v10755
    %v10757 = vpop.f32.mrb[0].mxu0
    %v10758 = vadd.f32 %v7178, %v10757
    %10759 = vdwg.mxu0
    %10760 = vmatprep.subr.bf16.mxu0 %v8786
    %10761 = vmatpush1.bf16.msra.mxu0 %v8785
    %10762 = vmatprep.subr.bf16.mxu0 %v8790
    %10763 = vmatpush1.bf16.msra.mxu0 %v8789
    %10764 = vmatprep.subr.bf16.mxu0 %v8794
    %10765 = vmatpush1.bf16.msra.mxu0 %v8793
    %10766 = vmatprep.subr.bf16.mxu0 %v8798
    %10767 = vmatpush1.bf16.msra.mxu0 %v8797
    %10768 = vmatprep.subr.bf16.mxu0 %v8802
    %10769 = vmatpush1.bf16.msra.mxu0 %v8801
    %10770 = vmatprep.subr.bf16.mxu0 %v8806
    %10771 = vmatpush1.bf16.msra.mxu0 %v8805
    %10772 = vmatprep.subr.bf16.mxu0 %v8810
    %10773 = vmatpush1.bf16.msra.mxu0 %v8809
    %10774 = vmatprep.subr.bf16.mxu0 %v8814
    %10775 = vmatpush1.bf16.msra.mxu0 %v8813
    %10776 = vmatprep.subr.bf16.mxu0 %v8818
    %10777 = vmatpush1.bf16.msra.mxu0 %v8817
    %10778 = vmatprep.subr.bf16.mxu0 %v8822
    %10779 = vmatpush1.bf16.msra.mxu0 %v8821
    %10780 = vmatprep.subr.bf16.mxu0 %v8826
    %10781 = vmatpush1.bf16.msra.mxu0 %v8825
    %10782 = vmatprep.subr.bf16.mxu0 %v8830
    %10783 = vmatpush1.bf16.msra.mxu0 %v8829
    %10784 = vmatprep.subr.bf16.mxu0 %v8834
    %10785 = vmatpush1.bf16.msra.mxu0 %v8833
    %10786 = vmatprep.subr.bf16.mxu0 %v8838
    %10787 = vmatpush1.bf16.msra.mxu0 %v8837
    %10788 = vmatprep.subr.bf16.mxu0 %v8842
    %10789 = vmatpush1.bf16.msra.mxu0 %v8841
    %10790 = vmatprep.subr.bf16.mxu0 %v8846
    %10791 = vmatpush1.bf16.msra.mxu0 %v8845
    %10792 = vmatprep.mubr.bf16.mxu0 %v6524
    %10793 = vmatmul.mubr.bf16.gmra.mrb[0].mxu0 %v6523
    %v10794 = vpop.f32.mrb[0].mxu0
    %v10795 = vadd.f32 %v10682, %v10794
    %v10796 = vpop.f32.mrb[0].mxu0
    %v10797 = vadd.f32 %v10684, %v10796
    %v10798 = vpop.f32.mrb[0].mxu0
    %v10799 = vadd.f32 %v10686, %v10798
    %v10800 = vpop.f32.mrb[0].mxu0
    %v10801 = vadd.f32 %v10688, %v10800
    %10802 = vmatprep.mubr.bf16.mxu0 %v6540
    %10803 = vmatmul.mubr.bf16.gmra.mrb[0].mxu0 %v6539
    %v10804 = vpop.f32.mrb[0].mxu0
    %v10805 = vadd.f32 %v10692, %v10804
    %v10806 = vpop.f32.mrb[0].mxu0
    %v10807 = vadd.f32 %v10694, %v10806
    %v10808 = vpop.f32.mrb[0].mxu0
    %v10809 = vadd.f32 %v10696, %v10808
    %v10810 = vpop.f32.mrb[0].mxu0
    %v10811 = vadd.f32 %v10698, %v10810
    %10812 = vmatprep.mubr.bf16.mxu0 %v6556
    %10813 = vmatmul.mubr.bf16.gmra.mrb[0].mxu0 %v6555
    %v10814 = vpop.f32.mrb[0].mxu0
    %v10815 = vadd.f32 %v10702, %v10814
    %v10816 = vpop.f32.mrb[0].mxu0
    %v10817 = vadd.f32 %v10704, %v10816
    %v10818 = vpop.f32.mrb[0].mxu0
    %v10819 = vadd.f32 %v10706, %v10818
    %v10820 = vpop.f32.mrb[0].mxu0
    %v10821 = vadd.f32 %v10708, %v10820
    %10822 = vmatprep.mubr.bf16.mxu0 %v6572
    %10823 = vmatmul.mubr.bf16.gmra.mrb[0].mxu0 %v6571
    %v10824 = vpop.f32.mrb[0].mxu0
    %v10825 = vadd.f32 %v10712, %v10824
    %v10826 = vpop.f32.mrb[0].mxu0
    %v10827 = vadd.f32 %v10714, %v10826
    %v10828 = vpop.f32.mrb[0].mxu0
    %v10829 = vadd.f32 %v10716, %v10828
    %v10830 = vpop.f32.mrb[0].mxu0
    %v10831 = vadd.f32 %v10718, %v10830
    %10832 = vmatprep.mubr.bf16.mxu0 %v6588
    %10833 = vmatmul.mubr.bf16.gmra.mrb[0].mxu0 %v6587
    %v10834 = vpop.f32.mrb[0].mxu0
    %v10835 = vadd.f32 %v10722, %v10834
    %v10836 = vpop.f32.mrb[0].mxu0
    %v10837 = vadd.f32 %v10724, %v10836
    %v10838 = vpop.f32.mrb[0].mxu0
    %v10839 = vadd.f32 %v10726, %v10838
    %v10840 = vpop.f32.mrb[0].mxu0
    %v10841 = vadd.f32 %v10728, %v10840
    %10842 = vmatprep.mubr.bf16.mxu0 %v6604
    %10843 = vmatmul.mubr.bf16.gmra.mrb[0].mxu0 %v6603
    %v10844 = vpop.f32.mrb[0].mxu0
    %v10845 = vadd.f32 %v10732, %v10844
    %v10846 = vpop.f32.mrb[0].mxu0
    %v10847 = vadd.f32 %v10734, %v10846
    %v10848 = vpop.f32.mrb[0].mxu0
    %v10849 = vadd.f32 %v10736, %v10848
    %v10850 = vpop.f32.mrb[0].mxu0
    %v10851 = vadd.f32 %v10738, %v10850
    %10852 = vmatprep.mubr.bf16.mxu0 %v6620
    %10853 = vmatmul.mubr.bf16.gmra.mrb[0].mxu0 %v6619
    %v10854 = vpop.f32.mrb[0].mxu0
    %v10855 = vadd.f32 %v10742, %v10854
    %v10856 = vpop.f32.mrb[0].mxu0
    %v10857 = vadd.f32 %v10744, %v10856
    %v10858 = vpop.f32.mrb[0].mxu0
    %v10859 = vadd.f32 %v10746, %v10858
    %v10860 = vpop.f32.mrb[0].mxu0
    %v10861 = vadd.f32 %v10748, %v10860
    %10862 = vmatprep.mubr.bf16.mxu0 %v6636
    %10863 = vmatmul.mubr.bf16.gmra.mrb[0].mxu0 %v6635
    %v10864 = vpop.f32.mrb[0].mxu0
    %v10865 = vadd.f32 %v10752, %v10864
    %v10866 = vpop.f32.mrb[0].mxu0
    %v10867 = vadd.f32 %v10754, %v10866
    %v10868 = vpop.f32.mrb[0].mxu0
    %v10869 = vadd.f32 %v10756, %v10868
    %v10870 = vpop.f32.mrb[0].mxu0
    %v10871 = vadd.f32 %v10758, %v10870
    %10872 = vdwg.mxu0
    %10873 = vmatprep.subr.bf16.mxu0 %v8850
    %10874 = vmatpush1.bf16.msra.mxu0 %v8849
    %10875 = vmatprep.subr.bf16.mxu0 %v8854
    %10876 = vmatpush1.bf16.msra.mxu0 %v8853
    %10877 = vmatprep.subr.bf16.mxu0 %v8858
    %10878 = vmatpush1.bf16.msra.mxu0 %v8857
    %10879 = vmatprep.subr.bf16.mxu0 %v8862
    %10880 = vmatpush1.bf16.msra.mxu0 %v8861
    %10881 = vmatprep.subr.bf16.mxu0 %v8866
    %10882 = vmatpush1.bf16.msra.mxu0 %v8865
    %10883 = vmatprep.subr.bf16.mxu0 %v8870
    %10884 = vmatpush1.bf16.msra.mxu0 %v8869
    %10885 = vmatprep.subr.bf16.mxu0 %v8874
    %10886 = vmatpush1.bf16.msra.mxu0 %v8873
    %10887 = vmatprep.subr.bf16.mxu0 %v8878
    %10888 = vmatpush1.bf16.msra.mxu0 %v8877
    %10889 = vmatprep.subr.bf16.mxu0 %v8882
    %10890 = vmatpush1.bf16.msra.mxu0 %v8881
    %10891 = vmatprep.subr.bf16.mxu0 %v8886
    %10892 = vmatpush1.bf16.msra.mxu0 %v8885
    %10893 = vmatprep.subr.bf16.mxu0 %v8890
    %10894 = vmatpush1.bf16.msra.mxu0 %v8889
    %10895 = vmatprep.subr.bf16.mxu0 %v8894
    %10896 = vmatpush1.bf16.msra.mxu0 %v8893
    %10897 = vmatprep.subr.bf16.mxu0 %v8898
    %10898 = vmatpush1.bf16.msra.mxu0 %v8897
    %10899 = vmatprep.subr.bf16.mxu0 %v8902
    %10900 = vmatpush1.bf16.msra.mxu0 %v8901
    %10901 = vmatprep.subr.bf16.mxu0 %v8906
    %10902 = vmatpush1.bf16.msra.mxu0 %v8905
    %10903 = vmatprep.subr.bf16.mxu0 %v8910
    %10904 = vmatpush1.bf16.msra.mxu0 %v8909
    %10905 = vmatprep.mubr.bf16.mxu0 %v6526
    %10906 = vmatmul.mubr.bf16.gmra.mrb[0].mxu0 %v6525
    %v10907 = vpop.f32.mrb[0].mxu0
    %v10908 = vadd.f32 %v10795, %v10907
    %v10909 = vpop.f32.mrb[0].mxu0
    %v10910 = vadd.f32 %v10797, %v10909
    %v10911 = vpop.f32.mrb[0].mxu0
    %v10912 = vadd.f32 %v10799, %v10911
    %v10913 = vpop.f32.mrb[0].mxu0
    %v10914 = vadd.f32 %v10801, %v10913
    %10915 = vmatprep.mubr.bf16.mxu0 %v6542
    %10916 = vmatmul.mubr.bf16.gmra.mrb[0].mxu0 %v6541
    %v10917 = vpop.f32.mrb[0].mxu0
    %v10918 = vadd.f32 %v10805, %v10917
    %v10919 = vpop.f32.mrb[0].mxu0
    %v10920 = vadd.f32 %v10807, %v10919
    %v10921 = vpop.f32.mrb[0].mxu0
    %v10922 = vadd.f32 %v10809, %v10921
    %v10923 = vpop.f32.mrb[0].mxu0
    %v10924 = vadd.f32 %v10811, %v10923
    %10925 = vmatprep.mubr.bf16.mxu0 %v6558
    %10926 = vmatmul.mubr.bf16.gmra.mrb[0].mxu0 %v6557
    %v10927 = vpop.f32.mrb[0].mxu0
    %v10928 = vadd.f32 %v10815, %v10927
    %v10929 = vpop.f32.mrb[0].mxu0
    %v10930 = vadd.f32 %v10817, %v10929
    %v10931 = vpop.f32.mrb[0].mxu0
    %v10932 = vadd.f32 %v10819, %v10931
    %v10933 = vpop.f32.mrb[0].mxu0
    %v10934 = vadd.f32 %v10821, %v10933
    %10935 = vmatprep.mubr.bf16.mxu0 %v6574
    %10936 = vmatmul.mubr.bf16.gmra.mrb[0].mxu0 %v6573
    %v10937 = vpop.f32.mrb[0].mxu0
    %v10938 = vadd.f32 %v10825, %v10937
    %v10939 = vpop.f32.mrb[0].mxu0
    %v10940 = vadd.f32 %v10827, %v10939
    %v10941 = vpop.f32.mrb[0].mxu0
    %v10942 = vadd.f32 %v10829, %v10941
    %v10943 = vpop.f32.mrb[0].mxu0
    %v10944 = vadd.f32 %v10831, %v10943
    %10945 = vmatprep.mubr.bf16.mxu0 %v6590
    %10946 = vmatmul.mubr.bf16.gmra.mrb[0].mxu0 %v6589
    %v10947 = vpop.f32.mrb[0].mxu0
    %v10948 = vadd.f32 %v10835, %v10947
    %v10949 = vpop.f32.mrb[0].mxu0
    %v10950 = vadd.f32 %v10837, %v10949
    %v10951 = vpop.f32.mrb[0].mxu0
    %v10952 = vadd.f32 %v10839, %v10951
    %v10953 = vpop.f32.mrb[0].mxu0
    %v10954 = vadd.f32 %v10841, %v10953
    %10955 = vmatprep.mubr.bf16.mxu0 %v6606
    %10956 = vmatmul.mubr.bf16.gmra.mrb[0].mxu0 %v6605
    %v10957 = vpop.f32.mrb[0].mxu0
    %v10958 = vadd.f32 %v10845, %v10957
    %v10959 = vpop.f32.mrb[0].mxu0
    %v10960 = vadd.f32 %v10847, %v10959
    %v10961 = vpop.f32.mrb[0].mxu0
    %v10962 = vadd.f32 %v10849, %v10961
    %v10963 = vpop.f32.mrb[0].mxu0
    %v10964 = vadd.f32 %v10851, %v10963
    %10965 = vmatprep.mubr.bf16.mxu0 %v6622
    %10966 = vmatmul.mubr.bf16.gmra.mrb[0].mxu0 %v6621
    %v10967 = vpop.f32.mrb[0].mxu0
    %v10968 = vadd.f32 %v10855, %v10967
    %v10969 = vpop.f32.mrb[0].mxu0
    %v10970 = vadd.f32 %v10857, %v10969
    %v10971 = vpop.f32.mrb[0].mxu0
    %v10972 = vadd.f32 %v10859, %v10971
    %v10973 = vpop.f32.mrb[0].mxu0
    %v10974 = vadd.f32 %v10861, %v10973
    %10975 = vmatprep.mubr.bf16.mxu0 %v6638
    %10976 = vmatmul.mubr.bf16.gmra.mrb[0].mxu0 %v6637
    %v10977 = vpop.f32.mrb[0].mxu0
    %v10978 = vadd.f32 %v10865, %v10977
    %v10979 = vpop.f32.mrb[0].mxu0
    %v10980 = vadd.f32 %v10867, %v10979
    %v10981 = vpop.f32.mrb[0].mxu0
    %v10982 = vadd.f32 %v10869, %v10981
    %v10983 = vpop.f32.mrb[0].mxu0
    %v10984 = vadd.f32 %v10871, %v10983
    %10985 = vdwg.mxu0
    %10986 = vmatprep.subr.bf16.mxu0 %v8914
    %10987 = vmatpush1.bf16.msra.mxu0 %v8913
    %10988 = vmatprep.subr.bf16.mxu0 %v8918
    %10989 = vmatpush1.bf16.msra.mxu0 %v8917
    %10990 = vmatprep.subr.bf16.mxu0 %v8922
    %10991 = vmatpush1.bf16.msra.mxu0 %v8921
    %10992 = vmatprep.subr.bf16.mxu0 %v8926
    %10993 = vmatpush1.bf16.msra.mxu0 %v8925
    %10994 = vmatprep.subr.bf16.mxu0 %v8930
    %10995 = vmatpush1.bf16.msra.mxu0 %v8929
    %10996 = vmatprep.subr.bf16.mxu0 %v8934
    %10997 = vmatpush1.bf16.msra.mxu0 %v8933
    %10998 = vmatprep.subr.bf16.mxu0 %v8938
    %10999 = vmatpush1.bf16.msra.mxu0 %v8937
    %11000 = vmatprep.subr.bf16.mxu0 %v8942
    %11001 = vmatpush1.bf16.msra.mxu0 %v8941
    %11002 = vmatprep.subr.bf16.mxu0 %v8946
    %11003 = vmatpush1.bf16.msra.mxu0 %v8945
    %11004 = vmatprep.subr.bf16.mxu0 %v8950
    %11005 = vmatpush1.bf16.msra.mxu0 %v8949
    %11006 = vmatprep.subr.bf16.mxu0 %v8954
    %11007 = vmatpush1.bf16.msra.mxu0 %v8953
    %11008 = vmatprep.subr.bf16.mxu0 %v8958
    %11009 = vmatpush1.bf16.msra.mxu0 %v8957
    %11010 = vmatprep.subr.bf16.mxu0 %v8962
    %11011 = vmatpush1.bf16.msra.mxu0 %v8961
    %11012 = vmatprep.subr.bf16.mxu0 %v8966
    %11013 = vmatpush1.bf16.msra.mxu0 %v8965
    %11014 = vmatprep.subr.bf16.mxu0 %v8970
    %11015 = vmatpush1.bf16.msra.mxu0 %v8969
    %11016 = vmatprep.subr.bf16.mxu0 %v8974
    %11017 = vmatpush1.bf16.msra.mxu0 %v8973
    %11018 = vmatprep.mubr.bf16.mxu0 %v6528
    %11019 = vmatmul.mubr.bf16.gmra.mrb[0].mxu0 %v6527
    %v11020 = vpop.f32.mrb[0].mxu0
    %v11021 = vadd.f32 %v10908, %v11020
    %v11022 = vpop.f32.mrb[0].mxu0
    %v11023 = vadd.f32 %v10910, %v11022
    %v11024 = vpop.f32.mrb[0].mxu0
    %v11025 = vadd.f32 %v10912, %v11024
    %v11026 = vpop.f32.mrb[0].mxu0
    %v11027 = vadd.f32 %v10914, %v11026
    %11028 = vmatprep.mubr.bf16.mxu0 %v6544
    %11029 = vmatmul.mubr.bf16.gmra.mrb[0].mxu0 %v6543
    %v11030 = vpop.f32.mrb[0].mxu0
    %v11031 = vadd.f32 %v10918, %v11030
    %v11032 = vpop.f32.mrb[0].mxu0
    %v11033 = vadd.f32 %v10920, %v11032
    %v11034 = vpop.f32.mrb[0].mxu0
    %v11035 = vadd.f32 %v10922, %v11034
    %v11036 = vpop.f32.mrb[0].mxu0
    %v11037 = vadd.f32 %v10924, %v11036
    %11038 = vmatprep.mubr.bf16.mxu0 %v6560
    %11039 = vmatmul.mubr.bf16.gmra.mrb[0].mxu0 %v6559
    %v11040 = vpop.f32.mrb[0].mxu0
    %v11041 = vadd.f32 %v10928, %v11040
    %v11042 = vpop.f32.mrb[0].mxu0
    %v11043 = vadd.f32 %v10930, %v11042
    %v11044 = vpop.f32.mrb[0].mxu0
    %v11045 = vadd.f32 %v10932, %v11044
    %v11046 = vpop.f32.mrb[0].mxu0
    %v11047 = vadd.f32 %v10934, %v11046
    %11048 = vmatprep.mubr.bf16.mxu0 %v6576
    %11049 = vmatmul.mubr.bf16.gmra.mrb[0].mxu0 %v6575
    %v11050 = vpop.f32.mrb[0].mxu0
    %v11051 = vadd.f32 %v10938, %v11050
    %v11052 = vpop.f32.mrb[0].mxu0
    %v11053 = vadd.f32 %v10940, %v11052
    %v11054 = vpop.f32.mrb[0].mxu0
    %v11055 = vadd.f32 %v10942, %v11054
    %v11056 = vpop.f32.mrb[0].mxu0
    %v11057 = vadd.f32 %v10944, %v11056
    %11058 = vmatprep.mubr.bf16.mxu0 %v6592
    %11059 = vmatmul.mubr.bf16.gmra.mrb[0].mxu0 %v6591
    %v11060 = vpop.f32.mrb[0].mxu0
    %v11061 = vadd.f32 %v10948, %v11060
    %v11062 = vpop.f32.mrb[0].mxu0
    %v11063 = vadd.f32 %v10950, %v11062
    %v11064 = vpop.f32.mrb[0].mxu0
    %v11065 = vadd.f32 %v10952, %v11064
    %v11066 = vpop.f32.mrb[0].mxu0
    %v11067 = vadd.f32 %v10954, %v11066
    %11068 = vmatprep.mubr.bf16.mxu0 %v6608
    %11069 = vmatmul.mubr.bf16.gmra.mrb[0].mxu0 %v6607
    %v11070 = vpop.f32.mrb[0].mxu0
    %v11071 = vadd.f32 %v10958, %v11070
    %v11072 = vpop.f32.mrb[0].mxu0
    %v11073 = vadd.f32 %v10960, %v11072
    %v11074 = vpop.f32.mrb[0].mxu0
    %v11075 = vadd.f32 %v10962, %v11074
    %v11076 = vpop.f32.mrb[0].mxu0
    %v11077 = vadd.f32 %v10964, %v11076
    %11078 = vmatprep.mubr.bf16.mxu0 %v6624
    %11079 = vmatmul.mubr.bf16.gmra.mrb[0].mxu0 %v6623
    %v11080 = vpop.f32.mrb[0].mxu0
    %v11081 = vadd.f32 %v10968, %v11080
    %v11082 = vpop.f32.mrb[0].mxu0
    %v11083 = vadd.f32 %v10970, %v11082
    %v11084 = vpop.f32.mrb[0].mxu0
    %v11085 = vadd.f32 %v10972, %v11084
    %v11086 = vpop.f32.mrb[0].mxu0
    %v11087 = vadd.f32 %v10974, %v11086
    %11088 = vmatprep.mubr.bf16.mxu0 %v6640
    %11089 = vmatmul.mubr.bf16.gmra.mrb[0].mxu0 %v6639
    %v11090 = vpop.f32.mrb[0].mxu0
    %v11091 = vadd.f32 %v10978, %v11090
    %v11092 = vpop.f32.mrb[0].mxu0
    %v11093 = vadd.f32 %v10980, %v11092
    %v11094 = vpop.f32.mrb[0].mxu0
    %v11095 = vadd.f32 %v10982, %v11094
    %v11096 = vpop.f32.mrb[0].mxu0
    %v11097 = vadd.f32 %v10984, %v11096
    %11098 = vdwg.mxu0
    %11099 = vmatprep.subr.bf16.mxu0 %v8978
    %11100 = vmatpush1.bf16.msra.mxu0 %v8977
    %11101 = vmatprep.subr.bf16.mxu0 %v8982
    %11102 = vmatpush1.bf16.msra.mxu0 %v8981
    %11103 = vmatprep.subr.bf16.mxu0 %v8986
    %11104 = vmatpush1.bf16.msra.mxu0 %v8985
    %11105 = vmatprep.subr.bf16.mxu0 %v8990
    %11106 = vmatpush1.bf16.msra.mxu0 %v8989
    %11107 = vmatprep.subr.bf16.mxu0 %v8994
    %11108 = vmatpush1.bf16.msra.mxu0 %v8993
    %11109 = vmatprep.subr.bf16.mxu0 %v8998
    %11110 = vmatpush1.bf16.msra.mxu0 %v8997
    %11111 = vmatprep.subr.bf16.mxu0 %v9002
    %11112 = vmatpush1.bf16.msra.mxu0 %v9001
    %11113 = vmatprep.subr.bf16.mxu0 %v9006
    %11114 = vmatpush1.bf16.msra.mxu0 %v9005
    %11115 = vmatprep.subr.bf16.mxu0 %v9010
    %11116 = vmatpush1.bf16.msra.mxu0 %v9009
    %11117 = vmatprep.subr.bf16.mxu0 %v9014
    %11118 = vmatpush1.bf16.msra.mxu0 %v9013
    %11119 = vmatprep.subr.bf16.mxu0 %v9018
    %11120 = vmatpush1.bf16.msra.mxu0 %v9017
    %11121 = vmatprep.subr.bf16.mxu0 %v9022
    %11122 = vmatpush1.bf16.msra.mxu0 %v9021
    %11123 = vmatprep.subr.bf16.mxu0 %v9026
    %11124 = vmatpush1.bf16.msra.mxu0 %v9025
    %11125 = vmatprep.subr.bf16.mxu0 %v9030
    %11126 = vmatpush1.bf16.msra.mxu0 %v9029
    %11127 = vmatprep.subr.bf16.mxu0 %v9034
    %11128 = vmatpush1.bf16.msra.mxu0 %v9033
    %11129 = vmatprep.subr.bf16.mxu0 %v9038
    %11130 = vmatpush1.bf16.msra.mxu0 %v9037
    %11131 = vmatprep.mubr.bf16.mxu0 %v6530
    %11132 = vmatmul.mubr.bf16.gmra.mrb[0].mxu0 %v6529
    %v11133 = vpop.f32.mrb[0].mxu0
    %v11134 = vadd.f32 %v11021, %v11133
    %v11135 = vpop.f32.mrb[0].mxu0
    %v11136 = vadd.f32 %v11023, %v11135
    %v11137 = vpop.f32.mrb[0].mxu0
    %v11138 = vadd.f32 %v11025, %v11137
    %v11139 = vpop.f32.mrb[0].mxu0
    %v11140 = vadd.f32 %v11027, %v11139
    %11141 = vmatprep.mubr.bf16.mxu0 %v6546
    %11142 = vmatmul.mubr.bf16.gmra.mrb[0].mxu0 %v6545
    %v11143 = vpop.f32.mrb[0].mxu0
    %v11144 = vadd.f32 %v11031, %v11143
    %v11145 = vpop.f32.mrb[0].mxu0
    %v11146 = vadd.f32 %v11033, %v11145
    %v11147 = vpop.f32.mrb[0].mxu0
    %v11148 = vadd.f32 %v11035, %v11147
    %v11149 = vpop.f32.mrb[0].mxu0
    %v11150 = vadd.f32 %v11037, %v11149
    %11151 = vmatprep.mubr.bf16.mxu0 %v6562
    %11152 = vmatmul.mubr.bf16.gmra.mrb[0].mxu0 %v6561
    %v11153 = vpop.f32.mrb[0].mxu0
    %v11154 = vadd.f32 %v11041, %v11153
    %v11155 = vpop.f32.mrb[0].mxu0
    %v11156 = vadd.f32 %v11043, %v11155
    %v11157 = vpop.f32.mrb[0].mxu0
    %v11158 = vadd.f32 %v11045, %v11157
    %v11159 = vpop.f32.mrb[0].mxu0
    %v11160 = vadd.f32 %v11047, %v11159
    %11161 = vmatprep.mubr.bf16.mxu0 %v6578
    %11162 = vmatmul.mubr.bf16.gmra.mrb[0].mxu0 %v6577
    %v11163 = vpop.f32.mrb[0].mxu0
    %v11164 = vadd.f32 %v11051, %v11163
    %v11165 = vpop.f32.mrb[0].mxu0
    %v11166 = vadd.f32 %v11053, %v11165
    %v11167 = vpop.f32.mrb[0].mxu0
    %v11168 = vadd.f32 %v11055, %v11167
    %v11169 = vpop.f32.mrb[0].mxu0
    %v11170 = vadd.f32 %v11057, %v11169
    %11171 = vmatprep.mubr.bf16.mxu0 %v6594
    %11172 = vmatmul.mubr.bf16.gmra.mrb[0].mxu0 %v6593
    %v11173 = vpop.f32.mrb[0].mxu0
    %v11174 = vadd.f32 %v11061, %v11173
    %v11175 = vpop.f32.mrb[0].mxu0
    %v11176 = vadd.f32 %v11063, %v11175
    %v11177 = vpop.f32.mrb[0].mxu0
    %v11178 = vadd.f32 %v11065, %v11177
    %v11179 = vpop.f32.mrb[0].mxu0
    %v11180 = vadd.f32 %v11067, %v11179
    %11181 = vmatprep.mubr.bf16.mxu0 %v6610
    %11182 = vmatmul.mubr.bf16.gmra.mrb[0].mxu0 %v6609
    %v11183 = vpop.f32.mrb[0].mxu0
    %v11184 = vadd.f32 %v11071, %v11183
    %v11185 = vpop.f32.mrb[0].mxu0
    %v11186 = vadd.f32 %v11073, %v11185
    %v11187 = vpop.f32.mrb[0].mxu0
    %v11188 = vadd.f32 %v11075, %v11187
    %v11189 = vpop.f32.mrb[0].mxu0
    %v11190 = vadd.f32 %v11077, %v11189
    %11191 = vmatprep.mubr.bf16.mxu0 %v6626
    %11192 = vmatmul.mubr.bf16.gmra.mrb[0].mxu0 %v6625
    %v11193 = vpop.f32.mrb[0].mxu0
    %v11194 = vadd.f32 %v11081, %v11193
    %v11195 = vpop.f32.mrb[0].mxu0
    %v11196 = vadd.f32 %v11083, %v11195
    %v11197 = vpop.f32.mrb[0].mxu0
    %v11198 = vadd.f32 %v11085, %v11197
    %v11199 = vpop.f32.mrb[0].mxu0
    %v11200 = vadd.f32 %v11087, %v11199
    %11201 = vmatprep.mubr.bf16.mxu0 %v6642
    %11202 = vmatmul.mubr.bf16.gmra.mrb[0].mxu0 %v6641
    %v11203 = vpop.f32.mrb[0].mxu0
    %v11204 = vadd.f32 %v11091, %v11203
    %v11205 = vpop.f32.mrb[0].mxu0
    %v11206 = vadd.f32 %v11093, %v11205
    %v11207 = vpop.f32.mrb[0].mxu0
    %v11208 = vadd.f32 %v11095, %v11207
    %v11209 = vpop.f32.mrb[0].mxu0
    %v11210 = vadd.f32 %v11097, %v11209
    %11211 = vdwg.mxu0
    %11212 = vmatprep.subr.bf16.mxu0 %v9042
    %11213 = vmatpush1.bf16.msra.mxu0 %v9041
    %11214 = vmatprep.subr.bf16.mxu0 %v9046
    %11215 = vmatpush1.bf16.msra.mxu0 %v9045
    %11216 = vmatprep.subr.bf16.mxu0 %v9050
    %11217 = vmatpush1.bf16.msra.mxu0 %v9049
    %11218 = vmatprep.subr.bf16.mxu0 %v9054
    %11219 = vmatpush1.bf16.msra.mxu0 %v9053
    %11220 = vmatprep.subr.bf16.mxu0 %v9058
    %11221 = vmatpush1.bf16.msra.mxu0 %v9057
    %11222 = vmatprep.subr.bf16.mxu0 %v9062
    %11223 = vmatpush1.bf16.msra.mxu0 %v9061
    %11224 = vmatprep.subr.bf16.mxu0 %v9066
    %11225 = vmatpush1.bf16.msra.mxu0 %v9065
    %11226 = vmatprep.subr.bf16.mxu0 %v9070
    %11227 = vmatpush1.bf16.msra.mxu0 %v9069
    %11228 = vmatprep.subr.bf16.mxu0 %v9074
    %11229 = vmatpush1.bf16.msra.mxu0 %v9073
    %11230 = vmatprep.subr.bf16.mxu0 %v9078
    %11231 = vmatpush1.bf16.msra.mxu0 %v9077
    %11232 = vmatprep.subr.bf16.mxu0 %v9082
    %11233 = vmatpush1.bf16.msra.mxu0 %v9081
    %11234 = vmatprep.subr.bf16.mxu0 %v9086
    %11235 = vmatpush1.bf16.msra.mxu0 %v9085
    %11236 = vmatprep.subr.bf16.mxu0 %v9090
    %11237 = vmatpush1.bf16.msra.mxu0 %v9089
    %11238 = vmatprep.subr.bf16.mxu0 %v9094
    %11239 = vmatpush1.bf16.msra.mxu0 %v9093
    %11240 = vmatprep.subr.bf16.mxu0 %v9098
    %11241 = vmatpush1.bf16.msra.mxu0 %v9097
    %11242 = vmatprep.subr.bf16.mxu0 %v9102
    %11243 = vmatpush1.bf16.msra.mxu0 %v9101
    %11244 = vmatprep.mubr.bf16.mxu0 %v6532
    %11245 = vmatmul.mubr.bf16.gmra.mrb[0].mxu0 %v6531
    %v11246 = vpop.f32.mrb[0].mxu0
    %v11247 = vadd.f32 %v11134, %v11246
    %v11248 = vpop.f32.mrb[0].mxu0
    %v11249 = vadd.f32 %v11136, %v11248
    %v11250 = vpop.f32.mrb[0].mxu0
    %v11251 = vadd.f32 %v11138, %v11250
    %v11252 = vpop.f32.mrb[0].mxu0
    %v11253 = vadd.f32 %v11140, %v11252
    %11254 = vmatprep.mubr.bf16.mxu0 %v6548
    %11255 = vmatmul.mubr.bf16.gmra.mrb[0].mxu0 %v6547
    %v11256 = vpop.f32.mrb[0].mxu0
    %v11257 = vadd.f32 %v11144, %v11256
    %v11258 = vpop.f32.mrb[0].mxu0
    %v11259 = vadd.f32 %v11146, %v11258
    %v11260 = vpop.f32.mrb[0].mxu0
    %v11261 = vadd.f32 %v11148, %v11260
    %v11262 = vpop.f32.mrb[0].mxu0
    %v11263 = vadd.f32 %v11150, %v11262
    %11264 = vmatprep.mubr.bf16.mxu0 %v6564
    %11265 = vmatmul.mubr.bf16.gmra.mrb[0].mxu0 %v6563
    %v11266 = vpop.f32.mrb[0].mxu0
    %v11267 = vadd.f32 %v11154, %v11266
    %v11268 = vpop.f32.mrb[0].mxu0
    %v11269 = vadd.f32 %v11156, %v11268
    %v11270 = vpop.f32.mrb[0].mxu0
    %v11271 = vadd.f32 %v11158, %v11270
    %v11272 = vpop.f32.mrb[0].mxu0
    %v11273 = vadd.f32 %v11160, %v11272
    %11274 = vmatprep.mubr.bf16.mxu0 %v6580
    %11275 = vmatmul.mubr.bf16.gmra.mrb[0].mxu0 %v6579
    %v11276 = vpop.f32.mrb[0].mxu0
    %v11277 = vadd.f32 %v11164, %v11276
    %v11278 = vpop.f32.mrb[0].mxu0
    %v11279 = vadd.f32 %v11166, %v11278
    %v11280 = vpop.f32.mrb[0].mxu0
    %v11281 = vadd.f32 %v11168, %v11280
    %v11282 = vpop.f32.mrb[0].mxu0
    %v11283 = vadd.f32 %v11170, %v11282
    %11284 = vmatprep.mubr.bf16.mxu0 %v6596
    %11285 = vmatmul.mubr.bf16.gmra.mrb[0].mxu0 %v6595
    %v11286 = vpop.f32.mrb[0].mxu0
    %v11287 = vadd.f32 %v11174, %v11286
    %v11288 = vpop.f32.mrb[0].mxu0
    %v11289 = vadd.f32 %v11176, %v11288
    %v11290 = vpop.f32.mrb[0].mxu0
    %v11291 = vadd.f32 %v11178, %v11290
    %v11292 = vpop.f32.mrb[0].mxu0
    %v11293 = vadd.f32 %v11180, %v11292
    %11294 = vmatprep.mubr.bf16.mxu0 %v6612
    %11295 = vmatmul.mubr.bf16.gmra.mrb[0].mxu0 %v6611
    %v11296 = vpop.f32.mrb[0].mxu0
    %v11297 = vadd.f32 %v11184, %v11296
    %v11298 = vpop.f32.mrb[0].mxu0
    %v11299 = vadd.f32 %v11186, %v11298
    %v11300 = vpop.f32.mrb[0].mxu0
    %v11301 = vadd.f32 %v11188, %v11300
    %v11302 = vpop.f32.mrb[0].mxu0
    %v11303 = vadd.f32 %v11190, %v11302
    %11304 = vmatprep.mubr.bf16.mxu0 %v6628
    %11305 = vmatmul.mubr.bf16.gmra.mrb[0].mxu0 %v6627
    %v11306 = vpop.f32.mrb[0].mxu0
    %v11307 = vadd.f32 %v11194, %v11306
    %v11308 = vpop.f32.mrb[0].mxu0
    %v11309 = vadd.f32 %v11196, %v11308
    %v11310 = vpop.f32.mrb[0].mxu0
    %v11311 = vadd.f32 %v11198, %v11310
    %v11312 = vpop.f32.mrb[0].mxu0
    %v11313 = vadd.f32 %v11200, %v11312
    %11314 = vmatprep.mubr.bf16.mxu0 %v6644
    %11315 = vmatmul.mubr.bf16.gmra.mrb[0].mxu0 %v6643
    %v11316 = vpop.f32.mrb[0].mxu0
    %v11317 = vadd.f32 %v11204, %v11316
    %v11318 = vpop.f32.mrb[0].mxu0
    %v11319 = vadd.f32 %v11206, %v11318
    %v11320 = vpop.f32.mrb[0].mxu0
    %v11321 = vadd.f32 %v11208, %v11320
    %v11322 = vpop.f32.mrb[0].mxu0
    %v11323 = vadd.f32 %v11210, %v11322
    %11324 = vdwg.mxu0
    %11325 = vmatprep.subr.bf16.mxu0 %v9106
    %11326 = vmatpush1.bf16.msra.mxu0 %v9105
    %11327 = vmatprep.subr.bf16.mxu0 %v9110
    %11328 = vmatpush1.bf16.msra.mxu0 %v9109
    %11329 = vmatprep.subr.bf16.mxu0 %v9114
    %11330 = vmatpush1.bf16.msra.mxu0 %v9113
    %11331 = vmatprep.subr.bf16.mxu0 %v9118
    %11332 = vmatpush1.bf16.msra.mxu0 %v9117
    %11333 = vmatprep.subr.bf16.mxu0 %v9122
    %11334 = vmatpush1.bf16.msra.mxu0 %v9121
    %11335 = vmatprep.subr.bf16.mxu0 %v9126
    %11336 = vmatpush1.bf16.msra.mxu0 %v9125
    %11337 = vmatprep.subr.bf16.mxu0 %v9130
    %11338 = vmatpush1.bf16.msra.mxu0 %v9129
    %11339 = vmatprep.subr.bf16.mxu0 %v9134
    %11340 = vmatpush1.bf16.msra.mxu0 %v9133
    %11341 = vmatprep.subr.bf16.mxu0 %v9138
    %11342 = vmatpush1.bf16.msra.mxu0 %v9137
    %11343 = vmatprep.subr.bf16.mxu0 %v9142
    %11344 = vmatpush1.bf16.msra.mxu0 %v9141
    %11345 = vmatprep.subr.bf16.mxu0 %v9146
    %11346 = vmatpush1.bf16.msra.mxu0 %v9145
    %11347 = vmatprep.subr.bf16.mxu0 %v9150
    %11348 = vmatpush1.bf16.msra.mxu0 %v9149
    %11349 = vmatprep.subr.bf16.mxu0 %v9154
    %11350 = vmatpush1.bf16.msra.mxu0 %v9153
    %11351 = vmatprep.subr.bf16.mxu0 %v9158
    %11352 = vmatpush1.bf16.msra.mxu0 %v9157
    %11353 = vmatprep.subr.bf16.mxu0 %v9162
    %11354 = vmatpush1.bf16.msra.mxu0 %v9161
    %11355 = vmatprep.subr.bf16.mxu0 %v9166
    %11356 = vmatpush1.bf16.msra.mxu0 %v9165
    %11357 = vmatprep.mubr.bf16.mxu0 %v6534
    %11358 = vmatmul.mubr.bf16.gmra.mrb[0].mxu0 %v6533
    %v11359 = vpop.f32.mrb[0].mxu0
    %v11360 = vadd.f32 %v11247, %v11359
    %v11361 = vpop.f32.mrb[0].mxu0
    %v11362 = vadd.f32 %v11249, %v11361
    %v11363 = vpop.f32.mrb[0].mxu0
    %v11364 = vadd.f32 %v11251, %v11363
    %v11365 = vpop.f32.mrb[0].mxu0
    %v11366 = vadd.f32 %v11253, %v11365
    %11367 = vmatprep.mubr.bf16.mxu0 %v6550
    %11368 = vmatmul.mubr.bf16.gmra.mrb[0].mxu0 %v6549
    %v11369 = vpop.f32.mrb[0].mxu0
    %v11370 = vadd.f32 %v11257, %v11369
    %v11371 = vpop.f32.mrb[0].mxu0
    %v11372 = vadd.f32 %v11259, %v11371
    %v11373 = vpop.f32.mrb[0].mxu0
    %v11374 = vadd.f32 %v11261, %v11373
    %v11375 = vpop.f32.mrb[0].mxu0
    %v11376 = vadd.f32 %v11263, %v11375
    %11377 = vmatprep.mubr.bf16.mxu0 %v6566
    %11378 = vmatmul.mubr.bf16.gmra.mrb[0].mxu0 %v6565
    %v11379 = vpop.f32.mrb[0].mxu0
    %v11380 = vadd.f32 %v11267, %v11379
    %v11381 = vpop.f32.mrb[0].mxu0
    %v11382 = vadd.f32 %v11269, %v11381
    %v11383 = vpop.f32.mrb[0].mxu0
    %v11384 = vadd.f32 %v11271, %v11383
    %v11385 = vpop.f32.mrb[0].mxu0
    %v11386 = vadd.f32 %v11273, %v11385
    %11387 = vmatprep.mubr.bf16.mxu0 %v6582
    %11388 = vmatmul.mubr.bf16.gmra.mrb[0].mxu0 %v6581
    %v11389 = vpop.f32.mrb[0].mxu0
    %v11390 = vadd.f32 %v11277, %v11389
    %v11391 = vpop.f32.mrb[0].mxu0
    %v11392 = vadd.f32 %v11279, %v11391
    %v11393 = vpop.f32.mrb[0].mxu0
    %v11394 = vadd.f32 %v11281, %v11393
    %v11395 = vpop.f32.mrb[0].mxu0
    %v11396 = vadd.f32 %v11283, %v11395
    %11397 = vmatprep.mubr.bf16.mxu0 %v6598
    %11398 = vmatmul.mubr.bf16.gmra.mrb[0].mxu0 %v6597
    %v11399 = vpop.f32.mrb[0].mxu0
    %v11400 = vadd.f32 %v11287, %v11399
    %v11401 = vpop.f32.mrb[0].mxu0
    %v11402 = vadd.f32 %v11289, %v11401
    %v11403 = vpop.f32.mrb[0].mxu0
    %v11404 = vadd.f32 %v11291, %v11403
    %v11405 = vpop.f32.mrb[0].mxu0
    %v11406 = vadd.f32 %v11293, %v11405
    %11407 = vmatprep.mubr.bf16.mxu0 %v6614
    %11408 = vmatmul.mubr.bf16.gmra.mrb[0].mxu0 %v6613
    %v11409 = vpop.f32.mrb[0].mxu0
    %v11410 = vadd.f32 %v11297, %v11409
    %v11411 = vpop.f32.mrb[0].mxu0
    %v11412 = vadd.f32 %v11299, %v11411
    %v11413 = vpop.f32.mrb[0].mxu0
    %v11414 = vadd.f32 %v11301, %v11413
    %v11415 = vpop.f32.mrb[0].mxu0
    %v11416 = vadd.f32 %v11303, %v11415
    %11417 = vmatprep.mubr.bf16.mxu0 %v6630
    %11418 = vmatmul.mubr.bf16.gmra.mrb[0].mxu0 %v6629
    %v11419 = vpop.f32.mrb[0].mxu0
    %v11420 = vadd.f32 %v11307, %v11419
    %v11421 = vpop.f32.mrb[0].mxu0
    %v11422 = vadd.f32 %v11309, %v11421
    %v11423 = vpop.f32.mrb[0].mxu0
    %v11424 = vadd.f32 %v11311, %v11423
    %v11425 = vpop.f32.mrb[0].mxu0
    %v11426 = vadd.f32 %v11313, %v11425
    %11427 = vmatprep.mubr.bf16.mxu0 %v6646
    %11428 = vmatmul.mubr.bf16.gmra.mrb[0].mxu0 %v6645
    %v11429 = vpop.f32.mrb[0].mxu0
    %v11430 = vadd.f32 %v11317, %v11429
    %v11431 = vpop.f32.mrb[0].mxu0
    %v11432 = vadd.f32 %v11319, %v11431
    %v11433 = vpop.f32.mrb[0].mxu0
    %v11434 = vadd.f32 %v11321, %v11433
    %v11435 = vpop.f32.mrb[0].mxu0
    %v11436 = vadd.f32 %v11323, %v11435
    %11437 = vdwg.mxu0
    %11438 = vmatprep.subr.bf16.mxu0 %v9170
    %11439 = vmatpush1.bf16.msra.mxu0 %v9169
    %11440 = vmatprep.subr.bf16.mxu0 %v9174
    %11441 = vmatpush1.bf16.msra.mxu0 %v9173
    %11442 = vmatprep.subr.bf16.mxu0 %v9178
    %11443 = vmatpush1.bf16.msra.mxu0 %v9177
    %11444 = vmatprep.subr.bf16.mxu0 %v9182
    %11445 = vmatpush1.bf16.msra.mxu0 %v9181
    %11446 = vmatprep.subr.bf16.mxu0 %v9186
    %11447 = vmatpush1.bf16.msra.mxu0 %v9185
    %11448 = vmatprep.subr.bf16.mxu0 %v9190
    %11449 = vmatpush1.bf16.msra.mxu0 %v9189
    %11450 = vmatprep.subr.bf16.mxu0 %v9194
    %11451 = vmatpush1.bf16.msra.mxu0 %v9193
    %11452 = vmatprep.subr.bf16.mxu0 %v9198
    %11453 = vmatpush1.bf16.msra.mxu0 %v9197
    %11454 = vmatprep.subr.bf16.mxu0 %v9202
    %11455 = vmatpush1.bf16.msra.mxu0 %v9201
    %11456 = vmatprep.subr.bf16.mxu0 %v9206
    %11457 = vmatpush1.bf16.msra.mxu0 %v9205
    %11458 = vmatprep.subr.bf16.mxu0 %v9210
    %11459 = vmatpush1.bf16.msra.mxu0 %v9209
    %11460 = vmatprep.subr.bf16.mxu0 %v9214
    %11461 = vmatpush1.bf16.msra.mxu0 %v9213
    %11462 = vmatprep.subr.bf16.mxu0 %v9218
    %11463 = vmatpush1.bf16.msra.mxu0 %v9217
    %11464 = vmatprep.subr.bf16.mxu0 %v9222
    %11465 = vmatpush1.bf16.msra.mxu0 %v9221
    %11466 = vmatprep.subr.bf16.mxu0 %v9226
    %11467 = vmatpush1.bf16.msra.mxu0 %v9225
    %11468 = vmatprep.subr.bf16.mxu0 %v9230
    %11469 = vmatpush1.bf16.msra.mxu0 %v9229
    %11470 = vmatprep.mubr.bf16.mxu0 %v6536
    %11471 = vmatmul.mubr.bf16.gmra.mrb[0].mxu0 %v6535
    %v11472 = vpop.f32.mrb[0].mxu0
    %v11473 = vadd.f32 %v11360, %v11472
    %v11474 = vpop.f32.mrb[0].mxu0
    %v11475 = vadd.f32 %v11362, %v11474
    %v11476 = vpop.f32.mrb[0].mxu0
    %v11477 = vadd.f32 %v11364, %v11476
    %v11478 = vpop.f32.mrb[0].mxu0
    %v11479 = vadd.f32 %v11366, %v11478
    %11480 = vmatprep.mubr.bf16.mxu0 %v6552
    %11481 = vmatmul.mubr.bf16.gmra.mrb[0].mxu0 %v6551
    %v11482 = vpop.f32.mrb[0].mxu0
    %v11483 = vadd.f32 %v11370, %v11482
    %v11484 = vpop.f32.mrb[0].mxu0
    %v11485 = vadd.f32 %v11372, %v11484
    %v11486 = vpop.f32.mrb[0].mxu0
    %v11487 = vadd.f32 %v11374, %v11486
    %v11488 = vpop.f32.mrb[0].mxu0
    %v11489 = vadd.f32 %v11376, %v11488
    %11490 = vmatprep.mubr.bf16.mxu0 %v6568
    %11491 = vmatmul.mubr.bf16.gmra.mrb[0].mxu0 %v6567
    %v11492 = vpop.f32.mrb[0].mxu0
    %v11493 = vadd.f32 %v11380, %v11492
    %v11494 = vpop.f32.mrb[0].mxu0
    %v11495 = vadd.f32 %v11382, %v11494
    %v11496 = vpop.f32.mrb[0].mxu0
    %v11497 = vadd.f32 %v11384, %v11496
    %v11498 = vpop.f32.mrb[0].mxu0
    %v11499 = vadd.f32 %v11386, %v11498
    %11500 = vmatprep.mubr.bf16.mxu0 %v6584
    %11501 = vmatmul.mubr.bf16.gmra.mrb[0].mxu0 %v6583
    %v11502 = vpop.f32.mrb[0].mxu0
    %v11503 = vadd.f32 %v11390, %v11502
    %v11504 = vpop.f32.mrb[0].mxu0
    %v11505 = vadd.f32 %v11392, %v11504
    %v11506 = vpop.f32.mrb[0].mxu0
    %v11507 = vadd.f32 %v11394, %v11506
    %v11508 = vpop.f32.mrb[0].mxu0
    %v11509 = vadd.f32 %v11396, %v11508
    %11510 = vmatprep.mubr.bf16.mxu0 %v6600
    %11511 = vmatmul.mubr.bf16.gmra.mrb[0].mxu0 %v6599
    %v11512 = vpop.f32.mrb[0].mxu0
    %v11513 = vadd.f32 %v11400, %v11512
    %v11514 = vpop.f32.mrb[0].mxu0
    %v11515 = vadd.f32 %v11402, %v11514
    %v11516 = vpop.f32.mrb[0].mxu0
    %v11517 = vadd.f32 %v11404, %v11516
    %v11518 = vpop.f32.mrb[0].mxu0
    %v11519 = vadd.f32 %v11406, %v11518
    %11520 = vmatprep.mubr.bf16.mxu0 %v6616
    %11521 = vmatmul.mubr.bf16.gmra.mrb[0].mxu0 %v6615
    %v11522 = vpop.f32.mrb[0].mxu0
    %v11523 = vadd.f32 %v11410, %v11522
    %v11524 = vpop.f32.mrb[0].mxu0
    %v11525 = vadd.f32 %v11412, %v11524
    %v11526 = vpop.f32.mrb[0].mxu0
    %v11527 = vadd.f32 %v11414, %v11526
    %v11528 = vpop.f32.mrb[0].mxu0
    %v11529 = vadd.f32 %v11416, %v11528
    %11530 = vmatprep.mubr.bf16.mxu0 %v6632
    %11531 = vmatmul.mubr.bf16.gmra.mrb[0].mxu0 %v6631
    %v11532 = vpop.f32.mrb[0].mxu0
    %v11533 = vadd.f32 %v11420, %v11532
    %v11534 = vpop.f32.mrb[0].mxu0
    %v11535 = vadd.f32 %v11422, %v11534
    %v11536 = vpop.f32.mrb[0].mxu0
    %v11537 = vadd.f32 %v11424, %v11536
    %v11538 = vpop.f32.mrb[0].mxu0
    %v11539 = vadd.f32 %v11426, %v11538
    %11540 = vmatprep.mubr.bf16.mxu0 %v6648
    %11541 = vmatmul.mubr.bf16.gmra.mrb[0].mxu0 %v6647
    %v11542 = vpop.f32.mrb[0].mxu0
    %v11543 = vadd.f32 %v11430, %v11542
    %v11544 = vpop.f32.mrb[0].mxu0
    %v11545 = vadd.f32 %v11432, %v11544
    %v11546 = vpop.f32.mrb[0].mxu0
    %v11547 = vadd.f32 %v11434, %v11546
    %v11548 = vpop.f32.mrb[0].mxu0
    %v11549 = vadd.f32 %v11436, %v11548
    %11550 = vdwg.mxu0
    %11551 = vst [vmem:[#allocation11] sm:$0xff] %v10569
    %11552 = vst [vmem:[#allocation11 + $0x8] sm:$0xff] %v10571
    %11553 = vst [vmem:[#allocation11 + $0x10] sm:$0xff] %v11473
    %11554 = vst [vmem:[#allocation11 + $0x18] sm:$0xff] %v11475
    %11555 = vst [vmem:[#allocation11 + $0x20] sm:$0xff] %v10573
    %11556 = vst [vmem:[#allocation11 + $0x28] sm:$0xff] %v10575
    %11557 = vst [vmem:[#allocation11 + $0x30] sm:$0xff] %v11477
    %11558 = vst [vmem:[#allocation11 + $0x38] sm:$0xff] %v11479
    %11559 = vst [vmem:[#allocation11 + $0x40] sm:$0xff] %v10579
    %11560 = vst [vmem:[#allocation11 + $0x48] sm:$0xff] %v10581
    %11561 = vst [vmem:[#allocation11 + $0x50] sm:$0xff] %v11483
    %11562 = vst [vmem:[#allocation11 + $0x58] sm:$0xff] %v11485
    %11563 = vst [vmem:[#allocation11 + $0x60] sm:$0xff] %v10583
    %11564 = vst [vmem:[#allocation11 + $0x68] sm:$0xff] %v10585
    %11565 = vst [vmem:[#allocation11 + $0x70] sm:$0xff] %v11487
    %11566 = vst [vmem:[#allocation11 + $0x78] sm:$0xff] %v11489
    %11567 = vst [vmem:[#allocation11 + $0x80] sm:$0xff] %v10589
    %11568 = vst [vmem:[#allocation11 + $0x88] sm:$0xff] %v10591
    %11569 = vst [vmem:[#allocation11 + $0x90] sm:$0xff] %v11493
    %11570 = vst [vmem:[#allocation11 + $0x98] sm:$0xff] %v11495
    %11571 = vst [vmem:[#allocation11 + $0xa0] sm:$0xff] %v10593
    %11572 = vst [vmem:[#allocation11 + $0xa8] sm:$0xff] %v10595
    %11573 = vst [vmem:[#allocation11 + $0xb0] sm:$0xff] %v11497
    %11574 = vst [vmem:[#allocation11 + $0xb8] sm:$0xff] %v11499
    %11575 = vst [vmem:[#allocation11 + $0xc0] sm:$0xff] %v10599
    %11576 = vst [vmem:[#allocation11 + $0xc8] sm:$0xff] %v10601
    %11577 = vst [vmem:[#allocation11 + $0xd0] sm:$0xff] %v11503
    %11578 = vst [vmem:[#allocation11 + $0xd8] sm:$0xff] %v11505
    %11579 = vst [vmem:[#allocation11 + $0xe0] sm:$0xff] %v10603
    %11580 = vst [vmem:[#allocation11 + $0xe8] sm:$0xff] %v10605
    %11581 = vst [vmem:[#allocation11 + $0xf0] sm:$0xff] %v11507
    %11582 = vst [vmem:[#allocation11 + $0xf8] sm:$0xff] %v11509
    %11583 = vst [vmem:[#allocation11 + $0x100] sm:$0xff] %v10609
    %11584 = vst [vmem:[#allocation11 + $0x108] sm:$0xff] %v10611
    %11585 = vst [vmem:[#allocation11 + $0x110] sm:$0xff] %v11513
    %11586 = vst [vmem:[#allocation11 + $0x118] sm:$0xff] %v11515
    %11587 = vst [vmem:[#allocation11 + $0x120] sm:$0xff] %v10613
    %11588 = vst [vmem:[#allocation11 + $0x128] sm:$0xff] %v10615
    %11589 = vst [vmem:[#allocation11 + $0x130] sm:$0xff] %v11517
    %11590 = vst [vmem:[#allocation11 + $0x138] sm:$0xff] %v11519
    %11591 = vst [vmem:[#allocation11 + $0x140] sm:$0xff] %v10619
    %11592 = vst [vmem:[#allocation11 + $0x148] sm:$0xff] %v10621
    %11593 = vst [vmem:[#allocation11 + $0x150] sm:$0xff] %v11523
    %11594 = vst [vmem:[#allocation11 + $0x158] sm:$0xff] %v11525
    %11595 = vst [vmem:[#allocation11 + $0x160] sm:$0xff] %v10623
    %11596 = vst [vmem:[#allocation11 + $0x168] sm:$0xff] %v10625
    %11597 = vst [vmem:[#allocation11 + $0x170] sm:$0xff] %v11527
    %11598 = vst [vmem:[#allocation11 + $0x178] sm:$0xff] %v11529
    %11599 = vst [vmem:[#allocation11 + $0x180] sm:$0xff] %v10629
    %11600 = vst [vmem:[#allocation11 + $0x188] sm:$0xff] %v10631
    %11601 = vst [vmem:[#allocation11 + $0x190] sm:$0xff] %v11533
    %11602 = vst [vmem:[#allocation11 + $0x198] sm:$0xff] %v11535
    %11603 = vst [vmem:[#allocation11 + $0x1a0] sm:$0xff] %v10633
    %11604 = vst [vmem:[#allocation11 + $0x1a8] sm:$0xff] %v10635
    %11605 = vst [vmem:[#allocation11 + $0x1b0] sm:$0xff] %v11537
    %11606 = vst [vmem:[#allocation11 + $0x1b8] sm:$0xff] %v11539
    %11607 = vst [vmem:[#allocation11 + $0x1c0] sm:$0xff] %v10639
    %11608 = vst [vmem:[#allocation11 + $0x1c8] sm:$0xff] %v10641
    %11609 = vst [vmem:[#allocation11 + $0x1d0] sm:$0xff] %v11543
    %11610 = vst [vmem:[#allocation11 + $0x1d8] sm:$0xff] %v11545
    %11611 = vst [vmem:[#allocation11 + $0x1e0] sm:$0xff] %v10643
    %11612 = vst [vmem:[#allocation11 + $0x1e8] sm:$0xff] %v10645
    %11613 = vst [vmem:[#allocation11 + $0x1f0] sm:$0xff] %v11547
    %11614 = vst [vmem:[#allocation11 + $0x1f8] sm:$0xff] %v11549
    // Predicated region
    $region42: #{tpu_custom_call.1} parent=1 // pred_check
      _
    $region43: #{tpu_custom_call.1} parent=1 // pred_check_branch
      %11616 = sbr.rel (0) target = $region45
    $region44: #{tpu_custom_call.1} parent=1 // pred_region
      %s11618 = ssub.s32 8192, 8192
      %11619 = vsyncadd [#allocation4], %s11618
      %s11620 = sshll.u32 [#allocation11], 4
      %s11621 = int_to_ptr.vmem [resolvable:$true] %s11620
      %11626 = dma.vmem_to_hbm [thread:$0]  %s11621, 8192, %s5, [#allocation4], 512, 512, 32
    $region45: #{tpu_custom_call.1} parent=1 // pred_fallthru
      _
    // Predicated region
    $region46: #{tpu_custom_call.1} parent=1 // pred_check
      _
    $region47: #{tpu_custom_call.1} parent=1 // pred_check_branch
      %11628 = sbr.rel (0) target = $region49
    $region48: #{tpu_custom_call.1} parent=1 // pred_region
      %11629 = dma.done [#allocation4], 8192
    $region49: #{tpu_custom_call.1} parent=1 // pred_fallthru
      _
    %11630 = vsyncpa [#allocation3], 1
    %11631 = vsyncpa [#allocation6], 1
    %11632 = vsyncpa [#allocation9], 1
    %11633 = vsyncpa [#allocation4], 1

</llo_original>
